<compile_context>
chip_gen: v6e
topology: v6e:2x2x1
jax: 0.10.0
libtpu: 0.0.40
codegen_flags: <defaults>
</compile_context>

<pallas_src>
import jax
import jax.numpy as jnp
from jax.experimental import pallas as pl
from jax.experimental.pallas import tpu as pltpu

LEAKY_SLOPE = 0.01  # F.leaky_relu default negative_slope


def _round_up(x, m):
    return ((x + m - 1) // m) * m


# --------------------------------------------------------------------------- #
# Kernel
# --------------------------------------------------------------------------- #
def cos_network_kernel(
    # activations (batch-tiled)
    x_ref, eps_ref,
    # resident weights/biases (constant index_map -> stay in VMEM)
    w1_ref, b1_ref,                      # fc1: [in_p,256], [1,256]
    wmid_ref,                            # [2,256,512]  : fc2, dc2
    wbig_ref,                            # [8,512,512]  : fc3..fc6, dc3..dc6
    b512_ref,                            # [10,512]     : fc2..fc6, dc2..dc6
    w7_ref, b7_ref,                      # fc7 fused:   [512, 2*lat_p], [1, 2*lat_p]
    wd1_ref, bd1_ref,                    # dc1: [lat_p,256], [1,256]
    wd7_ref, bd7_ref,                    # dc7: [512,in_p], [1,in_p]
    # outputs (lane-padded)
    recon_ref, mu_ref, logvar_ref,
):
    lat_p = mu_ref.shape[-1]             # static (128-aligned) latent slot width

    def lin(h, w, b):
        # bf16 MXU matmul with f32 accumulation, bias add in f32.
        return jnp.dot(h.astype(jnp.bfloat16), w,
                       preferred_element_type=jnp.float32) + b

    def lrelu(v):
        return jnp.where(v >= 0.0, v, LEAKY_SLOPE * v)

    h = x_ref[...].astype(jnp.float32)

    # ---- encoder ----
    h = lrelu(lin(h, w1_ref[...], b1_ref[...]))                 # fc1
    h = lrelu(lin(h, wmid_ref[0], b512_ref[0:1, :]))            # fc2
    h = lrelu(lin(h, wbig_ref[0], b512_ref[1:2, :]))            # fc3
    x0 = h
    h = lrelu(lin(h, wbig_ref[1], b512_ref[2:3, :])) + x0       # fc4 + residual
    x1 = h
    h = lrelu(lin(h, wbig_ref[2], b512_ref[3:4, :])) + x1       # fc5 + residual
    x2 = h
    h = lrelu(lin(h, wbig_ref[3], b512_ref[4:5, :])) + x2       # fc6 + residual

    # fc7 fused head: one matmul, 128-aligned split into mu / logvar slots.
    h7 = lin(h, w7_ref[...], b7_ref[...])                       # [bm, 2*lat_p]
    mu = h7[:, :lat_p]
    logvar = h7[:, lat_p:]
    mu_ref[...] = mu.astype(mu_ref.dtype)
    logvar_ref[...] = logvar.astype(logvar_ref.dtype)

    # ---- reparametrize (eps provided by caller; padded lanes stay zero) ----
    z = mu + eps_ref[...].astype(jnp.float32) * jnp.exp(0.5 * logvar)

    # ---- decoder ----
    h = lrelu(lin(z, wd1_ref[...], bd1_ref[...]))               # dc1
    h = lrelu(lin(h, wmid_ref[1], b512_ref[5:6, :]))            # dc2
    h = lrelu(lin(h, wbig_ref[4], b512_ref[6:7, :]))            # dc3
    x3 = h
    h = lrelu(lin(h, wbig_ref[5], b512_ref[7:8, :])) + x3       # dc4 + residual
    x4 = h
    h = lrelu(lin(h, wbig_ref[6], b512_ref[8:9, :])) + x4       # dc5 + residual
    x5 = h
    h = jnp.cos(lrelu(lin(h, wbig_ref[7], b512_ref[9:10, :]))) + x5  # cos(dc6) + res
    h = lin(h, wd7_ref[...], bd7_ref[...])                      # dc7 (lane-padded N)

    recon_ref[...] = h.astype(recon_ref.dtype)


# --------------------------------------------------------------------------- #
# One-time parameter packing (do NOT call per forward pass)
# --------------------------------------------------------------------------- #
def pack_params(params, input_dim, latent_dim):
    """Consolidate, lane-pad and bf16-cast the weights once.

    params: list of (W[in,out], b[out]) for fc1..fc7 then dc1..dc7.
    Returns a dict of packed arrays consumed by cos_network_forward.
    """
    bf16, f32 = jnp.bfloat16, jnp.float32
    in_p = _round_up(input_dim, 128)
    lat_p = _round_up(latent_dim, 128)

    (w1, b1), (w2, b2), (w3, b3), (w4, b4), (w5, b5), (w6, b6), (w7, b7), \
        (wd1, bd1), (wd2, bd2), (wd3, bd3), (wd4, bd4), (wd5, bd5), (wd6, bd6), \
        (wd7, bd7) = params

    # fc1: pad K (input features) to 128 so the x tiles / MXU K are unmasked.
    w1_p = jnp.zeros((in_p, 256), bf16).at[:input_dim, :].set(w1.astype(bf16))
    b1_p = b1.reshape(1, -1).astype(f32)

    # Consolidated mid/big weights and 512-wide biases (fewer, larger DMAs).
    wmid = jnp.stack([w2, wd2]).astype(bf16)                               # [2,256,512]
    wbig = jnp.stack([w3, w4, w5, w6, wd3, wd4, wd5, wd6]).astype(bf16)    # [8,512,512]
    b512 = jnp.stack([b2, b3, b4, b5, b6, bd2, bd3, bd4, bd5, bd6]).astype(f32)

    # fc7 fused head: each latent_dim-wide half padded into a 128-lane slot.
    w7_p = jnp.zeros((512, 2 * lat_p), bf16)
    w7_p = w7_p.at[:, :latent_dim].set(w7[:, :latent_dim].astype(bf16))
    w7_p = w7_p.at[:, lat_p:lat_p + latent_dim].set(w7[:, latent_dim:].astype(bf16))
    b7_p = jnp.zeros((1, 2 * lat_p), f32)
    b7_p = b7_p.at[0, :latent_dim].set(b7[:latent_dim].astype(f32))
    b7_p = b7_p.at[0, lat_p:lat_p + latent_dim].set(b7[latent_dim:].astype(f32))

    # dc1: pad K (latent) to 128; padded z lanes are zero so rows are zeroed.
    wd1_p = jnp.zeros((lat_p, 256), bf16).at[:latent_dim, :].set(wd1.astype(bf16))
    bd1_p = bd1.reshape(1, -1).astype(f32)

    # dc7: pad N (output features) to 128 lanes -> unmasked recon stores.
    wd7_p = jnp.zeros((512, in_p), bf16).at[:, :input_dim].set(wd7.astype(bf16))
    bd7_p = jnp.zeros((1, in_p), f32).at[0, :input_dim].set(bd7.astype(f32))

    return dict(w1=w1_p, b1=b1_p, wmid=wmid, wbig=wbig, b512=b512,
                w7=w7_p, b7=b7_p, wd1=wd1_p, bd1=bd1_p, wd7=wd7_p, bd7=bd7_p)


# --------------------------------------------------------------------------- #
# Forward wrapper
# --------------------------------------------------------------------------- #
def cos_network_forward(x, eps, packed, input_dim, latent_dim, *, block_m=256):
    """x: [B, input_dim], eps: [B, latent_dim], packed: output of pack_params."""
    B = x.shape[0]
    assert x.shape == (B, input_dim)
    assert eps.shape == (B, latent_dim)

    f32 = jnp.float32
    in_p = packed["w1"].shape[0]       # 128-aligned input width
    lat_p = packed["wd1"].shape[0]     # 128-aligned latent width

    # --- batch tiling (pad rows to a multiple of the tile) ---
    bm = min(block_m, _round_up(B, 8))
    bm = _round_up(bm, 8)
    Bp = _round_up(B, bm)
    num_tiles = Bp // bm

    # Zero-pad activations: rows to Bp, features to 128-aligned widths.
    x_p = jnp.pad(x.astype(f32), ((0, Bp - B), (0, in_p - input_dim)))
    eps_p = jnp.pad(eps.astype(f32), ((0, Bp - B), (0, lat_p - latent_dim)))

    def resident(arr):
        # Full-array block, constant index_map -> DMA'd once, kept in VMEM.
        # TODO(synk): pipeline_mode=pl.Buffered(1) would halve the resident
        # footprint on v7x; left at the default for maximum compile safety.
        n = arr.ndim
        return pl.BlockSpec(arr.shape, lambda i, _n=n: (0,) * _n)

    in_specs = [
        pl.BlockSpec((bm, in_p), lambda i: (i, 0)),     # x
        pl.BlockSpec((bm, lat_p), lambda i: (i, 0)),    # eps
        resident(packed["w1"]), resident(packed["b1"]),
        resident(packed["wmid"]), resident(packed["wbig"]), resident(packed["b512"]),
        resident(packed["w7"]), resident(packed["b7"]),
        resident(packed["wd1"]), resident(packed["bd1"]),
        resident(packed["wd7"]), resident(packed["bd7"]),
    ]
    out_specs = (
        pl.BlockSpec((bm, in_p), lambda i: (i, 0)),     # recon (lane-padded)
        pl.BlockSpec((bm, lat_p), lambda i: (i, 0)),    # mu    (lane-padded)
        pl.BlockSpec((bm, lat_p), lambda i: (i, 0)),    # logvar(lane-padded)
    )
    out_shape = (
        jax.ShapeDtypeStruct((Bp, in_p), f32),
        jax.ShapeDtypeStruct((Bp, lat_p), f32),
        jax.ShapeDtypeStruct((Bp, lat_p), f32),
    )

    # Only shard batch tiles across TensorCores when there are enough of them
    # to amortize the per-core duplication of the resident weight DMA (v7x).
    dim_sem = ("parallel",) if num_tiles >= 4 else ("arbitrary",)
    # Bigger tiles (v5e/v6e large-batch path) get more scoped VMEM headroom.
    vmem_limit = (64 << 20) if bm >= 512 else (32 << 20)

    recon, mu, logvar = pl.pallas_call(
        cos_network_kernel,
        out_shape=out_shape,
        grid=(num_tiles,),
        in_specs=in_specs,
        out_specs=out_specs,
        compiler_params=pltpu.CompilerParams(
            dimension_semantics=dim_sem,
            vmem_limit_bytes=vmem_limit,
        ),
    )(x_p, eps_p,
      packed["w1"], packed["b1"], packed["wmid"], packed["wbig"], packed["b512"],
      packed["w7"], packed["b7"], packed["wd1"], packed["bd1"],
      packed["wd7"], packed["bd7"])

    # Strip batch-row and lane padding.
    return (recon[:B, :input_dim], mu[:B, :latent_dim], logvar[:B, :latent_dim])


# --------------------------------------------------------------------------- #
# Init + pure-JAX reference (for validation)
# --------------------------------------------------------------------------- #
def init_params(key, input_dim, latent_dim, dtype=jnp.float32):
    """Deterministic init mirroring nn.Linear shapes (U(-1/sqrt(in), 1/sqrt(in)))."""
    dims = [
        # encoder fc1..fc7
        (input_dim, 256), (256, 512), (512, 512), (512, 512),
        (512, 512), (512, 512), (512, latent_dim * 2),
        # decoder dc1..dc7
        (latent_dim, 256), (256, 512), (512, 512), (512, 512),
        (512, 512), (512, 512), (512, input_dim),
    ]
    params = []
    for (fan_in, fan_out) in dims:
        key, kw, kb = jax.random.split(key, 3)
        bound = 1.0 / (fan_in ** 0.5)
        w = jax.random.uniform(kw, (fan_in, fan_out), dtype, -bound, bound)
        b = jax.random.uniform(kb, (fan_out,), dtype, -bound, bound)
        params.append((w, b))
    return params


def reference_forward(x, eps, params, latent_dim):
    """Pure-JAX reference using the same bf16 weights / f32 elementwise math."""
    def lin(h, w, b):
        return jnp.dot(h.astype(jnp.bfloat16), w.astype(jnp.bfloat16),
                       preferred_element_type=jnp.float32) + b.astype(jnp.float32)

    def lrelu(v):
        return jnp.where(v >= 0.0, v, LEAKY_SLOPE * v)

    (w1, b1), (w2, b2), (w3, b3), (w4, b4), (w5, b5), (w6, b6), (w7, b7), \
        (wd1, bd1), (wd2, bd2), (wd3, bd3), (wd4, bd4), (wd5, bd5), (wd6, bd6), \
        (wd7, bd7) = params

    h = x.astype(jnp.float32)
    h = lrelu(lin(h, w1, b1))
    h = lrelu(lin(h, w2, b2))
    h = lrelu(lin(h, w3, b3))
    x0 = h
    h = lrelu(lin(h, w4, b4)) + x0
    x1 = h
    h = lrelu(lin(h, w5, b5)) + x1
    x2 = h
    h = lrelu(lin(h, w6, b6)) + x2
    h = lin(h, w7, b7)
    mu, logvar = h[:, :latent_dim], h[:, latent_dim:]
    z = mu + eps.astype(jnp.float32) * jnp.exp(0.5 * logvar)
    h = lrelu(lin(z, wd1, bd1))
    h = lrelu(lin(h, wd2, bd2))
    h = lrelu(lin(h, wd3, bd3))
    x3 = h
    h = lrelu(lin(h, wd4, bd4)) + x3
    x4 = h
    h = lrelu(lin(h, wd5, bd5)) + x4
    x5 = h
    h = jnp.cos(lrelu(lin(h, wd6, bd6))) + x5
    h = lin(h, wd7, bd7)
    return h, mu, logvar


if __name__ == "__main__":
    INPUT_DIM = 16
    LATENT_DIM = 8
    BATCH = 16

    root = jax.random.PRNGKey(0)
    k_params, k_x, k_eps = jax.random.split(root, 3)

    params = init_params(k_params, INPUT_DIM, LATENT_DIM)
    x = jax.random.normal(k_x, (BATCH, INPUT_DIM), jnp.float32)
    # TODO(synk): torch.randn_like lives inside forward(); here eps is sampled
    # with jax.random outside the kernel and passed in (deterministic kernel).
    eps = jax.random.normal(k_eps, (BATCH, LATENT_DIM), jnp.float32)

    # One-time packing (bf16 cast + consolidation + 128-lane padding).
    packed = jax.tree_util.tree_map(jax.device_put,
                                    pack_params(params, INPUT_DIM, LATENT_DIM))

    recon, mu, logvar = cos_network_forward(x, eps, packed, INPUT_DIM, LATENT_DIM,
                                            block_m=256)
    jax.block_until_ready((recon, mu, logvar))

    assert recon.shape == (BATCH, INPUT_DIM)
    assert mu.shape == (BATCH, LATENT_DIM)
    assert logvar.shape == (BATCH, LATENT_DIM)

    r_recon, r_mu, r_logvar = reference_forward(x, eps, params, LATENT_DIM)
    assert bool(jnp.all(jnp.isfinite(recon)))
    assert bool(jnp.allclose(recon, r_recon, rtol=1e-2, atol=1e-2))
    assert bool(jnp.allclose(mu, r_mu, rtol=1e-2, atol=1e-2))
    assert bool(jnp.allclose(logvar, r_logvar, rtol=1e-2, atol=1e-2))

    print("KERNEL_OK")
</pallas_src>

<mosaic_0001>
module attributes {stable_mosaic.version = 11 : i64} {
  func.func @cos_network_kernel(%arg0: i32, %arg1: memref<16x128xf32, #tpu.memory_space<vmem>>, %arg2: memref<16x128xf32, #tpu.memory_space<vmem>>, %arg3: memref<128x256xbf16, #tpu.memory_space<vmem>>, %arg4: memref<1x256xf32, #tpu.memory_space<vmem>>, %arg5: memref<2x256x512xbf16, #tpu.memory_space<vmem>>, %arg6: memref<8x512x512xbf16, #tpu.memory_space<vmem>>, %arg7: memref<10x512xf32, #tpu.memory_space<vmem>>, %arg8: memref<512x256xbf16, #tpu.memory_space<vmem>>, %arg9: memref<1x256xf32, #tpu.memory_space<vmem>>, %arg10: memref<128x256xbf16, #tpu.memory_space<vmem>>, %arg11: memref<1x256xf32, #tpu.memory_space<vmem>>, %arg12: memref<512x128xbf16, #tpu.memory_space<vmem>>, %arg13: memref<1x128xf32, #tpu.memory_space<vmem>>, %arg14: memref<16x128xf32, #tpu.memory_space<vmem>>, %arg15: memref<16x128xf32, #tpu.memory_space<vmem>>, %arg16: memref<16x128xf32, #tpu.memory_space<vmem>>) attributes {dimension_semantics = [#tpu.dimension_semantics<arbitrary>], iteration_bounds = array<i64: 1>, scalar_prefetch = 0 : i64, scratch_operands = 0 : i64, tpu.core_type = #tpu.core_type<tc>, window_params = [{transform_indices = @transform_0, window_bounds = array<i64: 16, 128>}, {transform_indices = @transform_1, window_bounds = array<i64: 16, 128>}, {pipeline_mode = #tpu.pipeline_mode<synchronous>, transform_indices = @transform_2, window_bounds = array<i64: 128, 256>}, {pipeline_mode = #tpu.pipeline_mode<synchronous>, transform_indices = @transform_3, window_bounds = array<i64: 1, 256>}, {pipeline_mode = #tpu.pipeline_mode<synchronous>, transform_indices = @transform_4, window_bounds = array<i64: 2, 256, 512>}, {pipeline_mode = #tpu.pipeline_mode<synchronous>, transform_indices = @transform_5, window_bounds = array<i64: 8, 512, 512>}, {pipeline_mode = #tpu.pipeline_mode<synchronous>, transform_indices = @transform_6, window_bounds = array<i64: 10, 512>}, {pipeline_mode = #tpu.pipeline_mode<synchronous>, transform_indices = @transform_7, window_bounds = array<i64: 512, 256>}, {pipeline_mode = #tpu.pipeline_mode<synchronous>, transform_indices = @transform_8, window_bounds = array<i64: 1, 256>}, {pipeline_mode = #tpu.pipeline_mode<synchronous>, transform_indices = @transform_9, window_bounds = array<i64: 128, 256>}, {pipeline_mode = #tpu.pipeline_mode<synchronous>, transform_indices = @transform_10, window_bounds = array<i64: 1, 256>}, {pipeline_mode = #tpu.pipeline_mode<synchronous>, transform_indices = @transform_11, window_bounds = array<i64: 512, 128>}, {pipeline_mode = #tpu.pipeline_mode<synchronous>, transform_indices = @transform_12, window_bounds = array<i64: 1, 128>}, {transform_indices = @transform_13, window_bounds = array<i64: 16, 128>}, {transform_indices = @transform_14, window_bounds = array<i64: 16, 128>}, {transform_indices = @transform_15, window_bounds = array<i64: 16, 128>}]} {
    %c0 = arith.constant 0 : index
    %c0_0 = arith.constant 0 : index
    %0 = vector.load %arg1[%c0, %c0_0] : memref<16x128xf32, #tpu.memory_space<vmem>>, vector<16x128xf32>
    %c0_1 = arith.constant 0 : index
    %c0_2 = arith.constant 0 : index
    %1 = vector.load %arg3[%c0_1, %c0_2] : memref<128x256xbf16, #tpu.memory_space<vmem>>, vector<128x256xbf16>
    %c0_3 = arith.constant 0 : index
    %c0_4 = arith.constant 0 : index
    %2 = vector.load %arg4[%c0_3, %c0_4] : memref<1x256xf32, #tpu.memory_space<vmem>>, vector<1x256xf32>
    %3 = arith.truncf %0 : vector<16x128xf32> to vector<16x128xbf16>
    %cst = arith.constant dense<0.000000e+00> : vector<16x256xf32>
    %4 = tpu.matmul %3, %1, %cst {dimension_numbers = #tpu.dot_dimension_numbers<[1], [0], [0], [1], [0, 0, 1, 1], [], []>} : vector<16x128xbf16>, vector<128x256xbf16>, vector<16x256xf32> -> vector<16x256xf32>
    %5 = vector.broadcast %2 : vector<1x256xf32> to vector<16x256xf32>
    %6 = arith.addf %4, %5 : vector<16x256xf32>
    %cst_5 = arith.constant 0.000000e+00 : f32
    %7 = vector.broadcast %cst_5 : f32 to vector<16x256xf32>
    %8 = arith.cmpf oge, %6, %7 : vector<16x256xf32>
    %cst_6 = arith.constant 0.00999999977 : f32
    %9 = vector.broadcast %cst_6 : f32 to vector<16x256xf32>
    %10 = arith.mulf %9, %6 : vector<16x256xf32>
    %11 = arith.select %8, %6, %10 : vector<16x256xi1>, vector<16x256xf32>
    %c0_7 = arith.constant 0 : index
    %c0_8 = arith.constant 0 : index
    %c0_9 = arith.constant 0 : index
    %12 = vector.load %arg5[%c0_7, %c0_8, %c0_9] : memref<2x256x512xbf16, #tpu.memory_space<vmem>>, vector<1x256x512xbf16>
    %13 = vector.shape_cast %12 : vector<1x256x512xbf16> to vector<256x512xbf16>
    %c0_10 = arith.constant 0 : index
    %c0_11 = arith.constant 0 : index
    %14 = vector.load %arg7[%c0_10, %c0_11] : memref<10x512xf32, #tpu.memory_space<vmem>>, vector<1x512xf32>
    %15 = arith.truncf %11 : vector<16x256xf32> to vector<16x256xbf16>
    %cst_12 = arith.constant dense<0.000000e+00> : vector<16x512xf32>
    %16 = tpu.matmul %15, %13, %cst_12 {dimension_numbers = #tpu.dot_dimension_numbers<[1], [0], [0], [1], [0, 0, 1, 1], [], []>} : vector<16x256xbf16>, vector<256x512xbf16>, vector<16x512xf32> -> vector<16x512xf32>
    %17 = vector.broadcast %14 : vector<1x512xf32> to vector<16x512xf32>
    %18 = arith.addf %16, %17 : vector<16x512xf32>
    %cst_13 = arith.constant 0.000000e+00 : f32
    %19 = vector.broadcast %cst_13 : f32 to vector<16x512xf32>
    %20 = arith.cmpf oge, %18, %19 : vector<16x512xf32>
    %cst_14 = arith.constant 0.00999999977 : f32
    %21 = vector.broadcast %cst_14 : f32 to vector<16x512xf32>
    %22 = arith.mulf %21, %18 : vector<16x512xf32>
    %23 = arith.select %20, %18, %22 : vector<16x512xi1>, vector<16x512xf32>
    %c0_15 = arith.constant 0 : index
    %c0_16 = arith.constant 0 : index
    %c0_17 = arith.constant 0 : index
    %24 = vector.load %arg6[%c0_15, %c0_16, %c0_17] : memref<8x512x512xbf16, #tpu.memory_space<vmem>>, vector<1x512x512xbf16>
    %25 = vector.shape_cast %24 : vector<1x512x512xbf16> to vector<512x512xbf16>
    %c1 = arith.constant 1 : index
    %c0_18 = arith.constant 0 : index
    %26 = vector.load %arg7[%c1, %c0_18] : memref<10x512xf32, #tpu.memory_space<vmem>>, vector<1x512xf32>
    %27 = arith.truncf %23 : vector<16x512xf32> to vector<16x512xbf16>
    %cst_19 = arith.constant dense<0.000000e+00> : vector<16x512xf32>
    %28 = tpu.matmul %27, %25, %cst_19 {dimension_numbers = #tpu.dot_dimension_numbers<[1], [0], [0], [1], [0, 0, 1, 1], [], []>} : vector<16x512xbf16>, vector<512x512xbf16>, vector<16x512xf32> -> vector<16x512xf32>
    %29 = vector.broadcast %26 : vector<1x512xf32> to vector<16x512xf32>
    %30 = arith.addf %28, %29 : vector<16x512xf32>
    %cst_20 = arith.constant 0.000000e+00 : f32
    %31 = vector.broadcast %cst_20 : f32 to vector<16x512xf32>
    %32 = arith.cmpf oge, %30, %31 : vector<16x512xf32>
    %cst_21 = arith.constant 0.00999999977 : f32
    %33 = vector.broadcast %cst_21 : f32 to vector<16x512xf32>
    %34 = arith.mulf %33, %30 : vector<16x512xf32>
    %35 = arith.select %32, %30, %34 : vector<16x512xi1>, vector<16x512xf32>
    %c1_22 = arith.constant 1 : index
    %c0_23 = arith.constant 0 : index
    %c0_24 = arith.constant 0 : index
    %36 = vector.load %arg6[%c1_22, %c0_23, %c0_24] : memref<8x512x512xbf16, #tpu.memory_space<vmem>>, vector<1x512x512xbf16>
    %37 = vector.shape_cast %36 : vector<1x512x512xbf16> to vector<512x512xbf16>
    %c2 = arith.constant 2 : index
    %c0_25 = arith.constant 0 : index
    %38 = vector.load %arg7[%c2, %c0_25] : memref<10x512xf32, #tpu.memory_space<vmem>>, vector<1x512xf32>
    %39 = arith.truncf %35 : vector<16x512xf32> to vector<16x512xbf16>
    %cst_26 = arith.constant dense<0.000000e+00> : vector<16x512xf32>
    %40 = tpu.matmul %39, %37, %cst_26 {dimension_numbers = #tpu.dot_dimension_numbers<[1], [0], [0], [1], [0, 0, 1, 1], [], []>} : vector<16x512xbf16>, vector<512x512xbf16>, vector<16x512xf32> -> vector<16x512xf32>
    %41 = vector.broadcast %38 : vector<1x512xf32> to vector<16x512xf32>
    %42 = arith.addf %40, %41 : vector<16x512xf32>
    %cst_27 = arith.constant 0.000000e+00 : f32
    %43 = vector.broadcast %cst_27 : f32 to vector<16x512xf32>
    %44 = arith.cmpf oge, %42, %43 : vector<16x512xf32>
    %cst_28 = arith.constant 0.00999999977 : f32
    %45 = vector.broadcast %cst_28 : f32 to vector<16x512xf32>
    %46 = arith.mulf %45, %42 : vector<16x512xf32>
    %47 = arith.select %44, %42, %46 : vector<16x512xi1>, vector<16x512xf32>
    %48 = arith.addf %47, %35 : vector<16x512xf32>
    %c2_29 = arith.constant 2 : index
    %c0_30 = arith.constant 0 : index
    %c0_31 = arith.constant 0 : index
    %49 = vector.load %arg6[%c2_29, %c0_30, %c0_31] : memref<8x512x512xbf16, #tpu.memory_space<vmem>>, vector<1x512x512xbf16>
    %50 = vector.shape_cast %49 : vector<1x512x512xbf16> to vector<512x512xbf16>
    %c3 = arith.constant 3 : index
    %c0_32 = arith.constant 0 : index
    %51 = vector.load %arg7[%c3, %c0_32] : memref<10x512xf32, #tpu.memory_space<vmem>>, vector<1x512xf32>
    %52 = arith.truncf %48 : vector<16x512xf32> to vector<16x512xbf16>
    %cst_33 = arith.constant dense<0.000000e+00> : vector<16x512xf32>
    %53 = tpu.matmul %52, %50, %cst_33 {dimension_numbers = #tpu.dot_dimension_numbers<[1], [0], [0], [1], [0, 0, 1, 1], [], []>} : vector<16x512xbf16>, vector<512x512xbf16>, vector<16x512xf32> -> vector<16x512xf32>
    %54 = vector.broadcast %51 : vector<1x512xf32> to vector<16x512xf32>
    %55 = arith.addf %53, %54 : vector<16x512xf32>
    %cst_34 = arith.constant 0.000000e+00 : f32
    %56 = vector.broadcast %cst_34 : f32 to vector<16x512xf32>
    %57 = arith.cmpf oge, %55, %56 : vector<16x512xf32>
    %cst_35 = arith.constant 0.00999999977 : f32
    %58 = vector.broadcast %cst_35 : f32 to vector<16x512xf32>
    %59 = arith.mulf %58, %55 : vector<16x512xf32>
    %60 = arith.select %57, %55, %59 : vector<16x512xi1>, vector<16x512xf32>
    %61 = arith.addf %60, %48 : vector<16x512xf32>
    %c3_36 = arith.constant 3 : index
    %c0_37 = arith.constant 0 : index
    %c0_38 = arith.constant 0 : index
    %62 = vector.load %arg6[%c3_36, %c0_37, %c0_38] : memref<8x512x512xbf16, #tpu.memory_space<vmem>>, vector<1x512x512xbf16>
    %63 = vector.shape_cast %62 : vector<1x512x512xbf16> to vector<512x512xbf16>
    %c4 = arith.constant 4 : index
    %c0_39 = arith.constant 0 : index
    %64 = vector.load %arg7[%c4, %c0_39] : memref<10x512xf32, #tpu.memory_space<vmem>>, vector<1x512xf32>
    %65 = arith.truncf %61 : vector<16x512xf32> to vector<16x512xbf16>
    %cst_40 = arith.constant dense<0.000000e+00> : vector<16x512xf32>
    %66 = tpu.matmul %65, %63, %cst_40 {dimension_numbers = #tpu.dot_dimension_numbers<[1], [0], [0], [1], [0, 0, 1, 1], [], []>} : vector<16x512xbf16>, vector<512x512xbf16>, vector<16x512xf32> -> vector<16x512xf32>
    %67 = vector.broadcast %64 : vector<1x512xf32> to vector<16x512xf32>
    %68 = arith.addf %66, %67 : vector<16x512xf32>
    %cst_41 = arith.constant 0.000000e+00 : f32
    %69 = vector.broadcast %cst_41 : f32 to vector<16x512xf32>
    %70 = arith.cmpf oge, %68, %69 : vector<16x512xf32>
    %cst_42 = arith.constant 0.00999999977 : f32
    %71 = vector.broadcast %cst_42 : f32 to vector<16x512xf32>
    %72 = arith.mulf %71, %68 : vector<16x512xf32>
    %73 = arith.select %70, %68, %72 : vector<16x512xi1>, vector<16x512xf32>
    %74 = arith.addf %73, %61 : vector<16x512xf32>
    %c0_43 = arith.constant 0 : index
    %c0_44 = arith.constant 0 : index
    %75 = vector.load %arg8[%c0_43, %c0_44] : memref<512x256xbf16, #tpu.memory_space<vmem>>, vector<512x256xbf16>
    %c0_45 = arith.constant 0 : index
    %c0_46 = arith.constant 0 : index
    %76 = vector.load %arg9[%c0_45, %c0_46] : memref<1x256xf32, #tpu.memory_space<vmem>>, vector<1x256xf32>
    %77 = arith.truncf %74 : vector<16x512xf32> to vector<16x512xbf16>
    %cst_47 = arith.constant dense<0.000000e+00> : vector<16x256xf32>
    %78 = tpu.matmul %77, %75, %cst_47 {dimension_numbers = #tpu.dot_dimension_numbers<[1], [0], [0], [1], [0, 0, 1, 1], [], []>} : vector<16x512xbf16>, vector<512x256xbf16>, vector<16x256xf32> -> vector<16x256xf32>
    %79 = vector.broadcast %76 : vector<1x256xf32> to vector<16x256xf32>
    %80 = arith.addf %78, %79 : vector<16x256xf32>
    %81 = vector.extract_strided_slice %80 {offsets = [0, 0], sizes = [16, 128], strides = [1, 1]} : vector<16x256xf32> to vector<16x128xf32>
    %82 = vector.extract_strided_slice %80 {offsets = [0, 128], sizes = [16, 128], strides = [1, 1]} : vector<16x256xf32> to vector<16x128xf32>
    %c0_48 = arith.constant 0 : index
    %c0_49 = arith.constant 0 : index
    %83 = vector.load %arg15[%c0_48, %c0_49] : memref<16x128xf32, #tpu.memory_space<vmem>>, vector<16x128xf32>
    tpu.vector_store %arg15[%c0_48, %c0_49], %81 {strides = array<i32>} : memref<16x128xf32, #tpu.memory_space<vmem>>, vector<16x128xf32>,
    %c0_50 = arith.constant 0 : index
    %c0_51 = arith.constant 0 : index
    %84 = vector.load %arg16[%c0_50, %c0_51] : memref<16x128xf32, #tpu.memory_space<vmem>>, vector<16x128xf32>
    tpu.vector_store %arg16[%c0_50, %c0_51], %82 {strides = array<i32>} : memref<16x128xf32, #tpu.memory_space<vmem>>, vector<16x128xf32>,
    %c0_52 = arith.constant 0 : index
    %c0_53 = arith.constant 0 : index
    %85 = vector.load %arg2[%c0_52, %c0_53] : memref<16x128xf32, #tpu.memory_space<vmem>>, vector<16x128xf32>
    %cst_54 = arith.constant 5.000000e-01 : f32
    %86 = vector.broadcast %cst_54 : f32 to vector<16x128xf32>
    %87 = arith.mulf %86, %82 : vector<16x128xf32>
    %88 = math.exp %87 : vector<16x128xf32>
    %89 = arith.mulf %85, %88 : vector<16x128xf32>
    %90 = arith.addf %81, %89 : vector<16x128xf32>
    %c0_55 = arith.constant 0 : index
    %c0_56 = arith.constant 0 : index
    %91 = vector.load %arg10[%c0_55, %c0_56] : memref<128x256xbf16, #tpu.memory_space<vmem>>, vector<128x256xbf16>
    %c0_57 = arith.constant 0 : index
    %c0_58 = arith.constant 0 : index
    %92 = vector.load %arg11[%c0_57, %c0_58] : memref<1x256xf32, #tpu.memory_space<vmem>>, vector<1x256xf32>
    %93 = arith.truncf %90 : vector<16x128xf32> to vector<16x128xbf16>
    %cst_59 = arith.constant dense<0.000000e+00> : vector<16x256xf32>
    %94 = tpu.matmul %93, %91, %cst_59 {dimension_numbers = #tpu.dot_dimension_numbers<[1], [0], [0], [1], [0, 0, 1, 1], [], []>} : vector<16x128xbf16>, vector<128x256xbf16>, vector<16x256xf32> -> vector<16x256xf32>
    %95 = vector.broadcast %92 : vector<1x256xf32> to vector<16x256xf32>
    %96 = arith.addf %94, %95 : vector<16x256xf32>
    %cst_60 = arith.constant 0.000000e+00 : f32
    %97 = vector.broadcast %cst_60 : f32 to vector<16x256xf32>
    %98 = arith.cmpf oge, %96, %97 : vector<16x256xf32>
    %cst_61 = arith.constant 0.00999999977 : f32
    %99 = vector.broadcast %cst_61 : f32 to vector<16x256xf32>
    %100 = arith.mulf %99, %96 : vector<16x256xf32>
    %101 = arith.select %98, %96, %100 : vector<16x256xi1>, vector<16x256xf32>
    %c1_62 = arith.constant 1 : index
    %c0_63 = arith.constant 0 : index
    %c0_64 = arith.constant 0 : index
    %102 = vector.load %arg5[%c1_62, %c0_63, %c0_64] : memref<2x256x512xbf16, #tpu.memory_space<vmem>>, vector<1x256x512xbf16>
    %103 = vector.shape_cast %102 : vector<1x256x512xbf16> to vector<256x512xbf16>
    %c5 = arith.constant 5 : index
    %c0_65 = arith.constant 0 : index
    %104 = vector.load %arg7[%c5, %c0_65] : memref<10x512xf32, #tpu.memory_space<vmem>>, vector<1x512xf32>
    %105 = arith.truncf %101 : vector<16x256xf32> to vector<16x256xbf16>
    %cst_66 = arith.constant dense<0.000000e+00> : vector<16x512xf32>
    %106 = tpu.matmul %105, %103, %cst_66 {dimension_numbers = #tpu.dot_dimension_numbers<[1], [0], [0], [1], [0, 0, 1, 1], [], []>} : vector<16x256xbf16>, vector<256x512xbf16>, vector<16x512xf32> -> vector<16x512xf32>
    %107 = vector.broadcast %104 : vector<1x512xf32> to vector<16x512xf32>
    %108 = arith.addf %106, %107 : vector<16x512xf32>
    %cst_67 = arith.constant 0.000000e+00 : f32
    %109 = vector.broadcast %cst_67 : f32 to vector<16x512xf32>
    %110 = arith.cmpf oge, %108, %109 : vector<16x512xf32>
    %cst_68 = arith.constant 0.00999999977 : f32
    %111 = vector.broadcast %cst_68 : f32 to vector<16x512xf32>
    %112 = arith.mulf %111, %108 : vector<16x512xf32>
    %113 = arith.select %110, %108, %112 : vector<16x512xi1>, vector<16x512xf32>
    %c4_69 = arith.constant 4 : index
    %c0_70 = arith.constant 0 : index
    %c0_71 = arith.constant 0 : index
    %114 = vector.load %arg6[%c4_69, %c0_70, %c0_71] : memref<8x512x512xbf16, #tpu.memory_space<vmem>>, vector<1x512x512xbf16>
    %115 = vector.shape_cast %114 : vector<1x512x512xbf16> to vector<512x512xbf16>
    %c6 = arith.constant 6 : index
    %c0_72 = arith.constant 0 : index
    %116 = vector.load %arg7[%c6, %c0_72] : memref<10x512xf32, #tpu.memory_space<vmem>>, vector<1x512xf32>
    %117 = arith.truncf %113 : vector<16x512xf32> to vector<16x512xbf16>
    %cst_73 = arith.constant dense<0.000000e+00> : vector<16x512xf32>
    %118 = tpu.matmul %117, %115, %cst_73 {dimension_numbers = #tpu.dot_dimension_numbers<[1], [0], [0], [1], [0, 0, 1, 1], [], []>} : vector<16x512xbf16>, vector<512x512xbf16>, vector<16x512xf32> -> vector<16x512xf32>
    %119 = vector.broadcast %116 : vector<1x512xf32> to vector<16x512xf32>
    %120 = arith.addf %118, %119 : vector<16x512xf32>
    %cst_74 = arith.constant 0.000000e+00 : f32
    %121 = vector.broadcast %cst_74 : f32 to vector<16x512xf32>
    %122 = arith.cmpf oge, %120, %121 : vector<16x512xf32>
    %cst_75 = arith.constant 0.00999999977 : f32
    %123 = vector.broadcast %cst_75 : f32 to vector<16x512xf32>
    %124 = arith.mulf %123, %120 : vector<16x512xf32>
    %125 = arith.select %122, %120, %124 : vector<16x512xi1>, vector<16x512xf32>
    %c5_76 = arith.constant 5 : index
    %c0_77 = arith.constant 0 : index
    %c0_78 = arith.constant 0 : index
    %126 = vector.load %arg6[%c5_76, %c0_77, %c0_78] : memref<8x512x512xbf16, #tpu.memory_space<vmem>>, vector<1x512x512xbf16>
    %127 = vector.shape_cast %126 : vector<1x512x512xbf16> to vector<512x512xbf16>
    %c7 = arith.constant 7 : index
    %c0_79 = arith.constant 0 : index
    %128 = vector.load %arg7[%c7, %c0_79] : memref<10x512xf32, #tpu.memory_space<vmem>>, vector<1x512xf32>
    %129 = arith.truncf %125 : vector<16x512xf32> to vector<16x512xbf16>
    %cst_80 = arith.constant dense<0.000000e+00> : vector<16x512xf32>
    %130 = tpu.matmul %129, %127, %cst_80 {dimension_numbers = #tpu.dot_dimension_numbers<[1], [0], [0], [1], [0, 0, 1, 1], [], []>} : vector<16x512xbf16>, vector<512x512xbf16>, vector<16x512xf32> -> vector<16x512xf32>
    %131 = vector.broadcast %128 : vector<1x512xf32> to vector<16x512xf32>
    %132 = arith.addf %130, %131 : vector<16x512xf32>
    %cst_81 = arith.constant 0.000000e+00 : f32
    %133 = vector.broadcast %cst_81 : f32 to vector<16x512xf32>
    %134 = arith.cmpf oge, %132, %133 : vector<16x512xf32>
    %cst_82 = arith.constant 0.00999999977 : f32
    %135 = vector.broadcast %cst_82 : f32 to vector<16x512xf32>
    %136 = arith.mulf %135, %132 : vector<16x512xf32>
    %137 = arith.select %134, %132, %136 : vector<16x512xi1>, vector<16x512xf32>
    %138 = arith.addf %137, %125 : vector<16x512xf32>
    %c6_83 = arith.constant 6 : index
    %c0_84 = arith.constant 0 : index
    %c0_85 = arith.constant 0 : index
    %139 = vector.load %arg6[%c6_83, %c0_84, %c0_85] : memref<8x512x512xbf16, #tpu.memory_space<vmem>>, vector<1x512x512xbf16>
    %140 = vector.shape_cast %139 : vector<1x512x512xbf16> to vector<512x512xbf16>
    %c8 = arith.constant 8 : index
    %c0_86 = arith.constant 0 : index
    %141 = vector.load %arg7[%c8, %c0_86] : memref<10x512xf32, #tpu.memory_space<vmem>>, vector<1x512xf32>
    %142 = arith.truncf %138 : vector<16x512xf32> to vector<16x512xbf16>
    %cst_87 = arith.constant dense<0.000000e+00> : vector<16x512xf32>
    %143 = tpu.matmul %142, %140, %cst_87 {dimension_numbers = #tpu.dot_dimension_numbers<[1], [0], [0], [1], [0, 0, 1, 1], [], []>} : vector<16x512xbf16>, vector<512x512xbf16>, vector<16x512xf32> -> vector<16x512xf32>
    %144 = vector.broadcast %141 : vector<1x512xf32> to vector<16x512xf32>
    %145 = arith.addf %143, %144 : vector<16x512xf32>
    %cst_88 = arith.constant 0.000000e+00 : f32
    %146 = vector.broadcast %cst_88 : f32 to vector<16x512xf32>
    %147 = arith.cmpf oge, %145, %146 : vector<16x512xf32>
    %cst_89 = arith.constant 0.00999999977 : f32
    %148 = vector.broadcast %cst_89 : f32 to vector<16x512xf32>
    %149 = arith.mulf %148, %145 : vector<16x512xf32>
    %150 = arith.select %147, %145, %149 : vector<16x512xi1>, vector<16x512xf32>
    %151 = arith.addf %150, %138 : vector<16x512xf32>
    %c7_90 = arith.constant 7 : index
    %c0_91 = arith.constant 0 : index
    %c0_92 = arith.constant 0 : index
    %152 = vector.load %arg6[%c7_90, %c0_91, %c0_92] : memref<8x512x512xbf16, #tpu.memory_space<vmem>>, vector<1x512x512xbf16>
    %153 = vector.shape_cast %152 : vector<1x512x512xbf16> to vector<512x512xbf16>
    %c9 = arith.constant 9 : index
    %c0_93 = arith.constant 0 : index
    %154 = vector.load %arg7[%c9, %c0_93] : memref<10x512xf32, #tpu.memory_space<vmem>>, vector<1x512xf32>
    %155 = arith.truncf %151 : vector<16x512xf32> to vector<16x512xbf16>
    %cst_94 = arith.constant dense<0.000000e+00> : vector<16x512xf32>
    %156 = tpu.matmul %155, %153, %cst_94 {dimension_numbers = #tpu.dot_dimension_numbers<[1], [0], [0], [1], [0, 0, 1, 1], [], []>} : vector<16x512xbf16>, vector<512x512xbf16>, vector<16x512xf32> -> vector<16x512xf32>
    %157 = vector.broadcast %154 : vector<1x512xf32> to vector<16x512xf32>
    %158 = arith.addf %156, %157 : vector<16x512xf32>
    %cst_95 = arith.constant 0.000000e+00 : f32
    %159 = vector.broadcast %cst_95 : f32 to vector<16x512xf32>
    %160 = arith.cmpf oge, %158, %159 : vector<16x512xf32>
    %cst_96 = arith.constant 0.00999999977 : f32
    %161 = vector.broadcast %cst_96 : f32 to vector<16x512xf32>
    %162 = arith.mulf %161, %158 : vector<16x512xf32>
    %163 = arith.select %160, %158, %162 : vector<16x512xi1>, vector<16x512xf32>
    %164 = math.cos %163 : vector<16x512xf32>
    %165 = arith.addf %164, %151 : vector<16x512xf32>
    %c0_97 = arith.constant 0 : index
    %c0_98 = arith.constant 0 : index
    %166 = vector.load %arg12[%c0_97, %c0_98] : memref<512x128xbf16, #tpu.memory_space<vmem>>, vector<512x128xbf16>
    %c0_99 = arith.constant 0 : index
    %c0_100 = arith.constant 0 : index
    %167 = vector.load %arg13[%c0_99, %c0_100] : memref<1x128xf32, #tpu.memory_space<vmem>>, vector<1x128xf32>
    %168 = arith.truncf %165 : vector<16x512xf32> to vector<16x512xbf16>
    %cst_101 = arith.constant dense<0.000000e+00> : vector<16x128xf32>
    %169 = tpu.matmul %168, %166, %cst_101 {dimension_numbers = #tpu.dot_dimension_numbers<[1], [0], [0], [1], [0, 0, 1, 1], [], []>} : vector<16x512xbf16>, vector<512x128xbf16>, vector<16x128xf32> -> vector<16x128xf32>
    %170 = vector.broadcast %167 : vector<1x128xf32> to vector<16x128xf32>
    %171 = arith.addf %169, %170 : vector<16x128xf32>
    %c0_102 = arith.constant 0 : index
    %c0_103 = arith.constant 0 : index
    %172 = vector.load %arg14[%c0_102, %c0_103] : memref<16x128xf32, #tpu.memory_space<vmem>>, vector<16x128xf32>
    tpu.vector_store %arg14[%c0_102, %c0_103], %171 {strides = array<i32>} : memref<16x128xf32, #tpu.memory_space<vmem>>, vector<16x128xf32>,
    return
  }
  func.func @transform_0(%arg0: i32) -> (i32, i32) {
    %c0_i32 = arith.constant 0 : i32
    %c0_i32_0 = arith.constant 0 : i32
    return %arg0, %c0_i32 : i32, i32
  }
  func.func @transform_1(%arg0: i32) -> (i32, i32) {
    %c0_i32 = arith.constant 0 : i32
    %c0_i32_0 = arith.constant 0 : i32
    return %arg0, %c0_i32 : i32, i32
  }
  func.func @transform_2(%arg0: i32) -> (i32, i32) {
    %c0_i32 = arith.constant 0 : i32
    %c0_i32_0 = arith.constant 0 : i32
    %c0_i32_1 = arith.constant 0 : i32
    return %c0_i32, %c0_i32_0 : i32, i32
  }
  func.func @transform_3(%arg0: i32) -> (i32, i32) {
    %c0_i32 = arith.constant 0 : i32
    %c0_i32_0 = arith.constant 0 : i32
    %c0_i32_1 = arith.constant 0 : i32
    return %c0_i32, %c0_i32_0 : i32, i32
  }
  func.func @transform_4(%arg0: i32) -> (i32, i32, i32) {
    %c0_i32 = arith.constant 0 : i32
    %c0_i32_0 = arith.constant 0 : i32
    %c0_i32_1 = arith.constant 0 : i32
    %c0_i32_2 = arith.constant 0 : i32
    return %c0_i32, %c0_i32_0, %c0_i32_1 : i32, i32, i32
  }
  func.func @transform_5(%arg0: i32) -> (i32, i32, i32) {
    %c0_i32 = arith.constant 0 : i32
    %c0_i32_0 = arith.constant 0 : i32
    %c0_i32_1 = arith.constant 0 : i32
    %c0_i32_2 = arith.constant 0 : i32
    return %c0_i32, %c0_i32_0, %c0_i32_1 : i32, i32, i32
  }
  func.func @transform_6(%arg0: i32) -> (i32, i32) {
    %c0_i32 = arith.constant 0 : i32
    %c0_i32_0 = arith.constant 0 : i32
    %c0_i32_1 = arith.constant 0 : i32
    return %c0_i32, %c0_i32_0 : i32, i32
  }
  func.func @transform_7(%arg0: i32) -> (i32, i32) {
    %c0_i32 = arith.constant 0 : i32
    %c0_i32_0 = arith.constant 0 : i32
    %c0_i32_1 = arith.constant 0 : i32
    return %c0_i32, %c0_i32_0 : i32, i32
  }
  func.func @transform_8(%arg0: i32) -> (i32, i32) {
    %c0_i32 = arith.constant 0 : i32
    %c0_i32_0 = arith.constant 0 : i32
    %c0_i32_1 = arith.constant 0 : i32
    return %c0_i32, %c0_i32_0 : i32, i32
  }
  func.func @transform_9(%arg0: i32) -> (i32, i32) {
    %c0_i32 = arith.constant 0 : i32
    %c0_i32_0 = arith.constant 0 : i32
    %c0_i32_1 = arith.constant 0 : i32
    return %c0_i32, %c0_i32_0 : i32, i32
  }
  func.func @transform_10(%arg0: i32) -> (i32, i32) {
    %c0_i32 = arith.constant 0 : i32
    %c0_i32_0 = arith.constant 0 : i32
    %c0_i32_1 = arith.constant 0 : i32
    return %c0_i32, %c0_i32_0 : i32, i32
  }
  func.func @transform_11(%arg0: i32) -> (i32, i32) {
    %c0_i32 = arith.constant 0 : i32
    %c0_i32_0 = arith.constant 0 : i32
    %c0_i32_1 = arith.constant 0 : i32
    return %c0_i32, %c0_i32_0 : i32, i32
  }
  func.func @transform_12(%arg0: i32) -> (i32, i32) {
    %c0_i32 = arith.constant 0 : i32
    %c0_i32_0 = arith.constant 0 : i32
    %c0_i32_1 = arith.constant 0 : i32
    return %c0_i32, %c0_i32_0 : i32, i32
  }
  func.func @transform_13(%arg0: i32) -> (i32, i32) {
    %c0_i32 = arith.constant 0 : i32
    %c0_i32_0 = arith.constant 0 : i32
    return %arg0, %c0_i32 : i32, i32
  }
  func.func @transform_14(%arg0: i32) -> (i32, i32) {
    %c0_i32 = arith.constant 0 : i32
    %c0_i32_0 = arith.constant 0 : i32
    return %arg0, %c0_i32 : i32, i32
  }
  func.func @transform_15(%arg0: i32) -> (i32, i32) {
    %c0_i32 = arith.constant 0 : i32
    %c0_i32_0 = arith.constant 0 : i32
    return %arg0, %c0_i32 : i32, i32
  }
}

</mosaic_0001>

<llo_original>
// kernel: tpu_custom_call.1
$region0: #{tpu_custom_call.1}
  #allocation0 [shape = 'u32[]', space=smem, size = 0x4, offset = 0x4, fixed_abs, tag = 'smem constant byte address 0x4 - core index']
  #allocation1 [shape = 'u32[144,128]{1,0:T(1,128)}', space=vmem, size = 0x12000, scoped, tag = 'internal scratch']
  %s0 = inlined_call_operand.hbm [shape: f32[16,128], index: 0, kind: input, shape index: {}]
  %s1 = inlined_call_operand.hbm [shape: f32[16,128], index: 1, kind: input, shape index: {}]
  %s2 = inlined_call_operand.hbm [shape: bf16[128,256], index: 2, kind: input, shape index: {}]
  %s3 = inlined_call_operand.hbm [shape: f32[1,256], index: 3, kind: input, shape index: {}]
  %s4 = inlined_call_operand.hbm [shape: bf16[2,256,512], index: 4, kind: input, shape index: {}]
  %s5 = inlined_call_operand.hbm [shape: bf16[8,512,512], index: 5, kind: input, shape index: {}]
  %s6 = inlined_call_operand.hbm [shape: f32[10,512], index: 6, kind: input, shape index: {}]
  %s7 = inlined_call_operand.hbm [shape: bf16[512,256], index: 7, kind: input, shape index: {}]
  %s8 = inlined_call_operand.hbm [shape: f32[1,256], index: 8, kind: input, shape index: {}]
  %s9 = inlined_call_operand.hbm [shape: bf16[128,256], index: 9, kind: input, shape index: {}]
  %s10 = inlined_call_operand.hbm [shape: f32[1,256], index: 10, kind: input, shape index: {}]
  %s11 = inlined_call_operand.hbm [shape: bf16[512,128], index: 11, kind: input, shape index: {}]
  %s12 = inlined_call_operand.hbm [shape: f32[1,128], index: 12, kind: input, shape index: {}]
  %s13 = inlined_call_operand.hbm [shape: f32[16,128], index: 13, kind: output, shape index: {0}]
  %s14 = inlined_call_operand.hbm [shape: f32[16,128], index: 14, kind: output, shape index: {1}]
  %s15 = inlined_call_operand.hbm [shape: f32[16,128], index: 15, kind: output, shape index: {2}]
  %16 = xla_tuple %s13, %s14, %s15
  %s17 = sld [smem:[#allocation0]]
  $region130: #{tpu_custom_call.1} parent=0
    _
  %s19 = ssub.s32 1, %s17
  %s20 = scalar_select 0, %s19, %s17
  $region1: #{tpu_custom_call.1} parent=0
    #allocation2 [shape = 'u8[8192]{0}', space=vmem, size = 0x2000, scoped, tag = 'input window, operand 0, single buffered']
    #allocation3 [shape = 's32[1]{0}', space=sflag, size = 0x4, scoped, tag = 'scoped memory for tpu_custom_call.1']
    #allocation4 [shape = 's32[1]{0}', space=sflag, size = 0x4, scoped, tag = 'scoped memory for tpu_custom_call.1']
    #allocation5 [shape = 'u8[8192]{0}', space=vmem, size = 0x2000, scoped, tag = 'input window, operand 1, single buffered']
    #allocation6 [shape = 's32[1]{0}', space=sflag, size = 0x4, scoped, tag = 'scoped memory for tpu_custom_call.1']
    #allocation7 [shape = 'u8[65536]{0}', space=vmem, size = 0x10000, scoped, tag = 'input window, operand 2, single buffered']
    #allocation8 [shape = 'u8[1024]{0}', space=vmem, size = 0x400, scoped, tag = 'input window, operand 3, single buffered']
    #allocation9 [shape = 's32[1]{0}', space=sflag, size = 0x4, scoped, tag = 'scoped memory for tpu_custom_call.1']
    #allocation10 [shape = 'u8[524288]{0}', space=vmem, size = 0x80000, scoped, tag = 'input window, operand 4, single buffered']
    #allocation11 [shape = 'u8[4194304]{0}', space=vmem, size = 0x400000, scoped, tag = 'input window, operand 5, single buffered']
    #allocation12 [shape = 's32[1]{0}', space=sflag, size = 0x4, scoped, tag = 'scoped memory for tpu_custom_call.1']
    #allocation13 [shape = 'u8[32768]{0}', space=vmem, size = 0x8000, scoped, tag = 'input window, operand 6, single buffered']
    #allocation14 [shape = 'u8[262144]{0}', space=vmem, size = 0x40000, scoped, tag = 'input window, operand 7, single buffered']
    #allocation15 [shape = 's32[1]{0}', space=sflag, size = 0x4, scoped, tag = 'scoped memory for tpu_custom_call.1']
    #allocation16 [shape = 'u8[1024]{0}', space=vmem, size = 0x400, scoped, tag = 'input window, operand 8, single buffered']
    #allocation17 [shape = 'u8[65536]{0}', space=vmem, size = 0x10000, scoped, tag = 'input window, operand 9, single buffered']
    #allocation18 [shape = 's32[1]{0}', space=sflag, size = 0x4, scoped, tag = 'scoped memory for tpu_custom_call.1']
    #allocation19 [shape = 'u8[1024]{0}', space=vmem, size = 0x400, scoped, tag = 'input window, operand 10, single buffered']
    #allocation20 [shape = 'u8[131072]{0}', space=vmem, size = 0x20000, scoped, tag = 'input window, operand 11, single buffered']
    #allocation21 [shape = 's32[1]{0}', space=sflag, size = 0x4, scoped, tag = 'scoped memory for tpu_custom_call.1']
    #allocation22 [shape = 'u8[512]{0}', space=vmem, size = 0x400, scoped, tag = 'input window, operand 12, single buffered']
    #allocation23 [shape = 'u8[8192]{0}', space=vmem, size = 0x2000, scoped, tag = 'output window, operand 0, single buffered']
    #allocation24 [shape = 'u8[8192]{0}', space=vmem, size = 0x2000, scoped, tag = 'output window, operand 1, single buffered']
    #allocation25 [shape = 's32[1]{0}', space=sflag, size = 0x4, scoped, tag = 'scoped memory for tpu_custom_call.1']
    #allocation26 [shape = 'u8[8192]{0}', space=vmem, size = 0x2000, scoped, tag = 'output window, operand 2, single buffered']
    %21 = vsyncpa [#allocation3], 0
    %22 = vsyncpa [#allocation6], 0
    %23 = vsyncpa [#allocation9], 0
    %24 = vsyncpa [#allocation12], 0
    %25 = vsyncpa [#allocation15], 0
    %26 = vsyncpa [#allocation18], 0
    %27 = vsyncpa [#allocation21], 0
    %28 = vsyncpa [#allocation4], 0
    %29 = vsyncpa [#allocation25], 0
    // Predicated region
    $region2: #{tpu_custom_call.1} parent=1 // pred_check
      _
    $region3: #{tpu_custom_call.1} parent=1 // pred_check_branch
      %31 = sbr.rel (0) target = $region5
    $region4: #{tpu_custom_call.1} parent=1 // pred_region
      %s33 = ssub.s32 256, 256
      %34 = vsyncadd [#allocation3], %s33
      %s35 = sshll.u32 [#allocation2], 4
      %s36 = int_to_ptr.vmem [resolvable:$true] %s35
      %41 = dma.hbm_to_vmem [thread:$0]  %s0, 256, %s36, [#allocation3], 128, 128, 8
    $region5: #{tpu_custom_call.1} parent=1 // pred_fallthru
      _
    // Predicated region
    $region6: #{tpu_custom_call.1} parent=1 // pred_check
      _
    $region7: #{tpu_custom_call.1} parent=1 // pred_check_branch
      %43 = sbr.rel (0) target = $region9
    $region8: #{tpu_custom_call.1} parent=1 // pred_region
      %s45 = ssub.s32 256, 256
      %46 = vsyncadd [#allocation6], %s45
      %s47 = sshll.u32 [#allocation5], 4
      %s48 = int_to_ptr.vmem [resolvable:$true] %s47
      %53 = dma.hbm_to_vmem [thread:$0]  %s1, 256, %s48, [#allocation6], 128, 128, 8
    $region9: #{tpu_custom_call.1} parent=1 // pred_fallthru
      _
    // Predicated region
    $region10: #{tpu_custom_call.1} parent=1 // pred_check
      _
    $region11: #{tpu_custom_call.1} parent=1 // pred_check_branch
      %55 = sbr.rel (0) target = $region13
    $region12: #{tpu_custom_call.1} parent=1 // pred_region
      %s57 = ssub.s32 2048, 2048
      %58 = vsyncadd [#allocation6], %s57
      %s59 = sshll.u32 [#allocation7], 4
      %s60 = int_to_ptr.vmem [resolvable:$true] %s59
      %65 = dma.hbm_to_vmem [thread:$0]  %s2, 2048, %s60, [#allocation6], 128, 128, 8
    $region13: #{tpu_custom_call.1} parent=1 // pred_fallthru
      _
    // Predicated region
    $region14: #{tpu_custom_call.1} parent=1 // pred_check
      _
    $region15: #{tpu_custom_call.1} parent=1 // pred_check_branch
      %67 = sbr.rel (0) target = $region17
    $region16: #{tpu_custom_call.1} parent=1 // pred_region
      %s69 = ssub.s32 32, 32
      %70 = vsyncadd [#allocation9], %s69
      %s72 = sshll.u32 [#allocation8], 4
      %s73 = int_to_ptr.vmem [resolvable:$true] %s72
      %75 = dma.hbm_to_vmem [thread:$0]  %s3, 32, %s73, [#allocation9]
    $region17: #{tpu_custom_call.1} parent=1 // pred_fallthru
      _
    // Predicated region
    $region18: #{tpu_custom_call.1} parent=1 // pred_check
      _
    $region19: #{tpu_custom_call.1} parent=1 // pred_check_branch
      %77 = sbr.rel (0) target = $region21
    $region20: #{tpu_custom_call.1} parent=1 // pred_region
      %s79 = ssub.s32 16384, 16384
      %80 = vsyncadd [#allocation9], %s79
      %s81 = sshll.u32 [#allocation10], 4
      %s82 = int_to_ptr.vmem [resolvable:$true] %s81
      %87 = dma.hbm_to_vmem [thread:$0]  %s4, 16384, %s82, [#allocation9], 256, 256, 16
    $region21: #{tpu_custom_call.1} parent=1 // pred_fallthru
      _
    // Predicated region
    $region22: #{tpu_custom_call.1} parent=1 // pred_check
      _
    $region23: #{tpu_custom_call.1} parent=1 // pred_check_branch
      %89 = sbr.rel (0) target = $region25
    $region24: #{tpu_custom_call.1} parent=1 // pred_region
      %s91 = ssub.s32 131072, 131072
      %92 = vsyncadd [#allocation12], %s91
      %s93 = sshll.u32 [#allocation11], 4
      %s94 = int_to_ptr.vmem [resolvable:$true] %s93
      %99 = dma.hbm_to_vmem [thread:$0]  %s5, 131072, %s94, [#allocation12], 256, 256, 16
    $region25: #{tpu_custom_call.1} parent=1 // pred_fallthru
      _
    // Predicated region
    $region26: #{tpu_custom_call.1} parent=1 // pred_check
      _
    $region27: #{tpu_custom_call.1} parent=1 // pred_check_branch
      %101 = sbr.rel (0) target = $region29
    $region28: #{tpu_custom_call.1} parent=1 // pred_region
      %s103 = ssub.s32 1024, 1024
      %104 = vsyncadd [#allocation12], %s103
      %s105 = sshll.u32 [#allocation13], 4
      %s106 = int_to_ptr.vmem [resolvable:$true] %s105
      %111 = dma.hbm_to_vmem [thread:$0]  %s6, 1024, %s106, [#allocation12], 512, 512, 32
    $region29: #{tpu_custom_call.1} parent=1 // pred_fallthru
      _
    // Predicated region
    $region30: #{tpu_custom_call.1} parent=1 // pred_check
      _
    $region31: #{tpu_custom_call.1} parent=1 // pred_check_branch
      %113 = sbr.rel (0) target = $region33
    $region32: #{tpu_custom_call.1} parent=1 // pred_region
      %s115 = ssub.s32 8192, 8192
      %116 = vsyncadd [#allocation15], %s115
      %s117 = sshll.u32 [#allocation14], 4
      %s118 = int_to_ptr.vmem [resolvable:$true] %s117
      %123 = dma.hbm_to_vmem [thread:$0]  %s7, 8192, %s118, [#allocation15], 128, 128, 8
    $region33: #{tpu_custom_call.1} parent=1 // pred_fallthru
      _
    // Predicated region
    $region34: #{tpu_custom_call.1} parent=1 // pred_check
      _
    $region35: #{tpu_custom_call.1} parent=1 // pred_check_branch
      %125 = sbr.rel (0) target = $region37
    $region36: #{tpu_custom_call.1} parent=1 // pred_region
      %s127 = ssub.s32 32, 32
      %128 = vsyncadd [#allocation15], %s127
      %s130 = sshll.u32 [#allocation16], 4
      %s131 = int_to_ptr.vmem [resolvable:$true] %s130
      %133 = dma.hbm_to_vmem [thread:$0]  %s8, 32, %s131, [#allocation15]
    $region37: #{tpu_custom_call.1} parent=1 // pred_fallthru
      _
    // Predicated region
    $region38: #{tpu_custom_call.1} parent=1 // pred_check
      _
    $region39: #{tpu_custom_call.1} parent=1 // pred_check_branch
      %135 = sbr.rel (0) target = $region41
    $region40: #{tpu_custom_call.1} parent=1 // pred_region
      %s137 = ssub.s32 2048, 2048
      %138 = vsyncadd [#allocation18], %s137
      %s139 = sshll.u32 [#allocation17], 4
      %s140 = int_to_ptr.vmem [resolvable:$true] %s139
      %145 = dma.hbm_to_vmem [thread:$0]  %s9, 2048, %s140, [#allocation18], 128, 128, 8
    $region41: #{tpu_custom_call.1} parent=1 // pred_fallthru
      _
    // Predicated region
    $region42: #{tpu_custom_call.1} parent=1 // pred_check
      _
    $region43: #{tpu_custom_call.1} parent=1 // pred_check_branch
      %147 = sbr.rel (0) target = $region45
    $region44: #{tpu_custom_call.1} parent=1 // pred_region
      %s149 = ssub.s32 32, 32
      %150 = vsyncadd [#allocation18], %s149
      %s152 = sshll.u32 [#allocation19], 4
      %s153 = int_to_ptr.vmem [resolvable:$true] %s152
      %155 = dma.hbm_to_vmem [thread:$0]  %s10, 32, %s153, [#allocation18]
    $region45: #{tpu_custom_call.1} parent=1 // pred_fallthru
      _
    // Predicated region
    $region46: #{tpu_custom_call.1} parent=1 // pred_check
      _
    $region47: #{tpu_custom_call.1} parent=1 // pred_check_branch
      %157 = sbr.rel (0) target = $region49
    $region48: #{tpu_custom_call.1} parent=1 // pred_region
      %s159 = ssub.s32 4096, 4096
      %160 = vsyncadd [#allocation21], %s159
      %s161 = sshll.u32 [#allocation20], 4
      %s162 = int_to_ptr.vmem [resolvable:$true] %s161
      %167 = dma.hbm_to_vmem [thread:$0]  %s11, 4096, %s162, [#allocation21], 64, 64, 4
    $region49: #{tpu_custom_call.1} parent=1 // pred_fallthru
      _
    // Predicated region
    $region50: #{tpu_custom_call.1} parent=1 // pred_check
      _
    $region51: #{tpu_custom_call.1} parent=1 // pred_check_branch
      %169 = sbr.rel (0) target = $region53
    $region52: #{tpu_custom_call.1} parent=1 // pred_region
      %s171 = ssub.s32 16, 16
      %172 = vsyncadd [#allocation21], %s171
      %s174 = sshll.u32 [#allocation22], 4
      %s175 = int_to_ptr.vmem [resolvable:$true] %s174
      %177 = dma.hbm_to_vmem [thread:$0]  %s12, 16, %s175, [#allocation21]
    $region53: #{tpu_custom_call.1} parent=1 // pred_fallthru
      _
    // Predicated region
    $region54: #{tpu_custom_call.1} parent=1 // pred_check
      _
    $region55: #{tpu_custom_call.1} parent=1 // pred_check_branch
      %179 = sbr.rel (0) target = $region57
    $region56: #{tpu_custom_call.1} parent=1 // pred_region
      %180 = dma.done [#allocation3], 256
    $region57: #{tpu_custom_call.1} parent=1 // pred_fallthru
      _
    // Predicated region
    $region58: #{tpu_custom_call.1} parent=1 // pred_check
      _
    $region59: #{tpu_custom_call.1} parent=1 // pred_check_branch
      %182 = sbr.rel (0) target = $region61
    $region60: #{tpu_custom_call.1} parent=1 // pred_region
      %183 = dma.done [#allocation6], 256
    $region61: #{tpu_custom_call.1} parent=1 // pred_fallthru
      _
    // Predicated region
    $region62: #{tpu_custom_call.1} parent=1 // pred_check
      _
    $region63: #{tpu_custom_call.1} parent=1 // pred_check_branch
      %185 = sbr.rel (0) target = $region65
    $region64: #{tpu_custom_call.1} parent=1 // pred_region
      %186 = dma.done [#allocation6], 2048
    $region65: #{tpu_custom_call.1} parent=1 // pred_fallthru
      _
    // Predicated region
    $region66: #{tpu_custom_call.1} parent=1 // pred_check
      _
    $region67: #{tpu_custom_call.1} parent=1 // pred_check_branch
      %188 = sbr.rel (0) target = $region69
    $region68: #{tpu_custom_call.1} parent=1 // pred_region
      %189 = dma.done [#allocation9], 32
    $region69: #{tpu_custom_call.1} parent=1 // pred_fallthru
      _
    // Predicated region
    $region70: #{tpu_custom_call.1} parent=1 // pred_check
      _
    $region71: #{tpu_custom_call.1} parent=1 // pred_check_branch
      %191 = sbr.rel (0) target = $region73
    $region72: #{tpu_custom_call.1} parent=1 // pred_region
      %192 = dma.done [#allocation9], 16384
    $region73: #{tpu_custom_call.1} parent=1 // pred_fallthru
      _
    // Predicated region
    $region74: #{tpu_custom_call.1} parent=1 // pred_check
      _
    $region75: #{tpu_custom_call.1} parent=1 // pred_check_branch
      %194 = sbr.rel (0) target = $region77
    $region76: #{tpu_custom_call.1} parent=1 // pred_region
      %195 = dma.done [#allocation12], 131072
    $region77: #{tpu_custom_call.1} parent=1 // pred_fallthru
      _
    // Predicated region
    $region78: #{tpu_custom_call.1} parent=1 // pred_check
      _
    $region79: #{tpu_custom_call.1} parent=1 // pred_check_branch
      %197 = sbr.rel (0) target = $region81
    $region80: #{tpu_custom_call.1} parent=1 // pred_region
      %198 = dma.done [#allocation12], 1024
    $region81: #{tpu_custom_call.1} parent=1 // pred_fallthru
      _
    // Predicated region
    $region82: #{tpu_custom_call.1} parent=1 // pred_check
      _
    $region83: #{tpu_custom_call.1} parent=1 // pred_check_branch
      %200 = sbr.rel (0) target = $region85
    $region84: #{tpu_custom_call.1} parent=1 // pred_region
      %201 = dma.done [#allocation15], 8192
    $region85: #{tpu_custom_call.1} parent=1 // pred_fallthru
      _
    // Predicated region
    $region86: #{tpu_custom_call.1} parent=1 // pred_check
      _
    $region87: #{tpu_custom_call.1} parent=1 // pred_check_branch
      %203 = sbr.rel (0) target = $region89
    $region88: #{tpu_custom_call.1} parent=1 // pred_region
      %204 = dma.done [#allocation15], 32
    $region89: #{tpu_custom_call.1} parent=1 // pred_fallthru
      _
    // Predicated region
    $region90: #{tpu_custom_call.1} parent=1 // pred_check
      _
    $region91: #{tpu_custom_call.1} parent=1 // pred_check_branch
      %206 = sbr.rel (0) target = $region93
    $region92: #{tpu_custom_call.1} parent=1 // pred_region
      %207 = dma.done [#allocation18], 2048
    $region93: #{tpu_custom_call.1} parent=1 // pred_fallthru
      _
    // Predicated region
    $region94: #{tpu_custom_call.1} parent=1 // pred_check
      _
    $region95: #{tpu_custom_call.1} parent=1 // pred_check_branch
      %209 = sbr.rel (0) target = $region97
    $region96: #{tpu_custom_call.1} parent=1 // pred_region
      %210 = dma.done [#allocation18], 32
    $region97: #{tpu_custom_call.1} parent=1 // pred_fallthru
      _
    // Predicated region
    $region98: #{tpu_custom_call.1} parent=1 // pred_check
      _
    $region99: #{tpu_custom_call.1} parent=1 // pred_check_branch
      %212 = sbr.rel (0) target = $region101
    $region100: #{tpu_custom_call.1} parent=1 // pred_region
      %213 = dma.done [#allocation21], 4096
    $region101: #{tpu_custom_call.1} parent=1 // pred_fallthru
      _
    // Predicated region
    $region102: #{tpu_custom_call.1} parent=1 // pred_check
      _
    $region103: #{tpu_custom_call.1} parent=1 // pred_check_branch
      %215 = sbr.rel (0) target = $region105
    $region104: #{tpu_custom_call.1} parent=1 // pred_region
      %216 = dma.done [#allocation21], 16
    $region105: #{tpu_custom_call.1} parent=1 // pred_fallthru
      _
    %v218 = vld [vmem:[#allocation2] sm:$0xff]
    %v219 = vld [vmem:[#allocation2 + $0x8] sm:$0xff]
    %v220 = vld [vmem:[#allocation7] sm:$0xff]
    %v221 = vld [vmem:[#allocation7 + $0x8] sm:$0xff]
    %v222 = vld [vmem:[#allocation7 + $0x10] sm:$0xff]
    %v223 = vld [vmem:[#allocation7 + $0x18] sm:$0xff]
    %v224 = vld [vmem:[#allocation7 + $0x20] sm:$0xff]
    %v225 = vld [vmem:[#allocation7 + $0x28] sm:$0xff]
    %v226 = vld [vmem:[#allocation7 + $0x30] sm:$0xff]
    %v227 = vld [vmem:[#allocation7 + $0x38] sm:$0xff]
    %v228 = vld [vmem:[#allocation7 + $0x40] sm:$0xff]
    %v229 = vld [vmem:[#allocation7 + $0x48] sm:$0xff]
    %v230 = vld [vmem:[#allocation7 + $0x50] sm:$0xff]
    %v231 = vld [vmem:[#allocation7 + $0x58] sm:$0xff]
    %v232 = vld [vmem:[#allocation7 + $0x60] sm:$0xff]
    %v233 = vld [vmem:[#allocation7 + $0x68] sm:$0xff]
    %v234 = vld [vmem:[#allocation7 + $0x70] sm:$0xff]
    %v235 = vld [vmem:[#allocation7 + $0x78] sm:$0xff]
    %v236 = vld [vmem:[#allocation8] sm:$0x3]
    %v237 = vpack.c.bf16 %v219, %v218
    %v239 = vlaneseq
    %v240 = vshrl.u32 %v239, 7
    %v241 = vsub.s32 0, %v240
    %v242 = vrot.slane %v236, %v241
    %v243 = vlaneseq
    %v244 = vshrl.u32 %v243, 7
    %v245 = vsub.s32 1, %v244
    %v246 = vrot.slane %v236, %v245
    %v265 = vunpack.c.l.b16 %v220
    %v266 = vunpack.c.h.b16 %v220
    %v267 = vunpack.c.l.b16 %v221
    %v268 = vunpack.c.h.b16 %v221
    %v269 = vunpack.c.l.b16 %v222
    %v270 = vunpack.c.h.b16 %v222
    %v271 = vunpack.c.l.b16 %v223
    %v272 = vunpack.c.h.b16 %v223
    %v273 = vunpack.c.l.b16 %v224
    %v274 = vunpack.c.h.b16 %v224
    %v275 = vunpack.c.l.b16 %v225
    %v276 = vunpack.c.h.b16 %v225
    %v277 = vunpack.c.l.b16 %v226
    %v278 = vunpack.c.h.b16 %v226
    %v279 = vunpack.c.l.b16 %v227
    %v280 = vunpack.c.h.b16 %v227
    %v281 = vunpack.c.l.b16 %v228
    %v282 = vunpack.c.h.b16 %v228
    %v283 = vunpack.c.l.b16 %v229
    %v284 = vunpack.c.h.b16 %v229
    %v285 = vunpack.c.l.b16 %v230
    %v286 = vunpack.c.h.b16 %v230
    %v287 = vunpack.c.l.b16 %v231
    %v288 = vunpack.c.h.b16 %v231
    %v289 = vunpack.c.l.b16 %v232
    %v290 = vunpack.c.h.b16 %v232
    %v291 = vunpack.c.l.b16 %v233
    %v292 = vunpack.c.h.b16 %v233
    %v293 = vunpack.c.l.b16 %v234
    %v294 = vunpack.c.h.b16 %v234
    %v295 = vunpack.c.l.b16 %v235
    %v296 = vunpack.c.h.b16 %v235
    %v297 = vpack.c.b16 %v267, %v265
    %v298 = vpack.c.b16 %v268, %v266
    %v299 = vpack.c.b16 %v271, %v269
    %v300 = vpack.c.b16 %v272, %v270
    %v301 = vpack.c.b16 %v275, %v273
    %v302 = vpack.c.b16 %v276, %v274
    %v303 = vpack.c.b16 %v279, %v277
    %v304 = vpack.c.b16 %v280, %v278
    %v305 = vpack.c.b16 %v283, %v281
    %v306 = vpack.c.b16 %v284, %v282
    %v307 = vpack.c.b16 %v287, %v285
    %v308 = vpack.c.b16 %v288, %v286
    %v309 = vpack.c.b16 %v291, %v289
    %v310 = vpack.c.b16 %v292, %v290
    %v311 = vpack.c.b16 %v295, %v293
    %v312 = vpack.c.b16 %v296, %v294
    %329 = vmatprep.subr.bf16.mxu0 %v312
    %330 = vmatpush1.bf16.msra.mxu0 %v311
    %331 = vmatprep.subr.bf16.mxu0 %v310
    %332 = vmatpush1.bf16.msra.mxu0 %v309
    %333 = vmatprep.subr.bf16.mxu0 %v308
    %334 = vmatpush1.bf16.msra.mxu0 %v307
    %335 = vmatprep.subr.bf16.mxu0 %v306
    %336 = vmatpush1.bf16.msra.mxu0 %v305
    %337 = vmatprep.subr.bf16.mxu0 %v304
    %338 = vmatpush1.bf16.msra.mxu0 %v303
    %339 = vmatprep.subr.bf16.mxu0 %v302
    %340 = vmatpush1.bf16.msra.mxu0 %v301
    %341 = vmatprep.subr.bf16.mxu0 %v300
    %342 = vmatpush1.bf16.msra.mxu0 %v299
    %343 = vmatprep.subr.bf16.mxu0 %v298
    %344 = vmatpush1.bf16.msra.mxu0 %v297
    %345 = vmatprep.subr.bf16.mxu0 0
    %346 = vmatpush2.bf16.msra.mxu0 0
    %347 = vmatprep.subr.bf16.mxu0 0
    %348 = vmatpush2.bf16.msra.mxu0 0
    %349 = vmatprep.subr.bf16.mxu0 0
    %350 = vmatpush2.bf16.msra.mxu0 0
    %351 = vmatprep.subr.bf16.mxu0 0
    %352 = vmatpush2.bf16.msra.mxu0 0
    %353 = vmatprep.subr.bf16.mxu0 0
    %354 = vmatpush2.bf16.msra.mxu0 0
    %355 = vmatprep.subr.bf16.mxu0 0
    %356 = vmatpush2.bf16.msra.mxu0 0
    %357 = vmatprep.subr.bf16.mxu0 0
    %358 = vmatpush2.bf16.msra.mxu0 0
    %359 = vmatprep.subr.bf16.mxu0 0
    %360 = vmatpush2.bf16.msra.mxu0 0
    %361 = vmatprep.mubr.bf16.mxu0 0
    %362 = vmatmul.mubr.bf16.gmra.mxu0 %v237
    %v363 = vpop.f32.mrf.mxu0
    %v364 = vadd.f32 %v242, %v363
    %v365 = vpop.f32.mrf.mxu0
    %v366 = vadd.f32 %v246, %v365
    %v367 = vpop.f32.mrf.mxu0
    %v368 = vadd.f32 %v242, %v367
    %v369 = vpop.f32.mrf.mxu0
    %v370 = vadd.f32 %v246, %v369
    %371 = vdwg.mxu0
    %vm372 = vcmp.ge.f32.partialorder %v364, 0.0
    %vm373 = vcmp.ge.f32.partialorder %v366, 0.0
    %vm374 = vcmp.ge.f32.partialorder %v368, 0.0
    %vm375 = vcmp.ge.f32.partialorder %v370, 0.0
    %v376 = vmul.f32 %v364, 0.01
    %v377 = vmul.f32 %v366, 0.01
    %v378 = vmul.f32 %v368, 0.01
    %v379 = vmul.f32 %v370, 0.01
    %v380 = vsel %vm372, %v364, %v376
    %v381 = vsel %vm373, %v366, %v377
    %v382 = vsel %vm374, %v368, %v378
    %v383 = vsel %vm375, %v370, %v379
    %v384 = vld [vmem:[#allocation10] sm:$0xff]
    %v385 = vld [vmem:[#allocation10 + $0x8] sm:$0xff]
    %v386 = vld [vmem:[#allocation10 + $0x10] sm:$0xff]
    %v387 = vld [vmem:[#allocation10 + $0x18] sm:$0xff]
    %v388 = vld [vmem:[#allocation10 + $0x20] sm:$0xff]
    %v389 = vld [vmem:[#allocation10 + $0x28] sm:$0xff]
    %v390 = vld [vmem:[#allocation10 + $0x30] sm:$0xff]
    %v391 = vld [vmem:[#allocation10 + $0x38] sm:$0xff]
    %v392 = vld [vmem:[#allocation10 + $0x40] sm:$0xff]
    %v393 = vld [vmem:[#allocation10 + $0x48] sm:$0xff]
    %v394 = vld [vmem:[#allocation10 + $0x50] sm:$0xff]
    %v395 = vld [vmem:[#allocation10 + $0x58] sm:$0xff]
    %v396 = vld [vmem:[#allocation10 + $0x60] sm:$0xff]
    %v397 = vld [vmem:[#allocation10 + $0x68] sm:$0xff]
    %v398 = vld [vmem:[#allocation10 + $0x70] sm:$0xff]
    %v399 = vld [vmem:[#allocation10 + $0x78] sm:$0xff]
    %v400 = vld [vmem:[#allocation10 + $0x80] sm:$0xff]
    %v401 = vld [vmem:[#allocation10 + $0x88] sm:$0xff]
    %v402 = vld [vmem:[#allocation10 + $0x90] sm:$0xff]
    %v403 = vld [vmem:[#allocation10 + $0x98] sm:$0xff]
    %v404 = vld [vmem:[#allocation10 + $0xa0] sm:$0xff]
    %v405 = vld [vmem:[#allocation10 + $0xa8] sm:$0xff]
    %v406 = vld [vmem:[#allocation10 + $0xb0] sm:$0xff]
    %v407 = vld [vmem:[#allocation10 + $0xb8] sm:$0xff]
    %v408 = vld [vmem:[#allocation10 + $0xc0] sm:$0xff]
    %v409 = vld [vmem:[#allocation10 + $0xc8] sm:$0xff]
    %v410 = vld [vmem:[#allocation10 + $0xd0] sm:$0xff]
    %v411 = vld [vmem:[#allocation10 + $0xd8] sm:$0xff]
    %v412 = vld [vmem:[#allocation10 + $0xe0] sm:$0xff]
    %v413 = vld [vmem:[#allocation10 + $0xe8] sm:$0xff]
    %v414 = vld [vmem:[#allocation10 + $0xf0] sm:$0xff]
    %v415 = vld [vmem:[#allocation10 + $0xf8] sm:$0xff]
    %v416 = vld [vmem:[#allocation10 + $0x100] sm:$0xff]
    %v417 = vld [vmem:[#allocation10 + $0x108] sm:$0xff]
    %v418 = vld [vmem:[#allocation10 + $0x110] sm:$0xff]
    %v419 = vld [vmem:[#allocation10 + $0x118] sm:$0xff]
    %v420 = vld [vmem:[#allocation10 + $0x120] sm:$0xff]
    %v421 = vld [vmem:[#allocation10 + $0x128] sm:$0xff]
    %v422 = vld [vmem:[#allocation10 + $0x130] sm:$0xff]
    %v423 = vld [vmem:[#allocation10 + $0x138] sm:$0xff]
    %v424 = vld [vmem:[#allocation10 + $0x140] sm:$0xff]
    %v425 = vld [vmem:[#allocation10 + $0x148] sm:$0xff]
    %v426 = vld [vmem:[#allocation10 + $0x150] sm:$0xff]
    %v427 = vld [vmem:[#allocation10 + $0x158] sm:$0xff]
    %v428 = vld [vmem:[#allocation10 + $0x160] sm:$0xff]
    %v429 = vld [vmem:[#allocation10 + $0x168] sm:$0xff]
    %v430 = vld [vmem:[#allocation10 + $0x170] sm:$0xff]
    %v431 = vld [vmem:[#allocation10 + $0x178] sm:$0xff]
    %v432 = vld [vmem:[#allocation10 + $0x180] sm:$0xff]
    %v433 = vld [vmem:[#allocation10 + $0x188] sm:$0xff]
    %v434 = vld [vmem:[#allocation10 + $0x190] sm:$0xff]
    %v435 = vld [vmem:[#allocation10 + $0x198] sm:$0xff]
    %v436 = vld [vmem:[#allocation10 + $0x1a0] sm:$0xff]
    %v437 = vld [vmem:[#allocation10 + $0x1a8] sm:$0xff]
    %v438 = vld [vmem:[#allocation10 + $0x1b0] sm:$0xff]
    %v439 = vld [vmem:[#allocation10 + $0x1b8] sm:$0xff]
    %v440 = vld [vmem:[#allocation10 + $0x1c0] sm:$0xff]
    %v441 = vld [vmem:[#allocation10 + $0x1c8] sm:$0xff]
    %v442 = vld [vmem:[#allocation10 + $0x1d0] sm:$0xff]
    %v443 = vld [vmem:[#allocation10 + $0x1d8] sm:$0xff]
    %v444 = vld [vmem:[#allocation10 + $0x1e0] sm:$0xff]
    %v445 = vld [vmem:[#allocation10 + $0x1e8] sm:$0xff]
    %v446 = vld [vmem:[#allocation10 + $0x1f0] sm:$0xff]
    %v447 = vld [vmem:[#allocation10 + $0x1f8] sm:$0xff]
    %v448 = vld [vmem:[#allocation13] ss:$8 sm:$0xf]
    %v449 = vpack.c.bf16 %v382, %v380
    %v450 = vpack.c.bf16 %v383, %v381
    %v452 = vlaneseq
    %v453 = vshrl.u32 %v452, 7
    %v454 = vsub.s32 0, %v453
    %v455 = vrot.slane %v448, %v454
    %v456 = vlaneseq
    %v457 = vshrl.u32 %v456, 7
    %v458 = vsub.s32 1, %v457
    %v459 = vrot.slane %v448, %v458
    %v460 = vlaneseq
    %v461 = vshrl.u32 %v460, 7
    %v462 = vsub.s32 2, %v461
    %v463 = vrot.slane %v448, %v462
    %v464 = vlaneseq
    %v465 = vshrl.u32 %v464, 7
    %v466 = vsub.s32 3, %v465
    %v467 = vrot.slane %v448, %v466
    %v536 = vunpack.c.l.b16 %v384
    %v537 = vunpack.c.h.b16 %v384
    %v538 = vunpack.c.l.b16 %v385
    %v539 = vunpack.c.h.b16 %v385
    %v540 = vunpack.c.l.b16 %v386
    %v541 = vunpack.c.h.b16 %v386
    %v542 = vunpack.c.l.b16 %v387
    %v543 = vunpack.c.h.b16 %v387
    %v544 = vunpack.c.l.b16 %v388
    %v545 = vunpack.c.h.b16 %v388
    %v546 = vunpack.c.l.b16 %v389
    %v547 = vunpack.c.h.b16 %v389
    %v548 = vunpack.c.l.b16 %v390
    %v549 = vunpack.c.h.b16 %v390
    %v550 = vunpack.c.l.b16 %v391
    %v551 = vunpack.c.h.b16 %v391
    %v552 = vunpack.c.l.b16 %v392
    %v553 = vunpack.c.h.b16 %v392
    %v554 = vunpack.c.l.b16 %v393
    %v555 = vunpack.c.h.b16 %v393
    %v556 = vunpack.c.l.b16 %v394
    %v557 = vunpack.c.h.b16 %v394
    %v558 = vunpack.c.l.b16 %v395
    %v559 = vunpack.c.h.b16 %v395
    %v560 = vunpack.c.l.b16 %v396
    %v561 = vunpack.c.h.b16 %v396
    %v562 = vunpack.c.l.b16 %v397
    %v563 = vunpack.c.h.b16 %v397
    %v564 = vunpack.c.l.b16 %v398
    %v565 = vunpack.c.h.b16 %v398
    %v566 = vunpack.c.l.b16 %v399
    %v567 = vunpack.c.h.b16 %v399
    %v568 = vunpack.c.l.b16 %v400
    %v569 = vunpack.c.h.b16 %v400
    %v570 = vunpack.c.l.b16 %v401
    %v571 = vunpack.c.h.b16 %v401
    %v572 = vunpack.c.l.b16 %v402
    %v573 = vunpack.c.h.b16 %v402
    %v574 = vunpack.c.l.b16 %v403
    %v575 = vunpack.c.h.b16 %v403
    %v576 = vunpack.c.l.b16 %v404
    %v577 = vunpack.c.h.b16 %v404
    %v578 = vunpack.c.l.b16 %v405
    %v579 = vunpack.c.h.b16 %v405
    %v580 = vunpack.c.l.b16 %v406
    %v581 = vunpack.c.h.b16 %v406
    %v582 = vunpack.c.l.b16 %v407
    %v583 = vunpack.c.h.b16 %v407
    %v584 = vunpack.c.l.b16 %v408
    %v585 = vunpack.c.h.b16 %v408
    %v586 = vunpack.c.l.b16 %v409
    %v587 = vunpack.c.h.b16 %v409
    %v588 = vunpack.c.l.b16 %v410
    %v589 = vunpack.c.h.b16 %v410
    %v590 = vunpack.c.l.b16 %v411
    %v591 = vunpack.c.h.b16 %v411
    %v592 = vunpack.c.l.b16 %v412
    %v593 = vunpack.c.h.b16 %v412
    %v594 = vunpack.c.l.b16 %v413
    %v595 = vunpack.c.h.b16 %v413
    %v596 = vunpack.c.l.b16 %v414
    %v597 = vunpack.c.h.b16 %v414
    %v598 = vunpack.c.l.b16 %v415
    %v599 = vunpack.c.h.b16 %v415
    %v600 = vunpack.c.l.b16 %v416
    %v601 = vunpack.c.h.b16 %v416
    %v602 = vunpack.c.l.b16 %v417
    %v603 = vunpack.c.h.b16 %v417
    %v604 = vunpack.c.l.b16 %v418
    %v605 = vunpack.c.h.b16 %v418
    %v606 = vunpack.c.l.b16 %v419
    %v607 = vunpack.c.h.b16 %v419
    %v608 = vunpack.c.l.b16 %v420
    %v609 = vunpack.c.h.b16 %v420
    %v610 = vunpack.c.l.b16 %v421
    %v611 = vunpack.c.h.b16 %v421
    %v612 = vunpack.c.l.b16 %v422
    %v613 = vunpack.c.h.b16 %v422
    %v614 = vunpack.c.l.b16 %v423
    %v615 = vunpack.c.h.b16 %v423
    %v616 = vunpack.c.l.b16 %v424
    %v617 = vunpack.c.h.b16 %v424
    %v618 = vunpack.c.l.b16 %v425
    %v619 = vunpack.c.h.b16 %v425
    %v620 = vunpack.c.l.b16 %v426
    %v621 = vunpack.c.h.b16 %v426
    %v622 = vunpack.c.l.b16 %v427
    %v623 = vunpack.c.h.b16 %v427
    %v624 = vunpack.c.l.b16 %v428
    %v625 = vunpack.c.h.b16 %v428
    %v626 = vunpack.c.l.b16 %v429
    %v627 = vunpack.c.h.b16 %v429
    %v628 = vunpack.c.l.b16 %v430
    %v629 = vunpack.c.h.b16 %v430
    %v630 = vunpack.c.l.b16 %v431
    %v631 = vunpack.c.h.b16 %v431
    %v632 = vunpack.c.l.b16 %v432
    %v633 = vunpack.c.h.b16 %v432
    %v634 = vunpack.c.l.b16 %v433
    %v635 = vunpack.c.h.b16 %v433
    %v636 = vunpack.c.l.b16 %v434
    %v637 = vunpack.c.h.b16 %v434
    %v638 = vunpack.c.l.b16 %v435
    %v639 = vunpack.c.h.b16 %v435
    %v640 = vunpack.c.l.b16 %v436
    %v641 = vunpack.c.h.b16 %v436
    %v642 = vunpack.c.l.b16 %v437
    %v643 = vunpack.c.h.b16 %v437
    %v644 = vunpack.c.l.b16 %v438
    %v645 = vunpack.c.h.b16 %v438
    %v646 = vunpack.c.l.b16 %v439
    %v647 = vunpack.c.h.b16 %v439
    %v648 = vunpack.c.l.b16 %v440
    %v649 = vunpack.c.h.b16 %v440
    %v650 = vunpack.c.l.b16 %v441
    %v651 = vunpack.c.h.b16 %v441
    %v652 = vunpack.c.l.b16 %v442
    %v653 = vunpack.c.h.b16 %v442
    %v654 = vunpack.c.l.b16 %v443
    %v655 = vunpack.c.h.b16 %v443
    %v656 = vunpack.c.l.b16 %v444
    %v657 = vunpack.c.h.b16 %v444
    %v658 = vunpack.c.l.b16 %v445
    %v659 = vunpack.c.h.b16 %v445
    %v660 = vunpack.c.l.b16 %v446
    %v661 = vunpack.c.h.b16 %v446
    %v662 = vunpack.c.l.b16 %v447
    %v663 = vunpack.c.h.b16 %v447
    %v664 = vpack.c.b16 %v540, %v536
    %v665 = vpack.c.b16 %v541, %v537
    %v666 = vpack.c.b16 %v542, %v538
    %v667 = vpack.c.b16 %v543, %v539
    %v668 = vpack.c.b16 %v548, %v544
    %v669 = vpack.c.b16 %v549, %v545
    %v670 = vpack.c.b16 %v550, %v546
    %v671 = vpack.c.b16 %v551, %v547
    %v672 = vpack.c.b16 %v556, %v552
    %v673 = vpack.c.b16 %v557, %v553
    %v674 = vpack.c.b16 %v558, %v554
    %v675 = vpack.c.b16 %v559, %v555
    %v676 = vpack.c.b16 %v564, %v560
    %v677 = vpack.c.b16 %v565, %v561
    %v678 = vpack.c.b16 %v566, %v562
    %v679 = vpack.c.b16 %v567, %v563
    %v680 = vpack.c.b16 %v572, %v568
    %v681 = vpack.c.b16 %v573, %v569
    %v682 = vpack.c.b16 %v574, %v570
    %v683 = vpack.c.b16 %v575, %v571
    %v684 = vpack.c.b16 %v580, %v576
    %v685 = vpack.c.b16 %v581, %v577
    %v686 = vpack.c.b16 %v582, %v578
    %v687 = vpack.c.b16 %v583, %v579
    %v688 = vpack.c.b16 %v588, %v584
    %v689 = vpack.c.b16 %v589, %v585
    %v690 = vpack.c.b16 %v590, %v586
    %v691 = vpack.c.b16 %v591, %v587
    %v692 = vpack.c.b16 %v596, %v592
    %v693 = vpack.c.b16 %v597, %v593
    %v694 = vpack.c.b16 %v598, %v594
    %v695 = vpack.c.b16 %v599, %v595
    %v696 = vpack.c.b16 %v604, %v600
    %v697 = vpack.c.b16 %v605, %v601
    %v698 = vpack.c.b16 %v606, %v602
    %v699 = vpack.c.b16 %v607, %v603
    %v700 = vpack.c.b16 %v612, %v608
    %v701 = vpack.c.b16 %v613, %v609
    %v702 = vpack.c.b16 %v614, %v610
    %v703 = vpack.c.b16 %v615, %v611
    %v704 = vpack.c.b16 %v620, %v616
    %v705 = vpack.c.b16 %v621, %v617
    %v706 = vpack.c.b16 %v622, %v618
    %v707 = vpack.c.b16 %v623, %v619
    %v708 = vpack.c.b16 %v628, %v624
    %v709 = vpack.c.b16 %v629, %v625
    %v710 = vpack.c.b16 %v630, %v626
    %v711 = vpack.c.b16 %v631, %v627
    %v712 = vpack.c.b16 %v636, %v632
    %v713 = vpack.c.b16 %v637, %v633
    %v714 = vpack.c.b16 %v638, %v634
    %v715 = vpack.c.b16 %v639, %v635
    %v716 = vpack.c.b16 %v644, %v640
    %v717 = vpack.c.b16 %v645, %v641
    %v718 = vpack.c.b16 %v646, %v642
    %v719 = vpack.c.b16 %v647, %v643
    %v720 = vpack.c.b16 %v652, %v648
    %v721 = vpack.c.b16 %v653, %v649
    %v722 = vpack.c.b16 %v654, %v650
    %v723 = vpack.c.b16 %v655, %v651
    %v724 = vpack.c.b16 %v660, %v656
    %v725 = vpack.c.b16 %v661, %v657
    %v726 = vpack.c.b16 %v662, %v658
    %v727 = vpack.c.b16 %v663, %v659
    %792 = vmatprep.subr.bf16.mxu0 %v693
    %793 = vmatpush1.bf16.msra.mxu0 %v692
    %794 = vmatprep.subr.bf16.mxu0 %v689
    %795 = vmatpush1.bf16.msra.mxu0 %v688
    %796 = vmatprep.subr.bf16.mxu0 %v685
    %797 = vmatpush1.bf16.msra.mxu0 %v684
    %798 = vmatprep.subr.bf16.mxu0 %v681
    %799 = vmatpush1.bf16.msra.mxu0 %v680
    %800 = vmatprep.subr.bf16.mxu0 %v677
    %801 = vmatpush1.bf16.msra.mxu0 %v676
    %802 = vmatprep.subr.bf16.mxu0 %v673
    %803 = vmatpush1.bf16.msra.mxu0 %v672
    %804 = vmatprep.subr.bf16.mxu0 %v669
    %805 = vmatpush1.bf16.msra.mxu0 %v668
    %806 = vmatprep.subr.bf16.mxu0 %v665
    %807 = vmatpush1.bf16.msra.mxu0 %v664
    %808 = vmatprep.subr.bf16.mxu0 %v725
    %809 = vmatpush2.bf16.msra.mxu0 %v724
    %810 = vmatprep.subr.bf16.mxu0 %v721
    %811 = vmatpush2.bf16.msra.mxu0 %v720
    %812 = vmatprep.subr.bf16.mxu0 %v717
    %813 = vmatpush2.bf16.msra.mxu0 %v716
    %814 = vmatprep.subr.bf16.mxu0 %v713
    %815 = vmatpush2.bf16.msra.mxu0 %v712
    %816 = vmatprep.subr.bf16.mxu0 %v709
    %817 = vmatpush2.bf16.msra.mxu0 %v708
    %818 = vmatprep.subr.bf16.mxu0 %v705
    %819 = vmatpush2.bf16.msra.mxu0 %v704
    %820 = vmatprep.subr.bf16.mxu0 %v701
    %821 = vmatpush2.bf16.msra.mxu0 %v700
    %822 = vmatprep.subr.bf16.mxu0 %v697
    %823 = vmatpush2.bf16.msra.mxu0 %v696
    %824 = vmatprep.mubr.bf16.mxu0 %v450
    %825 = vmatmul.mubr.bf16.gmra.mxu0 %v449
    %v826 = vpop.f32.mrf.mxu0
    %v827 = vadd.f32 %v455, %v826
    %v828 = vpop.f32.mrf.mxu0
    %v829 = vadd.f32 %v459, %v828
    %v830 = vpop.f32.mrf.mxu0
    %v831 = vadd.f32 %v455, %v830
    %v832 = vpop.f32.mrf.mxu0
    %v833 = vadd.f32 %v459, %v832
    %834 = vdwg.mxu0
    %835 = vmatprep.subr.bf16.mxu0 %v695
    %836 = vmatpush1.bf16.msra.mxu0 %v694
    %837 = vmatprep.subr.bf16.mxu0 %v691
    %838 = vmatpush1.bf16.msra.mxu0 %v690
    %839 = vmatprep.subr.bf16.mxu0 %v687
    %840 = vmatpush1.bf16.msra.mxu0 %v686
    %841 = vmatprep.subr.bf16.mxu0 %v683
    %842 = vmatpush1.bf16.msra.mxu0 %v682
    %843 = vmatprep.subr.bf16.mxu0 %v679
    %844 = vmatpush1.bf16.msra.mxu0 %v678
    %845 = vmatprep.subr.bf16.mxu0 %v675
    %846 = vmatpush1.bf16.msra.mxu0 %v674
    %847 = vmatprep.subr.bf16.mxu0 %v671
    %848 = vmatpush1.bf16.msra.mxu0 %v670
    %849 = vmatprep.subr.bf16.mxu0 %v667
    %850 = vmatpush1.bf16.msra.mxu0 %v666
    %851 = vmatprep.subr.bf16.mxu0 %v727
    %852 = vmatpush2.bf16.msra.mxu0 %v726
    %853 = vmatprep.subr.bf16.mxu0 %v723
    %854 = vmatpush2.bf16.msra.mxu0 %v722
    %855 = vmatprep.subr.bf16.mxu0 %v719
    %856 = vmatpush2.bf16.msra.mxu0 %v718
    %857 = vmatprep.subr.bf16.mxu0 %v715
    %858 = vmatpush2.bf16.msra.mxu0 %v714
    %859 = vmatprep.subr.bf16.mxu0 %v711
    %860 = vmatpush2.bf16.msra.mxu0 %v710
    %861 = vmatprep.subr.bf16.mxu0 %v707
    %862 = vmatpush2.bf16.msra.mxu0 %v706
    %863 = vmatprep.subr.bf16.mxu0 %v703
    %864 = vmatpush2.bf16.msra.mxu0 %v702
    %865 = vmatprep.subr.bf16.mxu0 %v699
    %866 = vmatpush2.bf16.msra.mxu0 %v698
    %867 = vmatprep.mubr.bf16.mxu0 %v450
    %868 = vmatmul.mubr.bf16.gmra.mxu0 %v449
    %v869 = vpop.f32.mrf.mxu0
    %v870 = vadd.f32 %v463, %v869
    %v871 = vpop.f32.mrf.mxu0
    %v872 = vadd.f32 %v467, %v871
    %v873 = vpop.f32.mrf.mxu0
    %v874 = vadd.f32 %v463, %v873
    %v875 = vpop.f32.mrf.mxu0
    %v876 = vadd.f32 %v467, %v875
    %877 = vdwg.mxu0
    %vm878 = vcmp.ge.f32.partialorder %v827, 0.0
    %vm879 = vcmp.ge.f32.partialorder %v829, 0.0
    %vm880 = vcmp.ge.f32.partialorder %v870, 0.0
    %vm881 = vcmp.ge.f32.partialorder %v872, 0.0
    %vm882 = vcmp.ge.f32.partialorder %v831, 0.0
    %vm883 = vcmp.ge.f32.partialorder %v833, 0.0
    %vm884 = vcmp.ge.f32.partialorder %v874, 0.0
    %vm885 = vcmp.ge.f32.partialorder %v876, 0.0
    %v886 = vmul.f32 %v827, 0.01
    %v887 = vmul.f32 %v829, 0.01
    %v888 = vmul.f32 %v870, 0.01
    %v889 = vmul.f32 %v872, 0.01
    %v890 = vmul.f32 %v831, 0.01
    %v891 = vmul.f32 %v833, 0.01
    %v892 = vmul.f32 %v874, 0.01
    %v893 = vmul.f32 %v876, 0.01
    %v894 = vsel %vm878, %v827, %v886
    %v895 = vsel %vm879, %v829, %v887
    %v896 = vsel %vm880, %v870, %v888
    %v897 = vsel %vm881, %v872, %v889
    %v898 = vsel %vm882, %v831, %v890
    %v899 = vsel %vm883, %v833, %v891
    %v900 = vsel %vm884, %v874, %v892
    %v901 = vsel %vm885, %v876, %v893
    %v902 = vld [vmem:[#allocation11] sm:$0xff]
    %v903 = vld [vmem:[#allocation11 + $0x8] sm:$0xff]
    %v904 = vld [vmem:[#allocation11 + $0x10] sm:$0xff]
    %v905 = vld [vmem:[#allocation11 + $0x18] sm:$0xff]
    %v906 = vld [vmem:[#allocation11 + $0x20] sm:$0xff]
    %v907 = vld [vmem:[#allocation11 + $0x28] sm:$0xff]
    %v908 = vld [vmem:[#allocation11 + $0x30] sm:$0xff]
    %v909 = vld [vmem:[#allocation11 + $0x38] sm:$0xff]
    %v910 = vld [vmem:[#allocation11 + $0x40] sm:$0xff]
    %v911 = vld [vmem:[#allocation11 + $0x48] sm:$0xff]
    %v912 = vld [vmem:[#allocation11 + $0x50] sm:$0xff]
    %v913 = vld [vmem:[#allocation11 + $0x58] sm:$0xff]
    %v914 = vld [vmem:[#allocation11 + $0x60] sm:$0xff]
    %v915 = vld [vmem:[#allocation11 + $0x68] sm:$0xff]
    %v916 = vld [vmem:[#allocation11 + $0x70] sm:$0xff]
    %v917 = vld [vmem:[#allocation11 + $0x78] sm:$0xff]
    %v918 = vld [vmem:[#allocation11 + $0x80] sm:$0xff]
    %v919 = vld [vmem:[#allocation11 + $0x88] sm:$0xff]
    %v920 = vld [vmem:[#allocation11 + $0x90] sm:$0xff]
    %v921 = vld [vmem:[#allocation11 + $0x98] sm:$0xff]
    %v922 = vld [vmem:[#allocation11 + $0xa0] sm:$0xff]
    %v923 = vld [vmem:[#allocation11 + $0xa8] sm:$0xff]
    %v924 = vld [vmem:[#allocation11 + $0xb0] sm:$0xff]
    %v925 = vld [vmem:[#allocation11 + $0xb8] sm:$0xff]
    %v926 = vld [vmem:[#allocation11 + $0xc0] sm:$0xff]
    %v927 = vld [vmem:[#allocation11 + $0xc8] sm:$0xff]
    %v928 = vld [vmem:[#allocation11 + $0xd0] sm:$0xff]
    %v929 = vld [vmem:[#allocation11 + $0xd8] sm:$0xff]
    %v930 = vld [vmem:[#allocation11 + $0xe0] sm:$0xff]
    %v931 = vld [vmem:[#allocation11 + $0xe8] sm:$0xff]
    %v932 = vld [vmem:[#allocation11 + $0xf0] sm:$0xff]
    %v933 = vld [vmem:[#allocation11 + $0xf8] sm:$0xff]
    %v934 = vld [vmem:[#allocation11 + $0x100] sm:$0xff]
    %v935 = vld [vmem:[#allocation11 + $0x108] sm:$0xff]
    %v936 = vld [vmem:[#allocation11 + $0x110] sm:$0xff]
    %v937 = vld [vmem:[#allocation11 + $0x118] sm:$0xff]
    %v938 = vld [vmem:[#allocation11 + $0x120] sm:$0xff]
    %v939 = vld [vmem:[#allocation11 + $0x128] sm:$0xff]
    %v940 = vld [vmem:[#allocation11 + $0x130] sm:$0xff]
    %v941 = vld [vmem:[#allocation11 + $0x138] sm:$0xff]
    %v942 = vld [vmem:[#allocation11 + $0x140] sm:$0xff]
    %v943 = vld [vmem:[#allocation11 + $0x148] sm:$0xff]
    %v944 = vld [vmem:[#allocation11 + $0x150] sm:$0xff]
    %v945 = vld [vmem:[#allocation11 + $0x158] sm:$0xff]
    %v946 = vld [vmem:[#allocation11 + $0x160] sm:$0xff]
    %v947 = vld [vmem:[#allocation11 + $0x168] sm:$0xff]
    %v948 = vld [vmem:[#allocation11 + $0x170] sm:$0xff]
    %v949 = vld [vmem:[#allocation11 + $0x178] sm:$0xff]
    %v950 = vld [vmem:[#allocation11 + $0x180] sm:$0xff]
    %v951 = vld [vmem:[#allocation11 + $0x188] sm:$0xff]
    %v952 = vld [vmem:[#allocation11 + $0x190] sm:$0xff]
    %v953 = vld [vmem:[#allocation11 + $0x198] sm:$0xff]
    %v954 = vld [vmem:[#allocation11 + $0x1a0] sm:$0xff]
    %v955 = vld [vmem:[#allocation11 + $0x1a8] sm:$0xff]
    %v956 = vld [vmem:[#allocation11 + $0x1b0] sm:$0xff]
    %v957 = vld [vmem:[#allocation11 + $0x1b8] sm:$0xff]
    %v958 = vld [vmem:[#allocation11 + $0x1c0] sm:$0xff]
    %v959 = vld [vmem:[#allocation11 + $0x1c8] sm:$0xff]
    %v960 = vld [vmem:[#allocation11 + $0x1d0] sm:$0xff]
    %v961 = vld [vmem:[#allocation11 + $0x1d8] sm:$0xff]
    %v962 = vld [vmem:[#allocation11 + $0x1e0] sm:$0xff]
    %v963 = vld [vmem:[#allocation11 + $0x1e8] sm:$0xff]
    %v964 = vld [vmem:[#allocation11 + $0x1f0] sm:$0xff]
    %v965 = vld [vmem:[#allocation11 + $0x1f8] sm:$0xff]
    %v966 = vld [vmem:[#allocation11 + $0x200] sm:$0xff]
    %v967 = vld [vmem:[#allocation11 + $0x208] sm:$0xff]
    %v968 = vld [vmem:[#allocation11 + $0x210] sm:$0xff]
    %v969 = vld [vmem:[#allocation11 + $0x218] sm:$0xff]
    %v970 = vld [vmem:[#allocation11 + $0x220] sm:$0xff]
    %v971 = vld [vmem:[#allocation11 + $0x228] sm:$0xff]
    %v972 = vld [vmem:[#allocation11 + $0x230] sm:$0xff]
    %v973 = vld [vmem:[#allocation11 + $0x238] sm:$0xff]
    %v974 = vld [vmem:[#allocation11 + $0x240] sm:$0xff]
    %v975 = vld [vmem:[#allocation11 + $0x248] sm:$0xff]
    %v976 = vld [vmem:[#allocation11 + $0x250] sm:$0xff]
    %v977 = vld [vmem:[#allocation11 + $0x258] sm:$0xff]
    %v978 = vld [vmem:[#allocation11 + $0x260] sm:$0xff]
    %v979 = vld [vmem:[#allocation11 + $0x268] sm:$0xff]
    %v980 = vld [vmem:[#allocation11 + $0x270] sm:$0xff]
    %v981 = vld [vmem:[#allocation11 + $0x278] sm:$0xff]
    %v982 = vld [vmem:[#allocation11 + $0x280] sm:$0xff]
    %v983 = vld [vmem:[#allocation11 + $0x288] sm:$0xff]
    %v984 = vld [vmem:[#allocation11 + $0x290] sm:$0xff]
    %v985 = vld [vmem:[#allocation11 + $0x298] sm:$0xff]
    %v986 = vld [vmem:[#allocation11 + $0x2a0] sm:$0xff]
    %v987 = vld [vmem:[#allocation11 + $0x2a8] sm:$0xff]
    %v988 = vld [vmem:[#allocation11 + $0x2b0] sm:$0xff]
    %v989 = vld [vmem:[#allocation11 + $0x2b8] sm:$0xff]
    %v990 = vld [vmem:[#allocation11 + $0x2c0] sm:$0xff]
    %v991 = vld [vmem:[#allocation11 + $0x2c8] sm:$0xff]
    %v992 = vld [vmem:[#allocation11 + $0x2d0] sm:$0xff]
    %v993 = vld [vmem:[#allocation11 + $0x2d8] sm:$0xff]
    %v994 = vld [vmem:[#allocation11 + $0x2e0] sm:$0xff]
    %v995 = vld [vmem:[#allocation11 + $0x2e8] sm:$0xff]
    %v996 = vld [vmem:[#allocation11 + $0x2f0] sm:$0xff]
    %v997 = vld [vmem:[#allocation11 + $0x2f8] sm:$0xff]
    %v998 = vld [vmem:[#allocation11 + $0x300] sm:$0xff]
    %v999 = vld [vmem:[#allocation11 + $0x308] sm:$0xff]
    %v1000 = vld [vmem:[#allocation11 + $0x310] sm:$0xff]
    %v1001 = vld [vmem:[#allocation11 + $0x318] sm:$0xff]
    %v1002 = vld [vmem:[#allocation11 + $0x320] sm:$0xff]
    %v1003 = vld [vmem:[#allocation11 + $0x328] sm:$0xff]
    %v1004 = vld [vmem:[#allocation11 + $0x330] sm:$0xff]
    %v1005 = vld [vmem:[#allocation11 + $0x338] sm:$0xff]
    %v1006 = vld [vmem:[#allocation11 + $0x340] sm:$0xff]
    %v1007 = vld [vmem:[#allocation11 + $0x348] sm:$0xff]
    %v1008 = vld [vmem:[#allocation11 + $0x350] sm:$0xff]
    %v1009 = vld [vmem:[#allocation11 + $0x358] sm:$0xff]
    %v1010 = vld [vmem:[#allocation11 + $0x360] sm:$0xff]
    %v1011 = vld [vmem:[#allocation11 + $0x368] sm:$0xff]
    %v1012 = vld [vmem:[#allocation11 + $0x370] sm:$0xff]
    %v1013 = vld [vmem:[#allocation11 + $0x378] sm:$0xff]
    %v1014 = vld [vmem:[#allocation11 + $0x380] sm:$0xff]
    %v1015 = vld [vmem:[#allocation11 + $0x388] sm:$0xff]
    %v1016 = vld [vmem:[#allocation11 + $0x390] sm:$0xff]
    %v1017 = vld [vmem:[#allocation11 + $0x398] sm:$0xff]
    %v1018 = vld [vmem:[#allocation11 + $0x3a0] sm:$0xff]
    %v1019 = vld [vmem:[#allocation11 + $0x3a8] sm:$0xff]
    %v1020 = vld [vmem:[#allocation11 + $0x3b0] sm:$0xff]
    %v1021 = vld [vmem:[#allocation11 + $0x3b8] sm:$0xff]
    %v1022 = vld [vmem:[#allocation11 + $0x3c0] sm:$0xff]
    %v1023 = vld [vmem:[#allocation11 + $0x3c8] sm:$0xff]
    %v1024 = vld [vmem:[#allocation11 + $0x3d0] sm:$0xff]
    %v1025 = vld [vmem:[#allocation11 + $0x3d8] sm:$0xff]
    %v1026 = vld [vmem:[#allocation11 + $0x3e0] sm:$0xff]
    %v1027 = vld [vmem:[#allocation11 + $0x3e8] sm:$0xff]
    %v1028 = vld [vmem:[#allocation11 + $0x3f0] sm:$0xff]
    %v1029 = vld [vmem:[#allocation11 + $0x3f8] sm:$0xff]
    %s1030 = scalar_lea.vmem [#allocation13], 1
    %v1031 = vld [vmem:[%s1030] ss:$8 sm:$0xf]
    %v1032 = vpack.c.bf16 %v898, %v894
    %v1033 = vpack.c.bf16 %v899, %v895
    %v1034 = vpack.c.bf16 %v900, %v896
    %v1035 = vpack.c.bf16 %v901, %v897
    %v1037 = vlaneseq
    %v1038 = vshrl.u32 %v1037, 7
    %v1039 = vsub.s32 0, %v1038
    %v1040 = vrot.slane %v1031, %v1039
    %v1041 = vlaneseq
    %v1042 = vshrl.u32 %v1041, 7
    %v1043 = vsub.s32 1, %v1042
    %v1044 = vrot.slane %v1031, %v1043
    %v1045 = vlaneseq
    %v1046 = vshrl.u32 %v1045, 7
    %v1047 = vsub.s32 2, %v1046
    %v1048 = vrot.slane %v1031, %v1047
    %v1049 = vlaneseq
    %v1050 = vshrl.u32 %v1049, 7
    %v1051 = vsub.s32 3, %v1050
    %v1052 = vrot.slane %v1031, %v1051
    %v1185 = vunpack.c.l.b16 %v902
    %v1186 = vunpack.c.h.b16 %v902
    %v1187 = vunpack.c.l.b16 %v903
    %v1188 = vunpack.c.h.b16 %v903
    %v1189 = vunpack.c.l.b16 %v904
    %v1190 = vunpack.c.h.b16 %v904
    %v1191 = vunpack.c.l.b16 %v905
    %v1192 = vunpack.c.h.b16 %v905
    %v1193 = vunpack.c.l.b16 %v906
    %v1194 = vunpack.c.h.b16 %v906
    %v1195 = vunpack.c.l.b16 %v907
    %v1196 = vunpack.c.h.b16 %v907
    %v1197 = vunpack.c.l.b16 %v908
    %v1198 = vunpack.c.h.b16 %v908
    %v1199 = vunpack.c.l.b16 %v909
    %v1200 = vunpack.c.h.b16 %v909
    %v1201 = vunpack.c.l.b16 %v910
    %v1202 = vunpack.c.h.b16 %v910
    %v1203 = vunpack.c.l.b16 %v911
    %v1204 = vunpack.c.h.b16 %v911
    %v1205 = vunpack.c.l.b16 %v912
    %v1206 = vunpack.c.h.b16 %v912
    %v1207 = vunpack.c.l.b16 %v913
    %v1208 = vunpack.c.h.b16 %v913
    %v1209 = vunpack.c.l.b16 %v914
    %v1210 = vunpack.c.h.b16 %v914
    %v1211 = vunpack.c.l.b16 %v915
    %v1212 = vunpack.c.h.b16 %v915
    %v1213 = vunpack.c.l.b16 %v916
    %v1214 = vunpack.c.h.b16 %v916
    %v1215 = vunpack.c.l.b16 %v917
    %v1216 = vunpack.c.h.b16 %v917
    %v1217 = vunpack.c.l.b16 %v918
    %v1218 = vunpack.c.h.b16 %v918
    %v1219 = vunpack.c.l.b16 %v919
    %v1220 = vunpack.c.h.b16 %v919
    %v1221 = vunpack.c.l.b16 %v920
    %v1222 = vunpack.c.h.b16 %v920
    %v1223 = vunpack.c.l.b16 %v921
    %v1224 = vunpack.c.h.b16 %v921
    %v1225 = vunpack.c.l.b16 %v922
    %v1226 = vunpack.c.h.b16 %v922
    %v1227 = vunpack.c.l.b16 %v923
    %v1228 = vunpack.c.h.b16 %v923
    %v1229 = vunpack.c.l.b16 %v924
    %v1230 = vunpack.c.h.b16 %v924
    %v1231 = vunpack.c.l.b16 %v925
    %v1232 = vunpack.c.h.b16 %v925
    %v1233 = vunpack.c.l.b16 %v926
    %v1234 = vunpack.c.h.b16 %v926
    %v1235 = vunpack.c.l.b16 %v927
    %v1236 = vunpack.c.h.b16 %v927
    %v1237 = vunpack.c.l.b16 %v928
    %v1238 = vunpack.c.h.b16 %v928
    %v1239 = vunpack.c.l.b16 %v929
    %v1240 = vunpack.c.h.b16 %v929
    %v1241 = vunpack.c.l.b16 %v930
    %v1242 = vunpack.c.h.b16 %v930
    %v1243 = vunpack.c.l.b16 %v931
    %v1244 = vunpack.c.h.b16 %v931
    %v1245 = vunpack.c.l.b16 %v932
    %v1246 = vunpack.c.h.b16 %v932
    %v1247 = vunpack.c.l.b16 %v933
    %v1248 = vunpack.c.h.b16 %v933
    %v1249 = vunpack.c.l.b16 %v934
    %v1250 = vunpack.c.h.b16 %v934
    %v1251 = vunpack.c.l.b16 %v935
    %v1252 = vunpack.c.h.b16 %v935
    %v1253 = vunpack.c.l.b16 %v936
    %v1254 = vunpack.c.h.b16 %v936
    %v1255 = vunpack.c.l.b16 %v937
    %v1256 = vunpack.c.h.b16 %v937
    %v1257 = vunpack.c.l.b16 %v938
    %v1258 = vunpack.c.h.b16 %v938
    %v1259 = vunpack.c.l.b16 %v939
    %v1260 = vunpack.c.h.b16 %v939
    %v1261 = vunpack.c.l.b16 %v940
    %v1262 = vunpack.c.h.b16 %v940
    %v1263 = vunpack.c.l.b16 %v941
    %v1264 = vunpack.c.h.b16 %v941
    %v1265 = vunpack.c.l.b16 %v942
    %v1266 = vunpack.c.h.b16 %v942
    %v1267 = vunpack.c.l.b16 %v943
    %v1268 = vunpack.c.h.b16 %v943
    %v1269 = vunpack.c.l.b16 %v944
    %v1270 = vunpack.c.h.b16 %v944
    %v1271 = vunpack.c.l.b16 %v945
    %v1272 = vunpack.c.h.b16 %v945
    %v1273 = vunpack.c.l.b16 %v946
    %v1274 = vunpack.c.h.b16 %v946
    %v1275 = vunpack.c.l.b16 %v947
    %v1276 = vunpack.c.h.b16 %v947
    %v1277 = vunpack.c.l.b16 %v948
    %v1278 = vunpack.c.h.b16 %v948
    %v1279 = vunpack.c.l.b16 %v949
    %v1280 = vunpack.c.h.b16 %v949
    %v1281 = vunpack.c.l.b16 %v950
    %v1282 = vunpack.c.h.b16 %v950
    %v1283 = vunpack.c.l.b16 %v951
    %v1284 = vunpack.c.h.b16 %v951
    %v1285 = vunpack.c.l.b16 %v952
    %v1286 = vunpack.c.h.b16 %v952
    %v1287 = vunpack.c.l.b16 %v953
    %v1288 = vunpack.c.h.b16 %v953
    %v1289 = vunpack.c.l.b16 %v954
    %v1290 = vunpack.c.h.b16 %v954
    %v1291 = vunpack.c.l.b16 %v955
    %v1292 = vunpack.c.h.b16 %v955
    %v1293 = vunpack.c.l.b16 %v956
    %v1294 = vunpack.c.h.b16 %v956
    %v1295 = vunpack.c.l.b16 %v957
    %v1296 = vunpack.c.h.b16 %v957
    %v1297 = vunpack.c.l.b16 %v958
    %v1298 = vunpack.c.h.b16 %v958
    %v1299 = vunpack.c.l.b16 %v959
    %v1300 = vunpack.c.h.b16 %v959
    %v1301 = vunpack.c.l.b16 %v960
    %v1302 = vunpack.c.h.b16 %v960
    %v1303 = vunpack.c.l.b16 %v961
    %v1304 = vunpack.c.h.b16 %v961
    %v1305 = vunpack.c.l.b16 %v962
    %v1306 = vunpack.c.h.b16 %v962
    %v1307 = vunpack.c.l.b16 %v963
    %v1308 = vunpack.c.h.b16 %v963
    %v1309 = vunpack.c.l.b16 %v964
    %v1310 = vunpack.c.h.b16 %v964
    %v1311 = vunpack.c.l.b16 %v965
    %v1312 = vunpack.c.h.b16 %v965
    %v1313 = vunpack.c.l.b16 %v966
    %v1314 = vunpack.c.h.b16 %v966
    %v1315 = vunpack.c.l.b16 %v967
    %v1316 = vunpack.c.h.b16 %v967
    %v1317 = vunpack.c.l.b16 %v968
    %v1318 = vunpack.c.h.b16 %v968
    %v1319 = vunpack.c.l.b16 %v969
    %v1320 = vunpack.c.h.b16 %v969
    %v1321 = vunpack.c.l.b16 %v970
    %v1322 = vunpack.c.h.b16 %v970
    %v1323 = vunpack.c.l.b16 %v971
    %v1324 = vunpack.c.h.b16 %v971
    %v1325 = vunpack.c.l.b16 %v972
    %v1326 = vunpack.c.h.b16 %v972
    %v1327 = vunpack.c.l.b16 %v973
    %v1328 = vunpack.c.h.b16 %v973
    %v1329 = vunpack.c.l.b16 %v974
    %v1330 = vunpack.c.h.b16 %v974
    %v1331 = vunpack.c.l.b16 %v975
    %v1332 = vunpack.c.h.b16 %v975
    %v1333 = vunpack.c.l.b16 %v976
    %v1334 = vunpack.c.h.b16 %v976
    %v1335 = vunpack.c.l.b16 %v977
    %v1336 = vunpack.c.h.b16 %v977
    %v1337 = vunpack.c.l.b16 %v978
    %v1338 = vunpack.c.h.b16 %v978
    %v1339 = vunpack.c.l.b16 %v979
    %v1340 = vunpack.c.h.b16 %v979
    %v1341 = vunpack.c.l.b16 %v980
    %v1342 = vunpack.c.h.b16 %v980
    %v1343 = vunpack.c.l.b16 %v981
    %v1344 = vunpack.c.h.b16 %v981
    %v1345 = vunpack.c.l.b16 %v982
    %v1346 = vunpack.c.h.b16 %v982
    %v1347 = vunpack.c.l.b16 %v983
    %v1348 = vunpack.c.h.b16 %v983
    %v1349 = vunpack.c.l.b16 %v984
    %v1350 = vunpack.c.h.b16 %v984
    %v1351 = vunpack.c.l.b16 %v985
    %v1352 = vunpack.c.h.b16 %v985
    %v1353 = vunpack.c.l.b16 %v986
    %v1354 = vunpack.c.h.b16 %v986
    %v1355 = vunpack.c.l.b16 %v987
    %v1356 = vunpack.c.h.b16 %v987
    %v1357 = vunpack.c.l.b16 %v988
    %v1358 = vunpack.c.h.b16 %v988
    %v1359 = vunpack.c.l.b16 %v989
    %v1360 = vunpack.c.h.b16 %v989
    %v1361 = vunpack.c.l.b16 %v990
    %v1362 = vunpack.c.h.b16 %v990
    %v1363 = vunpack.c.l.b16 %v991
    %v1364 = vunpack.c.h.b16 %v991
    %v1365 = vunpack.c.l.b16 %v992
    %v1366 = vunpack.c.h.b16 %v992
    %v1367 = vunpack.c.l.b16 %v993
    %v1368 = vunpack.c.h.b16 %v993
    %v1369 = vunpack.c.l.b16 %v994
    %v1370 = vunpack.c.h.b16 %v994
    %v1371 = vunpack.c.l.b16 %v995
    %v1372 = vunpack.c.h.b16 %v995
    %v1373 = vunpack.c.l.b16 %v996
    %v1374 = vunpack.c.h.b16 %v996
    %v1375 = vunpack.c.l.b16 %v997
    %v1376 = vunpack.c.h.b16 %v997
    %v1377 = vunpack.c.l.b16 %v998
    %v1378 = vunpack.c.h.b16 %v998
    %v1379 = vunpack.c.l.b16 %v999
    %v1380 = vunpack.c.h.b16 %v999
    %v1381 = vunpack.c.l.b16 %v1000
    %v1382 = vunpack.c.h.b16 %v1000
    %v1383 = vunpack.c.l.b16 %v1001
    %v1384 = vunpack.c.h.b16 %v1001
    %v1385 = vunpack.c.l.b16 %v1002
    %v1386 = vunpack.c.h.b16 %v1002
    %v1387 = vunpack.c.l.b16 %v1003
    %v1388 = vunpack.c.h.b16 %v1003
    %v1389 = vunpack.c.l.b16 %v1004
    %v1390 = vunpack.c.h.b16 %v1004
    %v1391 = vunpack.c.l.b16 %v1005
    %v1392 = vunpack.c.h.b16 %v1005
    %v1393 = vunpack.c.l.b16 %v1006
    %v1394 = vunpack.c.h.b16 %v1006
    %v1395 = vunpack.c.l.b16 %v1007
    %v1396 = vunpack.c.h.b16 %v1007
    %v1397 = vunpack.c.l.b16 %v1008
    %v1398 = vunpack.c.h.b16 %v1008
    %v1399 = vunpack.c.l.b16 %v1009
    %v1400 = vunpack.c.h.b16 %v1009
    %v1401 = vunpack.c.l.b16 %v1010
    %v1402 = vunpack.c.h.b16 %v1010
    %v1403 = vunpack.c.l.b16 %v1011
    %v1404 = vunpack.c.h.b16 %v1011
    %v1405 = vunpack.c.l.b16 %v1012
    %v1406 = vunpack.c.h.b16 %v1012
    %v1407 = vunpack.c.l.b16 %v1013
    %v1408 = vunpack.c.h.b16 %v1013
    %v1409 = vunpack.c.l.b16 %v1014
    %v1410 = vunpack.c.h.b16 %v1014
    %v1411 = vunpack.c.l.b16 %v1015
    %v1412 = vunpack.c.h.b16 %v1015
    %v1413 = vunpack.c.l.b16 %v1016
    %v1414 = vunpack.c.h.b16 %v1016
    %v1415 = vunpack.c.l.b16 %v1017
    %v1416 = vunpack.c.h.b16 %v1017
    %v1417 = vunpack.c.l.b16 %v1018
    %v1418 = vunpack.c.h.b16 %v1018
    %v1419 = vunpack.c.l.b16 %v1019
    %v1420 = vunpack.c.h.b16 %v1019
    %v1421 = vunpack.c.l.b16 %v1020
    %v1422 = vunpack.c.h.b16 %v1020
    %v1423 = vunpack.c.l.b16 %v1021
    %v1424 = vunpack.c.h.b16 %v1021
    %v1425 = vunpack.c.l.b16 %v1022
    %v1426 = vunpack.c.h.b16 %v1022
    %v1427 = vunpack.c.l.b16 %v1023
    %v1428 = vunpack.c.h.b16 %v1023
    %v1429 = vunpack.c.l.b16 %v1024
    %v1430 = vunpack.c.h.b16 %v1024
    %v1431 = vunpack.c.l.b16 %v1025
    %v1432 = vunpack.c.h.b16 %v1025
    %v1433 = vunpack.c.l.b16 %v1026
    %v1434 = vunpack.c.h.b16 %v1026
    %v1435 = vunpack.c.l.b16 %v1027
    %v1436 = vunpack.c.h.b16 %v1027
    %v1437 = vunpack.c.l.b16 %v1028
    %v1438 = vunpack.c.h.b16 %v1028
    %v1439 = vunpack.c.l.b16 %v1029
    %v1440 = vunpack.c.h.b16 %v1029
    %v1441 = vpack.c.b16 %v1189, %v1185
    %v1442 = vpack.c.b16 %v1190, %v1186
    %v1443 = vpack.c.b16 %v1191, %v1187
    %v1444 = vpack.c.b16 %v1192, %v1188
    %v1445 = vpack.c.b16 %v1197, %v1193
    %v1446 = vpack.c.b16 %v1198, %v1194
    %v1447 = vpack.c.b16 %v1199, %v1195
    %v1448 = vpack.c.b16 %v1200, %v1196
    %v1449 = vpack.c.b16 %v1205, %v1201
    %v1450 = vpack.c.b16 %v1206, %v1202
    %v1451 = vpack.c.b16 %v1207, %v1203
    %v1452 = vpack.c.b16 %v1208, %v1204
    %v1453 = vpack.c.b16 %v1213, %v1209
    %v1454 = vpack.c.b16 %v1214, %v1210
    %v1455 = vpack.c.b16 %v1215, %v1211
    %v1456 = vpack.c.b16 %v1216, %v1212
    %v1457 = vpack.c.b16 %v1221, %v1217
    %v1458 = vpack.c.b16 %v1222, %v1218
    %v1459 = vpack.c.b16 %v1223, %v1219
    %v1460 = vpack.c.b16 %v1224, %v1220
    %v1461 = vpack.c.b16 %v1229, %v1225
    %v1462 = vpack.c.b16 %v1230, %v1226
    %v1463 = vpack.c.b16 %v1231, %v1227
    %v1464 = vpack.c.b16 %v1232, %v1228
    %v1465 = vpack.c.b16 %v1237, %v1233
    %v1466 = vpack.c.b16 %v1238, %v1234
    %v1467 = vpack.c.b16 %v1239, %v1235
    %v1468 = vpack.c.b16 %v1240, %v1236
    %v1469 = vpack.c.b16 %v1245, %v1241
    %v1470 = vpack.c.b16 %v1246, %v1242
    %v1471 = vpack.c.b16 %v1247, %v1243
    %v1472 = vpack.c.b16 %v1248, %v1244
    %v1473 = vpack.c.b16 %v1253, %v1249
    %v1474 = vpack.c.b16 %v1254, %v1250
    %v1475 = vpack.c.b16 %v1255, %v1251
    %v1476 = vpack.c.b16 %v1256, %v1252
    %v1477 = vpack.c.b16 %v1261, %v1257
    %v1478 = vpack.c.b16 %v1262, %v1258
    %v1479 = vpack.c.b16 %v1263, %v1259
    %v1480 = vpack.c.b16 %v1264, %v1260
    %v1481 = vpack.c.b16 %v1269, %v1265
    %v1482 = vpack.c.b16 %v1270, %v1266
    %v1483 = vpack.c.b16 %v1271, %v1267
    %v1484 = vpack.c.b16 %v1272, %v1268
    %v1485 = vpack.c.b16 %v1277, %v1273
    %v1486 = vpack.c.b16 %v1278, %v1274
    %v1487 = vpack.c.b16 %v1279, %v1275
    %v1488 = vpack.c.b16 %v1280, %v1276
    %v1489 = vpack.c.b16 %v1285, %v1281
    %v1490 = vpack.c.b16 %v1286, %v1282
    %v1491 = vpack.c.b16 %v1287, %v1283
    %v1492 = vpack.c.b16 %v1288, %v1284
    %v1493 = vpack.c.b16 %v1293, %v1289
    %v1494 = vpack.c.b16 %v1294, %v1290
    %v1495 = vpack.c.b16 %v1295, %v1291
    %v1496 = vpack.c.b16 %v1296, %v1292
    %v1497 = vpack.c.b16 %v1301, %v1297
    %v1498 = vpack.c.b16 %v1302, %v1298
    %v1499 = vpack.c.b16 %v1303, %v1299
    %v1500 = vpack.c.b16 %v1304, %v1300
    %v1501 = vpack.c.b16 %v1309, %v1305
    %v1502 = vpack.c.b16 %v1310, %v1306
    %v1503 = vpack.c.b16 %v1311, %v1307
    %v1504 = vpack.c.b16 %v1312, %v1308
    %v1505 = vpack.c.b16 %v1317, %v1313
    %v1506 = vpack.c.b16 %v1318, %v1314
    %v1507 = vpack.c.b16 %v1319, %v1315
    %v1508 = vpack.c.b16 %v1320, %v1316
    %v1509 = vpack.c.b16 %v1325, %v1321
    %v1510 = vpack.c.b16 %v1326, %v1322
    %v1511 = vpack.c.b16 %v1327, %v1323
    %v1512 = vpack.c.b16 %v1328, %v1324
    %v1513 = vpack.c.b16 %v1333, %v1329
    %v1514 = vpack.c.b16 %v1334, %v1330
    %v1515 = vpack.c.b16 %v1335, %v1331
    %v1516 = vpack.c.b16 %v1336, %v1332
    %v1517 = vpack.c.b16 %v1341, %v1337
    %v1518 = vpack.c.b16 %v1342, %v1338
    %v1519 = vpack.c.b16 %v1343, %v1339
    %v1520 = vpack.c.b16 %v1344, %v1340
    %v1521 = vpack.c.b16 %v1349, %v1345
    %v1522 = vpack.c.b16 %v1350, %v1346
    %v1523 = vpack.c.b16 %v1351, %v1347
    %v1524 = vpack.c.b16 %v1352, %v1348
    %v1525 = vpack.c.b16 %v1357, %v1353
    %v1526 = vpack.c.b16 %v1358, %v1354
    %v1527 = vpack.c.b16 %v1359, %v1355
    %v1528 = vpack.c.b16 %v1360, %v1356
    %v1529 = vpack.c.b16 %v1365, %v1361
    %v1530 = vpack.c.b16 %v1366, %v1362
    %v1531 = vpack.c.b16 %v1367, %v1363
    %v1532 = vpack.c.b16 %v1368, %v1364
    %v1533 = vpack.c.b16 %v1373, %v1369
    %v1534 = vpack.c.b16 %v1374, %v1370
    %v1535 = vpack.c.b16 %v1375, %v1371
    %v1536 = vpack.c.b16 %v1376, %v1372
    %v1537 = vpack.c.b16 %v1381, %v1377
    %v1538 = vpack.c.b16 %v1382, %v1378
    %v1539 = vpack.c.b16 %v1383, %v1379
    %v1540 = vpack.c.b16 %v1384, %v1380
    %v1541 = vpack.c.b16 %v1389, %v1385
    %v1542 = vpack.c.b16 %v1390, %v1386
    %v1543 = vpack.c.b16 %v1391, %v1387
    %v1544 = vpack.c.b16 %v1392, %v1388
    %v1545 = vpack.c.b16 %v1397, %v1393
    %v1546 = vpack.c.b16 %v1398, %v1394
    %v1547 = vpack.c.b16 %v1399, %v1395
    %v1548 = vpack.c.b16 %v1400, %v1396
    %v1549 = vpack.c.b16 %v1405, %v1401
    %v1550 = vpack.c.b16 %v1406, %v1402
    %v1551 = vpack.c.b16 %v1407, %v1403
    %v1552 = vpack.c.b16 %v1408, %v1404
    %v1553 = vpack.c.b16 %v1413, %v1409
    %v1554 = vpack.c.b16 %v1414, %v1410
    %v1555 = vpack.c.b16 %v1415, %v1411
    %v1556 = vpack.c.b16 %v1416, %v1412
    %v1557 = vpack.c.b16 %v1421, %v1417
    %v1558 = vpack.c.b16 %v1422, %v1418
    %v1559 = vpack.c.b16 %v1423, %v1419
    %v1560 = vpack.c.b16 %v1424, %v1420
    %v1561 = vpack.c.b16 %v1429, %v1425
    %v1562 = vpack.c.b16 %v1430, %v1426
    %v1563 = vpack.c.b16 %v1431, %v1427
    %v1564 = vpack.c.b16 %v1432, %v1428
    %v1565 = vpack.c.b16 %v1437, %v1433
    %v1566 = vpack.c.b16 %v1438, %v1434
    %v1567 = vpack.c.b16 %v1439, %v1435
    %v1568 = vpack.c.b16 %v1440, %v1436
    %1697 = vmatprep.subr.bf16.mxu0 %v1470
    %1698 = vmatpush1.bf16.msra.mxu0 %v1469
    %1699 = vmatprep.subr.bf16.mxu0 %v1466
    %1700 = vmatpush1.bf16.msra.mxu0 %v1465
    %1701 = vmatprep.subr.bf16.mxu0 %v1462
    %1702 = vmatpush1.bf16.msra.mxu0 %v1461
    %1703 = vmatprep.subr.bf16.mxu0 %v1458
    %1704 = vmatpush1.bf16.msra.mxu0 %v1457
    %1705 = vmatprep.subr.bf16.mxu0 %v1454
    %1706 = vmatpush1.bf16.msra.mxu0 %v1453
    %1707 = vmatprep.subr.bf16.mxu0 %v1450
    %1708 = vmatpush1.bf16.msra.mxu0 %v1449
    %1709 = vmatprep.subr.bf16.mxu0 %v1446
    %1710 = vmatpush1.bf16.msra.mxu0 %v1445
    %1711 = vmatprep.subr.bf16.mxu0 %v1442
    %1712 = vmatpush1.bf16.msra.mxu0 %v1441
    %1713 = vmatprep.subr.bf16.mxu0 %v1502
    %1714 = vmatpush2.bf16.msra.mxu0 %v1501
    %1715 = vmatprep.subr.bf16.mxu0 %v1498
    %1716 = vmatpush2.bf16.msra.mxu0 %v1497
    %1717 = vmatprep.subr.bf16.mxu0 %v1494
    %1718 = vmatpush2.bf16.msra.mxu0 %v1493
    %1719 = vmatprep.subr.bf16.mxu0 %v1490
    %1720 = vmatpush2.bf16.msra.mxu0 %v1489
    %1721 = vmatprep.subr.bf16.mxu0 %v1486
    %1722 = vmatpush2.bf16.msra.mxu0 %v1485
    %1723 = vmatprep.subr.bf16.mxu0 %v1482
    %1724 = vmatpush2.bf16.msra.mxu0 %v1481
    %1725 = vmatprep.subr.bf16.mxu0 %v1478
    %1726 = vmatpush2.bf16.msra.mxu0 %v1477
    %1727 = vmatprep.subr.bf16.mxu0 %v1474
    %1728 = vmatpush2.bf16.msra.mxu0 %v1473
    %1729 = vmatprep.mubr.bf16.mxu0 %v1033
    %1730 = vmatmul.mubr.bf16.gmra.mxu0 %v1032
    %v1731 = vpop.f32.mrf.mxu0
    %v1732 = vadd.f32 %v1040, %v1731
    %v1733 = vpop.f32.mrf.mxu0
    %v1734 = vadd.f32 %v1044, %v1733
    %v1735 = vpop.f32.mrf.mxu0
    %v1736 = vadd.f32 %v1040, %v1735
    %v1737 = vpop.f32.mrf.mxu0
    %v1738 = vadd.f32 %v1044, %v1737
    %1739 = vdwg.mxu0
    %1740 = vmatprep.subr.bf16.mxu0 %v1534
    %1741 = vmatpush1.bf16.msra.mxu0 %v1533
    %1742 = vmatprep.subr.bf16.mxu0 %v1530
    %1743 = vmatpush1.bf16.msra.mxu0 %v1529
    %1744 = vmatprep.subr.bf16.mxu0 %v1526
    %1745 = vmatpush1.bf16.msra.mxu0 %v1525
    %1746 = vmatprep.subr.bf16.mxu0 %v1522
    %1747 = vmatpush1.bf16.msra.mxu0 %v1521
    %1748 = vmatprep.subr.bf16.mxu0 %v1518
    %1749 = vmatpush1.bf16.msra.mxu0 %v1517
    %1750 = vmatprep.subr.bf16.mxu0 %v1514
    %1751 = vmatpush1.bf16.msra.mxu0 %v1513
    %1752 = vmatprep.subr.bf16.mxu0 %v1510
    %1753 = vmatpush1.bf16.msra.mxu0 %v1509
    %1754 = vmatprep.subr.bf16.mxu0 %v1506
    %1755 = vmatpush1.bf16.msra.mxu0 %v1505
    %1756 = vmatprep.subr.bf16.mxu0 %v1566
    %1757 = vmatpush2.bf16.msra.mxu0 %v1565
    %1758 = vmatprep.subr.bf16.mxu0 %v1562
    %1759 = vmatpush2.bf16.msra.mxu0 %v1561
    %1760 = vmatprep.subr.bf16.mxu0 %v1558
    %1761 = vmatpush2.bf16.msra.mxu0 %v1557
    %1762 = vmatprep.subr.bf16.mxu0 %v1554
    %1763 = vmatpush2.bf16.msra.mxu0 %v1553
    %1764 = vmatprep.subr.bf16.mxu0 %v1550
    %1765 = vmatpush2.bf16.msra.mxu0 %v1549
    %1766 = vmatprep.subr.bf16.mxu0 %v1546
    %1767 = vmatpush2.bf16.msra.mxu0 %v1545
    %1768 = vmatprep.subr.bf16.mxu0 %v1542
    %1769 = vmatpush2.bf16.msra.mxu0 %v1541
    %1770 = vmatprep.subr.bf16.mxu0 %v1538
    %1771 = vmatpush2.bf16.msra.mxu0 %v1537
    %1772 = vmatprep.mubr.bf16.mxu0 %v1035
    %1773 = vmatmul.mubr.bf16.gmra.mxu0 %v1034
    %v1774 = vpop.f32.mrf.mxu0
    %v1775 = vadd.f32 %v1732, %v1774
    %v1776 = vpop.f32.mrf.mxu0
    %v1777 = vadd.f32 %v1734, %v1776
    %v1778 = vpop.f32.mrf.mxu0
    %v1779 = vadd.f32 %v1736, %v1778
    %v1780 = vpop.f32.mrf.mxu0
    %v1781 = vadd.f32 %v1738, %v1780
    %1782 = vdwg.mxu0
    %1783 = vmatprep.subr.bf16.mxu0 %v1472
    %1784 = vmatpush1.bf16.msra.mxu0 %v1471
    %1785 = vmatprep.subr.bf16.mxu0 %v1468
    %1786 = vmatpush1.bf16.msra.mxu0 %v1467
    %1787 = vmatprep.subr.bf16.mxu0 %v1464
    %1788 = vmatpush1.bf16.msra.mxu0 %v1463
    %1789 = vmatprep.subr.bf16.mxu0 %v1460
    %1790 = vmatpush1.bf16.msra.mxu0 %v1459
    %1791 = vmatprep.subr.bf16.mxu0 %v1456
    %1792 = vmatpush1.bf16.msra.mxu0 %v1455
    %1793 = vmatprep.subr.bf16.mxu0 %v1452
    %1794 = vmatpush1.bf16.msra.mxu0 %v1451
    %1795 = vmatprep.subr.bf16.mxu0 %v1448
    %1796 = vmatpush1.bf16.msra.mxu0 %v1447
    %1797 = vmatprep.subr.bf16.mxu0 %v1444
    %1798 = vmatpush1.bf16.msra.mxu0 %v1443
    %1799 = vmatprep.subr.bf16.mxu0 %v1504
    %1800 = vmatpush2.bf16.msra.mxu0 %v1503
    %1801 = vmatprep.subr.bf16.mxu0 %v1500
    %1802 = vmatpush2.bf16.msra.mxu0 %v1499
    %1803 = vmatprep.subr.bf16.mxu0 %v1496
    %1804 = vmatpush2.bf16.msra.mxu0 %v1495
    %1805 = vmatprep.subr.bf16.mxu0 %v1492
    %1806 = vmatpush2.bf16.msra.mxu0 %v1491
    %1807 = vmatprep.subr.bf16.mxu0 %v1488
    %1808 = vmatpush2.bf16.msra.mxu0 %v1487
    %1809 = vmatprep.subr.bf16.mxu0 %v1484
    %1810 = vmatpush2.bf16.msra.mxu0 %v1483
    %1811 = vmatprep.subr.bf16.mxu0 %v1480
    %1812 = vmatpush2.bf16.msra.mxu0 %v1479
    %1813 = vmatprep.subr.bf16.mxu0 %v1476
    %1814 = vmatpush2.bf16.msra.mxu0 %v1475
    %1815 = vmatprep.mubr.bf16.mxu0 %v1033
    %1816 = vmatmul.mubr.bf16.gmra.mxu0 %v1032
    %v1817 = vpop.f32.mrf.mxu0
    %v1818 = vadd.f32 %v1048, %v1817
    %v1819 = vpop.f32.mrf.mxu0
    %v1820 = vadd.f32 %v1052, %v1819
    %v1821 = vpop.f32.mrf.mxu0
    %v1822 = vadd.f32 %v1048, %v1821
    %v1823 = vpop.f32.mrf.mxu0
    %v1824 = vadd.f32 %v1052, %v1823
    %1825 = vdwg.mxu0
    %1826 = vmatprep.subr.bf16.mxu0 %v1536
    %1827 = vmatpush1.bf16.msra.mxu0 %v1535
    %1828 = vmatprep.subr.bf16.mxu0 %v1532
    %1829 = vmatpush1.bf16.msra.mxu0 %v1531
    %1830 = vmatprep.subr.bf16.mxu0 %v1528
    %1831 = vmatpush1.bf16.msra.mxu0 %v1527
    %1832 = vmatprep.subr.bf16.mxu0 %v1524
    %1833 = vmatpush1.bf16.msra.mxu0 %v1523
    %1834 = vmatprep.subr.bf16.mxu0 %v1520
    %1835 = vmatpush1.bf16.msra.mxu0 %v1519
    %1836 = vmatprep.subr.bf16.mxu0 %v1516
    %1837 = vmatpush1.bf16.msra.mxu0 %v1515
    %1838 = vmatprep.subr.bf16.mxu0 %v1512
    %1839 = vmatpush1.bf16.msra.mxu0 %v1511
    %1840 = vmatprep.subr.bf16.mxu0 %v1508
    %1841 = vmatpush1.bf16.msra.mxu0 %v1507
    %1842 = vmatprep.subr.bf16.mxu0 %v1568
    %1843 = vmatpush2.bf16.msra.mxu0 %v1567
    %1844 = vmatprep.subr.bf16.mxu0 %v1564
    %1845 = vmatpush2.bf16.msra.mxu0 %v1563
    %1846 = vmatprep.subr.bf16.mxu0 %v1560
    %1847 = vmatpush2.bf16.msra.mxu0 %v1559
    %1848 = vmatprep.subr.bf16.mxu0 %v1556
    %1849 = vmatpush2.bf16.msra.mxu0 %v1555
    %1850 = vmatprep.subr.bf16.mxu0 %v1552
    %1851 = vmatpush2.bf16.msra.mxu0 %v1551
    %1852 = vmatprep.subr.bf16.mxu0 %v1548
    %1853 = vmatpush2.bf16.msra.mxu0 %v1547
    %1854 = vmatprep.subr.bf16.mxu0 %v1544
    %1855 = vmatpush2.bf16.msra.mxu0 %v1543
    %1856 = vmatprep.subr.bf16.mxu0 %v1540
    %1857 = vmatpush2.bf16.msra.mxu0 %v1539
    %1858 = vmatprep.mubr.bf16.mxu0 %v1035
    %1859 = vmatmul.mubr.bf16.gmra.mxu0 %v1034
    %v1860 = vpop.f32.mrf.mxu0
    %v1861 = vadd.f32 %v1818, %v1860
    %v1862 = vpop.f32.mrf.mxu0
    %v1863 = vadd.f32 %v1820, %v1862
    %v1864 = vpop.f32.mrf.mxu0
    %v1865 = vadd.f32 %v1822, %v1864
    %v1866 = vpop.f32.mrf.mxu0
    %v1867 = vadd.f32 %v1824, %v1866
    %1868 = vdwg.mxu0
    %vm1869 = vcmp.ge.f32.partialorder %v1775, 0.0
    %vm1870 = vcmp.ge.f32.partialorder %v1777, 0.0
    %vm1871 = vcmp.ge.f32.partialorder %v1861, 0.0
    %vm1872 = vcmp.ge.f32.partialorder %v1863, 0.0
    %vm1873 = vcmp.ge.f32.partialorder %v1779, 0.0
    %vm1874 = vcmp.ge.f32.partialorder %v1781, 0.0
    %vm1875 = vcmp.ge.f32.partialorder %v1865, 0.0
    %vm1876 = vcmp.ge.f32.partialorder %v1867, 0.0
    %v1877 = vmul.f32 %v1775, 0.01
    %v1878 = vmul.f32 %v1777, 0.01
    %v1879 = vmul.f32 %v1861, 0.01
    %v1880 = vmul.f32 %v1863, 0.01
    %v1881 = vmul.f32 %v1779, 0.01
    %v1882 = vmul.f32 %v1781, 0.01
    %v1883 = vmul.f32 %v1865, 0.01
    %v1884 = vmul.f32 %v1867, 0.01
    %v1885 = vsel %vm1869, %v1775, %v1877
    %v1886 = vsel %vm1870, %v1777, %v1878
    %v1887 = vsel %vm1871, %v1861, %v1879
    %v1888 = vsel %vm1872, %v1863, %v1880
    %v1889 = vsel %vm1873, %v1779, %v1881
    %v1890 = vsel %vm1874, %v1781, %v1882
    %v1891 = vsel %vm1875, %v1865, %v1883
    %v1892 = vsel %vm1876, %v1867, %v1884
    %s1893 = scalar_lea.vmem [#allocation11], 1024
    %v1894 = vld [vmem:[%s1893] sm:$0xff]
    %v1895 = vld [vmem:[%s1893 + $0x8] sm:$0xff]
    %v1896 = vld [vmem:[%s1893 + $0x10] sm:$0xff]
    %v1897 = vld [vmem:[%s1893 + $0x18] sm:$0xff]
    %v1898 = vld [vmem:[%s1893 + $0x20] sm:$0xff]
    %v1899 = vld [vmem:[%s1893 + $0x28] sm:$0xff]
    %v1900 = vld [vmem:[%s1893 + $0x30] sm:$0xff]
    %v1901 = vld [vmem:[%s1893 + $0x38] sm:$0xff]
    %v1902 = vld [vmem:[%s1893 + $0x40] sm:$0xff]
    %v1903 = vld [vmem:[%s1893 + $0x48] sm:$0xff]
    %v1904 = vld [vmem:[%s1893 + $0x50] sm:$0xff]
    %v1905 = vld [vmem:[%s1893 + $0x58] sm:$0xff]
    %v1906 = vld [vmem:[%s1893 + $0x60] sm:$0xff]
    %v1907 = vld [vmem:[%s1893 + $0x68] sm:$0xff]
    %v1908 = vld [vmem:[%s1893 + $0x70] sm:$0xff]
    %v1909 = vld [vmem:[%s1893 + $0x78] sm:$0xff]
    %v1910 = vld [vmem:[%s1893 + $0x80] sm:$0xff]
    %v1911 = vld [vmem:[%s1893 + $0x88] sm:$0xff]
    %v1912 = vld [vmem:[%s1893 + $0x90] sm:$0xff]
    %v1913 = vld [vmem:[%s1893 + $0x98] sm:$0xff]
    %v1914 = vld [vmem:[%s1893 + $0xa0] sm:$0xff]
    %v1915 = vld [vmem:[%s1893 + $0xa8] sm:$0xff]
    %v1916 = vld [vmem:[%s1893 + $0xb0] sm:$0xff]
    %v1917 = vld [vmem:[%s1893 + $0xb8] sm:$0xff]
    %v1918 = vld [vmem:[%s1893 + $0xc0] sm:$0xff]
    %v1919 = vld [vmem:[%s1893 + $0xc8] sm:$0xff]
    %v1920 = vld [vmem:[%s1893 + $0xd0] sm:$0xff]
    %v1921 = vld [vmem:[%s1893 + $0xd8] sm:$0xff]
    %v1922 = vld [vmem:[%s1893 + $0xe0] sm:$0xff]
    %v1923 = vld [vmem:[%s1893 + $0xe8] sm:$0xff]
    %v1924 = vld [vmem:[%s1893 + $0xf0] sm:$0xff]
    %v1925 = vld [vmem:[%s1893 + $0xf8] sm:$0xff]
    %v1926 = vld [vmem:[%s1893 + $0x100] sm:$0xff]
    %v1927 = vld [vmem:[%s1893 + $0x108] sm:$0xff]
    %v1928 = vld [vmem:[%s1893 + $0x110] sm:$0xff]
    %v1929 = vld [vmem:[%s1893 + $0x118] sm:$0xff]
    %v1930 = vld [vmem:[%s1893 + $0x120] sm:$0xff]
    %v1931 = vld [vmem:[%s1893 + $0x128] sm:$0xff]
    %v1932 = vld [vmem:[%s1893 + $0x130] sm:$0xff]
    %v1933 = vld [vmem:[%s1893 + $0x138] sm:$0xff]
    %v1934 = vld [vmem:[%s1893 + $0x140] sm:$0xff]
    %v1935 = vld [vmem:[%s1893 + $0x148] sm:$0xff]
    %v1936 = vld [vmem:[%s1893 + $0x150] sm:$0xff]
    %v1937 = vld [vmem:[%s1893 + $0x158] sm:$0xff]
    %v1938 = vld [vmem:[%s1893 + $0x160] sm:$0xff]
    %v1939 = vld [vmem:[%s1893 + $0x168] sm:$0xff]
    %v1940 = vld [vmem:[%s1893 + $0x170] sm:$0xff]
    %v1941 = vld [vmem:[%s1893 + $0x178] sm:$0xff]
    %v1942 = vld [vmem:[%s1893 + $0x180] sm:$0xff]
    %v1943 = vld [vmem:[%s1893 + $0x188] sm:$0xff]
    %v1944 = vld [vmem:[%s1893 + $0x190] sm:$0xff]
    %v1945 = vld [vmem:[%s1893 + $0x198] sm:$0xff]
    %v1946 = vld [vmem:[%s1893 + $0x1a0] sm:$0xff]
    %v1947 = vld [vmem:[%s1893 + $0x1a8] sm:$0xff]
    %v1948 = vld [vmem:[%s1893 + $0x1b0] sm:$0xff]
    %v1949 = vld [vmem:[%s1893 + $0x1b8] sm:$0xff]
    %v1950 = vld [vmem:[%s1893 + $0x1c0] sm:$0xff]
    %v1951 = vld [vmem:[%s1893 + $0x1c8] sm:$0xff]
    %v1952 = vld [vmem:[%s1893 + $0x1d0] sm:$0xff]
    %v1953 = vld [vmem:[%s1893 + $0x1d8] sm:$0xff]
    %v1954 = vld [vmem:[%s1893 + $0x1e0] sm:$0xff]
    %v1955 = vld [vmem:[%s1893 + $0x1e8] sm:$0xff]
    %v1956 = vld [vmem:[%s1893 + $0x1f0] sm:$0xff]
    %v1957 = vld [vmem:[%s1893 + $0x1f8] sm:$0xff]
    %v1958 = vld [vmem:[%s1893 + $0x200] sm:$0xff]
    %v1959 = vld [vmem:[%s1893 + $0x208] sm:$0xff]
    %v1960 = vld [vmem:[%s1893 + $0x210] sm:$0xff]
    %v1961 = vld [vmem:[%s1893 + $0x218] sm:$0xff]
    %v1962 = vld [vmem:[%s1893 + $0x220] sm:$0xff]
    %v1963 = vld [vmem:[%s1893 + $0x228] sm:$0xff]
    %v1964 = vld [vmem:[%s1893 + $0x230] sm:$0xff]
    %v1965 = vld [vmem:[%s1893 + $0x238] sm:$0xff]
    %v1966 = vld [vmem:[%s1893 + $0x240] sm:$0xff]
    %v1967 = vld [vmem:[%s1893 + $0x248] sm:$0xff]
    %v1968 = vld [vmem:[%s1893 + $0x250] sm:$0xff]
    %v1969 = vld [vmem:[%s1893 + $0x258] sm:$0xff]
    %v1970 = vld [vmem:[%s1893 + $0x260] sm:$0xff]
    %v1971 = vld [vmem:[%s1893 + $0x268] sm:$0xff]
    %v1972 = vld [vmem:[%s1893 + $0x270] sm:$0xff]
    %v1973 = vld [vmem:[%s1893 + $0x278] sm:$0xff]
    %v1974 = vld [vmem:[%s1893 + $0x280] sm:$0xff]
    %v1975 = vld [vmem:[%s1893 + $0x288] sm:$0xff]
    %v1976 = vld [vmem:[%s1893 + $0x290] sm:$0xff]
    %v1977 = vld [vmem:[%s1893 + $0x298] sm:$0xff]
    %v1978 = vld [vmem:[%s1893 + $0x2a0] sm:$0xff]
    %v1979 = vld [vmem:[%s1893 + $0x2a8] sm:$0xff]
    %v1980 = vld [vmem:[%s1893 + $0x2b0] sm:$0xff]
    %v1981 = vld [vmem:[%s1893 + $0x2b8] sm:$0xff]
    %v1982 = vld [vmem:[%s1893 + $0x2c0] sm:$0xff]
    %v1983 = vld [vmem:[%s1893 + $0x2c8] sm:$0xff]
    %v1984 = vld [vmem:[%s1893 + $0x2d0] sm:$0xff]
    %v1985 = vld [vmem:[%s1893 + $0x2d8] sm:$0xff]
    %v1986 = vld [vmem:[%s1893 + $0x2e0] sm:$0xff]
    %v1987 = vld [vmem:[%s1893 + $0x2e8] sm:$0xff]
    %v1988 = vld [vmem:[%s1893 + $0x2f0] sm:$0xff]
    %v1989 = vld [vmem:[%s1893 + $0x2f8] sm:$0xff]
    %v1990 = vld [vmem:[%s1893 + $0x300] sm:$0xff]
    %v1991 = vld [vmem:[%s1893 + $0x308] sm:$0xff]
    %v1992 = vld [vmem:[%s1893 + $0x310] sm:$0xff]
    %v1993 = vld [vmem:[%s1893 + $0x318] sm:$0xff]
    %v1994 = vld [vmem:[%s1893 + $0x320] sm:$0xff]
    %v1995 = vld [vmem:[%s1893 + $0x328] sm:$0xff]
    %v1996 = vld [vmem:[%s1893 + $0x330] sm:$0xff]
    %v1997 = vld [vmem:[%s1893 + $0x338] sm:$0xff]
    %v1998 = vld [vmem:[%s1893 + $0x340] sm:$0xff]
    %v1999 = vld [vmem:[%s1893 + $0x348] sm:$0xff]
    %v2000 = vld [vmem:[%s1893 + $0x350] sm:$0xff]
    %v2001 = vld [vmem:[%s1893 + $0x358] sm:$0xff]
    %v2002 = vld [vmem:[%s1893 + $0x360] sm:$0xff]
    %v2003 = vld [vmem:[%s1893 + $0x368] sm:$0xff]
    %v2004 = vld [vmem:[%s1893 + $0x370] sm:$0xff]
    %v2005 = vld [vmem:[%s1893 + $0x378] sm:$0xff]
    %v2006 = vld [vmem:[%s1893 + $0x380] sm:$0xff]
    %v2007 = vld [vmem:[%s1893 + $0x388] sm:$0xff]
    %v2008 = vld [vmem:[%s1893 + $0x390] sm:$0xff]
    %v2009 = vld [vmem:[%s1893 + $0x398] sm:$0xff]
    %v2010 = vld [vmem:[%s1893 + $0x3a0] sm:$0xff]
    %v2011 = vld [vmem:[%s1893 + $0x3a8] sm:$0xff]
    %v2012 = vld [vmem:[%s1893 + $0x3b0] sm:$0xff]
    %v2013 = vld [vmem:[%s1893 + $0x3b8] sm:$0xff]
    %v2014 = vld [vmem:[%s1893 + $0x3c0] sm:$0xff]
    %v2015 = vld [vmem:[%s1893 + $0x3c8] sm:$0xff]
    %v2016 = vld [vmem:[%s1893 + $0x3d0] sm:$0xff]
    %v2017 = vld [vmem:[%s1893 + $0x3d8] sm:$0xff]
    %v2018 = vld [vmem:[%s1893 + $0x3e0] sm:$0xff]
    %v2019 = vld [vmem:[%s1893 + $0x3e8] sm:$0xff]
    %v2020 = vld [vmem:[%s1893 + $0x3f0] sm:$0xff]
    %v2021 = vld [vmem:[%s1893 + $0x3f8] sm:$0xff]
    %s2022 = scalar_lea.vmem [#allocation13], 2
    %v2023 = vld [vmem:[%s2022] ss:$8 sm:$0xf]
    %v2024 = vpack.c.bf16 %v1889, %v1885
    %v2025 = vpack.c.bf16 %v1890, %v1886
    %v2026 = vpack.c.bf16 %v1891, %v1887
    %v2027 = vpack.c.bf16 %v1892, %v1888
    %v2029 = vlaneseq
    %v2030 = vshrl.u32 %v2029, 7
    %v2031 = vsub.s32 0, %v2030
    %v2032 = vrot.slane %v2023, %v2031
    %v2033 = vlaneseq
    %v2034 = vshrl.u32 %v2033, 7
    %v2035 = vsub.s32 1, %v2034
    %v2036 = vrot.slane %v2023, %v2035
    %v2037 = vlaneseq
    %v2038 = vshrl.u32 %v2037, 7
    %v2039 = vsub.s32 2, %v2038
    %v2040 = vrot.slane %v2023, %v2039
    %v2041 = vlaneseq
    %v2042 = vshrl.u32 %v2041, 7
    %v2043 = vsub.s32 3, %v2042
    %v2044 = vrot.slane %v2023, %v2043
    %v2177 = vunpack.c.l.b16 %v1894
    %v2178 = vunpack.c.h.b16 %v1894
    %v2179 = vunpack.c.l.b16 %v1895
    %v2180 = vunpack.c.h.b16 %v1895
    %v2181 = vunpack.c.l.b16 %v1896
    %v2182 = vunpack.c.h.b16 %v1896
    %v2183 = vunpack.c.l.b16 %v1897
    %v2184 = vunpack.c.h.b16 %v1897
    %v2185 = vunpack.c.l.b16 %v1898
    %v2186 = vunpack.c.h.b16 %v1898
    %v2187 = vunpack.c.l.b16 %v1899
    %v2188 = vunpack.c.h.b16 %v1899
    %v2189 = vunpack.c.l.b16 %v1900
    %v2190 = vunpack.c.h.b16 %v1900
    %v2191 = vunpack.c.l.b16 %v1901
    %v2192 = vunpack.c.h.b16 %v1901
    %v2193 = vunpack.c.l.b16 %v1902
    %v2194 = vunpack.c.h.b16 %v1902
    %v2195 = vunpack.c.l.b16 %v1903
    %v2196 = vunpack.c.h.b16 %v1903
    %v2197 = vunpack.c.l.b16 %v1904
    %v2198 = vunpack.c.h.b16 %v1904
    %v2199 = vunpack.c.l.b16 %v1905
    %v2200 = vunpack.c.h.b16 %v1905
    %v2201 = vunpack.c.l.b16 %v1906
    %v2202 = vunpack.c.h.b16 %v1906
    %v2203 = vunpack.c.l.b16 %v1907
    %v2204 = vunpack.c.h.b16 %v1907
    %v2205 = vunpack.c.l.b16 %v1908
    %v2206 = vunpack.c.h.b16 %v1908
    %v2207 = vunpack.c.l.b16 %v1909
    %v2208 = vunpack.c.h.b16 %v1909
    %v2209 = vunpack.c.l.b16 %v1910
    %v2210 = vunpack.c.h.b16 %v1910
    %v2211 = vunpack.c.l.b16 %v1911
    %v2212 = vunpack.c.h.b16 %v1911
    %v2213 = vunpack.c.l.b16 %v1912
    %v2214 = vunpack.c.h.b16 %v1912
    %v2215 = vunpack.c.l.b16 %v1913
    %v2216 = vunpack.c.h.b16 %v1913
    %v2217 = vunpack.c.l.b16 %v1914
    %v2218 = vunpack.c.h.b16 %v1914
    %v2219 = vunpack.c.l.b16 %v1915
    %v2220 = vunpack.c.h.b16 %v1915
    %v2221 = vunpack.c.l.b16 %v1916
    %v2222 = vunpack.c.h.b16 %v1916
    %v2223 = vunpack.c.l.b16 %v1917
    %v2224 = vunpack.c.h.b16 %v1917
    %v2225 = vunpack.c.l.b16 %v1918
    %v2226 = vunpack.c.h.b16 %v1918
    %v2227 = vunpack.c.l.b16 %v1919
    %v2228 = vunpack.c.h.b16 %v1919
    %v2229 = vunpack.c.l.b16 %v1920
    %v2230 = vunpack.c.h.b16 %v1920
    %v2231 = vunpack.c.l.b16 %v1921
    %v2232 = vunpack.c.h.b16 %v1921
    %v2233 = vunpack.c.l.b16 %v1922
    %v2234 = vunpack.c.h.b16 %v1922
    %v2235 = vunpack.c.l.b16 %v1923
    %v2236 = vunpack.c.h.b16 %v1923
    %v2237 = vunpack.c.l.b16 %v1924
    %v2238 = vunpack.c.h.b16 %v1924
    %v2239 = vunpack.c.l.b16 %v1925
    %v2240 = vunpack.c.h.b16 %v1925
    %v2241 = vunpack.c.l.b16 %v1926
    %v2242 = vunpack.c.h.b16 %v1926
    %v2243 = vunpack.c.l.b16 %v1927
    %v2244 = vunpack.c.h.b16 %v1927
    %v2245 = vunpack.c.l.b16 %v1928
    %v2246 = vunpack.c.h.b16 %v1928
    %v2247 = vunpack.c.l.b16 %v1929
    %v2248 = vunpack.c.h.b16 %v1929
    %v2249 = vunpack.c.l.b16 %v1930
    %v2250 = vunpack.c.h.b16 %v1930
    %v2251 = vunpack.c.l.b16 %v1931
    %v2252 = vunpack.c.h.b16 %v1931
    %v2253 = vunpack.c.l.b16 %v1932
    %v2254 = vunpack.c.h.b16 %v1932
    %v2255 = vunpack.c.l.b16 %v1933
    %v2256 = vunpack.c.h.b16 %v1933
    %v2257 = vunpack.c.l.b16 %v1934
    %v2258 = vunpack.c.h.b16 %v1934
    %v2259 = vunpack.c.l.b16 %v1935
    %v2260 = vunpack.c.h.b16 %v1935
    %v2261 = vunpack.c.l.b16 %v1936
    %v2262 = vunpack.c.h.b16 %v1936
    %v2263 = vunpack.c.l.b16 %v1937
    %v2264 = vunpack.c.h.b16 %v1937
    %v2265 = vunpack.c.l.b16 %v1938
    %v2266 = vunpack.c.h.b16 %v1938
    %v2267 = vunpack.c.l.b16 %v1939
    %v2268 = vunpack.c.h.b16 %v1939
    %v2269 = vunpack.c.l.b16 %v1940
    %v2270 = vunpack.c.h.b16 %v1940
    %v2271 = vunpack.c.l.b16 %v1941
    %v2272 = vunpack.c.h.b16 %v1941
    %v2273 = vunpack.c.l.b16 %v1942
    %v2274 = vunpack.c.h.b16 %v1942
    %v2275 = vunpack.c.l.b16 %v1943
    %v2276 = vunpack.c.h.b16 %v1943
    %v2277 = vunpack.c.l.b16 %v1944
    %v2278 = vunpack.c.h.b16 %v1944
    %v2279 = vunpack.c.l.b16 %v1945
    %v2280 = vunpack.c.h.b16 %v1945
    %v2281 = vunpack.c.l.b16 %v1946
    %v2282 = vunpack.c.h.b16 %v1946
    %v2283 = vunpack.c.l.b16 %v1947
    %v2284 = vunpack.c.h.b16 %v1947
    %v2285 = vunpack.c.l.b16 %v1948
    %v2286 = vunpack.c.h.b16 %v1948
    %v2287 = vunpack.c.l.b16 %v1949
    %v2288 = vunpack.c.h.b16 %v1949
    %v2289 = vunpack.c.l.b16 %v1950
    %v2290 = vunpack.c.h.b16 %v1950
    %v2291 = vunpack.c.l.b16 %v1951
    %v2292 = vunpack.c.h.b16 %v1951
    %v2293 = vunpack.c.l.b16 %v1952
    %v2294 = vunpack.c.h.b16 %v1952
    %v2295 = vunpack.c.l.b16 %v1953
    %v2296 = vunpack.c.h.b16 %v1953
    %v2297 = vunpack.c.l.b16 %v1954
    %v2298 = vunpack.c.h.b16 %v1954
    %v2299 = vunpack.c.l.b16 %v1955
    %v2300 = vunpack.c.h.b16 %v1955
    %v2301 = vunpack.c.l.b16 %v1956
    %v2302 = vunpack.c.h.b16 %v1956
    %v2303 = vunpack.c.l.b16 %v1957
    %v2304 = vunpack.c.h.b16 %v1957
    %v2305 = vunpack.c.l.b16 %v1958
    %v2306 = vunpack.c.h.b16 %v1958
    %v2307 = vunpack.c.l.b16 %v1959
    %v2308 = vunpack.c.h.b16 %v1959
    %v2309 = vunpack.c.l.b16 %v1960
    %v2310 = vunpack.c.h.b16 %v1960
    %v2311 = vunpack.c.l.b16 %v1961
    %v2312 = vunpack.c.h.b16 %v1961
    %v2313 = vunpack.c.l.b16 %v1962
    %v2314 = vunpack.c.h.b16 %v1962
    %v2315 = vunpack.c.l.b16 %v1963
    %v2316 = vunpack.c.h.b16 %v1963
    %v2317 = vunpack.c.l.b16 %v1964
    %v2318 = vunpack.c.h.b16 %v1964
    %v2319 = vunpack.c.l.b16 %v1965
    %v2320 = vunpack.c.h.b16 %v1965
    %v2321 = vunpack.c.l.b16 %v1966
    %v2322 = vunpack.c.h.b16 %v1966
    %v2323 = vunpack.c.l.b16 %v1967
    %v2324 = vunpack.c.h.b16 %v1967
    %v2325 = vunpack.c.l.b16 %v1968
    %v2326 = vunpack.c.h.b16 %v1968
    %v2327 = vunpack.c.l.b16 %v1969
    %v2328 = vunpack.c.h.b16 %v1969
    %v2329 = vunpack.c.l.b16 %v1970
    %v2330 = vunpack.c.h.b16 %v1970
    %v2331 = vunpack.c.l.b16 %v1971
    %v2332 = vunpack.c.h.b16 %v1971
    %v2333 = vunpack.c.l.b16 %v1972
    %v2334 = vunpack.c.h.b16 %v1972
    %v2335 = vunpack.c.l.b16 %v1973
    %v2336 = vunpack.c.h.b16 %v1973
    %v2337 = vunpack.c.l.b16 %v1974
    %v2338 = vunpack.c.h.b16 %v1974
    %v2339 = vunpack.c.l.b16 %v1975
    %v2340 = vunpack.c.h.b16 %v1975
    %v2341 = vunpack.c.l.b16 %v1976
    %v2342 = vunpack.c.h.b16 %v1976
    %v2343 = vunpack.c.l.b16 %v1977
    %v2344 = vunpack.c.h.b16 %v1977
    %v2345 = vunpack.c.l.b16 %v1978
    %v2346 = vunpack.c.h.b16 %v1978
    %v2347 = vunpack.c.l.b16 %v1979
    %v2348 = vunpack.c.h.b16 %v1979
    %v2349 = vunpack.c.l.b16 %v1980
    %v2350 = vunpack.c.h.b16 %v1980
    %v2351 = vunpack.c.l.b16 %v1981
    %v2352 = vunpack.c.h.b16 %v1981
    %v2353 = vunpack.c.l.b16 %v1982
    %v2354 = vunpack.c.h.b16 %v1982
    %v2355 = vunpack.c.l.b16 %v1983
    %v2356 = vunpack.c.h.b16 %v1983
    %v2357 = vunpack.c.l.b16 %v1984
    %v2358 = vunpack.c.h.b16 %v1984
    %v2359 = vunpack.c.l.b16 %v1985
    %v2360 = vunpack.c.h.b16 %v1985
    %v2361 = vunpack.c.l.b16 %v1986
    %v2362 = vunpack.c.h.b16 %v1986
    %v2363 = vunpack.c.l.b16 %v1987
    %v2364 = vunpack.c.h.b16 %v1987
    %v2365 = vunpack.c.l.b16 %v1988
    %v2366 = vunpack.c.h.b16 %v1988
    %v2367 = vunpack.c.l.b16 %v1989
    %v2368 = vunpack.c.h.b16 %v1989
    %v2369 = vunpack.c.l.b16 %v1990
    %v2370 = vunpack.c.h.b16 %v1990
    %v2371 = vunpack.c.l.b16 %v1991
    %v2372 = vunpack.c.h.b16 %v1991
    %v2373 = vunpack.c.l.b16 %v1992
    %v2374 = vunpack.c.h.b16 %v1992
    %v2375 = vunpack.c.l.b16 %v1993
    %v2376 = vunpack.c.h.b16 %v1993
    %v2377 = vunpack.c.l.b16 %v1994
    %v2378 = vunpack.c.h.b16 %v1994
    %v2379 = vunpack.c.l.b16 %v1995
    %v2380 = vunpack.c.h.b16 %v1995
    %v2381 = vunpack.c.l.b16 %v1996
    %v2382 = vunpack.c.h.b16 %v1996
    %v2383 = vunpack.c.l.b16 %v1997
    %v2384 = vunpack.c.h.b16 %v1997
    %v2385 = vunpack.c.l.b16 %v1998
    %v2386 = vunpack.c.h.b16 %v1998
    %v2387 = vunpack.c.l.b16 %v1999
    %v2388 = vunpack.c.h.b16 %v1999
    %v2389 = vunpack.c.l.b16 %v2000
    %v2390 = vunpack.c.h.b16 %v2000
    %v2391 = vunpack.c.l.b16 %v2001
    %v2392 = vunpack.c.h.b16 %v2001
    %v2393 = vunpack.c.l.b16 %v2002
    %v2394 = vunpack.c.h.b16 %v2002
    %v2395 = vunpack.c.l.b16 %v2003
    %v2396 = vunpack.c.h.b16 %v2003
    %v2397 = vunpack.c.l.b16 %v2004
    %v2398 = vunpack.c.h.b16 %v2004
    %v2399 = vunpack.c.l.b16 %v2005
    %v2400 = vunpack.c.h.b16 %v2005
    %v2401 = vunpack.c.l.b16 %v2006
    %v2402 = vunpack.c.h.b16 %v2006
    %v2403 = vunpack.c.l.b16 %v2007
    %v2404 = vunpack.c.h.b16 %v2007
    %v2405 = vunpack.c.l.b16 %v2008
    %v2406 = vunpack.c.h.b16 %v2008
    %v2407 = vunpack.c.l.b16 %v2009
    %v2408 = vunpack.c.h.b16 %v2009
    %v2409 = vunpack.c.l.b16 %v2010
    %v2410 = vunpack.c.h.b16 %v2010
    %v2411 = vunpack.c.l.b16 %v2011
    %v2412 = vunpack.c.h.b16 %v2011
    %v2413 = vunpack.c.l.b16 %v2012
    %v2414 = vunpack.c.h.b16 %v2012
    %v2415 = vunpack.c.l.b16 %v2013
    %v2416 = vunpack.c.h.b16 %v2013
    %v2417 = vunpack.c.l.b16 %v2014
    %v2418 = vunpack.c.h.b16 %v2014
    %v2419 = vunpack.c.l.b16 %v2015
    %v2420 = vunpack.c.h.b16 %v2015
    %v2421 = vunpack.c.l.b16 %v2016
    %v2422 = vunpack.c.h.b16 %v2016
    %v2423 = vunpack.c.l.b16 %v2017
    %v2424 = vunpack.c.h.b16 %v2017
    %v2425 = vunpack.c.l.b16 %v2018
    %v2426 = vunpack.c.h.b16 %v2018
    %v2427 = vunpack.c.l.b16 %v2019
    %v2428 = vunpack.c.h.b16 %v2019
    %v2429 = vunpack.c.l.b16 %v2020
    %v2430 = vunpack.c.h.b16 %v2020
    %v2431 = vunpack.c.l.b16 %v2021
    %v2432 = vunpack.c.h.b16 %v2021
    %v2433 = vpack.c.b16 %v2181, %v2177
    %v2434 = vpack.c.b16 %v2182, %v2178
    %v2435 = vpack.c.b16 %v2183, %v2179
    %v2436 = vpack.c.b16 %v2184, %v2180
    %v2437 = vpack.c.b16 %v2189, %v2185
    %v2438 = vpack.c.b16 %v2190, %v2186
    %v2439 = vpack.c.b16 %v2191, %v2187
    %v2440 = vpack.c.b16 %v2192, %v2188
    %v2441 = vpack.c.b16 %v2197, %v2193
    %v2442 = vpack.c.b16 %v2198, %v2194
    %v2443 = vpack.c.b16 %v2199, %v2195
    %v2444 = vpack.c.b16 %v2200, %v2196
    %v2445 = vpack.c.b16 %v2205, %v2201
    %v2446 = vpack.c.b16 %v2206, %v2202
    %v2447 = vpack.c.b16 %v2207, %v2203
    %v2448 = vpack.c.b16 %v2208, %v2204
    %v2449 = vpack.c.b16 %v2213, %v2209
    %v2450 = vpack.c.b16 %v2214, %v2210
    %v2451 = vpack.c.b16 %v2215, %v2211
    %v2452 = vpack.c.b16 %v2216, %v2212
    %v2453 = vpack.c.b16 %v2221, %v2217
    %v2454 = vpack.c.b16 %v2222, %v2218
    %v2455 = vpack.c.b16 %v2223, %v2219
    %v2456 = vpack.c.b16 %v2224, %v2220
    %v2457 = vpack.c.b16 %v2229, %v2225
    %v2458 = vpack.c.b16 %v2230, %v2226
    %v2459 = vpack.c.b16 %v2231, %v2227
    %v2460 = vpack.c.b16 %v2232, %v2228
    %v2461 = vpack.c.b16 %v2237, %v2233
    %v2462 = vpack.c.b16 %v2238, %v2234
    %v2463 = vpack.c.b16 %v2239, %v2235
    %v2464 = vpack.c.b16 %v2240, %v2236
    %v2465 = vpack.c.b16 %v2245, %v2241
    %v2466 = vpack.c.b16 %v2246, %v2242
    %v2467 = vpack.c.b16 %v2247, %v2243
    %v2468 = vpack.c.b16 %v2248, %v2244
    %v2469 = vpack.c.b16 %v2253, %v2249
    %v2470 = vpack.c.b16 %v2254, %v2250
    %v2471 = vpack.c.b16 %v2255, %v2251
    %v2472 = vpack.c.b16 %v2256, %v2252
    %v2473 = vpack.c.b16 %v2261, %v2257
    %v2474 = vpack.c.b16 %v2262, %v2258
    %v2475 = vpack.c.b16 %v2263, %v2259
    %v2476 = vpack.c.b16 %v2264, %v2260
    %v2477 = vpack.c.b16 %v2269, %v2265
    %v2478 = vpack.c.b16 %v2270, %v2266
    %v2479 = vpack.c.b16 %v2271, %v2267
    %v2480 = vpack.c.b16 %v2272, %v2268
    %v2481 = vpack.c.b16 %v2277, %v2273
    %v2482 = vpack.c.b16 %v2278, %v2274
    %v2483 = vpack.c.b16 %v2279, %v2275
    %v2484 = vpack.c.b16 %v2280, %v2276
    %v2485 = vpack.c.b16 %v2285, %v2281
    %v2486 = vpack.c.b16 %v2286, %v2282
    %v2487 = vpack.c.b16 %v2287, %v2283
    %v2488 = vpack.c.b16 %v2288, %v2284
    %v2489 = vpack.c.b16 %v2293, %v2289
    %v2490 = vpack.c.b16 %v2294, %v2290
    %v2491 = vpack.c.b16 %v2295, %v2291
    %v2492 = vpack.c.b16 %v2296, %v2292
    %v2493 = vpack.c.b16 %v2301, %v2297
    %v2494 = vpack.c.b16 %v2302, %v2298
    %v2495 = vpack.c.b16 %v2303, %v2299
    %v2496 = vpack.c.b16 %v2304, %v2300
    %v2497 = vpack.c.b16 %v2309, %v2305
    %v2498 = vpack.c.b16 %v2310, %v2306
    %v2499 = vpack.c.b16 %v2311, %v2307
    %v2500 = vpack.c.b16 %v2312, %v2308
    %v2501 = vpack.c.b16 %v2317, %v2313
    %v2502 = vpack.c.b16 %v2318, %v2314
    %v2503 = vpack.c.b16 %v2319, %v2315
    %v2504 = vpack.c.b16 %v2320, %v2316
    %v2505 = vpack.c.b16 %v2325, %v2321
    %v2506 = vpack.c.b16 %v2326, %v2322
    %v2507 = vpack.c.b16 %v2327, %v2323
    %v2508 = vpack.c.b16 %v2328, %v2324
    %v2509 = vpack.c.b16 %v2333, %v2329
    %v2510 = vpack.c.b16 %v2334, %v2330
    %v2511 = vpack.c.b16 %v2335, %v2331
    %v2512 = vpack.c.b16 %v2336, %v2332
    %v2513 = vpack.c.b16 %v2341, %v2337
    %v2514 = vpack.c.b16 %v2342, %v2338
    %v2515 = vpack.c.b16 %v2343, %v2339
    %v2516 = vpack.c.b16 %v2344, %v2340
    %v2517 = vpack.c.b16 %v2349, %v2345
    %v2518 = vpack.c.b16 %v2350, %v2346
    %v2519 = vpack.c.b16 %v2351, %v2347
    %v2520 = vpack.c.b16 %v2352, %v2348
    %v2521 = vpack.c.b16 %v2357, %v2353
    %v2522 = vpack.c.b16 %v2358, %v2354
    %v2523 = vpack.c.b16 %v2359, %v2355
    %v2524 = vpack.c.b16 %v2360, %v2356
    %v2525 = vpack.c.b16 %v2365, %v2361
    %v2526 = vpack.c.b16 %v2366, %v2362
    %v2527 = vpack.c.b16 %v2367, %v2363
    %v2528 = vpack.c.b16 %v2368, %v2364
    %v2529 = vpack.c.b16 %v2373, %v2369
    %v2530 = vpack.c.b16 %v2374, %v2370
    %v2531 = vpack.c.b16 %v2375, %v2371
    %v2532 = vpack.c.b16 %v2376, %v2372
    %v2533 = vpack.c.b16 %v2381, %v2377
    %v2534 = vpack.c.b16 %v2382, %v2378
    %v2535 = vpack.c.b16 %v2383, %v2379
    %v2536 = vpack.c.b16 %v2384, %v2380
    %v2537 = vpack.c.b16 %v2389, %v2385
    %v2538 = vpack.c.b16 %v2390, %v2386
    %v2539 = vpack.c.b16 %v2391, %v2387
    %v2540 = vpack.c.b16 %v2392, %v2388
    %v2541 = vpack.c.b16 %v2397, %v2393
    %v2542 = vpack.c.b16 %v2398, %v2394
    %v2543 = vpack.c.b16 %v2399, %v2395
    %v2544 = vpack.c.b16 %v2400, %v2396
    %v2545 = vpack.c.b16 %v2405, %v2401
    %v2546 = vpack.c.b16 %v2406, %v2402
    %v2547 = vpack.c.b16 %v2407, %v2403
    %v2548 = vpack.c.b16 %v2408, %v2404
    %v2549 = vpack.c.b16 %v2413, %v2409
    %v2550 = vpack.c.b16 %v2414, %v2410
    %v2551 = vpack.c.b16 %v2415, %v2411
    %v2552 = vpack.c.b16 %v2416, %v2412
    %v2553 = vpack.c.b16 %v2421, %v2417
    %v2554 = vpack.c.b16 %v2422, %v2418
    %v2555 = vpack.c.b16 %v2423, %v2419
    %v2556 = vpack.c.b16 %v2424, %v2420
    %v2557 = vpack.c.b16 %v2429, %v2425
    %v2558 = vpack.c.b16 %v2430, %v2426
    %v2559 = vpack.c.b16 %v2431, %v2427
    %v2560 = vpack.c.b16 %v2432, %v2428
    %2689 = vmatprep.subr.bf16.mxu0 %v2462
    %2690 = vmatpush1.bf16.msra.mxu0 %v2461
    %2691 = vmatprep.subr.bf16.mxu0 %v2458
    %2692 = vmatpush1.bf16.msra.mxu0 %v2457
    %2693 = vmatprep.subr.bf16.mxu0 %v2454
    %2694 = vmatpush1.bf16.msra.mxu0 %v2453
    %2695 = vmatprep.subr.bf16.mxu0 %v2450
    %2696 = vmatpush1.bf16.msra.mxu0 %v2449
    %2697 = vmatprep.subr.bf16.mxu0 %v2446
    %2698 = vmatpush1.bf16.msra.mxu0 %v2445
    %2699 = vmatprep.subr.bf16.mxu0 %v2442
    %2700 = vmatpush1.bf16.msra.mxu0 %v2441
    %2701 = vmatprep.subr.bf16.mxu0 %v2438
    %2702 = vmatpush1.bf16.msra.mxu0 %v2437
    %2703 = vmatprep.subr.bf16.mxu0 %v2434
    %2704 = vmatpush1.bf16.msra.mxu0 %v2433
    %2705 = vmatprep.subr.bf16.mxu0 %v2494
    %2706 = vmatpush2.bf16.msra.mxu0 %v2493
    %2707 = vmatprep.subr.bf16.mxu0 %v2490
    %2708 = vmatpush2.bf16.msra.mxu0 %v2489
    %2709 = vmatprep.subr.bf16.mxu0 %v2486
    %2710 = vmatpush2.bf16.msra.mxu0 %v2485
    %2711 = vmatprep.subr.bf16.mxu0 %v2482
    %2712 = vmatpush2.bf16.msra.mxu0 %v2481
    %2713 = vmatprep.subr.bf16.mxu0 %v2478
    %2714 = vmatpush2.bf16.msra.mxu0 %v2477
    %2715 = vmatprep.subr.bf16.mxu0 %v2474
    %2716 = vmatpush2.bf16.msra.mxu0 %v2473
    %2717 = vmatprep.subr.bf16.mxu0 %v2470
    %2718 = vmatpush2.bf16.msra.mxu0 %v2469
    %2719 = vmatprep.subr.bf16.mxu0 %v2466
    %2720 = vmatpush2.bf16.msra.mxu0 %v2465
    %2721 = vmatprep.mubr.bf16.mxu0 %v2025
    %2722 = vmatmul.mubr.bf16.gmra.mxu0 %v2024
    %v2723 = vpop.f32.mrf.mxu0
    %v2724 = vadd.f32 %v2032, %v2723
    %v2725 = vpop.f32.mrf.mxu0
    %v2726 = vadd.f32 %v2036, %v2725
    %v2727 = vpop.f32.mrf.mxu0
    %v2728 = vadd.f32 %v2032, %v2727
    %v2729 = vpop.f32.mrf.mxu0
    %v2730 = vadd.f32 %v2036, %v2729
    %2731 = vdwg.mxu0
    %2732 = vmatprep.subr.bf16.mxu0 %v2526
    %2733 = vmatpush1.bf16.msra.mxu0 %v2525
    %2734 = vmatprep.subr.bf16.mxu0 %v2522
    %2735 = vmatpush1.bf16.msra.mxu0 %v2521
    %2736 = vmatprep.subr.bf16.mxu0 %v2518
    %2737 = vmatpush1.bf16.msra.mxu0 %v2517
    %2738 = vmatprep.subr.bf16.mxu0 %v2514
    %2739 = vmatpush1.bf16.msra.mxu0 %v2513
    %2740 = vmatprep.subr.bf16.mxu0 %v2510
    %2741 = vmatpush1.bf16.msra.mxu0 %v2509
    %2742 = vmatprep.subr.bf16.mxu0 %v2506
    %2743 = vmatpush1.bf16.msra.mxu0 %v2505
    %2744 = vmatprep.subr.bf16.mxu0 %v2502
    %2745 = vmatpush1.bf16.msra.mxu0 %v2501
    %2746 = vmatprep.subr.bf16.mxu0 %v2498
    %2747 = vmatpush1.bf16.msra.mxu0 %v2497
    %2748 = vmatprep.subr.bf16.mxu0 %v2558
    %2749 = vmatpush2.bf16.msra.mxu0 %v2557
    %2750 = vmatprep.subr.bf16.mxu0 %v2554
    %2751 = vmatpush2.bf16.msra.mxu0 %v2553
    %2752 = vmatprep.subr.bf16.mxu0 %v2550
    %2753 = vmatpush2.bf16.msra.mxu0 %v2549
    %2754 = vmatprep.subr.bf16.mxu0 %v2546
    %2755 = vmatpush2.bf16.msra.mxu0 %v2545
    %2756 = vmatprep.subr.bf16.mxu0 %v2542
    %2757 = vmatpush2.bf16.msra.mxu0 %v2541
    %2758 = vmatprep.subr.bf16.mxu0 %v2538
    %2759 = vmatpush2.bf16.msra.mxu0 %v2537
    %2760 = vmatprep.subr.bf16.mxu0 %v2534
    %2761 = vmatpush2.bf16.msra.mxu0 %v2533
    %2762 = vmatprep.subr.bf16.mxu0 %v2530
    %2763 = vmatpush2.bf16.msra.mxu0 %v2529
    %2764 = vmatprep.mubr.bf16.mxu0 %v2027
    %2765 = vmatmul.mubr.bf16.gmra.mxu0 %v2026
    %v2766 = vpop.f32.mrf.mxu0
    %v2767 = vadd.f32 %v2724, %v2766
    %v2768 = vpop.f32.mrf.mxu0
    %v2769 = vadd.f32 %v2726, %v2768
    %v2770 = vpop.f32.mrf.mxu0
    %v2771 = vadd.f32 %v2728, %v2770
    %v2772 = vpop.f32.mrf.mxu0
    %v2773 = vadd.f32 %v2730, %v2772
    %2774 = vdwg.mxu0
    %2775 = vmatprep.subr.bf16.mxu0 %v2464
    %2776 = vmatpush1.bf16.msra.mxu0 %v2463
    %2777 = vmatprep.subr.bf16.mxu0 %v2460
    %2778 = vmatpush1.bf16.msra.mxu0 %v2459
    %2779 = vmatprep.subr.bf16.mxu0 %v2456
    %2780 = vmatpush1.bf16.msra.mxu0 %v2455
    %2781 = vmatprep.subr.bf16.mxu0 %v2452
    %2782 = vmatpush1.bf16.msra.mxu0 %v2451
    %2783 = vmatprep.subr.bf16.mxu0 %v2448
    %2784 = vmatpush1.bf16.msra.mxu0 %v2447
    %2785 = vmatprep.subr.bf16.mxu0 %v2444
    %2786 = vmatpush1.bf16.msra.mxu0 %v2443
    %2787 = vmatprep.subr.bf16.mxu0 %v2440
    %2788 = vmatpush1.bf16.msra.mxu0 %v2439
    %2789 = vmatprep.subr.bf16.mxu0 %v2436
    %2790 = vmatpush1.bf16.msra.mxu0 %v2435
    %2791 = vmatprep.subr.bf16.mxu0 %v2496
    %2792 = vmatpush2.bf16.msra.mxu0 %v2495
    %2793 = vmatprep.subr.bf16.mxu0 %v2492
    %2794 = vmatpush2.bf16.msra.mxu0 %v2491
    %2795 = vmatprep.subr.bf16.mxu0 %v2488
    %2796 = vmatpush2.bf16.msra.mxu0 %v2487
    %2797 = vmatprep.subr.bf16.mxu0 %v2484
    %2798 = vmatpush2.bf16.msra.mxu0 %v2483
    %2799 = vmatprep.subr.bf16.mxu0 %v2480
    %2800 = vmatpush2.bf16.msra.mxu0 %v2479
    %2801 = vmatprep.subr.bf16.mxu0 %v2476
    %2802 = vmatpush2.bf16.msra.mxu0 %v2475
    %2803 = vmatprep.subr.bf16.mxu0 %v2472
    %2804 = vmatpush2.bf16.msra.mxu0 %v2471
    %2805 = vmatprep.subr.bf16.mxu0 %v2468
    %2806 = vmatpush2.bf16.msra.mxu0 %v2467
    %2807 = vmatprep.mubr.bf16.mxu0 %v2025
    %2808 = vmatmul.mubr.bf16.gmra.mxu0 %v2024
    %v2809 = vpop.f32.mrf.mxu0
    %v2810 = vadd.f32 %v2040, %v2809
    %v2811 = vpop.f32.mrf.mxu0
    %v2812 = vadd.f32 %v2044, %v2811
    %v2813 = vpop.f32.mrf.mxu0
    %v2814 = vadd.f32 %v2040, %v2813
    %v2815 = vpop.f32.mrf.mxu0
    %v2816 = vadd.f32 %v2044, %v2815
    %2817 = vdwg.mxu0
    %2818 = vmatprep.subr.bf16.mxu0 %v2528
    %2819 = vmatpush1.bf16.msra.mxu0 %v2527
    %2820 = vmatprep.subr.bf16.mxu0 %v2524
    %2821 = vmatpush1.bf16.msra.mxu0 %v2523
    %2822 = vmatprep.subr.bf16.mxu0 %v2520
    %2823 = vmatpush1.bf16.msra.mxu0 %v2519
    %2824 = vmatprep.subr.bf16.mxu0 %v2516
    %2825 = vmatpush1.bf16.msra.mxu0 %v2515
    %2826 = vmatprep.subr.bf16.mxu0 %v2512
    %2827 = vmatpush1.bf16.msra.mxu0 %v2511
    %2828 = vmatprep.subr.bf16.mxu0 %v2508
    %2829 = vmatpush1.bf16.msra.mxu0 %v2507
    %2830 = vmatprep.subr.bf16.mxu0 %v2504
    %2831 = vmatpush1.bf16.msra.mxu0 %v2503
    %2832 = vmatprep.subr.bf16.mxu0 %v2500
    %2833 = vmatpush1.bf16.msra.mxu0 %v2499
    %2834 = vmatprep.subr.bf16.mxu0 %v2560
    %2835 = vmatpush2.bf16.msra.mxu0 %v2559
    %2836 = vmatprep.subr.bf16.mxu0 %v2556
    %2837 = vmatpush2.bf16.msra.mxu0 %v2555
    %2838 = vmatprep.subr.bf16.mxu0 %v2552
    %2839 = vmatpush2.bf16.msra.mxu0 %v2551
    %2840 = vmatprep.subr.bf16.mxu0 %v2548
    %2841 = vmatpush2.bf16.msra.mxu0 %v2547
    %2842 = vmatprep.subr.bf16.mxu0 %v2544
    %2843 = vmatpush2.bf16.msra.mxu0 %v2543
    %2844 = vmatprep.subr.bf16.mxu0 %v2540
    %2845 = vmatpush2.bf16.msra.mxu0 %v2539
    %2846 = vmatprep.subr.bf16.mxu0 %v2536
    %2847 = vmatpush2.bf16.msra.mxu0 %v2535
    %2848 = vmatprep.subr.bf16.mxu0 %v2532
    %2849 = vmatpush2.bf16.msra.mxu0 %v2531
    %2850 = vmatprep.mubr.bf16.mxu0 %v2027
    %2851 = vmatmul.mubr.bf16.gmra.mxu0 %v2026
    %v2852 = vpop.f32.mrf.mxu0
    %v2853 = vadd.f32 %v2810, %v2852
    %v2854 = vpop.f32.mrf.mxu0
    %v2855 = vadd.f32 %v2812, %v2854
    %v2856 = vpop.f32.mrf.mxu0
    %v2857 = vadd.f32 %v2814, %v2856
    %v2858 = vpop.f32.mrf.mxu0
    %v2859 = vadd.f32 %v2816, %v2858
    %2860 = vdwg.mxu0
    %vm2861 = vcmp.ge.f32.partialorder %v2767, 0.0
    %vm2862 = vcmp.ge.f32.partialorder %v2769, 0.0
    %vm2863 = vcmp.ge.f32.partialorder %v2853, 0.0
    %vm2864 = vcmp.ge.f32.partialorder %v2855, 0.0
    %vm2865 = vcmp.ge.f32.partialorder %v2771, 0.0
    %vm2866 = vcmp.ge.f32.partialorder %v2773, 0.0
    %vm2867 = vcmp.ge.f32.partialorder %v2857, 0.0
    %vm2868 = vcmp.ge.f32.partialorder %v2859, 0.0
    %v2869 = vmul.f32 %v2767, 0.01
    %v2870 = vmul.f32 %v2769, 0.01
    %v2871 = vmul.f32 %v2853, 0.01
    %v2872 = vmul.f32 %v2855, 0.01
    %v2873 = vmul.f32 %v2771, 0.01
    %v2874 = vmul.f32 %v2773, 0.01
    %v2875 = vmul.f32 %v2857, 0.01
    %v2876 = vmul.f32 %v2859, 0.01
    %v2877 = vsel %vm2861, %v2767, %v2869
    %v2878 = vsel %vm2862, %v2769, %v2870
    %v2879 = vsel %vm2863, %v2853, %v2871
    %v2880 = vsel %vm2864, %v2855, %v2872
    %v2881 = vsel %vm2865, %v2771, %v2873
    %v2882 = vsel %vm2866, %v2773, %v2874
    %v2883 = vsel %vm2867, %v2857, %v2875
    %v2884 = vsel %vm2868, %v2859, %v2876
    %v2885 = vadd.f32 %v2877, %v1885
    %v2886 = vadd.f32 %v2878, %v1886
    %v2887 = vadd.f32 %v2879, %v1887
    %v2888 = vadd.f32 %v2880, %v1888
    %v2889 = vadd.f32 %v2881, %v1889
    %v2890 = vadd.f32 %v2882, %v1890
    %v2891 = vadd.f32 %v2883, %v1891
    %v2892 = vadd.f32 %v2884, %v1892
    %s2893 = scalar_lea.vmem [#allocation11], 2048
    %v2894 = vld [vmem:[%s2893] sm:$0xff]
    %v2895 = vld [vmem:[%s2893 + $0x8] sm:$0xff]
    %v2896 = vld [vmem:[%s2893 + $0x10] sm:$0xff]
    %v2897 = vld [vmem:[%s2893 + $0x18] sm:$0xff]
    %v2898 = vld [vmem:[%s2893 + $0x20] sm:$0xff]
    %v2899 = vld [vmem:[%s2893 + $0x28] sm:$0xff]
    %v2900 = vld [vmem:[%s2893 + $0x30] sm:$0xff]
    %v2901 = vld [vmem:[%s2893 + $0x38] sm:$0xff]
    %v2902 = vld [vmem:[%s2893 + $0x40] sm:$0xff]
    %v2903 = vld [vmem:[%s2893 + $0x48] sm:$0xff]
    %v2904 = vld [vmem:[%s2893 + $0x50] sm:$0xff]
    %v2905 = vld [vmem:[%s2893 + $0x58] sm:$0xff]
    %v2906 = vld [vmem:[%s2893 + $0x60] sm:$0xff]
    %v2907 = vld [vmem:[%s2893 + $0x68] sm:$0xff]
    %v2908 = vld [vmem:[%s2893 + $0x70] sm:$0xff]
    %v2909 = vld [vmem:[%s2893 + $0x78] sm:$0xff]
    %v2910 = vld [vmem:[%s2893 + $0x80] sm:$0xff]
    %v2911 = vld [vmem:[%s2893 + $0x88] sm:$0xff]
    %v2912 = vld [vmem:[%s2893 + $0x90] sm:$0xff]
    %v2913 = vld [vmem:[%s2893 + $0x98] sm:$0xff]
    %v2914 = vld [vmem:[%s2893 + $0xa0] sm:$0xff]
    %v2915 = vld [vmem:[%s2893 + $0xa8] sm:$0xff]
    %v2916 = vld [vmem:[%s2893 + $0xb0] sm:$0xff]
    %v2917 = vld [vmem:[%s2893 + $0xb8] sm:$0xff]
    %v2918 = vld [vmem:[%s2893 + $0xc0] sm:$0xff]
    %v2919 = vld [vmem:[%s2893 + $0xc8] sm:$0xff]
    %v2920 = vld [vmem:[%s2893 + $0xd0] sm:$0xff]
    %v2921 = vld [vmem:[%s2893 + $0xd8] sm:$0xff]
    %v2922 = vld [vmem:[%s2893 + $0xe0] sm:$0xff]
    %v2923 = vld [vmem:[%s2893 + $0xe8] sm:$0xff]
    %v2924 = vld [vmem:[%s2893 + $0xf0] sm:$0xff]
    %v2925 = vld [vmem:[%s2893 + $0xf8] sm:$0xff]
    %v2926 = vld [vmem:[%s2893 + $0x100] sm:$0xff]
    %v2927 = vld [vmem:[%s2893 + $0x108] sm:$0xff]
    %v2928 = vld [vmem:[%s2893 + $0x110] sm:$0xff]
    %v2929 = vld [vmem:[%s2893 + $0x118] sm:$0xff]
    %v2930 = vld [vmem:[%s2893 + $0x120] sm:$0xff]
    %v2931 = vld [vmem:[%s2893 + $0x128] sm:$0xff]
    %v2932 = vld [vmem:[%s2893 + $0x130] sm:$0xff]
    %v2933 = vld [vmem:[%s2893 + $0x138] sm:$0xff]
    %v2934 = vld [vmem:[%s2893 + $0x140] sm:$0xff]
    %v2935 = vld [vmem:[%s2893 + $0x148] sm:$0xff]
    %v2936 = vld [vmem:[%s2893 + $0x150] sm:$0xff]
    %v2937 = vld [vmem:[%s2893 + $0x158] sm:$0xff]
    %v2938 = vld [vmem:[%s2893 + $0x160] sm:$0xff]
    %v2939 = vld [vmem:[%s2893 + $0x168] sm:$0xff]
    %v2940 = vld [vmem:[%s2893 + $0x170] sm:$0xff]
    %v2941 = vld [vmem:[%s2893 + $0x178] sm:$0xff]
    %v2942 = vld [vmem:[%s2893 + $0x180] sm:$0xff]
    %v2943 = vld [vmem:[%s2893 + $0x188] sm:$0xff]
    %v2944 = vld [vmem:[%s2893 + $0x190] sm:$0xff]
    %v2945 = vld [vmem:[%s2893 + $0x198] sm:$0xff]
    %v2946 = vld [vmem:[%s2893 + $0x1a0] sm:$0xff]
    %v2947 = vld [vmem:[%s2893 + $0x1a8] sm:$0xff]
    %v2948 = vld [vmem:[%s2893 + $0x1b0] sm:$0xff]
    %v2949 = vld [vmem:[%s2893 + $0x1b8] sm:$0xff]
    %v2950 = vld [vmem:[%s2893 + $0x1c0] sm:$0xff]
    %v2951 = vld [vmem:[%s2893 + $0x1c8] sm:$0xff]
    %v2952 = vld [vmem:[%s2893 + $0x1d0] sm:$0xff]
    %v2953 = vld [vmem:[%s2893 + $0x1d8] sm:$0xff]
    %v2954 = vld [vmem:[%s2893 + $0x1e0] sm:$0xff]
    %v2955 = vld [vmem:[%s2893 + $0x1e8] sm:$0xff]
    %v2956 = vld [vmem:[%s2893 + $0x1f0] sm:$0xff]
    %v2957 = vld [vmem:[%s2893 + $0x1f8] sm:$0xff]
    %v2958 = vld [vmem:[%s2893 + $0x200] sm:$0xff]
    %v2959 = vld [vmem:[%s2893 + $0x208] sm:$0xff]
    %v2960 = vld [vmem:[%s2893 + $0x210] sm:$0xff]
    %v2961 = vld [vmem:[%s2893 + $0x218] sm:$0xff]
    %v2962 = vld [vmem:[%s2893 + $0x220] sm:$0xff]
    %v2963 = vld [vmem:[%s2893 + $0x228] sm:$0xff]
    %v2964 = vld [vmem:[%s2893 + $0x230] sm:$0xff]
    %v2965 = vld [vmem:[%s2893 + $0x238] sm:$0xff]
    %v2966 = vld [vmem:[%s2893 + $0x240] sm:$0xff]
    %v2967 = vld [vmem:[%s2893 + $0x248] sm:$0xff]
    %v2968 = vld [vmem:[%s2893 + $0x250] sm:$0xff]
    %v2969 = vld [vmem:[%s2893 + $0x258] sm:$0xff]
    %v2970 = vld [vmem:[%s2893 + $0x260] sm:$0xff]
    %v2971 = vld [vmem:[%s2893 + $0x268] sm:$0xff]
    %v2972 = vld [vmem:[%s2893 + $0x270] sm:$0xff]
    %v2973 = vld [vmem:[%s2893 + $0x278] sm:$0xff]
    %v2974 = vld [vmem:[%s2893 + $0x280] sm:$0xff]
    %v2975 = vld [vmem:[%s2893 + $0x288] sm:$0xff]
    %v2976 = vld [vmem:[%s2893 + $0x290] sm:$0xff]
    %v2977 = vld [vmem:[%s2893 + $0x298] sm:$0xff]
    %v2978 = vld [vmem:[%s2893 + $0x2a0] sm:$0xff]
    %v2979 = vld [vmem:[%s2893 + $0x2a8] sm:$0xff]
    %v2980 = vld [vmem:[%s2893 + $0x2b0] sm:$0xff]
    %v2981 = vld [vmem:[%s2893 + $0x2b8] sm:$0xff]
    %v2982 = vld [vmem:[%s2893 + $0x2c0] sm:$0xff]
    %v2983 = vld [vmem:[%s2893 + $0x2c8] sm:$0xff]
    %v2984 = vld [vmem:[%s2893 + $0x2d0] sm:$0xff]
    %v2985 = vld [vmem:[%s2893 + $0x2d8] sm:$0xff]
    %v2986 = vld [vmem:[%s2893 + $0x2e0] sm:$0xff]
    %v2987 = vld [vmem:[%s2893 + $0x2e8] sm:$0xff]
    %v2988 = vld [vmem:[%s2893 + $0x2f0] sm:$0xff]
    %v2989 = vld [vmem:[%s2893 + $0x2f8] sm:$0xff]
    %v2990 = vld [vmem:[%s2893 + $0x300] sm:$0xff]
    %v2991 = vld [vmem:[%s2893 + $0x308] sm:$0xff]
    %v2992 = vld [vmem:[%s2893 + $0x310] sm:$0xff]
    %v2993 = vld [vmem:[%s2893 + $0x318] sm:$0xff]
    %v2994 = vld [vmem:[%s2893 + $0x320] sm:$0xff]
    %v2995 = vld [vmem:[%s2893 + $0x328] sm:$0xff]
    %v2996 = vld [vmem:[%s2893 + $0x330] sm:$0xff]
    %v2997 = vld [vmem:[%s2893 + $0x338] sm:$0xff]
    %v2998 = vld [vmem:[%s2893 + $0x340] sm:$0xff]
    %v2999 = vld [vmem:[%s2893 + $0x348] sm:$0xff]
    %v3000 = vld [vmem:[%s2893 + $0x350] sm:$0xff]
    %v3001 = vld [vmem:[%s2893 + $0x358] sm:$0xff]
    %v3002 = vld [vmem:[%s2893 + $0x360] sm:$0xff]
    %v3003 = vld [vmem:[%s2893 + $0x368] sm:$0xff]
    %v3004 = vld [vmem:[%s2893 + $0x370] sm:$0xff]
    %v3005 = vld [vmem:[%s2893 + $0x378] sm:$0xff]
    %v3006 = vld [vmem:[%s2893 + $0x380] sm:$0xff]
    %v3007 = vld [vmem:[%s2893 + $0x388] sm:$0xff]
    %v3008 = vld [vmem:[%s2893 + $0x390] sm:$0xff]
    %v3009 = vld [vmem:[%s2893 + $0x398] sm:$0xff]
    %v3010 = vld [vmem:[%s2893 + $0x3a0] sm:$0xff]
    %v3011 = vld [vmem:[%s2893 + $0x3a8] sm:$0xff]
    %v3012 = vld [vmem:[%s2893 + $0x3b0] sm:$0xff]
    %v3013 = vld [vmem:[%s2893 + $0x3b8] sm:$0xff]
    %v3014 = vld [vmem:[%s2893 + $0x3c0] sm:$0xff]
    %v3015 = vld [vmem:[%s2893 + $0x3c8] sm:$0xff]
    %v3016 = vld [vmem:[%s2893 + $0x3d0] sm:$0xff]
    %v3017 = vld [vmem:[%s2893 + $0x3d8] sm:$0xff]
    %v3018 = vld [vmem:[%s2893 + $0x3e0] sm:$0xff]
    %v3019 = vld [vmem:[%s2893 + $0x3e8] sm:$0xff]
    %v3020 = vld [vmem:[%s2893 + $0x3f0] sm:$0xff]
    %v3021 = vld [vmem:[%s2893 + $0x3f8] sm:$0xff]
    %s3022 = scalar_lea.vmem [#allocation13], 3
    %v3023 = vld [vmem:[%s3022] ss:$8 sm:$0xf]
    %v3024 = vpack.c.bf16 %v2889, %v2885
    %v3025 = vpack.c.bf16 %v2890, %v2886
    %v3026 = vpack.c.bf16 %v2891, %v2887
    %v3027 = vpack.c.bf16 %v2892, %v2888
    %v3029 = vlaneseq
    %v3030 = vshrl.u32 %v3029, 7
    %v3031 = vsub.s32 0, %v3030
    %v3032 = vrot.slane %v3023, %v3031
    %v3033 = vlaneseq
    %v3034 = vshrl.u32 %v3033, 7
    %v3035 = vsub.s32 1, %v3034
    %v3036 = vrot.slane %v3023, %v3035
    %v3037 = vlaneseq
    %v3038 = vshrl.u32 %v3037, 7
    %v3039 = vsub.s32 2, %v3038
    %v3040 = vrot.slane %v3023, %v3039
    %v3041 = vlaneseq
    %v3042 = vshrl.u32 %v3041, 7
    %v3043 = vsub.s32 3, %v3042
    %v3044 = vrot.slane %v3023, %v3043
    %v3177 = vunpack.c.l.b16 %v2894
    %v3178 = vunpack.c.h.b16 %v2894
    %v3179 = vunpack.c.l.b16 %v2895
    %v3180 = vunpack.c.h.b16 %v2895
    %v3181 = vunpack.c.l.b16 %v2896
    %v3182 = vunpack.c.h.b16 %v2896
    %v3183 = vunpack.c.l.b16 %v2897
    %v3184 = vunpack.c.h.b16 %v2897
    %v3185 = vunpack.c.l.b16 %v2898
    %v3186 = vunpack.c.h.b16 %v2898
    %v3187 = vunpack.c.l.b16 %v2899
    %v3188 = vunpack.c.h.b16 %v2899
    %v3189 = vunpack.c.l.b16 %v2900
    %v3190 = vunpack.c.h.b16 %v2900
    %v3191 = vunpack.c.l.b16 %v2901
    %v3192 = vunpack.c.h.b16 %v2901
    %v3193 = vunpack.c.l.b16 %v2902
    %v3194 = vunpack.c.h.b16 %v2902
    %v3195 = vunpack.c.l.b16 %v2903
    %v3196 = vunpack.c.h.b16 %v2903
    %v3197 = vunpack.c.l.b16 %v2904
    %v3198 = vunpack.c.h.b16 %v2904
    %v3199 = vunpack.c.l.b16 %v2905
    %v3200 = vunpack.c.h.b16 %v2905
    %v3201 = vunpack.c.l.b16 %v2906
    %v3202 = vunpack.c.h.b16 %v2906
    %v3203 = vunpack.c.l.b16 %v2907
    %v3204 = vunpack.c.h.b16 %v2907
    %v3205 = vunpack.c.l.b16 %v2908
    %v3206 = vunpack.c.h.b16 %v2908
    %v3207 = vunpack.c.l.b16 %v2909
    %v3208 = vunpack.c.h.b16 %v2909
    %v3209 = vunpack.c.l.b16 %v2910
    %v3210 = vunpack.c.h.b16 %v2910
    %v3211 = vunpack.c.l.b16 %v2911
    %v3212 = vunpack.c.h.b16 %v2911
    %v3213 = vunpack.c.l.b16 %v2912
    %v3214 = vunpack.c.h.b16 %v2912
    %v3215 = vunpack.c.l.b16 %v2913
    %v3216 = vunpack.c.h.b16 %v2913
    %v3217 = vunpack.c.l.b16 %v2914
    %v3218 = vunpack.c.h.b16 %v2914
    %v3219 = vunpack.c.l.b16 %v2915
    %v3220 = vunpack.c.h.b16 %v2915
    %v3221 = vunpack.c.l.b16 %v2916
    %v3222 = vunpack.c.h.b16 %v2916
    %v3223 = vunpack.c.l.b16 %v2917
    %v3224 = vunpack.c.h.b16 %v2917
    %v3225 = vunpack.c.l.b16 %v2918
    %v3226 = vunpack.c.h.b16 %v2918
    %v3227 = vunpack.c.l.b16 %v2919
    %v3228 = vunpack.c.h.b16 %v2919
    %v3229 = vunpack.c.l.b16 %v2920
    %v3230 = vunpack.c.h.b16 %v2920
    %v3231 = vunpack.c.l.b16 %v2921
    %v3232 = vunpack.c.h.b16 %v2921
    %v3233 = vunpack.c.l.b16 %v2922
    %v3234 = vunpack.c.h.b16 %v2922
    %v3235 = vunpack.c.l.b16 %v2923
    %v3236 = vunpack.c.h.b16 %v2923
    %v3237 = vunpack.c.l.b16 %v2924
    %v3238 = vunpack.c.h.b16 %v2924
    %v3239 = vunpack.c.l.b16 %v2925
    %v3240 = vunpack.c.h.b16 %v2925
    %v3241 = vunpack.c.l.b16 %v2926
    %v3242 = vunpack.c.h.b16 %v2926
    %v3243 = vunpack.c.l.b16 %v2927
    %v3244 = vunpack.c.h.b16 %v2927
    %v3245 = vunpack.c.l.b16 %v2928
    %v3246 = vunpack.c.h.b16 %v2928
    %v3247 = vunpack.c.l.b16 %v2929
    %v3248 = vunpack.c.h.b16 %v2929
    %v3249 = vunpack.c.l.b16 %v2930
    %v3250 = vunpack.c.h.b16 %v2930
    %v3251 = vunpack.c.l.b16 %v2931
    %v3252 = vunpack.c.h.b16 %v2931
    %v3253 = vunpack.c.l.b16 %v2932
    %v3254 = vunpack.c.h.b16 %v2932
    %v3255 = vunpack.c.l.b16 %v2933
    %v3256 = vunpack.c.h.b16 %v2933
    %v3257 = vunpack.c.l.b16 %v2934
    %v3258 = vunpack.c.h.b16 %v2934
    %v3259 = vunpack.c.l.b16 %v2935
    %v3260 = vunpack.c.h.b16 %v2935
    %v3261 = vunpack.c.l.b16 %v2936
    %v3262 = vunpack.c.h.b16 %v2936
    %v3263 = vunpack.c.l.b16 %v2937
    %v3264 = vunpack.c.h.b16 %v2937
    %v3265 = vunpack.c.l.b16 %v2938
    %v3266 = vunpack.c.h.b16 %v2938
    %v3267 = vunpack.c.l.b16 %v2939
    %v3268 = vunpack.c.h.b16 %v2939
    %v3269 = vunpack.c.l.b16 %v2940
    %v3270 = vunpack.c.h.b16 %v2940
    %v3271 = vunpack.c.l.b16 %v2941
    %v3272 = vunpack.c.h.b16 %v2941
    %v3273 = vunpack.c.l.b16 %v2942
    %v3274 = vunpack.c.h.b16 %v2942
    %v3275 = vunpack.c.l.b16 %v2943
    %v3276 = vunpack.c.h.b16 %v2943
    %v3277 = vunpack.c.l.b16 %v2944
    %v3278 = vunpack.c.h.b16 %v2944
    %v3279 = vunpack.c.l.b16 %v2945
    %v3280 = vunpack.c.h.b16 %v2945
    %v3281 = vunpack.c.l.b16 %v2946
    %v3282 = vunpack.c.h.b16 %v2946
    %v3283 = vunpack.c.l.b16 %v2947
    %v3284 = vunpack.c.h.b16 %v2947
    %v3285 = vunpack.c.l.b16 %v2948
    %v3286 = vunpack.c.h.b16 %v2948
    %v3287 = vunpack.c.l.b16 %v2949
    %v3288 = vunpack.c.h.b16 %v2949
    %v3289 = vunpack.c.l.b16 %v2950
    %v3290 = vunpack.c.h.b16 %v2950
    %v3291 = vunpack.c.l.b16 %v2951
    %v3292 = vunpack.c.h.b16 %v2951
    %v3293 = vunpack.c.l.b16 %v2952
    %v3294 = vunpack.c.h.b16 %v2952
    %v3295 = vunpack.c.l.b16 %v2953
    %v3296 = vunpack.c.h.b16 %v2953
    %v3297 = vunpack.c.l.b16 %v2954
    %v3298 = vunpack.c.h.b16 %v2954
    %v3299 = vunpack.c.l.b16 %v2955
    %v3300 = vunpack.c.h.b16 %v2955
    %v3301 = vunpack.c.l.b16 %v2956
    %v3302 = vunpack.c.h.b16 %v2956
    %v3303 = vunpack.c.l.b16 %v2957
    %v3304 = vunpack.c.h.b16 %v2957
    %v3305 = vunpack.c.l.b16 %v2958
    %v3306 = vunpack.c.h.b16 %v2958
    %v3307 = vunpack.c.l.b16 %v2959
    %v3308 = vunpack.c.h.b16 %v2959
    %v3309 = vunpack.c.l.b16 %v2960
    %v3310 = vunpack.c.h.b16 %v2960
    %v3311 = vunpack.c.l.b16 %v2961
    %v3312 = vunpack.c.h.b16 %v2961
    %v3313 = vunpack.c.l.b16 %v2962
    %v3314 = vunpack.c.h.b16 %v2962
    %v3315 = vunpack.c.l.b16 %v2963
    %v3316 = vunpack.c.h.b16 %v2963
    %v3317 = vunpack.c.l.b16 %v2964
    %v3318 = vunpack.c.h.b16 %v2964
    %v3319 = vunpack.c.l.b16 %v2965
    %v3320 = vunpack.c.h.b16 %v2965
    %v3321 = vunpack.c.l.b16 %v2966
    %v3322 = vunpack.c.h.b16 %v2966
    %v3323 = vunpack.c.l.b16 %v2967
    %v3324 = vunpack.c.h.b16 %v2967
    %v3325 = vunpack.c.l.b16 %v2968
    %v3326 = vunpack.c.h.b16 %v2968
    %v3327 = vunpack.c.l.b16 %v2969
    %v3328 = vunpack.c.h.b16 %v2969
    %v3329 = vunpack.c.l.b16 %v2970
    %v3330 = vunpack.c.h.b16 %v2970
    %v3331 = vunpack.c.l.b16 %v2971
    %v3332 = vunpack.c.h.b16 %v2971
    %v3333 = vunpack.c.l.b16 %v2972
    %v3334 = vunpack.c.h.b16 %v2972
    %v3335 = vunpack.c.l.b16 %v2973
    %v3336 = vunpack.c.h.b16 %v2973
    %v3337 = vunpack.c.l.b16 %v2974
    %v3338 = vunpack.c.h.b16 %v2974
    %v3339 = vunpack.c.l.b16 %v2975
    %v3340 = vunpack.c.h.b16 %v2975
    %v3341 = vunpack.c.l.b16 %v2976
    %v3342 = vunpack.c.h.b16 %v2976
    %v3343 = vunpack.c.l.b16 %v2977
    %v3344 = vunpack.c.h.b16 %v2977
    %v3345 = vunpack.c.l.b16 %v2978
    %v3346 = vunpack.c.h.b16 %v2978
    %v3347 = vunpack.c.l.b16 %v2979
    %v3348 = vunpack.c.h.b16 %v2979
    %v3349 = vunpack.c.l.b16 %v2980
    %v3350 = vunpack.c.h.b16 %v2980
    %v3351 = vunpack.c.l.b16 %v2981
    %v3352 = vunpack.c.h.b16 %v2981
    %v3353 = vunpack.c.l.b16 %v2982
    %v3354 = vunpack.c.h.b16 %v2982
    %v3355 = vunpack.c.l.b16 %v2983
    %v3356 = vunpack.c.h.b16 %v2983
    %v3357 = vunpack.c.l.b16 %v2984
    %v3358 = vunpack.c.h.b16 %v2984
    %v3359 = vunpack.c.l.b16 %v2985
    %v3360 = vunpack.c.h.b16 %v2985
    %v3361 = vunpack.c.l.b16 %v2986
    %v3362 = vunpack.c.h.b16 %v2986
    %v3363 = vunpack.c.l.b16 %v2987
    %v3364 = vunpack.c.h.b16 %v2987
    %v3365 = vunpack.c.l.b16 %v2988
    %v3366 = vunpack.c.h.b16 %v2988
    %v3367 = vunpack.c.l.b16 %v2989
    %v3368 = vunpack.c.h.b16 %v2989
    %v3369 = vunpack.c.l.b16 %v2990
    %v3370 = vunpack.c.h.b16 %v2990
    %v3371 = vunpack.c.l.b16 %v2991
    %v3372 = vunpack.c.h.b16 %v2991
    %v3373 = vunpack.c.l.b16 %v2992
    %v3374 = vunpack.c.h.b16 %v2992
    %v3375 = vunpack.c.l.b16 %v2993
    %v3376 = vunpack.c.h.b16 %v2993
    %v3377 = vunpack.c.l.b16 %v2994
    %v3378 = vunpack.c.h.b16 %v2994
    %v3379 = vunpack.c.l.b16 %v2995
    %v3380 = vunpack.c.h.b16 %v2995
    %v3381 = vunpack.c.l.b16 %v2996
    %v3382 = vunpack.c.h.b16 %v2996
    %v3383 = vunpack.c.l.b16 %v2997
    %v3384 = vunpack.c.h.b16 %v2997
    %v3385 = vunpack.c.l.b16 %v2998
    %v3386 = vunpack.c.h.b16 %v2998
    %v3387 = vunpack.c.l.b16 %v2999
    %v3388 = vunpack.c.h.b16 %v2999
    %v3389 = vunpack.c.l.b16 %v3000
    %v3390 = vunpack.c.h.b16 %v3000
    %v3391 = vunpack.c.l.b16 %v3001
    %v3392 = vunpack.c.h.b16 %v3001
    %v3393 = vunpack.c.l.b16 %v3002
    %v3394 = vunpack.c.h.b16 %v3002
    %v3395 = vunpack.c.l.b16 %v3003
    %v3396 = vunpack.c.h.b16 %v3003
    %v3397 = vunpack.c.l.b16 %v3004
    %v3398 = vunpack.c.h.b16 %v3004
    %v3399 = vunpack.c.l.b16 %v3005
    %v3400 = vunpack.c.h.b16 %v3005
    %v3401 = vunpack.c.l.b16 %v3006
    %v3402 = vunpack.c.h.b16 %v3006
    %v3403 = vunpack.c.l.b16 %v3007
    %v3404 = vunpack.c.h.b16 %v3007
    %v3405 = vunpack.c.l.b16 %v3008
    %v3406 = vunpack.c.h.b16 %v3008
    %v3407 = vunpack.c.l.b16 %v3009
    %v3408 = vunpack.c.h.b16 %v3009
    %v3409 = vunpack.c.l.b16 %v3010
    %v3410 = vunpack.c.h.b16 %v3010
    %v3411 = vunpack.c.l.b16 %v3011
    %v3412 = vunpack.c.h.b16 %v3011
    %v3413 = vunpack.c.l.b16 %v3012
    %v3414 = vunpack.c.h.b16 %v3012
    %v3415 = vunpack.c.l.b16 %v3013
    %v3416 = vunpack.c.h.b16 %v3013
    %v3417 = vunpack.c.l.b16 %v3014
    %v3418 = vunpack.c.h.b16 %v3014
    %v3419 = vunpack.c.l.b16 %v3015
    %v3420 = vunpack.c.h.b16 %v3015
    %v3421 = vunpack.c.l.b16 %v3016
    %v3422 = vunpack.c.h.b16 %v3016
    %v3423 = vunpack.c.l.b16 %v3017
    %v3424 = vunpack.c.h.b16 %v3017
    %v3425 = vunpack.c.l.b16 %v3018
    %v3426 = vunpack.c.h.b16 %v3018
    %v3427 = vunpack.c.l.b16 %v3019
    %v3428 = vunpack.c.h.b16 %v3019
    %v3429 = vunpack.c.l.b16 %v3020
    %v3430 = vunpack.c.h.b16 %v3020
    %v3431 = vunpack.c.l.b16 %v3021
    %v3432 = vunpack.c.h.b16 %v3021
    %v3433 = vpack.c.b16 %v3181, %v3177
    %v3434 = vpack.c.b16 %v3182, %v3178
    %v3435 = vpack.c.b16 %v3183, %v3179
    %v3436 = vpack.c.b16 %v3184, %v3180
    %v3437 = vpack.c.b16 %v3189, %v3185
    %v3438 = vpack.c.b16 %v3190, %v3186
    %v3439 = vpack.c.b16 %v3191, %v3187
    %v3440 = vpack.c.b16 %v3192, %v3188
    %v3441 = vpack.c.b16 %v3197, %v3193
    %v3442 = vpack.c.b16 %v3198, %v3194
    %v3443 = vpack.c.b16 %v3199, %v3195
    %v3444 = vpack.c.b16 %v3200, %v3196
    %v3445 = vpack.c.b16 %v3205, %v3201
    %v3446 = vpack.c.b16 %v3206, %v3202
    %v3447 = vpack.c.b16 %v3207, %v3203
    %v3448 = vpack.c.b16 %v3208, %v3204
    %v3449 = vpack.c.b16 %v3213, %v3209
    %v3450 = vpack.c.b16 %v3214, %v3210
    %v3451 = vpack.c.b16 %v3215, %v3211
    %v3452 = vpack.c.b16 %v3216, %v3212
    %v3453 = vpack.c.b16 %v3221, %v3217
    %v3454 = vpack.c.b16 %v3222, %v3218
    %v3455 = vpack.c.b16 %v3223, %v3219
    %v3456 = vpack.c.b16 %v3224, %v3220
    %v3457 = vpack.c.b16 %v3229, %v3225
    %v3458 = vpack.c.b16 %v3230, %v3226
    %v3459 = vpack.c.b16 %v3231, %v3227
    %v3460 = vpack.c.b16 %v3232, %v3228
    %v3461 = vpack.c.b16 %v3237, %v3233
    %v3462 = vpack.c.b16 %v3238, %v3234
    %v3463 = vpack.c.b16 %v3239, %v3235
    %v3464 = vpack.c.b16 %v3240, %v3236
    %v3465 = vpack.c.b16 %v3245, %v3241
    %v3466 = vpack.c.b16 %v3246, %v3242
    %v3467 = vpack.c.b16 %v3247, %v3243
    %v3468 = vpack.c.b16 %v3248, %v3244
    %v3469 = vpack.c.b16 %v3253, %v3249
    %v3470 = vpack.c.b16 %v3254, %v3250
    %v3471 = vpack.c.b16 %v3255, %v3251
    %v3472 = vpack.c.b16 %v3256, %v3252
    %v3473 = vpack.c.b16 %v3261, %v3257
    %v3474 = vpack.c.b16 %v3262, %v3258
    %v3475 = vpack.c.b16 %v3263, %v3259
    %v3476 = vpack.c.b16 %v3264, %v3260
    %v3477 = vpack.c.b16 %v3269, %v3265
    %v3478 = vpack.c.b16 %v3270, %v3266
    %v3479 = vpack.c.b16 %v3271, %v3267
    %v3480 = vpack.c.b16 %v3272, %v3268
    %v3481 = vpack.c.b16 %v3277, %v3273
    %v3482 = vpack.c.b16 %v3278, %v3274
    %v3483 = vpack.c.b16 %v3279, %v3275
    %v3484 = vpack.c.b16 %v3280, %v3276
    %v3485 = vpack.c.b16 %v3285, %v3281
    %v3486 = vpack.c.b16 %v3286, %v3282
    %v3487 = vpack.c.b16 %v3287, %v3283
    %v3488 = vpack.c.b16 %v3288, %v3284
    %v3489 = vpack.c.b16 %v3293, %v3289
    %v3490 = vpack.c.b16 %v3294, %v3290
    %v3491 = vpack.c.b16 %v3295, %v3291
    %v3492 = vpack.c.b16 %v3296, %v3292
    %v3493 = vpack.c.b16 %v3301, %v3297
    %v3494 = vpack.c.b16 %v3302, %v3298
    %v3495 = vpack.c.b16 %v3303, %v3299
    %v3496 = vpack.c.b16 %v3304, %v3300
    %v3497 = vpack.c.b16 %v3309, %v3305
    %v3498 = vpack.c.b16 %v3310, %v3306
    %v3499 = vpack.c.b16 %v3311, %v3307
    %v3500 = vpack.c.b16 %v3312, %v3308
    %v3501 = vpack.c.b16 %v3317, %v3313
    %v3502 = vpack.c.b16 %v3318, %v3314
    %v3503 = vpack.c.b16 %v3319, %v3315
    %v3504 = vpack.c.b16 %v3320, %v3316
    %v3505 = vpack.c.b16 %v3325, %v3321
    %v3506 = vpack.c.b16 %v3326, %v3322
    %v3507 = vpack.c.b16 %v3327, %v3323
    %v3508 = vpack.c.b16 %v3328, %v3324
    %v3509 = vpack.c.b16 %v3333, %v3329
    %v3510 = vpack.c.b16 %v3334, %v3330
    %v3511 = vpack.c.b16 %v3335, %v3331
    %v3512 = vpack.c.b16 %v3336, %v3332
    %v3513 = vpack.c.b16 %v3341, %v3337
    %v3514 = vpack.c.b16 %v3342, %v3338
    %v3515 = vpack.c.b16 %v3343, %v3339
    %v3516 = vpack.c.b16 %v3344, %v3340
    %v3517 = vpack.c.b16 %v3349, %v3345
    %v3518 = vpack.c.b16 %v3350, %v3346
    %v3519 = vpack.c.b16 %v3351, %v3347
    %v3520 = vpack.c.b16 %v3352, %v3348
    %v3521 = vpack.c.b16 %v3357, %v3353
    %v3522 = vpack.c.b16 %v3358, %v3354
    %v3523 = vpack.c.b16 %v3359, %v3355
    %v3524 = vpack.c.b16 %v3360, %v3356
    %v3525 = vpack.c.b16 %v3365, %v3361
    %v3526 = vpack.c.b16 %v3366, %v3362
    %v3527 = vpack.c.b16 %v3367, %v3363
    %v3528 = vpack.c.b16 %v3368, %v3364
    %v3529 = vpack.c.b16 %v3373, %v3369
    %v3530 = vpack.c.b16 %v3374, %v3370
    %v3531 = vpack.c.b16 %v3375, %v3371
    %v3532 = vpack.c.b16 %v3376, %v3372
    %v3533 = vpack.c.b16 %v3381, %v3377
    %v3534 = vpack.c.b16 %v3382, %v3378
    %v3535 = vpack.c.b16 %v3383, %v3379
    %v3536 = vpack.c.b16 %v3384, %v3380
    %v3537 = vpack.c.b16 %v3389, %v3385
    %v3538 = vpack.c.b16 %v3390, %v3386
    %v3539 = vpack.c.b16 %v3391, %v3387
    %v3540 = vpack.c.b16 %v3392, %v3388
    %v3541 = vpack.c.b16 %v3397, %v3393
    %v3542 = vpack.c.b16 %v3398, %v3394
    %v3543 = vpack.c.b16 %v3399, %v3395
    %v3544 = vpack.c.b16 %v3400, %v3396
    %v3545 = vpack.c.b16 %v3405, %v3401
    %v3546 = vpack.c.b16 %v3406, %v3402
    %v3547 = vpack.c.b16 %v3407, %v3403
    %v3548 = vpack.c.b16 %v3408, %v3404
    %v3549 = vpack.c.b16 %v3413, %v3409
    %v3550 = vpack.c.b16 %v3414, %v3410
    %v3551 = vpack.c.b16 %v3415, %v3411
    %v3552 = vpack.c.b16 %v3416, %v3412
    %v3553 = vpack.c.b16 %v3421, %v3417
    %v3554 = vpack.c.b16 %v3422, %v3418
    %v3555 = vpack.c.b16 %v3423, %v3419
    %v3556 = vpack.c.b16 %v3424, %v3420
    %v3557 = vpack.c.b16 %v3429, %v3425
    %v3558 = vpack.c.b16 %v3430, %v3426
    %v3559 = vpack.c.b16 %v3431, %v3427
    %v3560 = vpack.c.b16 %v3432, %v3428
    %3689 = vmatprep.subr.bf16.mxu0 %v3462
    %3690 = vmatpush1.bf16.msra.mxu0 %v3461
    %3691 = vmatprep.subr.bf16.mxu0 %v3458
    %3692 = vmatpush1.bf16.msra.mxu0 %v3457
    %3693 = vmatprep.subr.bf16.mxu0 %v3454
    %3694 = vmatpush1.bf16.msra.mxu0 %v3453
    %3695 = vmatprep.subr.bf16.mxu0 %v3450
    %3696 = vmatpush1.bf16.msra.mxu0 %v3449
    %3697 = vmatprep.subr.bf16.mxu0 %v3446
    %3698 = vmatpush1.bf16.msra.mxu0 %v3445
    %3699 = vmatprep.subr.bf16.mxu0 %v3442
    %3700 = vmatpush1.bf16.msra.mxu0 %v3441
    %3701 = vmatprep.subr.bf16.mxu0 %v3438
    %3702 = vmatpush1.bf16.msra.mxu0 %v3437
    %3703 = vmatprep.subr.bf16.mxu0 %v3434
    %3704 = vmatpush1.bf16.msra.mxu0 %v3433
    %3705 = vmatprep.subr.bf16.mxu0 %v3494
    %3706 = vmatpush2.bf16.msra.mxu0 %v3493
    %3707 = vmatprep.subr.bf16.mxu0 %v3490
    %3708 = vmatpush2.bf16.msra.mxu0 %v3489
    %3709 = vmatprep.subr.bf16.mxu0 %v3486
    %3710 = vmatpush2.bf16.msra.mxu0 %v3485
    %3711 = vmatprep.subr.bf16.mxu0 %v3482
    %3712 = vmatpush2.bf16.msra.mxu0 %v3481
    %3713 = vmatprep.subr.bf16.mxu0 %v3478
    %3714 = vmatpush2.bf16.msra.mxu0 %v3477
    %3715 = vmatprep.subr.bf16.mxu0 %v3474
    %3716 = vmatpush2.bf16.msra.mxu0 %v3473
    %3717 = vmatprep.subr.bf16.mxu0 %v3470
    %3718 = vmatpush2.bf16.msra.mxu0 %v3469
    %3719 = vmatprep.subr.bf16.mxu0 %v3466
    %3720 = vmatpush2.bf16.msra.mxu0 %v3465
    %3721 = vmatprep.mubr.bf16.mxu0 %v3025
    %3722 = vmatmul.mubr.bf16.gmra.mxu0 %v3024
    %v3723 = vpop.f32.mrf.mxu0
    %v3724 = vadd.f32 %v3032, %v3723
    %v3725 = vpop.f32.mrf.mxu0
    %v3726 = vadd.f32 %v3036, %v3725
    %v3727 = vpop.f32.mrf.mxu0
    %v3728 = vadd.f32 %v3032, %v3727
    %v3729 = vpop.f32.mrf.mxu0
    %v3730 = vadd.f32 %v3036, %v3729
    %3731 = vdwg.mxu0
    %3732 = vmatprep.subr.bf16.mxu0 %v3526
    %3733 = vmatpush1.bf16.msra.mxu0 %v3525
    %3734 = vmatprep.subr.bf16.mxu0 %v3522
    %3735 = vmatpush1.bf16.msra.mxu0 %v3521
    %3736 = vmatprep.subr.bf16.mxu0 %v3518
    %3737 = vmatpush1.bf16.msra.mxu0 %v3517
    %3738 = vmatprep.subr.bf16.mxu0 %v3514
    %3739 = vmatpush1.bf16.msra.mxu0 %v3513
    %3740 = vmatprep.subr.bf16.mxu0 %v3510
    %3741 = vmatpush1.bf16.msra.mxu0 %v3509
    %3742 = vmatprep.subr.bf16.mxu0 %v3506
    %3743 = vmatpush1.bf16.msra.mxu0 %v3505
    %3744 = vmatprep.subr.bf16.mxu0 %v3502
    %3745 = vmatpush1.bf16.msra.mxu0 %v3501
    %3746 = vmatprep.subr.bf16.mxu0 %v3498
    %3747 = vmatpush1.bf16.msra.mxu0 %v3497
    %3748 = vmatprep.subr.bf16.mxu0 %v3558
    %3749 = vmatpush2.bf16.msra.mxu0 %v3557
    %3750 = vmatprep.subr.bf16.mxu0 %v3554
    %3751 = vmatpush2.bf16.msra.mxu0 %v3553
    %3752 = vmatprep.subr.bf16.mxu0 %v3550
    %3753 = vmatpush2.bf16.msra.mxu0 %v3549
    %3754 = vmatprep.subr.bf16.mxu0 %v3546
    %3755 = vmatpush2.bf16.msra.mxu0 %v3545
    %3756 = vmatprep.subr.bf16.mxu0 %v3542
    %3757 = vmatpush2.bf16.msra.mxu0 %v3541
    %3758 = vmatprep.subr.bf16.mxu0 %v3538
    %3759 = vmatpush2.bf16.msra.mxu0 %v3537
    %3760 = vmatprep.subr.bf16.mxu0 %v3534
    %3761 = vmatpush2.bf16.msra.mxu0 %v3533
    %3762 = vmatprep.subr.bf16.mxu0 %v3530
    %3763 = vmatpush2.bf16.msra.mxu0 %v3529
    %3764 = vmatprep.mubr.bf16.mxu0 %v3027
    %3765 = vmatmul.mubr.bf16.gmra.mxu0 %v3026
    %v3766 = vpop.f32.mrf.mxu0
    %v3767 = vadd.f32 %v3724, %v3766
    %v3768 = vpop.f32.mrf.mxu0
    %v3769 = vadd.f32 %v3726, %v3768
    %v3770 = vpop.f32.mrf.mxu0
    %v3771 = vadd.f32 %v3728, %v3770
    %v3772 = vpop.f32.mrf.mxu0
    %v3773 = vadd.f32 %v3730, %v3772
    %3774 = vdwg.mxu0
    %3775 = vmatprep.subr.bf16.mxu0 %v3464
    %3776 = vmatpush1.bf16.msra.mxu0 %v3463
    %3777 = vmatprep.subr.bf16.mxu0 %v3460
    %3778 = vmatpush1.bf16.msra.mxu0 %v3459
    %3779 = vmatprep.subr.bf16.mxu0 %v3456
    %3780 = vmatpush1.bf16.msra.mxu0 %v3455
    %3781 = vmatprep.subr.bf16.mxu0 %v3452
    %3782 = vmatpush1.bf16.msra.mxu0 %v3451
    %3783 = vmatprep.subr.bf16.mxu0 %v3448
    %3784 = vmatpush1.bf16.msra.mxu0 %v3447
    %3785 = vmatprep.subr.bf16.mxu0 %v3444
    %3786 = vmatpush1.bf16.msra.mxu0 %v3443
    %3787 = vmatprep.subr.bf16.mxu0 %v3440
    %3788 = vmatpush1.bf16.msra.mxu0 %v3439
    %3789 = vmatprep.subr.bf16.mxu0 %v3436
    %3790 = vmatpush1.bf16.msra.mxu0 %v3435
    %3791 = vmatprep.subr.bf16.mxu0 %v3496
    %3792 = vmatpush2.bf16.msra.mxu0 %v3495
    %3793 = vmatprep.subr.bf16.mxu0 %v3492
    %3794 = vmatpush2.bf16.msra.mxu0 %v3491
    %3795 = vmatprep.subr.bf16.mxu0 %v3488
    %3796 = vmatpush2.bf16.msra.mxu0 %v3487
    %3797 = vmatprep.subr.bf16.mxu0 %v3484
    %3798 = vmatpush2.bf16.msra.mxu0 %v3483
    %3799 = vmatprep.subr.bf16.mxu0 %v3480
    %3800 = vmatpush2.bf16.msra.mxu0 %v3479
    %3801 = vmatprep.subr.bf16.mxu0 %v3476
    %3802 = vmatpush2.bf16.msra.mxu0 %v3475
    %3803 = vmatprep.subr.bf16.mxu0 %v3472
    %3804 = vmatpush2.bf16.msra.mxu0 %v3471
    %3805 = vmatprep.subr.bf16.mxu0 %v3468
    %3806 = vmatpush2.bf16.msra.mxu0 %v3467
    %3807 = vmatprep.mubr.bf16.mxu0 %v3025
    %3808 = vmatmul.mubr.bf16.gmra.mxu0 %v3024
    %v3809 = vpop.f32.mrf.mxu0
    %v3810 = vadd.f32 %v3040, %v3809
    %v3811 = vpop.f32.mrf.mxu0
    %v3812 = vadd.f32 %v3044, %v3811
    %v3813 = vpop.f32.mrf.mxu0
    %v3814 = vadd.f32 %v3040, %v3813
    %v3815 = vpop.f32.mrf.mxu0
    %v3816 = vadd.f32 %v3044, %v3815
    %3817 = vdwg.mxu0
    %3818 = vmatprep.subr.bf16.mxu0 %v3528
    %3819 = vmatpush1.bf16.msra.mxu0 %v3527
    %3820 = vmatprep.subr.bf16.mxu0 %v3524
    %3821 = vmatpush1.bf16.msra.mxu0 %v3523
    %3822 = vmatprep.subr.bf16.mxu0 %v3520
    %3823 = vmatpush1.bf16.msra.mxu0 %v3519
    %3824 = vmatprep.subr.bf16.mxu0 %v3516
    %3825 = vmatpush1.bf16.msra.mxu0 %v3515
    %3826 = vmatprep.subr.bf16.mxu0 %v3512
    %3827 = vmatpush1.bf16.msra.mxu0 %v3511
    %3828 = vmatprep.subr.bf16.mxu0 %v3508
    %3829 = vmatpush1.bf16.msra.mxu0 %v3507
    %3830 = vmatprep.subr.bf16.mxu0 %v3504
    %3831 = vmatpush1.bf16.msra.mxu0 %v3503
    %3832 = vmatprep.subr.bf16.mxu0 %v3500
    %3833 = vmatpush1.bf16.msra.mxu0 %v3499
    %3834 = vmatprep.subr.bf16.mxu0 %v3560
    %3835 = vmatpush2.bf16.msra.mxu0 %v3559
    %3836 = vmatprep.subr.bf16.mxu0 %v3556
    %3837 = vmatpush2.bf16.msra.mxu0 %v3555
    %3838 = vmatprep.subr.bf16.mxu0 %v3552
    %3839 = vmatpush2.bf16.msra.mxu0 %v3551
    %3840 = vmatprep.subr.bf16.mxu0 %v3548
    %3841 = vmatpush2.bf16.msra.mxu0 %v3547
    %3842 = vmatprep.subr.bf16.mxu0 %v3544
    %3843 = vmatpush2.bf16.msra.mxu0 %v3543
    %3844 = vmatprep.subr.bf16.mxu0 %v3540
    %3845 = vmatpush2.bf16.msra.mxu0 %v3539
    %3846 = vmatprep.subr.bf16.mxu0 %v3536
    %3847 = vmatpush2.bf16.msra.mxu0 %v3535
    %3848 = vmatprep.subr.bf16.mxu0 %v3532
    %3849 = vmatpush2.bf16.msra.mxu0 %v3531
    %3850 = vmatprep.mubr.bf16.mxu0 %v3027
    %3851 = vmatmul.mubr.bf16.gmra.mxu0 %v3026
    %v3852 = vpop.f32.mrf.mxu0
    %v3853 = vadd.f32 %v3810, %v3852
    %v3854 = vpop.f32.mrf.mxu0
    %v3855 = vadd.f32 %v3812, %v3854
    %v3856 = vpop.f32.mrf.mxu0
    %v3857 = vadd.f32 %v3814, %v3856
    %v3858 = vpop.f32.mrf.mxu0
    %v3859 = vadd.f32 %v3816, %v3858
    %3860 = vdwg.mxu0
    %vm3861 = vcmp.ge.f32.partialorder %v3767, 0.0
    %vm3862 = vcmp.ge.f32.partialorder %v3769, 0.0
    %vm3863 = vcmp.ge.f32.partialorder %v3853, 0.0
    %vm3864 = vcmp.ge.f32.partialorder %v3855, 0.0
    %vm3865 = vcmp.ge.f32.partialorder %v3771, 0.0
    %vm3866 = vcmp.ge.f32.partialorder %v3773, 0.0
    %vm3867 = vcmp.ge.f32.partialorder %v3857, 0.0
    %vm3868 = vcmp.ge.f32.partialorder %v3859, 0.0
    %v3869 = vmul.f32 %v3767, 0.01
    %v3870 = vmul.f32 %v3769, 0.01
    %v3871 = vmul.f32 %v3853, 0.01
    %v3872 = vmul.f32 %v3855, 0.01
    %v3873 = vmul.f32 %v3771, 0.01
    %v3874 = vmul.f32 %v3773, 0.01
    %v3875 = vmul.f32 %v3857, 0.01
    %v3876 = vmul.f32 %v3859, 0.01
    %v3877 = vsel %vm3861, %v3767, %v3869
    %v3878 = vsel %vm3862, %v3769, %v3870
    %v3879 = vsel %vm3863, %v3853, %v3871
    %v3880 = vsel %vm3864, %v3855, %v3872
    %v3881 = vsel %vm3865, %v3771, %v3873
    %v3882 = vsel %vm3866, %v3773, %v3874
    %v3883 = vsel %vm3867, %v3857, %v3875
    %v3884 = vsel %vm3868, %v3859, %v3876
    %v3885 = vadd.f32 %v3877, %v2885
    %v3886 = vadd.f32 %v3878, %v2886
    %v3887 = vadd.f32 %v3879, %v2887
    %v3888 = vadd.f32 %v3880, %v2888
    %v3889 = vadd.f32 %v3881, %v2889
    %v3890 = vadd.f32 %v3882, %v2890
    %v3891 = vadd.f32 %v3883, %v2891
    %v3892 = vadd.f32 %v3884, %v2892
    %s3893 = scalar_lea.vmem [#allocation11], 3072
    %v3894 = vld [vmem:[%s3893] sm:$0xff]
    %v3895 = vld [vmem:[%s3893 + $0x8] sm:$0xff]
    %v3896 = vld [vmem:[%s3893 + $0x10] sm:$0xff]
    %v3897 = vld [vmem:[%s3893 + $0x18] sm:$0xff]
    %v3898 = vld [vmem:[%s3893 + $0x20] sm:$0xff]
    %v3899 = vld [vmem:[%s3893 + $0x28] sm:$0xff]
    %v3900 = vld [vmem:[%s3893 + $0x30] sm:$0xff]
    %v3901 = vld [vmem:[%s3893 + $0x38] sm:$0xff]
    %v3902 = vld [vmem:[%s3893 + $0x40] sm:$0xff]
    %v3903 = vld [vmem:[%s3893 + $0x48] sm:$0xff]
    %v3904 = vld [vmem:[%s3893 + $0x50] sm:$0xff]
    %v3905 = vld [vmem:[%s3893 + $0x58] sm:$0xff]
    %v3906 = vld [vmem:[%s3893 + $0x60] sm:$0xff]
    %v3907 = vld [vmem:[%s3893 + $0x68] sm:$0xff]
    %v3908 = vld [vmem:[%s3893 + $0x70] sm:$0xff]
    %v3909 = vld [vmem:[%s3893 + $0x78] sm:$0xff]
    %v3910 = vld [vmem:[%s3893 + $0x80] sm:$0xff]
    %v3911 = vld [vmem:[%s3893 + $0x88] sm:$0xff]
    %v3912 = vld [vmem:[%s3893 + $0x90] sm:$0xff]
    %v3913 = vld [vmem:[%s3893 + $0x98] sm:$0xff]
    %v3914 = vld [vmem:[%s3893 + $0xa0] sm:$0xff]
    %v3915 = vld [vmem:[%s3893 + $0xa8] sm:$0xff]
    %v3916 = vld [vmem:[%s3893 + $0xb0] sm:$0xff]
    %v3917 = vld [vmem:[%s3893 + $0xb8] sm:$0xff]
    %v3918 = vld [vmem:[%s3893 + $0xc0] sm:$0xff]
    %v3919 = vld [vmem:[%s3893 + $0xc8] sm:$0xff]
    %v3920 = vld [vmem:[%s3893 + $0xd0] sm:$0xff]
    %v3921 = vld [vmem:[%s3893 + $0xd8] sm:$0xff]
    %v3922 = vld [vmem:[%s3893 + $0xe0] sm:$0xff]
    %v3923 = vld [vmem:[%s3893 + $0xe8] sm:$0xff]
    %v3924 = vld [vmem:[%s3893 + $0xf0] sm:$0xff]
    %v3925 = vld [vmem:[%s3893 + $0xf8] sm:$0xff]
    %v3926 = vld [vmem:[%s3893 + $0x100] sm:$0xff]
    %v3927 = vld [vmem:[%s3893 + $0x108] sm:$0xff]
    %v3928 = vld [vmem:[%s3893 + $0x110] sm:$0xff]
    %v3929 = vld [vmem:[%s3893 + $0x118] sm:$0xff]
    %v3930 = vld [vmem:[%s3893 + $0x120] sm:$0xff]
    %v3931 = vld [vmem:[%s3893 + $0x128] sm:$0xff]
    %v3932 = vld [vmem:[%s3893 + $0x130] sm:$0xff]
    %v3933 = vld [vmem:[%s3893 + $0x138] sm:$0xff]
    %v3934 = vld [vmem:[%s3893 + $0x140] sm:$0xff]
    %v3935 = vld [vmem:[%s3893 + $0x148] sm:$0xff]
    %v3936 = vld [vmem:[%s3893 + $0x150] sm:$0xff]
    %v3937 = vld [vmem:[%s3893 + $0x158] sm:$0xff]
    %v3938 = vld [vmem:[%s3893 + $0x160] sm:$0xff]
    %v3939 = vld [vmem:[%s3893 + $0x168] sm:$0xff]
    %v3940 = vld [vmem:[%s3893 + $0x170] sm:$0xff]
    %v3941 = vld [vmem:[%s3893 + $0x178] sm:$0xff]
    %v3942 = vld [vmem:[%s3893 + $0x180] sm:$0xff]
    %v3943 = vld [vmem:[%s3893 + $0x188] sm:$0xff]
    %v3944 = vld [vmem:[%s3893 + $0x190] sm:$0xff]
    %v3945 = vld [vmem:[%s3893 + $0x198] sm:$0xff]
    %v3946 = vld [vmem:[%s3893 + $0x1a0] sm:$0xff]
    %v3947 = vld [vmem:[%s3893 + $0x1a8] sm:$0xff]
    %v3948 = vld [vmem:[%s3893 + $0x1b0] sm:$0xff]
    %v3949 = vld [vmem:[%s3893 + $0x1b8] sm:$0xff]
    %v3950 = vld [vmem:[%s3893 + $0x1c0] sm:$0xff]
    %v3951 = vld [vmem:[%s3893 + $0x1c8] sm:$0xff]
    %v3952 = vld [vmem:[%s3893 + $0x1d0] sm:$0xff]
    %v3953 = vld [vmem:[%s3893 + $0x1d8] sm:$0xff]
    %v3954 = vld [vmem:[%s3893 + $0x1e0] sm:$0xff]
    %v3955 = vld [vmem:[%s3893 + $0x1e8] sm:$0xff]
    %v3956 = vld [vmem:[%s3893 + $0x1f0] sm:$0xff]
    %v3957 = vld [vmem:[%s3893 + $0x1f8] sm:$0xff]
    %v3958 = vld [vmem:[%s3893 + $0x200] sm:$0xff]
    %v3959 = vld [vmem:[%s3893 + $0x208] sm:$0xff]
    %v3960 = vld [vmem:[%s3893 + $0x210] sm:$0xff]
    %v3961 = vld [vmem:[%s3893 + $0x218] sm:$0xff]
    %v3962 = vld [vmem:[%s3893 + $0x220] sm:$0xff]
    %v3963 = vld [vmem:[%s3893 + $0x228] sm:$0xff]
    %v3964 = vld [vmem:[%s3893 + $0x230] sm:$0xff]
    %v3965 = vld [vmem:[%s3893 + $0x238] sm:$0xff]
    %v3966 = vld [vmem:[%s3893 + $0x240] sm:$0xff]
    %v3967 = vld [vmem:[%s3893 + $0x248] sm:$0xff]
    %v3968 = vld [vmem:[%s3893 + $0x250] sm:$0xff]
    %v3969 = vld [vmem:[%s3893 + $0x258] sm:$0xff]
    %v3970 = vld [vmem:[%s3893 + $0x260] sm:$0xff]
    %v3971 = vld [vmem:[%s3893 + $0x268] sm:$0xff]
    %v3972 = vld [vmem:[%s3893 + $0x270] sm:$0xff]
    %v3973 = vld [vmem:[%s3893 + $0x278] sm:$0xff]
    %v3974 = vld [vmem:[%s3893 + $0x280] sm:$0xff]
    %v3975 = vld [vmem:[%s3893 + $0x288] sm:$0xff]
    %v3976 = vld [vmem:[%s3893 + $0x290] sm:$0xff]
    %v3977 = vld [vmem:[%s3893 + $0x298] sm:$0xff]
    %v3978 = vld [vmem:[%s3893 + $0x2a0] sm:$0xff]
    %v3979 = vld [vmem:[%s3893 + $0x2a8] sm:$0xff]
    %v3980 = vld [vmem:[%s3893 + $0x2b0] sm:$0xff]
    %v3981 = vld [vmem:[%s3893 + $0x2b8] sm:$0xff]
    %v3982 = vld [vmem:[%s3893 + $0x2c0] sm:$0xff]
    %v3983 = vld [vmem:[%s3893 + $0x2c8] sm:$0xff]
    %v3984 = vld [vmem:[%s3893 + $0x2d0] sm:$0xff]
    %v3985 = vld [vmem:[%s3893 + $0x2d8] sm:$0xff]
    %v3986 = vld [vmem:[%s3893 + $0x2e0] sm:$0xff]
    %v3987 = vld [vmem:[%s3893 + $0x2e8] sm:$0xff]
    %v3988 = vld [vmem:[%s3893 + $0x2f0] sm:$0xff]
    %v3989 = vld [vmem:[%s3893 + $0x2f8] sm:$0xff]
    %v3990 = vld [vmem:[%s3893 + $0x300] sm:$0xff]
    %v3991 = vld [vmem:[%s3893 + $0x308] sm:$0xff]
    %v3992 = vld [vmem:[%s3893 + $0x310] sm:$0xff]
    %v3993 = vld [vmem:[%s3893 + $0x318] sm:$0xff]
    %v3994 = vld [vmem:[%s3893 + $0x320] sm:$0xff]
    %v3995 = vld [vmem:[%s3893 + $0x328] sm:$0xff]
    %v3996 = vld [vmem:[%s3893 + $0x330] sm:$0xff]
    %v3997 = vld [vmem:[%s3893 + $0x338] sm:$0xff]
    %v3998 = vld [vmem:[%s3893 + $0x340] sm:$0xff]
    %v3999 = vld [vmem:[%s3893 + $0x348] sm:$0xff]
    %v4000 = vld [vmem:[%s3893 + $0x350] sm:$0xff]
    %v4001 = vld [vmem:[%s3893 + $0x358] sm:$0xff]
    %v4002 = vld [vmem:[%s3893 + $0x360] sm:$0xff]
    %v4003 = vld [vmem:[%s3893 + $0x368] sm:$0xff]
    %v4004 = vld [vmem:[%s3893 + $0x370] sm:$0xff]
    %v4005 = vld [vmem:[%s3893 + $0x378] sm:$0xff]
    %v4006 = vld [vmem:[%s3893 + $0x380] sm:$0xff]
    %v4007 = vld [vmem:[%s3893 + $0x388] sm:$0xff]
    %v4008 = vld [vmem:[%s3893 + $0x390] sm:$0xff]
    %v4009 = vld [vmem:[%s3893 + $0x398] sm:$0xff]
    %v4010 = vld [vmem:[%s3893 + $0x3a0] sm:$0xff]
    %v4011 = vld [vmem:[%s3893 + $0x3a8] sm:$0xff]
    %v4012 = vld [vmem:[%s3893 + $0x3b0] sm:$0xff]
    %v4013 = vld [vmem:[%s3893 + $0x3b8] sm:$0xff]
    %v4014 = vld [vmem:[%s3893 + $0x3c0] sm:$0xff]
    %v4015 = vld [vmem:[%s3893 + $0x3c8] sm:$0xff]
    %v4016 = vld [vmem:[%s3893 + $0x3d0] sm:$0xff]
    %v4017 = vld [vmem:[%s3893 + $0x3d8] sm:$0xff]
    %v4018 = vld [vmem:[%s3893 + $0x3e0] sm:$0xff]
    %v4019 = vld [vmem:[%s3893 + $0x3e8] sm:$0xff]
    %v4020 = vld [vmem:[%s3893 + $0x3f0] sm:$0xff]
    %v4021 = vld [vmem:[%s3893 + $0x3f8] sm:$0xff]
    %s4022 = scalar_lea.vmem [#allocation13], 4
    %v4023 = vld [vmem:[%s4022] ss:$8 sm:$0xf]
    %v4024 = vpack.c.bf16 %v3889, %v3885
    %v4025 = vpack.c.bf16 %v3890, %v3886
    %v4026 = vpack.c.bf16 %v3891, %v3887
    %v4027 = vpack.c.bf16 %v3892, %v3888
    %v4029 = vlaneseq
    %v4030 = vshrl.u32 %v4029, 7
    %v4031 = vsub.s32 0, %v4030
    %v4032 = vrot.slane %v4023, %v4031
    %v4033 = vlaneseq
    %v4034 = vshrl.u32 %v4033, 7
    %v4035 = vsub.s32 1, %v4034
    %v4036 = vrot.slane %v4023, %v4035
    %v4037 = vlaneseq
    %v4038 = vshrl.u32 %v4037, 7
    %v4039 = vsub.s32 2, %v4038
    %v4040 = vrot.slane %v4023, %v4039
    %v4041 = vlaneseq
    %v4042 = vshrl.u32 %v4041, 7
    %v4043 = vsub.s32 3, %v4042
    %v4044 = vrot.slane %v4023, %v4043
    %v4177 = vunpack.c.l.b16 %v3894
    %v4178 = vunpack.c.h.b16 %v3894
    %v4179 = vunpack.c.l.b16 %v3895
    %v4180 = vunpack.c.h.b16 %v3895
    %v4181 = vunpack.c.l.b16 %v3896
    %v4182 = vunpack.c.h.b16 %v3896
    %v4183 = vunpack.c.l.b16 %v3897
    %v4184 = vunpack.c.h.b16 %v3897
    %v4185 = vunpack.c.l.b16 %v3898
    %v4186 = vunpack.c.h.b16 %v3898
    %v4187 = vunpack.c.l.b16 %v3899
    %v4188 = vunpack.c.h.b16 %v3899
    %v4189 = vunpack.c.l.b16 %v3900
    %v4190 = vunpack.c.h.b16 %v3900
    %v4191 = vunpack.c.l.b16 %v3901
    %v4192 = vunpack.c.h.b16 %v3901
    %v4193 = vunpack.c.l.b16 %v3902
    %v4194 = vunpack.c.h.b16 %v3902
    %v4195 = vunpack.c.l.b16 %v3903
    %v4196 = vunpack.c.h.b16 %v3903
    %v4197 = vunpack.c.l.b16 %v3904
    %v4198 = vunpack.c.h.b16 %v3904
    %v4199 = vunpack.c.l.b16 %v3905
    %v4200 = vunpack.c.h.b16 %v3905
    %v4201 = vunpack.c.l.b16 %v3906
    %v4202 = vunpack.c.h.b16 %v3906
    %v4203 = vunpack.c.l.b16 %v3907
    %v4204 = vunpack.c.h.b16 %v3907
    %v4205 = vunpack.c.l.b16 %v3908
    %v4206 = vunpack.c.h.b16 %v3908
    %v4207 = vunpack.c.l.b16 %v3909
    %v4208 = vunpack.c.h.b16 %v3909
    %v4209 = vunpack.c.l.b16 %v3910
    %v4210 = vunpack.c.h.b16 %v3910
    %v4211 = vunpack.c.l.b16 %v3911
    %v4212 = vunpack.c.h.b16 %v3911
    %v4213 = vunpack.c.l.b16 %v3912
    %v4214 = vunpack.c.h.b16 %v3912
    %v4215 = vunpack.c.l.b16 %v3913
    %v4216 = vunpack.c.h.b16 %v3913
    %v4217 = vunpack.c.l.b16 %v3914
    %v4218 = vunpack.c.h.b16 %v3914
    %v4219 = vunpack.c.l.b16 %v3915
    %v4220 = vunpack.c.h.b16 %v3915
    %v4221 = vunpack.c.l.b16 %v3916
    %v4222 = vunpack.c.h.b16 %v3916
    %v4223 = vunpack.c.l.b16 %v3917
    %v4224 = vunpack.c.h.b16 %v3917
    %v4225 = vunpack.c.l.b16 %v3918
    %v4226 = vunpack.c.h.b16 %v3918
    %v4227 = vunpack.c.l.b16 %v3919
    %v4228 = vunpack.c.h.b16 %v3919
    %v4229 = vunpack.c.l.b16 %v3920
    %v4230 = vunpack.c.h.b16 %v3920
    %v4231 = vunpack.c.l.b16 %v3921
    %v4232 = vunpack.c.h.b16 %v3921
    %v4233 = vunpack.c.l.b16 %v3922
    %v4234 = vunpack.c.h.b16 %v3922
    %v4235 = vunpack.c.l.b16 %v3923
    %v4236 = vunpack.c.h.b16 %v3923
    %v4237 = vunpack.c.l.b16 %v3924
    %v4238 = vunpack.c.h.b16 %v3924
    %v4239 = vunpack.c.l.b16 %v3925
    %v4240 = vunpack.c.h.b16 %v3925
    %v4241 = vunpack.c.l.b16 %v3926
    %v4242 = vunpack.c.h.b16 %v3926
    %v4243 = vunpack.c.l.b16 %v3927
    %v4244 = vunpack.c.h.b16 %v3927
    %v4245 = vunpack.c.l.b16 %v3928
    %v4246 = vunpack.c.h.b16 %v3928
    %v4247 = vunpack.c.l.b16 %v3929
    %v4248 = vunpack.c.h.b16 %v3929
    %v4249 = vunpack.c.l.b16 %v3930
    %v4250 = vunpack.c.h.b16 %v3930
    %v4251 = vunpack.c.l.b16 %v3931
    %v4252 = vunpack.c.h.b16 %v3931
    %v4253 = vunpack.c.l.b16 %v3932
    %v4254 = vunpack.c.h.b16 %v3932
    %v4255 = vunpack.c.l.b16 %v3933
    %v4256 = vunpack.c.h.b16 %v3933
    %v4257 = vunpack.c.l.b16 %v3934
    %v4258 = vunpack.c.h.b16 %v3934
    %v4259 = vunpack.c.l.b16 %v3935
    %v4260 = vunpack.c.h.b16 %v3935
    %v4261 = vunpack.c.l.b16 %v3936
    %v4262 = vunpack.c.h.b16 %v3936
    %v4263 = vunpack.c.l.b16 %v3937
    %v4264 = vunpack.c.h.b16 %v3937
    %v4265 = vunpack.c.l.b16 %v3938
    %v4266 = vunpack.c.h.b16 %v3938
    %v4267 = vunpack.c.l.b16 %v3939
    %v4268 = vunpack.c.h.b16 %v3939
    %v4269 = vunpack.c.l.b16 %v3940
    %v4270 = vunpack.c.h.b16 %v3940
    %v4271 = vunpack.c.l.b16 %v3941
    %v4272 = vunpack.c.h.b16 %v3941
    %v4273 = vunpack.c.l.b16 %v3942
    %v4274 = vunpack.c.h.b16 %v3942
    %v4275 = vunpack.c.l.b16 %v3943
    %v4276 = vunpack.c.h.b16 %v3943
    %v4277 = vunpack.c.l.b16 %v3944
    %v4278 = vunpack.c.h.b16 %v3944
    %v4279 = vunpack.c.l.b16 %v3945
    %v4280 = vunpack.c.h.b16 %v3945
    %v4281 = vunpack.c.l.b16 %v3946
    %v4282 = vunpack.c.h.b16 %v3946
    %v4283 = vunpack.c.l.b16 %v3947
    %v4284 = vunpack.c.h.b16 %v3947
    %v4285 = vunpack.c.l.b16 %v3948
    %v4286 = vunpack.c.h.b16 %v3948
    %v4287 = vunpack.c.l.b16 %v3949
    %v4288 = vunpack.c.h.b16 %v3949
    %v4289 = vunpack.c.l.b16 %v3950
    %v4290 = vunpack.c.h.b16 %v3950
    %v4291 = vunpack.c.l.b16 %v3951
    %v4292 = vunpack.c.h.b16 %v3951
    %v4293 = vunpack.c.l.b16 %v3952
    %v4294 = vunpack.c.h.b16 %v3952
    %v4295 = vunpack.c.l.b16 %v3953
    %v4296 = vunpack.c.h.b16 %v3953
    %v4297 = vunpack.c.l.b16 %v3954
    %v4298 = vunpack.c.h.b16 %v3954
    %v4299 = vunpack.c.l.b16 %v3955
    %v4300 = vunpack.c.h.b16 %v3955
    %v4301 = vunpack.c.l.b16 %v3956
    %v4302 = vunpack.c.h.b16 %v3956
    %v4303 = vunpack.c.l.b16 %v3957
    %v4304 = vunpack.c.h.b16 %v3957
    %v4305 = vunpack.c.l.b16 %v3958
    %v4306 = vunpack.c.h.b16 %v3958
    %v4307 = vunpack.c.l.b16 %v3959
    %v4308 = vunpack.c.h.b16 %v3959
    %v4309 = vunpack.c.l.b16 %v3960
    %v4310 = vunpack.c.h.b16 %v3960
    %v4311 = vunpack.c.l.b16 %v3961
    %v4312 = vunpack.c.h.b16 %v3961
    %v4313 = vunpack.c.l.b16 %v3962
    %v4314 = vunpack.c.h.b16 %v3962
    %v4315 = vunpack.c.l.b16 %v3963
    %v4316 = vunpack.c.h.b16 %v3963
    %v4317 = vunpack.c.l.b16 %v3964
    %v4318 = vunpack.c.h.b16 %v3964
    %v4319 = vunpack.c.l.b16 %v3965
    %v4320 = vunpack.c.h.b16 %v3965
    %v4321 = vunpack.c.l.b16 %v3966
    %v4322 = vunpack.c.h.b16 %v3966
    %v4323 = vunpack.c.l.b16 %v3967
    %v4324 = vunpack.c.h.b16 %v3967
    %v4325 = vunpack.c.l.b16 %v3968
    %v4326 = vunpack.c.h.b16 %v3968
    %v4327 = vunpack.c.l.b16 %v3969
    %v4328 = vunpack.c.h.b16 %v3969
    %v4329 = vunpack.c.l.b16 %v3970
    %v4330 = vunpack.c.h.b16 %v3970
    %v4331 = vunpack.c.l.b16 %v3971
    %v4332 = vunpack.c.h.b16 %v3971
    %v4333 = vunpack.c.l.b16 %v3972
    %v4334 = vunpack.c.h.b16 %v3972
    %v4335 = vunpack.c.l.b16 %v3973
    %v4336 = vunpack.c.h.b16 %v3973
    %v4337 = vunpack.c.l.b16 %v3974
    %v4338 = vunpack.c.h.b16 %v3974
    %v4339 = vunpack.c.l.b16 %v3975
    %v4340 = vunpack.c.h.b16 %v3975
    %v4341 = vunpack.c.l.b16 %v3976
    %v4342 = vunpack.c.h.b16 %v3976
    %v4343 = vunpack.c.l.b16 %v3977
    %v4344 = vunpack.c.h.b16 %v3977
    %v4345 = vunpack.c.l.b16 %v3978
    %v4346 = vunpack.c.h.b16 %v3978
    %v4347 = vunpack.c.l.b16 %v3979
    %v4348 = vunpack.c.h.b16 %v3979
    %v4349 = vunpack.c.l.b16 %v3980
    %v4350 = vunpack.c.h.b16 %v3980
    %v4351 = vunpack.c.l.b16 %v3981
    %v4352 = vunpack.c.h.b16 %v3981
    %v4353 = vunpack.c.l.b16 %v3982
    %v4354 = vunpack.c.h.b16 %v3982
    %v4355 = vunpack.c.l.b16 %v3983
    %v4356 = vunpack.c.h.b16 %v3983
    %v4357 = vunpack.c.l.b16 %v3984
    %v4358 = vunpack.c.h.b16 %v3984
    %v4359 = vunpack.c.l.b16 %v3985
    %v4360 = vunpack.c.h.b16 %v3985
    %v4361 = vunpack.c.l.b16 %v3986
    %v4362 = vunpack.c.h.b16 %v3986
    %v4363 = vunpack.c.l.b16 %v3987
    %v4364 = vunpack.c.h.b16 %v3987
    %v4365 = vunpack.c.l.b16 %v3988
    %v4366 = vunpack.c.h.b16 %v3988
    %v4367 = vunpack.c.l.b16 %v3989
    %v4368 = vunpack.c.h.b16 %v3989
    %v4369 = vunpack.c.l.b16 %v3990
    %v4370 = vunpack.c.h.b16 %v3990
    %v4371 = vunpack.c.l.b16 %v3991
    %v4372 = vunpack.c.h.b16 %v3991
    %v4373 = vunpack.c.l.b16 %v3992
    %v4374 = vunpack.c.h.b16 %v3992
    %v4375 = vunpack.c.l.b16 %v3993
    %v4376 = vunpack.c.h.b16 %v3993
    %v4377 = vunpack.c.l.b16 %v3994
    %v4378 = vunpack.c.h.b16 %v3994
    %v4379 = vunpack.c.l.b16 %v3995
    %v4380 = vunpack.c.h.b16 %v3995
    %v4381 = vunpack.c.l.b16 %v3996
    %v4382 = vunpack.c.h.b16 %v3996
    %v4383 = vunpack.c.l.b16 %v3997
    %v4384 = vunpack.c.h.b16 %v3997
    %v4385 = vunpack.c.l.b16 %v3998
    %v4386 = vunpack.c.h.b16 %v3998
    %v4387 = vunpack.c.l.b16 %v3999
    %v4388 = vunpack.c.h.b16 %v3999
    %v4389 = vunpack.c.l.b16 %v4000
    %v4390 = vunpack.c.h.b16 %v4000
    %v4391 = vunpack.c.l.b16 %v4001
    %v4392 = vunpack.c.h.b16 %v4001
    %v4393 = vunpack.c.l.b16 %v4002
    %v4394 = vunpack.c.h.b16 %v4002
    %v4395 = vunpack.c.l.b16 %v4003
    %v4396 = vunpack.c.h.b16 %v4003
    %v4397 = vunpack.c.l.b16 %v4004
    %v4398 = vunpack.c.h.b16 %v4004
    %v4399 = vunpack.c.l.b16 %v4005
    %v4400 = vunpack.c.h.b16 %v4005
    %v4401 = vunpack.c.l.b16 %v4006
    %v4402 = vunpack.c.h.b16 %v4006
    %v4403 = vunpack.c.l.b16 %v4007
    %v4404 = vunpack.c.h.b16 %v4007
    %v4405 = vunpack.c.l.b16 %v4008
    %v4406 = vunpack.c.h.b16 %v4008
    %v4407 = vunpack.c.l.b16 %v4009
    %v4408 = vunpack.c.h.b16 %v4009
    %v4409 = vunpack.c.l.b16 %v4010
    %v4410 = vunpack.c.h.b16 %v4010
    %v4411 = vunpack.c.l.b16 %v4011
    %v4412 = vunpack.c.h.b16 %v4011
    %v4413 = vunpack.c.l.b16 %v4012
    %v4414 = vunpack.c.h.b16 %v4012
    %v4415 = vunpack.c.l.b16 %v4013
    %v4416 = vunpack.c.h.b16 %v4013
    %v4417 = vunpack.c.l.b16 %v4014
    %v4418 = vunpack.c.h.b16 %v4014
    %v4419 = vunpack.c.l.b16 %v4015
    %v4420 = vunpack.c.h.b16 %v4015
    %v4421 = vunpack.c.l.b16 %v4016
    %v4422 = vunpack.c.h.b16 %v4016
    %v4423 = vunpack.c.l.b16 %v4017
    %v4424 = vunpack.c.h.b16 %v4017
    %v4425 = vunpack.c.l.b16 %v4018
    %v4426 = vunpack.c.h.b16 %v4018
    %v4427 = vunpack.c.l.b16 %v4019
    %v4428 = vunpack.c.h.b16 %v4019
    %v4429 = vunpack.c.l.b16 %v4020
    %v4430 = vunpack.c.h.b16 %v4020
    %v4431 = vunpack.c.l.b16 %v4021
    %v4432 = vunpack.c.h.b16 %v4021
    %v4433 = vpack.c.b16 %v4181, %v4177
    %v4434 = vpack.c.b16 %v4182, %v4178
    %v4435 = vpack.c.b16 %v4183, %v4179
    %v4436 = vpack.c.b16 %v4184, %v4180
    %v4437 = vpack.c.b16 %v4189, %v4185
    %v4438 = vpack.c.b16 %v4190, %v4186
    %v4439 = vpack.c.b16 %v4191, %v4187
    %v4440 = vpack.c.b16 %v4192, %v4188
    %v4441 = vpack.c.b16 %v4197, %v4193
    %v4442 = vpack.c.b16 %v4198, %v4194
    %v4443 = vpack.c.b16 %v4199, %v4195
    %v4444 = vpack.c.b16 %v4200, %v4196
    %v4445 = vpack.c.b16 %v4205, %v4201
    %v4446 = vpack.c.b16 %v4206, %v4202
    %v4447 = vpack.c.b16 %v4207, %v4203
    %v4448 = vpack.c.b16 %v4208, %v4204
    %v4449 = vpack.c.b16 %v4213, %v4209
    %v4450 = vpack.c.b16 %v4214, %v4210
    %v4451 = vpack.c.b16 %v4215, %v4211
    %v4452 = vpack.c.b16 %v4216, %v4212
    %v4453 = vpack.c.b16 %v4221, %v4217
    %v4454 = vpack.c.b16 %v4222, %v4218
    %v4455 = vpack.c.b16 %v4223, %v4219
    %v4456 = vpack.c.b16 %v4224, %v4220
    %v4457 = vpack.c.b16 %v4229, %v4225
    %v4458 = vpack.c.b16 %v4230, %v4226
    %v4459 = vpack.c.b16 %v4231, %v4227
    %v4460 = vpack.c.b16 %v4232, %v4228
    %v4461 = vpack.c.b16 %v4237, %v4233
    %v4462 = vpack.c.b16 %v4238, %v4234
    %v4463 = vpack.c.b16 %v4239, %v4235
    %v4464 = vpack.c.b16 %v4240, %v4236
    %v4465 = vpack.c.b16 %v4245, %v4241
    %v4466 = vpack.c.b16 %v4246, %v4242
    %v4467 = vpack.c.b16 %v4247, %v4243
    %v4468 = vpack.c.b16 %v4248, %v4244
    %v4469 = vpack.c.b16 %v4253, %v4249
    %v4470 = vpack.c.b16 %v4254, %v4250
    %v4471 = vpack.c.b16 %v4255, %v4251
    %v4472 = vpack.c.b16 %v4256, %v4252
    %v4473 = vpack.c.b16 %v4261, %v4257
    %v4474 = vpack.c.b16 %v4262, %v4258
    %v4475 = vpack.c.b16 %v4263, %v4259
    %v4476 = vpack.c.b16 %v4264, %v4260
    %v4477 = vpack.c.b16 %v4269, %v4265
    %v4478 = vpack.c.b16 %v4270, %v4266
    %v4479 = vpack.c.b16 %v4271, %v4267
    %v4480 = vpack.c.b16 %v4272, %v4268
    %v4481 = vpack.c.b16 %v4277, %v4273
    %v4482 = vpack.c.b16 %v4278, %v4274
    %v4483 = vpack.c.b16 %v4279, %v4275
    %v4484 = vpack.c.b16 %v4280, %v4276
    %v4485 = vpack.c.b16 %v4285, %v4281
    %v4486 = vpack.c.b16 %v4286, %v4282
    %v4487 = vpack.c.b16 %v4287, %v4283
    %v4488 = vpack.c.b16 %v4288, %v4284
    %v4489 = vpack.c.b16 %v4293, %v4289
    %v4490 = vpack.c.b16 %v4294, %v4290
    %v4491 = vpack.c.b16 %v4295, %v4291
    %v4492 = vpack.c.b16 %v4296, %v4292
    %v4493 = vpack.c.b16 %v4301, %v4297
    %v4494 = vpack.c.b16 %v4302, %v4298
    %v4495 = vpack.c.b16 %v4303, %v4299
    %v4496 = vpack.c.b16 %v4304, %v4300
    %v4497 = vpack.c.b16 %v4309, %v4305
    %v4498 = vpack.c.b16 %v4310, %v4306
    %v4499 = vpack.c.b16 %v4311, %v4307
    %v4500 = vpack.c.b16 %v4312, %v4308
    %v4501 = vpack.c.b16 %v4317, %v4313
    %v4502 = vpack.c.b16 %v4318, %v4314
    %v4503 = vpack.c.b16 %v4319, %v4315
    %v4504 = vpack.c.b16 %v4320, %v4316
    %v4505 = vpack.c.b16 %v4325, %v4321
    %v4506 = vpack.c.b16 %v4326, %v4322
    %v4507 = vpack.c.b16 %v4327, %v4323
    %v4508 = vpack.c.b16 %v4328, %v4324
    %v4509 = vpack.c.b16 %v4333, %v4329
    %v4510 = vpack.c.b16 %v4334, %v4330
    %v4511 = vpack.c.b16 %v4335, %v4331
    %v4512 = vpack.c.b16 %v4336, %v4332
    %v4513 = vpack.c.b16 %v4341, %v4337
    %v4514 = vpack.c.b16 %v4342, %v4338
    %v4515 = vpack.c.b16 %v4343, %v4339
    %v4516 = vpack.c.b16 %v4344, %v4340
    %v4517 = vpack.c.b16 %v4349, %v4345
    %v4518 = vpack.c.b16 %v4350, %v4346
    %v4519 = vpack.c.b16 %v4351, %v4347
    %v4520 = vpack.c.b16 %v4352, %v4348
    %v4521 = vpack.c.b16 %v4357, %v4353
    %v4522 = vpack.c.b16 %v4358, %v4354
    %v4523 = vpack.c.b16 %v4359, %v4355
    %v4524 = vpack.c.b16 %v4360, %v4356
    %v4525 = vpack.c.b16 %v4365, %v4361
    %v4526 = vpack.c.b16 %v4366, %v4362
    %v4527 = vpack.c.b16 %v4367, %v4363
    %v4528 = vpack.c.b16 %v4368, %v4364
    %v4529 = vpack.c.b16 %v4373, %v4369
    %v4530 = vpack.c.b16 %v4374, %v4370
    %v4531 = vpack.c.b16 %v4375, %v4371
    %v4532 = vpack.c.b16 %v4376, %v4372
    %v4533 = vpack.c.b16 %v4381, %v4377
    %v4534 = vpack.c.b16 %v4382, %v4378
    %v4535 = vpack.c.b16 %v4383, %v4379
    %v4536 = vpack.c.b16 %v4384, %v4380
    %v4537 = vpack.c.b16 %v4389, %v4385
    %v4538 = vpack.c.b16 %v4390, %v4386
    %v4539 = vpack.c.b16 %v4391, %v4387
    %v4540 = vpack.c.b16 %v4392, %v4388
    %v4541 = vpack.c.b16 %v4397, %v4393
    %v4542 = vpack.c.b16 %v4398, %v4394
    %v4543 = vpack.c.b16 %v4399, %v4395
    %v4544 = vpack.c.b16 %v4400, %v4396
    %v4545 = vpack.c.b16 %v4405, %v4401
    %v4546 = vpack.c.b16 %v4406, %v4402
    %v4547 = vpack.c.b16 %v4407, %v4403
    %v4548 = vpack.c.b16 %v4408, %v4404
    %v4549 = vpack.c.b16 %v4413, %v4409
    %v4550 = vpack.c.b16 %v4414, %v4410
    %v4551 = vpack.c.b16 %v4415, %v4411
    %v4552 = vpack.c.b16 %v4416, %v4412
    %v4553 = vpack.c.b16 %v4421, %v4417
    %v4554 = vpack.c.b16 %v4422, %v4418
    %v4555 = vpack.c.b16 %v4423, %v4419
    %v4556 = vpack.c.b16 %v4424, %v4420
    %v4557 = vpack.c.b16 %v4429, %v4425
    %v4558 = vpack.c.b16 %v4430, %v4426
    %v4559 = vpack.c.b16 %v4431, %v4427
    %v4560 = vpack.c.b16 %v4432, %v4428
    %4689 = vmatprep.subr.bf16.mxu0 %v4462
    %4690 = vmatpush1.bf16.msra.mxu0 %v4461
    %4691 = vmatprep.subr.bf16.mxu0 %v4458
    %4692 = vmatpush1.bf16.msra.mxu0 %v4457
    %4693 = vmatprep.subr.bf16.mxu0 %v4454
    %4694 = vmatpush1.bf16.msra.mxu0 %v4453
    %4695 = vmatprep.subr.bf16.mxu0 %v4450
    %4696 = vmatpush1.bf16.msra.mxu0 %v4449
    %4697 = vmatprep.subr.bf16.mxu0 %v4446
    %4698 = vmatpush1.bf16.msra.mxu0 %v4445
    %4699 = vmatprep.subr.bf16.mxu0 %v4442
    %4700 = vmatpush1.bf16.msra.mxu0 %v4441
    %4701 = vmatprep.subr.bf16.mxu0 %v4438
    %4702 = vmatpush1.bf16.msra.mxu0 %v4437
    %4703 = vmatprep.subr.bf16.mxu0 %v4434
    %4704 = vmatpush1.bf16.msra.mxu0 %v4433
    %4705 = vmatprep.subr.bf16.mxu0 %v4494
    %4706 = vmatpush2.bf16.msra.mxu0 %v4493
    %4707 = vmatprep.subr.bf16.mxu0 %v4490
    %4708 = vmatpush2.bf16.msra.mxu0 %v4489
    %4709 = vmatprep.subr.bf16.mxu0 %v4486
    %4710 = vmatpush2.bf16.msra.mxu0 %v4485
    %4711 = vmatprep.subr.bf16.mxu0 %v4482
    %4712 = vmatpush2.bf16.msra.mxu0 %v4481
    %4713 = vmatprep.subr.bf16.mxu0 %v4478
    %4714 = vmatpush2.bf16.msra.mxu0 %v4477
    %4715 = vmatprep.subr.bf16.mxu0 %v4474
    %4716 = vmatpush2.bf16.msra.mxu0 %v4473
    %4717 = vmatprep.subr.bf16.mxu0 %v4470
    %4718 = vmatpush2.bf16.msra.mxu0 %v4469
    %4719 = vmatprep.subr.bf16.mxu0 %v4466
    %4720 = vmatpush2.bf16.msra.mxu0 %v4465
    %4721 = vmatprep.mubr.bf16.mxu0 %v4025
    %4722 = vmatmul.mubr.bf16.gmra.mxu0 %v4024
    %v4723 = vpop.f32.mrf.mxu0
    %v4724 = vadd.f32 %v4032, %v4723
    %v4725 = vpop.f32.mrf.mxu0
    %v4726 = vadd.f32 %v4036, %v4725
    %v4727 = vpop.f32.mrf.mxu0
    %v4728 = vadd.f32 %v4032, %v4727
    %v4729 = vpop.f32.mrf.mxu0
    %v4730 = vadd.f32 %v4036, %v4729
    %4731 = vdwg.mxu0
    %4732 = vmatprep.subr.bf16.mxu0 %v4526
    %4733 = vmatpush1.bf16.msra.mxu0 %v4525
    %4734 = vmatprep.subr.bf16.mxu0 %v4522
    %4735 = vmatpush1.bf16.msra.mxu0 %v4521
    %4736 = vmatprep.subr.bf16.mxu0 %v4518
    %4737 = vmatpush1.bf16.msra.mxu0 %v4517
    %4738 = vmatprep.subr.bf16.mxu0 %v4514
    %4739 = vmatpush1.bf16.msra.mxu0 %v4513
    %4740 = vmatprep.subr.bf16.mxu0 %v4510
    %4741 = vmatpush1.bf16.msra.mxu0 %v4509
    %4742 = vmatprep.subr.bf16.mxu0 %v4506
    %4743 = vmatpush1.bf16.msra.mxu0 %v4505
    %4744 = vmatprep.subr.bf16.mxu0 %v4502
    %4745 = vmatpush1.bf16.msra.mxu0 %v4501
    %4746 = vmatprep.subr.bf16.mxu0 %v4498
    %4747 = vmatpush1.bf16.msra.mxu0 %v4497
    %4748 = vmatprep.subr.bf16.mxu0 %v4558
    %4749 = vmatpush2.bf16.msra.mxu0 %v4557
    %4750 = vmatprep.subr.bf16.mxu0 %v4554
    %4751 = vmatpush2.bf16.msra.mxu0 %v4553
    %4752 = vmatprep.subr.bf16.mxu0 %v4550
    %4753 = vmatpush2.bf16.msra.mxu0 %v4549
    %4754 = vmatprep.subr.bf16.mxu0 %v4546
    %4755 = vmatpush2.bf16.msra.mxu0 %v4545
    %4756 = vmatprep.subr.bf16.mxu0 %v4542
    %4757 = vmatpush2.bf16.msra.mxu0 %v4541
    %4758 = vmatprep.subr.bf16.mxu0 %v4538
    %4759 = vmatpush2.bf16.msra.mxu0 %v4537
    %4760 = vmatprep.subr.bf16.mxu0 %v4534
    %4761 = vmatpush2.bf16.msra.mxu0 %v4533
    %4762 = vmatprep.subr.bf16.mxu0 %v4530
    %4763 = vmatpush2.bf16.msra.mxu0 %v4529
    %4764 = vmatprep.mubr.bf16.mxu0 %v4027
    %4765 = vmatmul.mubr.bf16.gmra.mxu0 %v4026
    %v4766 = vpop.f32.mrf.mxu0
    %v4767 = vadd.f32 %v4724, %v4766
    %v4768 = vpop.f32.mrf.mxu0
    %v4769 = vadd.f32 %v4726, %v4768
    %v4770 = vpop.f32.mrf.mxu0
    %v4771 = vadd.f32 %v4728, %v4770
    %v4772 = vpop.f32.mrf.mxu0
    %v4773 = vadd.f32 %v4730, %v4772
    %4774 = vdwg.mxu0
    %4775 = vmatprep.subr.bf16.mxu0 %v4464
    %4776 = vmatpush1.bf16.msra.mxu0 %v4463
    %4777 = vmatprep.subr.bf16.mxu0 %v4460
    %4778 = vmatpush1.bf16.msra.mxu0 %v4459
    %4779 = vmatprep.subr.bf16.mxu0 %v4456
    %4780 = vmatpush1.bf16.msra.mxu0 %v4455
    %4781 = vmatprep.subr.bf16.mxu0 %v4452
    %4782 = vmatpush1.bf16.msra.mxu0 %v4451
    %4783 = vmatprep.subr.bf16.mxu0 %v4448
    %4784 = vmatpush1.bf16.msra.mxu0 %v4447
    %4785 = vmatprep.subr.bf16.mxu0 %v4444
    %4786 = vmatpush1.bf16.msra.mxu0 %v4443
    %4787 = vmatprep.subr.bf16.mxu0 %v4440
    %4788 = vmatpush1.bf16.msra.mxu0 %v4439
    %4789 = vmatprep.subr.bf16.mxu0 %v4436
    %4790 = vmatpush1.bf16.msra.mxu0 %v4435
    %4791 = vmatprep.subr.bf16.mxu0 %v4496
    %4792 = vmatpush2.bf16.msra.mxu0 %v4495
    %4793 = vmatprep.subr.bf16.mxu0 %v4492
    %4794 = vmatpush2.bf16.msra.mxu0 %v4491
    %4795 = vmatprep.subr.bf16.mxu0 %v4488
    %4796 = vmatpush2.bf16.msra.mxu0 %v4487
    %4797 = vmatprep.subr.bf16.mxu0 %v4484
    %4798 = vmatpush2.bf16.msra.mxu0 %v4483
    %4799 = vmatprep.subr.bf16.mxu0 %v4480
    %4800 = vmatpush2.bf16.msra.mxu0 %v4479
    %4801 = vmatprep.subr.bf16.mxu0 %v4476
    %4802 = vmatpush2.bf16.msra.mxu0 %v4475
    %4803 = vmatprep.subr.bf16.mxu0 %v4472
    %4804 = vmatpush2.bf16.msra.mxu0 %v4471
    %4805 = vmatprep.subr.bf16.mxu0 %v4468
    %4806 = vmatpush2.bf16.msra.mxu0 %v4467
    %4807 = vmatprep.mubr.bf16.mxu0 %v4025
    %4808 = vmatmul.mubr.bf16.gmra.mxu0 %v4024
    %v4809 = vpop.f32.mrf.mxu0
    %v4810 = vadd.f32 %v4040, %v4809
    %v4811 = vpop.f32.mrf.mxu0
    %v4812 = vadd.f32 %v4044, %v4811
    %v4813 = vpop.f32.mrf.mxu0
    %v4814 = vadd.f32 %v4040, %v4813
    %v4815 = vpop.f32.mrf.mxu0
    %v4816 = vadd.f32 %v4044, %v4815
    %4817 = vdwg.mxu0
    %4818 = vmatprep.subr.bf16.mxu0 %v4528
    %4819 = vmatpush1.bf16.msra.mxu0 %v4527
    %4820 = vmatprep.subr.bf16.mxu0 %v4524
    %4821 = vmatpush1.bf16.msra.mxu0 %v4523
    %4822 = vmatprep.subr.bf16.mxu0 %v4520
    %4823 = vmatpush1.bf16.msra.mxu0 %v4519
    %4824 = vmatprep.subr.bf16.mxu0 %v4516
    %4825 = vmatpush1.bf16.msra.mxu0 %v4515
    %4826 = vmatprep.subr.bf16.mxu0 %v4512
    %4827 = vmatpush1.bf16.msra.mxu0 %v4511
    %4828 = vmatprep.subr.bf16.mxu0 %v4508
    %4829 = vmatpush1.bf16.msra.mxu0 %v4507
    %4830 = vmatprep.subr.bf16.mxu0 %v4504
    %4831 = vmatpush1.bf16.msra.mxu0 %v4503
    %4832 = vmatprep.subr.bf16.mxu0 %v4500
    %4833 = vmatpush1.bf16.msra.mxu0 %v4499
    %4834 = vmatprep.subr.bf16.mxu0 %v4560
    %4835 = vmatpush2.bf16.msra.mxu0 %v4559
    %4836 = vmatprep.subr.bf16.mxu0 %v4556
    %4837 = vmatpush2.bf16.msra.mxu0 %v4555
    %4838 = vmatprep.subr.bf16.mxu0 %v4552
    %4839 = vmatpush2.bf16.msra.mxu0 %v4551
    %4840 = vmatprep.subr.bf16.mxu0 %v4548
    %4841 = vmatpush2.bf16.msra.mxu0 %v4547
    %4842 = vmatprep.subr.bf16.mxu0 %v4544
    %4843 = vmatpush2.bf16.msra.mxu0 %v4543
    %4844 = vmatprep.subr.bf16.mxu0 %v4540
    %4845 = vmatpush2.bf16.msra.mxu0 %v4539
    %4846 = vmatprep.subr.bf16.mxu0 %v4536
    %4847 = vmatpush2.bf16.msra.mxu0 %v4535
    %4848 = vmatprep.subr.bf16.mxu0 %v4532
    %4849 = vmatpush2.bf16.msra.mxu0 %v4531
    %4850 = vmatprep.mubr.bf16.mxu0 %v4027
    %4851 = vmatmul.mubr.bf16.gmra.mxu0 %v4026
    %v4852 = vpop.f32.mrf.mxu0
    %v4853 = vadd.f32 %v4810, %v4852
    %v4854 = vpop.f32.mrf.mxu0
    %v4855 = vadd.f32 %v4812, %v4854
    %v4856 = vpop.f32.mrf.mxu0
    %v4857 = vadd.f32 %v4814, %v4856
    %v4858 = vpop.f32.mrf.mxu0
    %v4859 = vadd.f32 %v4816, %v4858
    %4860 = vdwg.mxu0
    %vm4861 = vcmp.ge.f32.partialorder %v4767, 0.0
    %vm4862 = vcmp.ge.f32.partialorder %v4769, 0.0
    %vm4863 = vcmp.ge.f32.partialorder %v4853, 0.0
    %vm4864 = vcmp.ge.f32.partialorder %v4855, 0.0
    %vm4865 = vcmp.ge.f32.partialorder %v4771, 0.0
    %vm4866 = vcmp.ge.f32.partialorder %v4773, 0.0
    %vm4867 = vcmp.ge.f32.partialorder %v4857, 0.0
    %vm4868 = vcmp.ge.f32.partialorder %v4859, 0.0
    %v4869 = vmul.f32 %v4767, 0.01
    %v4870 = vmul.f32 %v4769, 0.01
    %v4871 = vmul.f32 %v4853, 0.01
    %v4872 = vmul.f32 %v4855, 0.01
    %v4873 = vmul.f32 %v4771, 0.01
    %v4874 = vmul.f32 %v4773, 0.01
    %v4875 = vmul.f32 %v4857, 0.01
    %v4876 = vmul.f32 %v4859, 0.01
    %v4877 = vsel %vm4861, %v4767, %v4869
    %v4878 = vsel %vm4862, %v4769, %v4870
    %v4879 = vsel %vm4863, %v4853, %v4871
    %v4880 = vsel %vm4864, %v4855, %v4872
    %v4881 = vsel %vm4865, %v4771, %v4873
    %v4882 = vsel %vm4866, %v4773, %v4874
    %v4883 = vsel %vm4867, %v4857, %v4875
    %v4884 = vsel %vm4868, %v4859, %v4876
    %v4885 = vadd.f32 %v4877, %v3885
    %v4886 = vadd.f32 %v4878, %v3886
    %v4887 = vadd.f32 %v4879, %v3887
    %v4888 = vadd.f32 %v4880, %v3888
    %v4889 = vadd.f32 %v4881, %v3889
    %v4890 = vadd.f32 %v4882, %v3890
    %v4891 = vadd.f32 %v4883, %v3891
    %v4892 = vadd.f32 %v4884, %v3892
    %v4893 = vld [vmem:[#allocation14] sm:$0xff]
    %v4894 = vld [vmem:[#allocation14 + $0x8] sm:$0xff]
    %v4895 = vld [vmem:[#allocation14 + $0x10] sm:$0xff]
    %v4896 = vld [vmem:[#allocation14 + $0x18] sm:$0xff]
    %v4897 = vld [vmem:[#allocation14 + $0x20] sm:$0xff]
    %v4898 = vld [vmem:[#allocation14 + $0x28] sm:$0xff]
    %v4899 = vld [vmem:[#allocation14 + $0x30] sm:$0xff]
    %v4900 = vld [vmem:[#allocation14 + $0x38] sm:$0xff]
    %v4901 = vld [vmem:[#allocation14 + $0x40] sm:$0xff]
    %v4902 = vld [vmem:[#allocation14 + $0x48] sm:$0xff]
    %v4903 = vld [vmem:[#allocation14 + $0x50] sm:$0xff]
    %v4904 = vld [vmem:[#allocation14 + $0x58] sm:$0xff]
    %v4905 = vld [vmem:[#allocation14 + $0x60] sm:$0xff]
    %v4906 = vld [vmem:[#allocation14 + $0x68] sm:$0xff]
    %v4907 = vld [vmem:[#allocation14 + $0x70] sm:$0xff]
    %v4908 = vld [vmem:[#allocation14 + $0x78] sm:$0xff]
    %v4909 = vld [vmem:[#allocation14 + $0x80] sm:$0xff]
    %v4910 = vld [vmem:[#allocation14 + $0x88] sm:$0xff]
    %v4911 = vld [vmem:[#allocation14 + $0x90] sm:$0xff]
    %v4912 = vld [vmem:[#allocation14 + $0x98] sm:$0xff]
    %v4913 = vld [vmem:[#allocation14 + $0xa0] sm:$0xff]
    %v4914 = vld [vmem:[#allocation14 + $0xa8] sm:$0xff]
    %v4915 = vld [vmem:[#allocation14 + $0xb0] sm:$0xff]
    %v4916 = vld [vmem:[#allocation14 + $0xb8] sm:$0xff]
    %v4917 = vld [vmem:[#allocation14 + $0xc0] sm:$0xff]
    %v4918 = vld [vmem:[#allocation14 + $0xc8] sm:$0xff]
    %v4919 = vld [vmem:[#allocation14 + $0xd0] sm:$0xff]
    %v4920 = vld [vmem:[#allocation14 + $0xd8] sm:$0xff]
    %v4921 = vld [vmem:[#allocation14 + $0xe0] sm:$0xff]
    %v4922 = vld [vmem:[#allocation14 + $0xe8] sm:$0xff]
    %v4923 = vld [vmem:[#allocation14 + $0xf0] sm:$0xff]
    %v4924 = vld [vmem:[#allocation14 + $0xf8] sm:$0xff]
    %v4925 = vld [vmem:[#allocation14 + $0x100] sm:$0xff]
    %v4926 = vld [vmem:[#allocation14 + $0x108] sm:$0xff]
    %v4927 = vld [vmem:[#allocation14 + $0x110] sm:$0xff]
    %v4928 = vld [vmem:[#allocation14 + $0x118] sm:$0xff]
    %v4929 = vld [vmem:[#allocation14 + $0x120] sm:$0xff]
    %v4930 = vld [vmem:[#allocation14 + $0x128] sm:$0xff]
    %v4931 = vld [vmem:[#allocation14 + $0x130] sm:$0xff]
    %v4932 = vld [vmem:[#allocation14 + $0x138] sm:$0xff]
    %v4933 = vld [vmem:[#allocation14 + $0x140] sm:$0xff]
    %v4934 = vld [vmem:[#allocation14 + $0x148] sm:$0xff]
    %v4935 = vld [vmem:[#allocation14 + $0x150] sm:$0xff]
    %v4936 = vld [vmem:[#allocation14 + $0x158] sm:$0xff]
    %v4937 = vld [vmem:[#allocation14 + $0x160] sm:$0xff]
    %v4938 = vld [vmem:[#allocation14 + $0x168] sm:$0xff]
    %v4939 = vld [vmem:[#allocation14 + $0x170] sm:$0xff]
    %v4940 = vld [vmem:[#allocation14 + $0x178] sm:$0xff]
    %v4941 = vld [vmem:[#allocation14 + $0x180] sm:$0xff]
    %v4942 = vld [vmem:[#allocation14 + $0x188] sm:$0xff]
    %v4943 = vld [vmem:[#allocation14 + $0x190] sm:$0xff]
    %v4944 = vld [vmem:[#allocation14 + $0x198] sm:$0xff]
    %v4945 = vld [vmem:[#allocation14 + $0x1a0] sm:$0xff]
    %v4946 = vld [vmem:[#allocation14 + $0x1a8] sm:$0xff]
    %v4947 = vld [vmem:[#allocation14 + $0x1b0] sm:$0xff]
    %v4948 = vld [vmem:[#allocation14 + $0x1b8] sm:$0xff]
    %v4949 = vld [vmem:[#allocation14 + $0x1c0] sm:$0xff]
    %v4950 = vld [vmem:[#allocation14 + $0x1c8] sm:$0xff]
    %v4951 = vld [vmem:[#allocation14 + $0x1d0] sm:$0xff]
    %v4952 = vld [vmem:[#allocation14 + $0x1d8] sm:$0xff]
    %v4953 = vld [vmem:[#allocation14 + $0x1e0] sm:$0xff]
    %v4954 = vld [vmem:[#allocation14 + $0x1e8] sm:$0xff]
    %v4955 = vld [vmem:[#allocation14 + $0x1f0] sm:$0xff]
    %v4956 = vld [vmem:[#allocation14 + $0x1f8] sm:$0xff]
    %v4957 = vld [vmem:[#allocation16] sm:$0x3]
    %v4958 = vpack.c.bf16 %v4889, %v4885
    %v4959 = vpack.c.bf16 %v4890, %v4886
    %v4960 = vpack.c.bf16 %v4891, %v4887
    %v4961 = vpack.c.bf16 %v4892, %v4888
    %v4963 = vlaneseq
    %v4964 = vshrl.u32 %v4963, 7
    %v4965 = vsub.s32 0, %v4964
    %v4966 = vrot.slane %v4957, %v4965
    %v4967 = vlaneseq
    %v4968 = vshrl.u32 %v4967, 7
    %v4969 = vsub.s32 1, %v4968
    %v4970 = vrot.slane %v4957, %v4969
    %v5037 = vunpack.c.l.b16 %v4893
    %v5038 = vunpack.c.h.b16 %v4893
    %v5039 = vunpack.c.l.b16 %v4894
    %v5040 = vunpack.c.h.b16 %v4894
    %v5041 = vunpack.c.l.b16 %v4895
    %v5042 = vunpack.c.h.b16 %v4895
    %v5043 = vunpack.c.l.b16 %v4896
    %v5044 = vunpack.c.h.b16 %v4896
    %v5045 = vunpack.c.l.b16 %v4897
    %v5046 = vunpack.c.h.b16 %v4897
    %v5047 = vunpack.c.l.b16 %v4898
    %v5048 = vunpack.c.h.b16 %v4898
    %v5049 = vunpack.c.l.b16 %v4899
    %v5050 = vunpack.c.h.b16 %v4899
    %v5051 = vunpack.c.l.b16 %v4900
    %v5052 = vunpack.c.h.b16 %v4900
    %v5053 = vunpack.c.l.b16 %v4901
    %v5054 = vunpack.c.h.b16 %v4901
    %v5055 = vunpack.c.l.b16 %v4902
    %v5056 = vunpack.c.h.b16 %v4902
    %v5057 = vunpack.c.l.b16 %v4903
    %v5058 = vunpack.c.h.b16 %v4903
    %v5059 = vunpack.c.l.b16 %v4904
    %v5060 = vunpack.c.h.b16 %v4904
    %v5061 = vunpack.c.l.b16 %v4905
    %v5062 = vunpack.c.h.b16 %v4905
    %v5063 = vunpack.c.l.b16 %v4906
    %v5064 = vunpack.c.h.b16 %v4906
    %v5065 = vunpack.c.l.b16 %v4907
    %v5066 = vunpack.c.h.b16 %v4907
    %v5067 = vunpack.c.l.b16 %v4908
    %v5068 = vunpack.c.h.b16 %v4908
    %v5069 = vunpack.c.l.b16 %v4909
    %v5070 = vunpack.c.h.b16 %v4909
    %v5071 = vunpack.c.l.b16 %v4910
    %v5072 = vunpack.c.h.b16 %v4910
    %v5073 = vunpack.c.l.b16 %v4911
    %v5074 = vunpack.c.h.b16 %v4911
    %v5075 = vunpack.c.l.b16 %v4912
    %v5076 = vunpack.c.h.b16 %v4912
    %v5077 = vunpack.c.l.b16 %v4913
    %v5078 = vunpack.c.h.b16 %v4913
    %v5079 = vunpack.c.l.b16 %v4914
    %v5080 = vunpack.c.h.b16 %v4914
    %v5081 = vunpack.c.l.b16 %v4915
    %v5082 = vunpack.c.h.b16 %v4915
    %v5083 = vunpack.c.l.b16 %v4916
    %v5084 = vunpack.c.h.b16 %v4916
    %v5085 = vunpack.c.l.b16 %v4917
    %v5086 = vunpack.c.h.b16 %v4917
    %v5087 = vunpack.c.l.b16 %v4918
    %v5088 = vunpack.c.h.b16 %v4918
    %v5089 = vunpack.c.l.b16 %v4919
    %v5090 = vunpack.c.h.b16 %v4919
    %v5091 = vunpack.c.l.b16 %v4920
    %v5092 = vunpack.c.h.b16 %v4920
    %v5093 = vunpack.c.l.b16 %v4921
    %v5094 = vunpack.c.h.b16 %v4921
    %v5095 = vunpack.c.l.b16 %v4922
    %v5096 = vunpack.c.h.b16 %v4922
    %v5097 = vunpack.c.l.b16 %v4923
    %v5098 = vunpack.c.h.b16 %v4923
    %v5099 = vunpack.c.l.b16 %v4924
    %v5100 = vunpack.c.h.b16 %v4924
    %v5101 = vunpack.c.l.b16 %v4925
    %v5102 = vunpack.c.h.b16 %v4925
    %v5103 = vunpack.c.l.b16 %v4926
    %v5104 = vunpack.c.h.b16 %v4926
    %v5105 = vunpack.c.l.b16 %v4927
    %v5106 = vunpack.c.h.b16 %v4927
    %v5107 = vunpack.c.l.b16 %v4928
    %v5108 = vunpack.c.h.b16 %v4928
    %v5109 = vunpack.c.l.b16 %v4929
    %v5110 = vunpack.c.h.b16 %v4929
    %v5111 = vunpack.c.l.b16 %v4930
    %v5112 = vunpack.c.h.b16 %v4930
    %v5113 = vunpack.c.l.b16 %v4931
    %v5114 = vunpack.c.h.b16 %v4931
    %v5115 = vunpack.c.l.b16 %v4932
    %v5116 = vunpack.c.h.b16 %v4932
    %v5117 = vunpack.c.l.b16 %v4933
    %v5118 = vunpack.c.h.b16 %v4933
    %v5119 = vunpack.c.l.b16 %v4934
    %v5120 = vunpack.c.h.b16 %v4934
    %v5121 = vunpack.c.l.b16 %v4935
    %v5122 = vunpack.c.h.b16 %v4935
    %v5123 = vunpack.c.l.b16 %v4936
    %v5124 = vunpack.c.h.b16 %v4936
    %v5125 = vunpack.c.l.b16 %v4937
    %v5126 = vunpack.c.h.b16 %v4937
    %v5127 = vunpack.c.l.b16 %v4938
    %v5128 = vunpack.c.h.b16 %v4938
    %v5129 = vunpack.c.l.b16 %v4939
    %v5130 = vunpack.c.h.b16 %v4939
    %v5131 = vunpack.c.l.b16 %v4940
    %v5132 = vunpack.c.h.b16 %v4940
    %v5133 = vunpack.c.l.b16 %v4941
    %v5134 = vunpack.c.h.b16 %v4941
    %v5135 = vunpack.c.l.b16 %v4942
    %v5136 = vunpack.c.h.b16 %v4942
    %v5137 = vunpack.c.l.b16 %v4943
    %v5138 = vunpack.c.h.b16 %v4943
    %v5139 = vunpack.c.l.b16 %v4944
    %v5140 = vunpack.c.h.b16 %v4944
    %v5141 = vunpack.c.l.b16 %v4945
    %v5142 = vunpack.c.h.b16 %v4945
    %v5143 = vunpack.c.l.b16 %v4946
    %v5144 = vunpack.c.h.b16 %v4946
    %v5145 = vunpack.c.l.b16 %v4947
    %v5146 = vunpack.c.h.b16 %v4947
    %v5147 = vunpack.c.l.b16 %v4948
    %v5148 = vunpack.c.h.b16 %v4948
    %v5149 = vunpack.c.l.b16 %v4949
    %v5150 = vunpack.c.h.b16 %v4949
    %v5151 = vunpack.c.l.b16 %v4950
    %v5152 = vunpack.c.h.b16 %v4950
    %v5153 = vunpack.c.l.b16 %v4951
    %v5154 = vunpack.c.h.b16 %v4951
    %v5155 = vunpack.c.l.b16 %v4952
    %v5156 = vunpack.c.h.b16 %v4952
    %v5157 = vunpack.c.l.b16 %v4953
    %v5158 = vunpack.c.h.b16 %v4953
    %v5159 = vunpack.c.l.b16 %v4954
    %v5160 = vunpack.c.h.b16 %v4954
    %v5161 = vunpack.c.l.b16 %v4955
    %v5162 = vunpack.c.h.b16 %v4955
    %v5163 = vunpack.c.l.b16 %v4956
    %v5164 = vunpack.c.h.b16 %v4956
    %v5165 = vpack.c.b16 %v5039, %v5037
    %v5166 = vpack.c.b16 %v5040, %v5038
    %v5167 = vpack.c.b16 %v5043, %v5041
    %v5168 = vpack.c.b16 %v5044, %v5042
    %v5169 = vpack.c.b16 %v5047, %v5045
    %v5170 = vpack.c.b16 %v5048, %v5046
    %v5171 = vpack.c.b16 %v5051, %v5049
    %v5172 = vpack.c.b16 %v5052, %v5050
    %v5173 = vpack.c.b16 %v5055, %v5053
    %v5174 = vpack.c.b16 %v5056, %v5054
    %v5175 = vpack.c.b16 %v5059, %v5057
    %v5176 = vpack.c.b16 %v5060, %v5058
    %v5177 = vpack.c.b16 %v5063, %v5061
    %v5178 = vpack.c.b16 %v5064, %v5062
    %v5179 = vpack.c.b16 %v5067, %v5065
    %v5180 = vpack.c.b16 %v5068, %v5066
    %v5181 = vpack.c.b16 %v5071, %v5069
    %v5182 = vpack.c.b16 %v5072, %v5070
    %v5183 = vpack.c.b16 %v5075, %v5073
    %v5184 = vpack.c.b16 %v5076, %v5074
    %v5185 = vpack.c.b16 %v5079, %v5077
    %v5186 = vpack.c.b16 %v5080, %v5078
    %v5187 = vpack.c.b16 %v5083, %v5081
    %v5188 = vpack.c.b16 %v5084, %v5082
    %v5189 = vpack.c.b16 %v5087, %v5085
    %v5190 = vpack.c.b16 %v5088, %v5086
    %v5191 = vpack.c.b16 %v5091, %v5089
    %v5192 = vpack.c.b16 %v5092, %v5090
    %v5193 = vpack.c.b16 %v5095, %v5093
    %v5194 = vpack.c.b16 %v5096, %v5094
    %v5195 = vpack.c.b16 %v5099, %v5097
    %v5196 = vpack.c.b16 %v5100, %v5098
    %v5197 = vpack.c.b16 %v5103, %v5101
    %v5198 = vpack.c.b16 %v5104, %v5102
    %v5199 = vpack.c.b16 %v5107, %v5105
    %v5200 = vpack.c.b16 %v5108, %v5106
    %v5201 = vpack.c.b16 %v5111, %v5109
    %v5202 = vpack.c.b16 %v5112, %v5110
    %v5203 = vpack.c.b16 %v5115, %v5113
    %v5204 = vpack.c.b16 %v5116, %v5114
    %v5205 = vpack.c.b16 %v5119, %v5117
    %v5206 = vpack.c.b16 %v5120, %v5118
    %v5207 = vpack.c.b16 %v5123, %v5121
    %v5208 = vpack.c.b16 %v5124, %v5122
    %v5209 = vpack.c.b16 %v5127, %v5125
    %v5210 = vpack.c.b16 %v5128, %v5126
    %v5211 = vpack.c.b16 %v5131, %v5129
    %v5212 = vpack.c.b16 %v5132, %v5130
    %v5213 = vpack.c.b16 %v5135, %v5133
    %v5214 = vpack.c.b16 %v5136, %v5134
    %v5215 = vpack.c.b16 %v5139, %v5137
    %v5216 = vpack.c.b16 %v5140, %v5138
    %v5217 = vpack.c.b16 %v5143, %v5141
    %v5218 = vpack.c.b16 %v5144, %v5142
    %v5219 = vpack.c.b16 %v5147, %v5145
    %v5220 = vpack.c.b16 %v5148, %v5146
    %v5221 = vpack.c.b16 %v5151, %v5149
    %v5222 = vpack.c.b16 %v5152, %v5150
    %v5223 = vpack.c.b16 %v5155, %v5153
    %v5224 = vpack.c.b16 %v5156, %v5154
    %v5225 = vpack.c.b16 %v5159, %v5157
    %v5226 = vpack.c.b16 %v5160, %v5158
    %v5227 = vpack.c.b16 %v5163, %v5161
    %v5228 = vpack.c.b16 %v5164, %v5162
    %5293 = vmatprep.subr.bf16.mxu0 %v5180
    %5294 = vmatpush1.bf16.msra.mxu0 %v5179
    %5295 = vmatprep.subr.bf16.mxu0 %v5178
    %5296 = vmatpush1.bf16.msra.mxu0 %v5177
    %5297 = vmatprep.subr.bf16.mxu0 %v5176
    %5298 = vmatpush1.bf16.msra.mxu0 %v5175
    %5299 = vmatprep.subr.bf16.mxu0 %v5174
    %5300 = vmatpush1.bf16.msra.mxu0 %v5173
    %5301 = vmatprep.subr.bf16.mxu0 %v5172
    %5302 = vmatpush1.bf16.msra.mxu0 %v5171
    %5303 = vmatprep.subr.bf16.mxu0 %v5170
    %5304 = vmatpush1.bf16.msra.mxu0 %v5169
    %5305 = vmatprep.subr.bf16.mxu0 %v5168
    %5306 = vmatpush1.bf16.msra.mxu0 %v5167
    %5307 = vmatprep.subr.bf16.mxu0 %v5166
    %5308 = vmatpush1.bf16.msra.mxu0 %v5165
    %5309 = vmatprep.subr.bf16.mxu0 %v5196
    %5310 = vmatpush2.bf16.msra.mxu0 %v5195
    %5311 = vmatprep.subr.bf16.mxu0 %v5194
    %5312 = vmatpush2.bf16.msra.mxu0 %v5193
    %5313 = vmatprep.subr.bf16.mxu0 %v5192
    %5314 = vmatpush2.bf16.msra.mxu0 %v5191
    %5315 = vmatprep.subr.bf16.mxu0 %v5190
    %5316 = vmatpush2.bf16.msra.mxu0 %v5189
    %5317 = vmatprep.subr.bf16.mxu0 %v5188
    %5318 = vmatpush2.bf16.msra.mxu0 %v5187
    %5319 = vmatprep.subr.bf16.mxu0 %v5186
    %5320 = vmatpush2.bf16.msra.mxu0 %v5185
    %5321 = vmatprep.subr.bf16.mxu0 %v5184
    %5322 = vmatpush2.bf16.msra.mxu0 %v5183
    %5323 = vmatprep.subr.bf16.mxu0 %v5182
    %5324 = vmatpush2.bf16.msra.mxu0 %v5181
    %5325 = vmatprep.mubr.bf16.mxu0 %v4959
    %5326 = vmatmul.mubr.bf16.gmra.mxu0 %v4958
    %v5327 = vpop.f32.mrf.mxu0
    %v5328 = vadd.f32 %v4966, %v5327
    %v5329 = vpop.f32.mrf.mxu0
    %v5330 = vadd.f32 %v4970, %v5329
    %v5331 = vpop.f32.mrf.mxu0
    %v5332 = vadd.f32 %v4966, %v5331
    %v5333 = vpop.f32.mrf.mxu0
    %v5334 = vadd.f32 %v4970, %v5333
    %5335 = vdwg.mxu0
    %5336 = vmatprep.subr.bf16.mxu0 %v5212
    %5337 = vmatpush1.bf16.msra.mxu0 %v5211
    %5338 = vmatprep.subr.bf16.mxu0 %v5210
    %5339 = vmatpush1.bf16.msra.mxu0 %v5209
    %5340 = vmatprep.subr.bf16.mxu0 %v5208
    %5341 = vmatpush1.bf16.msra.mxu0 %v5207
    %5342 = vmatprep.subr.bf16.mxu0 %v5206
    %5343 = vmatpush1.bf16.msra.mxu0 %v5205
    %5344 = vmatprep.subr.bf16.mxu0 %v5204
    %5345 = vmatpush1.bf16.msra.mxu0 %v5203
    %5346 = vmatprep.subr.bf16.mxu0 %v5202
    %5347 = vmatpush1.bf16.msra.mxu0 %v5201
    %5348 = vmatprep.subr.bf16.mxu0 %v5200
    %5349 = vmatpush1.bf16.msra.mxu0 %v5199
    %5350 = vmatprep.subr.bf16.mxu0 %v5198
    %5351 = vmatpush1.bf16.msra.mxu0 %v5197
    %5352 = vmatprep.subr.bf16.mxu0 %v5228
    %5353 = vmatpush2.bf16.msra.mxu0 %v5227
    %5354 = vmatprep.subr.bf16.mxu0 %v5226
    %5355 = vmatpush2.bf16.msra.mxu0 %v5225
    %5356 = vmatprep.subr.bf16.mxu0 %v5224
    %5357 = vmatpush2.bf16.msra.mxu0 %v5223
    %5358 = vmatprep.subr.bf16.mxu0 %v5222
    %5359 = vmatpush2.bf16.msra.mxu0 %v5221
    %5360 = vmatprep.subr.bf16.mxu0 %v5220
    %5361 = vmatpush2.bf16.msra.mxu0 %v5219
    %5362 = vmatprep.subr.bf16.mxu0 %v5218
    %5363 = vmatpush2.bf16.msra.mxu0 %v5217
    %5364 = vmatprep.subr.bf16.mxu0 %v5216
    %5365 = vmatpush2.bf16.msra.mxu0 %v5215
    %5366 = vmatprep.subr.bf16.mxu0 %v5214
    %5367 = vmatpush2.bf16.msra.mxu0 %v5213
    %5368 = vmatprep.mubr.bf16.mxu0 %v4961
    %5369 = vmatmul.mubr.bf16.gmra.mxu0 %v4960
    %v5370 = vpop.f32.mrf.mxu0
    %v5371 = vadd.f32 %v5328, %v5370
    %v5372 = vpop.f32.mrf.mxu0
    %v5373 = vadd.f32 %v5330, %v5372
    %v5374 = vpop.f32.mrf.mxu0
    %v5375 = vadd.f32 %v5332, %v5374
    %v5376 = vpop.f32.mrf.mxu0
    %v5377 = vadd.f32 %v5334, %v5376
    %5378 = vdwg.mxu0
    %5379 = vst [vmem:[#allocation24] sm:$0xff] %v5371
    %5380 = vst [vmem:[#allocation24 + $0x8] sm:$0xff] %v5375
    %5381 = vst [vmem:[#allocation26] sm:$0xff] %v5373
    %5382 = vst [vmem:[#allocation26 + $0x8] sm:$0xff] %v5377
    %v5383 = vld [vmem:[#allocation5] sm:$0xff]
    %v5384 = vld [vmem:[#allocation5 + $0x8] sm:$0xff]
    %v5385 = vmul.f32 %v5373, 0.5
    %v5386 = vmul.f32 %v5377, 0.5
    %v5387 = vmul.f32 %v5385, 1.442695
    %v5388 = vpow.pop %v5387
    %v5389 = vmul.f32 %v5386, 1.442695
    %v5390 = vpow.pop %v5389
    %v5391 = vmul.f32 %v5383, %v5388
    %v5392 = vmul.f32 %v5384, %v5390
    %v5393 = vadd.f32 %v5371, %v5391
    %v5394 = vadd.f32 %v5375, %v5392
    %v5395 = vld [vmem:[#allocation17] sm:$0xff]
    %v5396 = vld [vmem:[#allocation17 + $0x8] sm:$0xff]
    %v5397 = vld [vmem:[#allocation17 + $0x10] sm:$0xff]
    %v5398 = vld [vmem:[#allocation17 + $0x18] sm:$0xff]
    %v5399 = vld [vmem:[#allocation17 + $0x20] sm:$0xff]
    %v5400 = vld [vmem:[#allocation17 + $0x28] sm:$0xff]
    %v5401 = vld [vmem:[#allocation17 + $0x30] sm:$0xff]
    %v5402 = vld [vmem:[#allocation17 + $0x38] sm:$0xff]
    %v5403 = vld [vmem:[#allocation17 + $0x40] sm:$0xff]
    %v5404 = vld [vmem:[#allocation17 + $0x48] sm:$0xff]
    %v5405 = vld [vmem:[#allocation17 + $0x50] sm:$0xff]
    %v5406 = vld [vmem:[#allocation17 + $0x58] sm:$0xff]
    %v5407 = vld [vmem:[#allocation17 + $0x60] sm:$0xff]
    %v5408 = vld [vmem:[#allocation17 + $0x68] sm:$0xff]
    %v5409 = vld [vmem:[#allocation17 + $0x70] sm:$0xff]
    %v5410 = vld [vmem:[#allocation17 + $0x78] sm:$0xff]
    %v5411 = vld [vmem:[#allocation19] sm:$0x3]
    %v5412 = vpack.c.bf16 %v5394, %v5393
    %v5414 = vlaneseq
    %v5415 = vshrl.u32 %v5414, 7
    %v5416 = vsub.s32 0, %v5415
    %v5417 = vrot.slane %v5411, %v5416
    %v5418 = vlaneseq
    %v5419 = vshrl.u32 %v5418, 7
    %v5420 = vsub.s32 1, %v5419
    %v5421 = vrot.slane %v5411, %v5420
    %v5440 = vunpack.c.l.b16 %v5395
    %v5441 = vunpack.c.h.b16 %v5395
    %v5442 = vunpack.c.l.b16 %v5396
    %v5443 = vunpack.c.h.b16 %v5396
    %v5444 = vunpack.c.l.b16 %v5397
    %v5445 = vunpack.c.h.b16 %v5397
    %v5446 = vunpack.c.l.b16 %v5398
    %v5447 = vunpack.c.h.b16 %v5398
    %v5448 = vunpack.c.l.b16 %v5399
    %v5449 = vunpack.c.h.b16 %v5399
    %v5450 = vunpack.c.l.b16 %v5400
    %v5451 = vunpack.c.h.b16 %v5400
    %v5452 = vunpack.c.l.b16 %v5401
    %v5453 = vunpack.c.h.b16 %v5401
    %v5454 = vunpack.c.l.b16 %v5402
    %v5455 = vunpack.c.h.b16 %v5402
    %v5456 = vunpack.c.l.b16 %v5403
    %v5457 = vunpack.c.h.b16 %v5403
    %v5458 = vunpack.c.l.b16 %v5404
    %v5459 = vunpack.c.h.b16 %v5404
    %v5460 = vunpack.c.l.b16 %v5405
    %v5461 = vunpack.c.h.b16 %v5405
    %v5462 = vunpack.c.l.b16 %v5406
    %v5463 = vunpack.c.h.b16 %v5406
    %v5464 = vunpack.c.l.b16 %v5407
    %v5465 = vunpack.c.h.b16 %v5407
    %v5466 = vunpack.c.l.b16 %v5408
    %v5467 = vunpack.c.h.b16 %v5408
    %v5468 = vunpack.c.l.b16 %v5409
    %v5469 = vunpack.c.h.b16 %v5409
    %v5470 = vunpack.c.l.b16 %v5410
    %v5471 = vunpack.c.h.b16 %v5410
    %v5472 = vpack.c.b16 %v5442, %v5440
    %v5473 = vpack.c.b16 %v5443, %v5441
    %v5474 = vpack.c.b16 %v5446, %v5444
    %v5475 = vpack.c.b16 %v5447, %v5445
    %v5476 = vpack.c.b16 %v5450, %v5448
    %v5477 = vpack.c.b16 %v5451, %v5449
    %v5478 = vpack.c.b16 %v5454, %v5452
    %v5479 = vpack.c.b16 %v5455, %v5453
    %v5480 = vpack.c.b16 %v5458, %v5456
    %v5481 = vpack.c.b16 %v5459, %v5457
    %v5482 = vpack.c.b16 %v5462, %v5460
    %v5483 = vpack.c.b16 %v5463, %v5461
    %v5484 = vpack.c.b16 %v5466, %v5464
    %v5485 = vpack.c.b16 %v5467, %v5465
    %v5486 = vpack.c.b16 %v5470, %v5468
    %v5487 = vpack.c.b16 %v5471, %v5469
    %5504 = vmatprep.subr.bf16.mxu0 %v5487
    %5505 = vmatpush1.bf16.msra.mxu0 %v5486
    %5506 = vmatprep.subr.bf16.mxu0 %v5485
    %5507 = vmatpush1.bf16.msra.mxu0 %v5484
    %5508 = vmatprep.subr.bf16.mxu0 %v5483
    %5509 = vmatpush1.bf16.msra.mxu0 %v5482
    %5510 = vmatprep.subr.bf16.mxu0 %v5481
    %5511 = vmatpush1.bf16.msra.mxu0 %v5480
    %5512 = vmatprep.subr.bf16.mxu0 %v5479
    %5513 = vmatpush1.bf16.msra.mxu0 %v5478
    %5514 = vmatprep.subr.bf16.mxu0 %v5477
    %5515 = vmatpush1.bf16.msra.mxu0 %v5476
    %5516 = vmatprep.subr.bf16.mxu0 %v5475
    %5517 = vmatpush1.bf16.msra.mxu0 %v5474
    %5518 = vmatprep.subr.bf16.mxu0 %v5473
    %5519 = vmatpush1.bf16.msra.mxu0 %v5472
    %5520 = vmatprep.subr.bf16.mxu0 0
    %5521 = vmatpush2.bf16.msra.mxu0 0
    %5522 = vmatprep.subr.bf16.mxu0 0
    %5523 = vmatpush2.bf16.msra.mxu0 0
    %5524 = vmatprep.subr.bf16.mxu0 0
    %5525 = vmatpush2.bf16.msra.mxu0 0
    %5526 = vmatprep.subr.bf16.mxu0 0
    %5527 = vmatpush2.bf16.msra.mxu0 0
    %5528 = vmatprep.subr.bf16.mxu0 0
    %5529 = vmatpush2.bf16.msra.mxu0 0
    %5530 = vmatprep.subr.bf16.mxu0 0
    %5531 = vmatpush2.bf16.msra.mxu0 0
    %5532 = vmatprep.subr.bf16.mxu0 0
    %5533 = vmatpush2.bf16.msra.mxu0 0
    %5534 = vmatprep.subr.bf16.mxu0 0
    %5535 = vmatpush2.bf16.msra.mxu0 0
    %5536 = vmatprep.mubr.bf16.mxu0 0
    %5537 = vmatmul.mubr.bf16.gmra.mxu0 %v5412
    %v5538 = vpop.f32.mrf.mxu0
    %v5539 = vadd.f32 %v5417, %v5538
    %v5540 = vpop.f32.mrf.mxu0
    %v5541 = vadd.f32 %v5421, %v5540
    %v5542 = vpop.f32.mrf.mxu0
    %v5543 = vadd.f32 %v5417, %v5542
    %v5544 = vpop.f32.mrf.mxu0
    %v5545 = vadd.f32 %v5421, %v5544
    %5546 = vdwg.mxu0
    %vm5547 = vcmp.ge.f32.partialorder %v5539, 0.0
    %vm5548 = vcmp.ge.f32.partialorder %v5541, 0.0
    %vm5549 = vcmp.ge.f32.partialorder %v5543, 0.0
    %vm5550 = vcmp.ge.f32.partialorder %v5545, 0.0
    %v5551 = vmul.f32 %v5539, 0.01
    %v5552 = vmul.f32 %v5541, 0.01
    %v5553 = vmul.f32 %v5543, 0.01
    %v5554 = vmul.f32 %v5545, 0.01
    %v5555 = vsel %vm5547, %v5539, %v5551
    %v5556 = vsel %vm5548, %v5541, %v5552
    %v5557 = vsel %vm5549, %v5543, %v5553
    %v5558 = vsel %vm5550, %v5545, %v5554
    %s5559 = scalar_lea.vmem [#allocation10], 512
    %v5560 = vld [vmem:[%s5559] sm:$0xff]
    %v5561 = vld [vmem:[%s5559 + $0x8] sm:$0xff]
    %v5562 = vld [vmem:[%s5559 + $0x10] sm:$0xff]
    %v5563 = vld [vmem:[%s5559 + $0x18] sm:$0xff]
    %v5564 = vld [vmem:[%s5559 + $0x20] sm:$0xff]
    %v5565 = vld [vmem:[%s5559 + $0x28] sm:$0xff]
    %v5566 = vld [vmem:[%s5559 + $0x30] sm:$0xff]
    %v5567 = vld [vmem:[%s5559 + $0x38] sm:$0xff]
    %v5568 = vld [vmem:[%s5559 + $0x40] sm:$0xff]
    %v5569 = vld [vmem:[%s5559 + $0x48] sm:$0xff]
    %v5570 = vld [vmem:[%s5559 + $0x50] sm:$0xff]
    %v5571 = vld [vmem:[%s5559 + $0x58] sm:$0xff]
    %v5572 = vld [vmem:[%s5559 + $0x60] sm:$0xff]
    %v5573 = vld [vmem:[%s5559 + $0x68] sm:$0xff]
    %v5574 = vld [vmem:[%s5559 + $0x70] sm:$0xff]
    %v5575 = vld [vmem:[%s5559 + $0x78] sm:$0xff]
    %v5576 = vld [vmem:[%s5559 + $0x80] sm:$0xff]
    %v5577 = vld [vmem:[%s5559 + $0x88] sm:$0xff]
    %v5578 = vld [vmem:[%s5559 + $0x90] sm:$0xff]
    %v5579 = vld [vmem:[%s5559 + $0x98] sm:$0xff]
    %v5580 = vld [vmem:[%s5559 + $0xa0] sm:$0xff]
    %v5581 = vld [vmem:[%s5559 + $0xa8] sm:$0xff]
    %v5582 = vld [vmem:[%s5559 + $0xb0] sm:$0xff]
    %v5583 = vld [vmem:[%s5559 + $0xb8] sm:$0xff]
    %v5584 = vld [vmem:[%s5559 + $0xc0] sm:$0xff]
    %v5585 = vld [vmem:[%s5559 + $0xc8] sm:$0xff]
    %v5586 = vld [vmem:[%s5559 + $0xd0] sm:$0xff]
    %v5587 = vld [vmem:[%s5559 + $0xd8] sm:$0xff]
    %v5588 = vld [vmem:[%s5559 + $0xe0] sm:$0xff]
    %v5589 = vld [vmem:[%s5559 + $0xe8] sm:$0xff]
    %v5590 = vld [vmem:[%s5559 + $0xf0] sm:$0xff]
    %v5591 = vld [vmem:[%s5559 + $0xf8] sm:$0xff]
    %v5592 = vld [vmem:[%s5559 + $0x100] sm:$0xff]
    %v5593 = vld [vmem:[%s5559 + $0x108] sm:$0xff]
    %v5594 = vld [vmem:[%s5559 + $0x110] sm:$0xff]
    %v5595 = vld [vmem:[%s5559 + $0x118] sm:$0xff]
    %v5596 = vld [vmem:[%s5559 + $0x120] sm:$0xff]
    %v5597 = vld [vmem:[%s5559 + $0x128] sm:$0xff]
    %v5598 = vld [vmem:[%s5559 + $0x130] sm:$0xff]
    %v5599 = vld [vmem:[%s5559 + $0x138] sm:$0xff]
    %v5600 = vld [vmem:[%s5559 + $0x140] sm:$0xff]
    %v5601 = vld [vmem:[%s5559 + $0x148] sm:$0xff]
    %v5602 = vld [vmem:[%s5559 + $0x150] sm:$0xff]
    %v5603 = vld [vmem:[%s5559 + $0x158] sm:$0xff]
    %v5604 = vld [vmem:[%s5559 + $0x160] sm:$0xff]
    %v5605 = vld [vmem:[%s5559 + $0x168] sm:$0xff]
    %v5606 = vld [vmem:[%s5559 + $0x170] sm:$0xff]
    %v5607 = vld [vmem:[%s5559 + $0x178] sm:$0xff]
    %v5608 = vld [vmem:[%s5559 + $0x180] sm:$0xff]
    %v5609 = vld [vmem:[%s5559 + $0x188] sm:$0xff]
    %v5610 = vld [vmem:[%s5559 + $0x190] sm:$0xff]
    %v5611 = vld [vmem:[%s5559 + $0x198] sm:$0xff]
    %v5612 = vld [vmem:[%s5559 + $0x1a0] sm:$0xff]
    %v5613 = vld [vmem:[%s5559 + $0x1a8] sm:$0xff]
    %v5614 = vld [vmem:[%s5559 + $0x1b0] sm:$0xff]
    %v5615 = vld [vmem:[%s5559 + $0x1b8] sm:$0xff]
    %v5616 = vld [vmem:[%s5559 + $0x1c0] sm:$0xff]
    %v5617 = vld [vmem:[%s5559 + $0x1c8] sm:$0xff]
    %v5618 = vld [vmem:[%s5559 + $0x1d0] sm:$0xff]
    %v5619 = vld [vmem:[%s5559 + $0x1d8] sm:$0xff]
    %v5620 = vld [vmem:[%s5559 + $0x1e0] sm:$0xff]
    %v5621 = vld [vmem:[%s5559 + $0x1e8] sm:$0xff]
    %v5622 = vld [vmem:[%s5559 + $0x1f0] sm:$0xff]
    %v5623 = vld [vmem:[%s5559 + $0x1f8] sm:$0xff]
    %s5624 = scalar_lea.vmem [#allocation13], 5
    %v5625 = vld [vmem:[%s5624] ss:$8 sm:$0xf]
    %v5626 = vpack.c.bf16 %v5557, %v5555
    %v5627 = vpack.c.bf16 %v5558, %v5556
    %v5629 = vlaneseq
    %v5630 = vshrl.u32 %v5629, 7
    %v5631 = vsub.s32 0, %v5630
    %v5632 = vrot.slane %v5625, %v5631
    %v5633 = vlaneseq
    %v5634 = vshrl.u32 %v5633, 7
    %v5635 = vsub.s32 1, %v5634
    %v5636 = vrot.slane %v5625, %v5635
    %v5637 = vlaneseq
    %v5638 = vshrl.u32 %v5637, 7
    %v5639 = vsub.s32 2, %v5638
    %v5640 = vrot.slane %v5625, %v5639
    %v5641 = vlaneseq
    %v5642 = vshrl.u32 %v5641, 7
    %v5643 = vsub.s32 3, %v5642
    %v5644 = vrot.slane %v5625, %v5643
    %v5713 = vunpack.c.l.b16 %v5560
    %v5714 = vunpack.c.h.b16 %v5560
    %v5715 = vunpack.c.l.b16 %v5561
    %v5716 = vunpack.c.h.b16 %v5561
    %v5717 = vunpack.c.l.b16 %v5562
    %v5718 = vunpack.c.h.b16 %v5562
    %v5719 = vunpack.c.l.b16 %v5563
    %v5720 = vunpack.c.h.b16 %v5563
    %v5721 = vunpack.c.l.b16 %v5564
    %v5722 = vunpack.c.h.b16 %v5564
    %v5723 = vunpack.c.l.b16 %v5565
    %v5724 = vunpack.c.h.b16 %v5565
    %v5725 = vunpack.c.l.b16 %v5566
    %v5726 = vunpack.c.h.b16 %v5566
    %v5727 = vunpack.c.l.b16 %v5567
    %v5728 = vunpack.c.h.b16 %v5567
    %v5729 = vunpack.c.l.b16 %v5568
    %v5730 = vunpack.c.h.b16 %v5568
    %v5731 = vunpack.c.l.b16 %v5569
    %v5732 = vunpack.c.h.b16 %v5569
    %v5733 = vunpack.c.l.b16 %v5570
    %v5734 = vunpack.c.h.b16 %v5570
    %v5735 = vunpack.c.l.b16 %v5571
    %v5736 = vunpack.c.h.b16 %v5571
    %v5737 = vunpack.c.l.b16 %v5572
    %v5738 = vunpack.c.h.b16 %v5572
    %v5739 = vunpack.c.l.b16 %v5573
    %v5740 = vunpack.c.h.b16 %v5573
    %v5741 = vunpack.c.l.b16 %v5574
    %v5742 = vunpack.c.h.b16 %v5574
    %v5743 = vunpack.c.l.b16 %v5575
    %v5744 = vunpack.c.h.b16 %v5575
    %v5745 = vunpack.c.l.b16 %v5576
    %v5746 = vunpack.c.h.b16 %v5576
    %v5747 = vunpack.c.l.b16 %v5577
    %v5748 = vunpack.c.h.b16 %v5577
    %v5749 = vunpack.c.l.b16 %v5578
    %v5750 = vunpack.c.h.b16 %v5578
    %v5751 = vunpack.c.l.b16 %v5579
    %v5752 = vunpack.c.h.b16 %v5579
    %v5753 = vunpack.c.l.b16 %v5580
    %v5754 = vunpack.c.h.b16 %v5580
    %v5755 = vunpack.c.l.b16 %v5581
    %v5756 = vunpack.c.h.b16 %v5581
    %v5757 = vunpack.c.l.b16 %v5582
    %v5758 = vunpack.c.h.b16 %v5582
    %v5759 = vunpack.c.l.b16 %v5583
    %v5760 = vunpack.c.h.b16 %v5583
    %v5761 = vunpack.c.l.b16 %v5584
    %v5762 = vunpack.c.h.b16 %v5584
    %v5763 = vunpack.c.l.b16 %v5585
    %v5764 = vunpack.c.h.b16 %v5585
    %v5765 = vunpack.c.l.b16 %v5586
    %v5766 = vunpack.c.h.b16 %v5586
    %v5767 = vunpack.c.l.b16 %v5587
    %v5768 = vunpack.c.h.b16 %v5587
    %v5769 = vunpack.c.l.b16 %v5588
    %v5770 = vunpack.c.h.b16 %v5588
    %v5771 = vunpack.c.l.b16 %v5589
    %v5772 = vunpack.c.h.b16 %v5589
    %v5773 = vunpack.c.l.b16 %v5590
    %v5774 = vunpack.c.h.b16 %v5590
    %v5775 = vunpack.c.l.b16 %v5591
    %v5776 = vunpack.c.h.b16 %v5591
    %v5777 = vunpack.c.l.b16 %v5592
    %v5778 = vunpack.c.h.b16 %v5592
    %v5779 = vunpack.c.l.b16 %v5593
    %v5780 = vunpack.c.h.b16 %v5593
    %v5781 = vunpack.c.l.b16 %v5594
    %v5782 = vunpack.c.h.b16 %v5594
    %v5783 = vunpack.c.l.b16 %v5595
    %v5784 = vunpack.c.h.b16 %v5595
    %v5785 = vunpack.c.l.b16 %v5596
    %v5786 = vunpack.c.h.b16 %v5596
    %v5787 = vunpack.c.l.b16 %v5597
    %v5788 = vunpack.c.h.b16 %v5597
    %v5789 = vunpack.c.l.b16 %v5598
    %v5790 = vunpack.c.h.b16 %v5598
    %v5791 = vunpack.c.l.b16 %v5599
    %v5792 = vunpack.c.h.b16 %v5599
    %v5793 = vunpack.c.l.b16 %v5600
    %v5794 = vunpack.c.h.b16 %v5600
    %v5795 = vunpack.c.l.b16 %v5601
    %v5796 = vunpack.c.h.b16 %v5601
    %v5797 = vunpack.c.l.b16 %v5602
    %v5798 = vunpack.c.h.b16 %v5602
    %v5799 = vunpack.c.l.b16 %v5603
    %v5800 = vunpack.c.h.b16 %v5603
    %v5801 = vunpack.c.l.b16 %v5604
    %v5802 = vunpack.c.h.b16 %v5604
    %v5803 = vunpack.c.l.b16 %v5605
    %v5804 = vunpack.c.h.b16 %v5605
    %v5805 = vunpack.c.l.b16 %v5606
    %v5806 = vunpack.c.h.b16 %v5606
    %v5807 = vunpack.c.l.b16 %v5607
    %v5808 = vunpack.c.h.b16 %v5607
    %v5809 = vunpack.c.l.b16 %v5608
    %v5810 = vunpack.c.h.b16 %v5608
    %v5811 = vunpack.c.l.b16 %v5609
    %v5812 = vunpack.c.h.b16 %v5609
    %v5813 = vunpack.c.l.b16 %v5610
    %v5814 = vunpack.c.h.b16 %v5610
    %v5815 = vunpack.c.l.b16 %v5611
    %v5816 = vunpack.c.h.b16 %v5611
    %v5817 = vunpack.c.l.b16 %v5612
    %v5818 = vunpack.c.h.b16 %v5612
    %v5819 = vunpack.c.l.b16 %v5613
    %v5820 = vunpack.c.h.b16 %v5613
    %v5821 = vunpack.c.l.b16 %v5614
    %v5822 = vunpack.c.h.b16 %v5614
    %v5823 = vunpack.c.l.b16 %v5615
    %v5824 = vunpack.c.h.b16 %v5615
    %v5825 = vunpack.c.l.b16 %v5616
    %v5826 = vunpack.c.h.b16 %v5616
    %v5827 = vunpack.c.l.b16 %v5617
    %v5828 = vunpack.c.h.b16 %v5617
    %v5829 = vunpack.c.l.b16 %v5618
    %v5830 = vunpack.c.h.b16 %v5618
    %v5831 = vunpack.c.l.b16 %v5619
    %v5832 = vunpack.c.h.b16 %v5619
    %v5833 = vunpack.c.l.b16 %v5620
    %v5834 = vunpack.c.h.b16 %v5620
    %v5835 = vunpack.c.l.b16 %v5621
    %v5836 = vunpack.c.h.b16 %v5621
    %v5837 = vunpack.c.l.b16 %v5622
    %v5838 = vunpack.c.h.b16 %v5622
    %v5839 = vunpack.c.l.b16 %v5623
    %v5840 = vunpack.c.h.b16 %v5623
    %v5841 = vpack.c.b16 %v5717, %v5713
    %v5842 = vpack.c.b16 %v5718, %v5714
    %v5843 = vpack.c.b16 %v5719, %v5715
    %v5844 = vpack.c.b16 %v5720, %v5716
    %v5845 = vpack.c.b16 %v5725, %v5721
    %v5846 = vpack.c.b16 %v5726, %v5722
    %v5847 = vpack.c.b16 %v5727, %v5723
    %v5848 = vpack.c.b16 %v5728, %v5724
    %v5849 = vpack.c.b16 %v5733, %v5729
    %v5850 = vpack.c.b16 %v5734, %v5730
    %v5851 = vpack.c.b16 %v5735, %v5731
    %v5852 = vpack.c.b16 %v5736, %v5732
    %v5853 = vpack.c.b16 %v5741, %v5737
    %v5854 = vpack.c.b16 %v5742, %v5738
    %v5855 = vpack.c.b16 %v5743, %v5739
    %v5856 = vpack.c.b16 %v5744, %v5740
    %v5857 = vpack.c.b16 %v5749, %v5745
    %v5858 = vpack.c.b16 %v5750, %v5746
    %v5859 = vpack.c.b16 %v5751, %v5747
    %v5860 = vpack.c.b16 %v5752, %v5748
    %v5861 = vpack.c.b16 %v5757, %v5753
    %v5862 = vpack.c.b16 %v5758, %v5754
    %v5863 = vpack.c.b16 %v5759, %v5755
    %v5864 = vpack.c.b16 %v5760, %v5756
    %v5865 = vpack.c.b16 %v5765, %v5761
    %v5866 = vpack.c.b16 %v5766, %v5762
    %v5867 = vpack.c.b16 %v5767, %v5763
    %v5868 = vpack.c.b16 %v5768, %v5764
    %v5869 = vpack.c.b16 %v5773, %v5769
    %v5870 = vpack.c.b16 %v5774, %v5770
    %v5871 = vpack.c.b16 %v5775, %v5771
    %v5872 = vpack.c.b16 %v5776, %v5772
    %v5873 = vpack.c.b16 %v5781, %v5777
    %v5874 = vpack.c.b16 %v5782, %v5778
    %v5875 = vpack.c.b16 %v5783, %v5779
    %v5876 = vpack.c.b16 %v5784, %v5780
    %v5877 = vpack.c.b16 %v5789, %v5785
    %v5878 = vpack.c.b16 %v5790, %v5786
    %v5879 = vpack.c.b16 %v5791, %v5787
    %v5880 = vpack.c.b16 %v5792, %v5788
    %v5881 = vpack.c.b16 %v5797, %v5793
    %v5882 = vpack.c.b16 %v5798, %v5794
    %v5883 = vpack.c.b16 %v5799, %v5795
    %v5884 = vpack.c.b16 %v5800, %v5796
    %v5885 = vpack.c.b16 %v5805, %v5801
    %v5886 = vpack.c.b16 %v5806, %v5802
    %v5887 = vpack.c.b16 %v5807, %v5803
    %v5888 = vpack.c.b16 %v5808, %v5804
    %v5889 = vpack.c.b16 %v5813, %v5809
    %v5890 = vpack.c.b16 %v5814, %v5810
    %v5891 = vpack.c.b16 %v5815, %v5811
    %v5892 = vpack.c.b16 %v5816, %v5812
    %v5893 = vpack.c.b16 %v5821, %v5817
    %v5894 = vpack.c.b16 %v5822, %v5818
    %v5895 = vpack.c.b16 %v5823, %v5819
    %v5896 = vpack.c.b16 %v5824, %v5820
    %v5897 = vpack.c.b16 %v5829, %v5825
    %v5898 = vpack.c.b16 %v5830, %v5826
    %v5899 = vpack.c.b16 %v5831, %v5827
    %v5900 = vpack.c.b16 %v5832, %v5828
    %v5901 = vpack.c.b16 %v5837, %v5833
    %v5902 = vpack.c.b16 %v5838, %v5834
    %v5903 = vpack.c.b16 %v5839, %v5835
    %v5904 = vpack.c.b16 %v5840, %v5836
    %5969 = vmatprep.subr.bf16.mxu0 %v5870
    %5970 = vmatpush1.bf16.msra.mxu0 %v5869
    %5971 = vmatprep.subr.bf16.mxu0 %v5866
    %5972 = vmatpush1.bf16.msra.mxu0 %v5865
    %5973 = vmatprep.subr.bf16.mxu0 %v5862
    %5974 = vmatpush1.bf16.msra.mxu0 %v5861
    %5975 = vmatprep.subr.bf16.mxu0 %v5858
    %5976 = vmatpush1.bf16.msra.mxu0 %v5857
    %5977 = vmatprep.subr.bf16.mxu0 %v5854
    %5978 = vmatpush1.bf16.msra.mxu0 %v5853
    %5979 = vmatprep.subr.bf16.mxu0 %v5850
    %5980 = vmatpush1.bf16.msra.mxu0 %v5849
    %5981 = vmatprep.subr.bf16.mxu0 %v5846
    %5982 = vmatpush1.bf16.msra.mxu0 %v5845
    %5983 = vmatprep.subr.bf16.mxu0 %v5842
    %5984 = vmatpush1.bf16.msra.mxu0 %v5841
    %5985 = vmatprep.subr.bf16.mxu0 %v5902
    %5986 = vmatpush2.bf16.msra.mxu0 %v5901
    %5987 = vmatprep.subr.bf16.mxu0 %v5898
    %5988 = vmatpush2.bf16.msra.mxu0 %v5897
    %5989 = vmatprep.subr.bf16.mxu0 %v5894
    %5990 = vmatpush2.bf16.msra.mxu0 %v5893
    %5991 = vmatprep.subr.bf16.mxu0 %v5890
    %5992 = vmatpush2.bf16.msra.mxu0 %v5889
    %5993 = vmatprep.subr.bf16.mxu0 %v5886
    %5994 = vmatpush2.bf16.msra.mxu0 %v5885
    %5995 = vmatprep.subr.bf16.mxu0 %v5882
    %5996 = vmatpush2.bf16.msra.mxu0 %v5881
    %5997 = vmatprep.subr.bf16.mxu0 %v5878
    %5998 = vmatpush2.bf16.msra.mxu0 %v5877
    %5999 = vmatprep.subr.bf16.mxu0 %v5874
    %6000 = vmatpush2.bf16.msra.mxu0 %v5873
    %6001 = vmatprep.mubr.bf16.mxu0 %v5627
    %6002 = vmatmul.mubr.bf16.gmra.mxu0 %v5626
    %v6003 = vpop.f32.mrf.mxu0
    %v6004 = vadd.f32 %v5632, %v6003
    %v6005 = vpop.f32.mrf.mxu0
    %v6006 = vadd.f32 %v5636, %v6005
    %v6007 = vpop.f32.mrf.mxu0
    %v6008 = vadd.f32 %v5632, %v6007
    %v6009 = vpop.f32.mrf.mxu0
    %v6010 = vadd.f32 %v5636, %v6009
    %6011 = vdwg.mxu0
    %6012 = vmatprep.subr.bf16.mxu0 %v5872
    %6013 = vmatpush1.bf16.msra.mxu0 %v5871
    %6014 = vmatprep.subr.bf16.mxu0 %v5868
    %6015 = vmatpush1.bf16.msra.mxu0 %v5867
    %6016 = vmatprep.subr.bf16.mxu0 %v5864
    %6017 = vmatpush1.bf16.msra.mxu0 %v5863
    %6018 = vmatprep.subr.bf16.mxu0 %v5860
    %6019 = vmatpush1.bf16.msra.mxu0 %v5859
    %6020 = vmatprep.subr.bf16.mxu0 %v5856
    %6021 = vmatpush1.bf16.msra.mxu0 %v5855
    %6022 = vmatprep.subr.bf16.mxu0 %v5852
    %6023 = vmatpush1.bf16.msra.mxu0 %v5851
    %6024 = vmatprep.subr.bf16.mxu0 %v5848
    %6025 = vmatpush1.bf16.msra.mxu0 %v5847
    %6026 = vmatprep.subr.bf16.mxu0 %v5844
    %6027 = vmatpush1.bf16.msra.mxu0 %v5843
    %6028 = vmatprep.subr.bf16.mxu0 %v5904
    %6029 = vmatpush2.bf16.msra.mxu0 %v5903
    %6030 = vmatprep.subr.bf16.mxu0 %v5900
    %6031 = vmatpush2.bf16.msra.mxu0 %v5899
    %6032 = vmatprep.subr.bf16.mxu0 %v5896
    %6033 = vmatpush2.bf16.msra.mxu0 %v5895
    %6034 = vmatprep.subr.bf16.mxu0 %v5892
    %6035 = vmatpush2.bf16.msra.mxu0 %v5891
    %6036 = vmatprep.subr.bf16.mxu0 %v5888
    %6037 = vmatpush2.bf16.msra.mxu0 %v5887
    %6038 = vmatprep.subr.bf16.mxu0 %v5884
    %6039 = vmatpush2.bf16.msra.mxu0 %v5883
    %6040 = vmatprep.subr.bf16.mxu0 %v5880
    %6041 = vmatpush2.bf16.msra.mxu0 %v5879
    %6042 = vmatprep.subr.bf16.mxu0 %v5876
    %6043 = vmatpush2.bf16.msra.mxu0 %v5875
    %6044 = vmatprep.mubr.bf16.mxu0 %v5627
    %6045 = vmatmul.mubr.bf16.gmra.mxu0 %v5626
    %v6046 = vpop.f32.mrf.mxu0
    %v6047 = vadd.f32 %v5640, %v6046
    %v6048 = vpop.f32.mrf.mxu0
    %v6049 = vadd.f32 %v5644, %v6048
    %v6050 = vpop.f32.mrf.mxu0
    %v6051 = vadd.f32 %v5640, %v6050
    %v6052 = vpop.f32.mrf.mxu0
    %v6053 = vadd.f32 %v5644, %v6052
    %6054 = vdwg.mxu0
    %vm6055 = vcmp.ge.f32.partialorder %v6004, 0.0
    %vm6056 = vcmp.ge.f32.partialorder %v6006, 0.0
    %vm6057 = vcmp.ge.f32.partialorder %v6047, 0.0
    %vm6058 = vcmp.ge.f32.partialorder %v6049, 0.0
    %vm6059 = vcmp.ge.f32.partialorder %v6008, 0.0
    %vm6060 = vcmp.ge.f32.partialorder %v6010, 0.0
    %vm6061 = vcmp.ge.f32.partialorder %v6051, 0.0
    %vm6062 = vcmp.ge.f32.partialorder %v6053, 0.0
    %v6063 = vmul.f32 %v6004, 0.01
    %v6064 = vmul.f32 %v6006, 0.01
    %v6065 = vmul.f32 %v6047, 0.01
    %v6066 = vmul.f32 %v6049, 0.01
    %v6067 = vmul.f32 %v6008, 0.01
    %v6068 = vmul.f32 %v6010, 0.01
    %v6069 = vmul.f32 %v6051, 0.01
    %v6070 = vmul.f32 %v6053, 0.01
    %v6071 = vsel %vm6055, %v6004, %v6063
    %v6072 = vsel %vm6056, %v6006, %v6064
    %v6073 = vsel %vm6057, %v6047, %v6065
    %v6074 = vsel %vm6058, %v6049, %v6066
    %v6075 = vsel %vm6059, %v6008, %v6067
    %v6076 = vsel %vm6060, %v6010, %v6068
    %v6077 = vsel %vm6061, %v6051, %v6069
    %v6078 = vsel %vm6062, %v6053, %v6070
    %s6079 = scalar_lea.vmem [#allocation11], 4096
    %v6080 = vld [vmem:[%s6079] sm:$0xff]
    %v6081 = vld [vmem:[%s6079 + $0x8] sm:$0xff]
    %v6082 = vld [vmem:[%s6079 + $0x10] sm:$0xff]
    %v6083 = vld [vmem:[%s6079 + $0x18] sm:$0xff]
    %v6084 = vld [vmem:[%s6079 + $0x20] sm:$0xff]
    %v6085 = vld [vmem:[%s6079 + $0x28] sm:$0xff]
    %v6086 = vld [vmem:[%s6079 + $0x30] sm:$0xff]
    %v6087 = vld [vmem:[%s6079 + $0x38] sm:$0xff]
    %v6088 = vld [vmem:[%s6079 + $0x40] sm:$0xff]
    %v6089 = vld [vmem:[%s6079 + $0x48] sm:$0xff]
    %v6090 = vld [vmem:[%s6079 + $0x50] sm:$0xff]
    %v6091 = vld [vmem:[%s6079 + $0x58] sm:$0xff]
    %v6092 = vld [vmem:[%s6079 + $0x60] sm:$0xff]
    %v6093 = vld [vmem:[%s6079 + $0x68] sm:$0xff]
    %v6094 = vld [vmem:[%s6079 + $0x70] sm:$0xff]
    %v6095 = vld [vmem:[%s6079 + $0x78] sm:$0xff]
    %v6096 = vld [vmem:[%s6079 + $0x80] sm:$0xff]
    %v6097 = vld [vmem:[%s6079 + $0x88] sm:$0xff]
    %v6098 = vld [vmem:[%s6079 + $0x90] sm:$0xff]
    %v6099 = vld [vmem:[%s6079 + $0x98] sm:$0xff]
    %v6100 = vld [vmem:[%s6079 + $0xa0] sm:$0xff]
    %v6101 = vld [vmem:[%s6079 + $0xa8] sm:$0xff]
    %v6102 = vld [vmem:[%s6079 + $0xb0] sm:$0xff]
    %v6103 = vld [vmem:[%s6079 + $0xb8] sm:$0xff]
    %v6104 = vld [vmem:[%s6079 + $0xc0] sm:$0xff]
    %v6105 = vld [vmem:[%s6079 + $0xc8] sm:$0xff]
    %v6106 = vld [vmem:[%s6079 + $0xd0] sm:$0xff]
    %v6107 = vld [vmem:[%s6079 + $0xd8] sm:$0xff]
    %v6108 = vld [vmem:[%s6079 + $0xe0] sm:$0xff]
    %v6109 = vld [vmem:[%s6079 + $0xe8] sm:$0xff]
    %v6110 = vld [vmem:[%s6079 + $0xf0] sm:$0xff]
    %v6111 = vld [vmem:[%s6079 + $0xf8] sm:$0xff]
    %v6112 = vld [vmem:[%s6079 + $0x100] sm:$0xff]
    %v6113 = vld [vmem:[%s6079 + $0x108] sm:$0xff]
    %v6114 = vld [vmem:[%s6079 + $0x110] sm:$0xff]
    %v6115 = vld [vmem:[%s6079 + $0x118] sm:$0xff]
    %v6116 = vld [vmem:[%s6079 + $0x120] sm:$0xff]
    %v6117 = vld [vmem:[%s6079 + $0x128] sm:$0xff]
    %v6118 = vld [vmem:[%s6079 + $0x130] sm:$0xff]
    %v6119 = vld [vmem:[%s6079 + $0x138] sm:$0xff]
    %v6120 = vld [vmem:[%s6079 + $0x140] sm:$0xff]
    %v6121 = vld [vmem:[%s6079 + $0x148] sm:$0xff]
    %v6122 = vld [vmem:[%s6079 + $0x150] sm:$0xff]
    %v6123 = vld [vmem:[%s6079 + $0x158] sm:$0xff]
    %v6124 = vld [vmem:[%s6079 + $0x160] sm:$0xff]
    %v6125 = vld [vmem:[%s6079 + $0x168] sm:$0xff]
    %v6126 = vld [vmem:[%s6079 + $0x170] sm:$0xff]
    %v6127 = vld [vmem:[%s6079 + $0x178] sm:$0xff]
    %v6128 = vld [vmem:[%s6079 + $0x180] sm:$0xff]
    %v6129 = vld [vmem:[%s6079 + $0x188] sm:$0xff]
    %v6130 = vld [vmem:[%s6079 + $0x190] sm:$0xff]
    %v6131 = vld [vmem:[%s6079 + $0x198] sm:$0xff]
    %v6132 = vld [vmem:[%s6079 + $0x1a0] sm:$0xff]
    %v6133 = vld [vmem:[%s6079 + $0x1a8] sm:$0xff]
    %v6134 = vld [vmem:[%s6079 + $0x1b0] sm:$0xff]
    %v6135 = vld [vmem:[%s6079 + $0x1b8] sm:$0xff]
    %v6136 = vld [vmem:[%s6079 + $0x1c0] sm:$0xff]
    %v6137 = vld [vmem:[%s6079 + $0x1c8] sm:$0xff]
    %v6138 = vld [vmem:[%s6079 + $0x1d0] sm:$0xff]
    %v6139 = vld [vmem:[%s6079 + $0x1d8] sm:$0xff]
    %v6140 = vld [vmem:[%s6079 + $0x1e0] sm:$0xff]
    %v6141 = vld [vmem:[%s6079 + $0x1e8] sm:$0xff]
    %v6142 = vld [vmem:[%s6079 + $0x1f0] sm:$0xff]
    %v6143 = vld [vmem:[%s6079 + $0x1f8] sm:$0xff]
    %v6144 = vld [vmem:[%s6079 + $0x200] sm:$0xff]
    %v6145 = vld [vmem:[%s6079 + $0x208] sm:$0xff]
    %v6146 = vld [vmem:[%s6079 + $0x210] sm:$0xff]
    %v6147 = vld [vmem:[%s6079 + $0x218] sm:$0xff]
    %v6148 = vld [vmem:[%s6079 + $0x220] sm:$0xff]
    %v6149 = vld [vmem:[%s6079 + $0x228] sm:$0xff]
    %v6150 = vld [vmem:[%s6079 + $0x230] sm:$0xff]
    %v6151 = vld [vmem:[%s6079 + $0x238] sm:$0xff]
    %v6152 = vld [vmem:[%s6079 + $0x240] sm:$0xff]
    %v6153 = vld [vmem:[%s6079 + $0x248] sm:$0xff]
    %v6154 = vld [vmem:[%s6079 + $0x250] sm:$0xff]
    %v6155 = vld [vmem:[%s6079 + $0x258] sm:$0xff]
    %v6156 = vld [vmem:[%s6079 + $0x260] sm:$0xff]
    %v6157 = vld [vmem:[%s6079 + $0x268] sm:$0xff]
    %v6158 = vld [vmem:[%s6079 + $0x270] sm:$0xff]
    %v6159 = vld [vmem:[%s6079 + $0x278] sm:$0xff]
    %v6160 = vld [vmem:[%s6079 + $0x280] sm:$0xff]
    %v6161 = vld [vmem:[%s6079 + $0x288] sm:$0xff]
    %v6162 = vld [vmem:[%s6079 + $0x290] sm:$0xff]
    %v6163 = vld [vmem:[%s6079 + $0x298] sm:$0xff]
    %v6164 = vld [vmem:[%s6079 + $0x2a0] sm:$0xff]
    %v6165 = vld [vmem:[%s6079 + $0x2a8] sm:$0xff]
    %v6166 = vld [vmem:[%s6079 + $0x2b0] sm:$0xff]
    %v6167 = vld [vmem:[%s6079 + $0x2b8] sm:$0xff]
    %v6168 = vld [vmem:[%s6079 + $0x2c0] sm:$0xff]
    %v6169 = vld [vmem:[%s6079 + $0x2c8] sm:$0xff]
    %v6170 = vld [vmem:[%s6079 + $0x2d0] sm:$0xff]
    %v6171 = vld [vmem:[%s6079 + $0x2d8] sm:$0xff]
    %v6172 = vld [vmem:[%s6079 + $0x2e0] sm:$0xff]
    %v6173 = vld [vmem:[%s6079 + $0x2e8] sm:$0xff]
    %v6174 = vld [vmem:[%s6079 + $0x2f0] sm:$0xff]
    %v6175 = vld [vmem:[%s6079 + $0x2f8] sm:$0xff]
    %v6176 = vld [vmem:[%s6079 + $0x300] sm:$0xff]
    %v6177 = vld [vmem:[%s6079 + $0x308] sm:$0xff]
    %v6178 = vld [vmem:[%s6079 + $0x310] sm:$0xff]
    %v6179 = vld [vmem:[%s6079 + $0x318] sm:$0xff]
    %v6180 = vld [vmem:[%s6079 + $0x320] sm:$0xff]
    %v6181 = vld [vmem:[%s6079 + $0x328] sm:$0xff]
    %v6182 = vld [vmem:[%s6079 + $0x330] sm:$0xff]
    %v6183 = vld [vmem:[%s6079 + $0x338] sm:$0xff]
    %v6184 = vld [vmem:[%s6079 + $0x340] sm:$0xff]
    %v6185 = vld [vmem:[%s6079 + $0x348] sm:$0xff]
    %v6186 = vld [vmem:[%s6079 + $0x350] sm:$0xff]
    %v6187 = vld [vmem:[%s6079 + $0x358] sm:$0xff]
    %v6188 = vld [vmem:[%s6079 + $0x360] sm:$0xff]
    %v6189 = vld [vmem:[%s6079 + $0x368] sm:$0xff]
    %v6190 = vld [vmem:[%s6079 + $0x370] sm:$0xff]
    %v6191 = vld [vmem:[%s6079 + $0x378] sm:$0xff]
    %v6192 = vld [vmem:[%s6079 + $0x380] sm:$0xff]
    %v6193 = vld [vmem:[%s6079 + $0x388] sm:$0xff]
    %v6194 = vld [vmem:[%s6079 + $0x390] sm:$0xff]
    %v6195 = vld [vmem:[%s6079 + $0x398] sm:$0xff]
    %v6196 = vld [vmem:[%s6079 + $0x3a0] sm:$0xff]
    %v6197 = vld [vmem:[%s6079 + $0x3a8] sm:$0xff]
    %v6198 = vld [vmem:[%s6079 + $0x3b0] sm:$0xff]
    %v6199 = vld [vmem:[%s6079 + $0x3b8] sm:$0xff]
    %v6200 = vld [vmem:[%s6079 + $0x3c0] sm:$0xff]
    %v6201 = vld [vmem:[%s6079 + $0x3c8] sm:$0xff]
    %v6202 = vld [vmem:[%s6079 + $0x3d0] sm:$0xff]
    %v6203 = vld [vmem:[%s6079 + $0x3d8] sm:$0xff]
    %v6204 = vld [vmem:[%s6079 + $0x3e0] sm:$0xff]
    %v6205 = vld [vmem:[%s6079 + $0x3e8] sm:$0xff]
    %v6206 = vld [vmem:[%s6079 + $0x3f0] sm:$0xff]
    %v6207 = vld [vmem:[%s6079 + $0x3f8] sm:$0xff]
    %s6208 = scalar_lea.vmem [#allocation13], 6
    %v6209 = vld [vmem:[%s6208] ss:$8 sm:$0xf]
    %v6210 = vpack.c.bf16 %v6075, %v6071
    %v6211 = vpack.c.bf16 %v6076, %v6072
    %v6212 = vpack.c.bf16 %v6077, %v6073
    %v6213 = vpack.c.bf16 %v6078, %v6074
    %v6215 = vlaneseq
    %v6216 = vshrl.u32 %v6215, 7
    %v6217 = vsub.s32 0, %v6216
    %v6218 = vrot.slane %v6209, %v6217
    %v6219 = vlaneseq
    %v6220 = vshrl.u32 %v6219, 7
    %v6221 = vsub.s32 1, %v6220
    %v6222 = vrot.slane %v6209, %v6221
    %v6223 = vlaneseq
    %v6224 = vshrl.u32 %v6223, 7
    %v6225 = vsub.s32 2, %v6224
    %v6226 = vrot.slane %v6209, %v6225
    %v6227 = vlaneseq
    %v6228 = vshrl.u32 %v6227, 7
    %v6229 = vsub.s32 3, %v6228
    %v6230 = vrot.slane %v6209, %v6229
    %v6363 = vunpack.c.l.b16 %v6080
    %v6364 = vunpack.c.h.b16 %v6080
    %v6365 = vunpack.c.l.b16 %v6081
    %v6366 = vunpack.c.h.b16 %v6081
    %v6367 = vunpack.c.l.b16 %v6082
    %v6368 = vunpack.c.h.b16 %v6082
    %v6369 = vunpack.c.l.b16 %v6083
    %v6370 = vunpack.c.h.b16 %v6083
    %v6371 = vunpack.c.l.b16 %v6084
    %v6372 = vunpack.c.h.b16 %v6084
    %v6373 = vunpack.c.l.b16 %v6085
    %v6374 = vunpack.c.h.b16 %v6085
    %v6375 = vunpack.c.l.b16 %v6086
    %v6376 = vunpack.c.h.b16 %v6086
    %v6377 = vunpack.c.l.b16 %v6087
    %v6378 = vunpack.c.h.b16 %v6087
    %v6379 = vunpack.c.l.b16 %v6088
    %v6380 = vunpack.c.h.b16 %v6088
    %v6381 = vunpack.c.l.b16 %v6089
    %v6382 = vunpack.c.h.b16 %v6089
    %v6383 = vunpack.c.l.b16 %v6090
    %v6384 = vunpack.c.h.b16 %v6090
    %v6385 = vunpack.c.l.b16 %v6091
    %v6386 = vunpack.c.h.b16 %v6091
    %v6387 = vunpack.c.l.b16 %v6092
    %v6388 = vunpack.c.h.b16 %v6092
    %v6389 = vunpack.c.l.b16 %v6093
    %v6390 = vunpack.c.h.b16 %v6093
    %v6391 = vunpack.c.l.b16 %v6094
    %v6392 = vunpack.c.h.b16 %v6094
    %v6393 = vunpack.c.l.b16 %v6095
    %v6394 = vunpack.c.h.b16 %v6095
    %v6395 = vunpack.c.l.b16 %v6096
    %v6396 = vunpack.c.h.b16 %v6096
    %v6397 = vunpack.c.l.b16 %v6097
    %v6398 = vunpack.c.h.b16 %v6097
    %v6399 = vunpack.c.l.b16 %v6098
    %v6400 = vunpack.c.h.b16 %v6098
    %v6401 = vunpack.c.l.b16 %v6099
    %v6402 = vunpack.c.h.b16 %v6099
    %v6403 = vunpack.c.l.b16 %v6100
    %v6404 = vunpack.c.h.b16 %v6100
    %v6405 = vunpack.c.l.b16 %v6101
    %v6406 = vunpack.c.h.b16 %v6101
    %v6407 = vunpack.c.l.b16 %v6102
    %v6408 = vunpack.c.h.b16 %v6102
    %v6409 = vunpack.c.l.b16 %v6103
    %v6410 = vunpack.c.h.b16 %v6103
    %v6411 = vunpack.c.l.b16 %v6104
    %v6412 = vunpack.c.h.b16 %v6104
    %v6413 = vunpack.c.l.b16 %v6105
    %v6414 = vunpack.c.h.b16 %v6105
    %v6415 = vunpack.c.l.b16 %v6106
    %v6416 = vunpack.c.h.b16 %v6106
    %v6417 = vunpack.c.l.b16 %v6107
    %v6418 = vunpack.c.h.b16 %v6107
    %v6419 = vunpack.c.l.b16 %v6108
    %v6420 = vunpack.c.h.b16 %v6108
    %v6421 = vunpack.c.l.b16 %v6109
    %v6422 = vunpack.c.h.b16 %v6109
    %v6423 = vunpack.c.l.b16 %v6110
    %v6424 = vunpack.c.h.b16 %v6110
    %v6425 = vunpack.c.l.b16 %v6111
    %v6426 = vunpack.c.h.b16 %v6111
    %v6427 = vunpack.c.l.b16 %v6112
    %v6428 = vunpack.c.h.b16 %v6112
    %v6429 = vunpack.c.l.b16 %v6113
    %v6430 = vunpack.c.h.b16 %v6113
    %v6431 = vunpack.c.l.b16 %v6114
    %v6432 = vunpack.c.h.b16 %v6114
    %v6433 = vunpack.c.l.b16 %v6115
    %v6434 = vunpack.c.h.b16 %v6115
    %v6435 = vunpack.c.l.b16 %v6116
    %v6436 = vunpack.c.h.b16 %v6116
    %v6437 = vunpack.c.l.b16 %v6117
    %v6438 = vunpack.c.h.b16 %v6117
    %v6439 = vunpack.c.l.b16 %v6118
    %v6440 = vunpack.c.h.b16 %v6118
    %v6441 = vunpack.c.l.b16 %v6119
    %v6442 = vunpack.c.h.b16 %v6119
    %v6443 = vunpack.c.l.b16 %v6120
    %v6444 = vunpack.c.h.b16 %v6120
    %v6445 = vunpack.c.l.b16 %v6121
    %v6446 = vunpack.c.h.b16 %v6121
    %v6447 = vunpack.c.l.b16 %v6122
    %v6448 = vunpack.c.h.b16 %v6122
    %v6449 = vunpack.c.l.b16 %v6123
    %v6450 = vunpack.c.h.b16 %v6123
    %v6451 = vunpack.c.l.b16 %v6124
    %v6452 = vunpack.c.h.b16 %v6124
    %v6453 = vunpack.c.l.b16 %v6125
    %v6454 = vunpack.c.h.b16 %v6125
    %v6455 = vunpack.c.l.b16 %v6126
    %v6456 = vunpack.c.h.b16 %v6126
    %v6457 = vunpack.c.l.b16 %v6127
    %v6458 = vunpack.c.h.b16 %v6127
    %v6459 = vunpack.c.l.b16 %v6128
    %v6460 = vunpack.c.h.b16 %v6128
    %v6461 = vunpack.c.l.b16 %v6129
    %v6462 = vunpack.c.h.b16 %v6129
    %v6463 = vunpack.c.l.b16 %v6130
    %v6464 = vunpack.c.h.b16 %v6130
    %v6465 = vunpack.c.l.b16 %v6131
    %v6466 = vunpack.c.h.b16 %v6131
    %v6467 = vunpack.c.l.b16 %v6132
    %v6468 = vunpack.c.h.b16 %v6132
    %v6469 = vunpack.c.l.b16 %v6133
    %v6470 = vunpack.c.h.b16 %v6133
    %v6471 = vunpack.c.l.b16 %v6134
    %v6472 = vunpack.c.h.b16 %v6134
    %v6473 = vunpack.c.l.b16 %v6135
    %v6474 = vunpack.c.h.b16 %v6135
    %v6475 = vunpack.c.l.b16 %v6136
    %v6476 = vunpack.c.h.b16 %v6136
    %v6477 = vunpack.c.l.b16 %v6137
    %v6478 = vunpack.c.h.b16 %v6137
    %v6479 = vunpack.c.l.b16 %v6138
    %v6480 = vunpack.c.h.b16 %v6138
    %v6481 = vunpack.c.l.b16 %v6139
    %v6482 = vunpack.c.h.b16 %v6139
    %v6483 = vunpack.c.l.b16 %v6140
    %v6484 = vunpack.c.h.b16 %v6140
    %v6485 = vunpack.c.l.b16 %v6141
    %v6486 = vunpack.c.h.b16 %v6141
    %v6487 = vunpack.c.l.b16 %v6142
    %v6488 = vunpack.c.h.b16 %v6142
    %v6489 = vunpack.c.l.b16 %v6143
    %v6490 = vunpack.c.h.b16 %v6143
    %v6491 = vunpack.c.l.b16 %v6144
    %v6492 = vunpack.c.h.b16 %v6144
    %v6493 = vunpack.c.l.b16 %v6145
    %v6494 = vunpack.c.h.b16 %v6145
    %v6495 = vunpack.c.l.b16 %v6146
    %v6496 = vunpack.c.h.b16 %v6146
    %v6497 = vunpack.c.l.b16 %v6147
    %v6498 = vunpack.c.h.b16 %v6147
    %v6499 = vunpack.c.l.b16 %v6148
    %v6500 = vunpack.c.h.b16 %v6148
    %v6501 = vunpack.c.l.b16 %v6149
    %v6502 = vunpack.c.h.b16 %v6149
    %v6503 = vunpack.c.l.b16 %v6150
    %v6504 = vunpack.c.h.b16 %v6150
    %v6505 = vunpack.c.l.b16 %v6151
    %v6506 = vunpack.c.h.b16 %v6151
    %v6507 = vunpack.c.l.b16 %v6152
    %v6508 = vunpack.c.h.b16 %v6152
    %v6509 = vunpack.c.l.b16 %v6153
    %v6510 = vunpack.c.h.b16 %v6153
    %v6511 = vunpack.c.l.b16 %v6154
    %v6512 = vunpack.c.h.b16 %v6154
    %v6513 = vunpack.c.l.b16 %v6155
    %v6514 = vunpack.c.h.b16 %v6155
    %v6515 = vunpack.c.l.b16 %v6156
    %v6516 = vunpack.c.h.b16 %v6156
    %v6517 = vunpack.c.l.b16 %v6157
    %v6518 = vunpack.c.h.b16 %v6157
    %v6519 = vunpack.c.l.b16 %v6158
    %v6520 = vunpack.c.h.b16 %v6158
    %v6521 = vunpack.c.l.b16 %v6159
    %v6522 = vunpack.c.h.b16 %v6159
    %v6523 = vunpack.c.l.b16 %v6160
    %v6524 = vunpack.c.h.b16 %v6160
    %v6525 = vunpack.c.l.b16 %v6161
    %v6526 = vunpack.c.h.b16 %v6161
    %v6527 = vunpack.c.l.b16 %v6162
    %v6528 = vunpack.c.h.b16 %v6162
    %v6529 = vunpack.c.l.b16 %v6163
    %v6530 = vunpack.c.h.b16 %v6163
    %v6531 = vunpack.c.l.b16 %v6164
    %v6532 = vunpack.c.h.b16 %v6164
    %v6533 = vunpack.c.l.b16 %v6165
    %v6534 = vunpack.c.h.b16 %v6165
    %v6535 = vunpack.c.l.b16 %v6166
    %v6536 = vunpack.c.h.b16 %v6166
    %v6537 = vunpack.c.l.b16 %v6167
    %v6538 = vunpack.c.h.b16 %v6167
    %v6539 = vunpack.c.l.b16 %v6168
    %v6540 = vunpack.c.h.b16 %v6168
    %v6541 = vunpack.c.l.b16 %v6169
    %v6542 = vunpack.c.h.b16 %v6169
    %v6543 = vunpack.c.l.b16 %v6170
    %v6544 = vunpack.c.h.b16 %v6170
    %v6545 = vunpack.c.l.b16 %v6171
    %v6546 = vunpack.c.h.b16 %v6171
    %v6547 = vunpack.c.l.b16 %v6172
    %v6548 = vunpack.c.h.b16 %v6172
    %v6549 = vunpack.c.l.b16 %v6173
    %v6550 = vunpack.c.h.b16 %v6173
    %v6551 = vunpack.c.l.b16 %v6174
    %v6552 = vunpack.c.h.b16 %v6174
    %v6553 = vunpack.c.l.b16 %v6175
    %v6554 = vunpack.c.h.b16 %v6175
    %v6555 = vunpack.c.l.b16 %v6176
    %v6556 = vunpack.c.h.b16 %v6176
    %v6557 = vunpack.c.l.b16 %v6177
    %v6558 = vunpack.c.h.b16 %v6177
    %v6559 = vunpack.c.l.b16 %v6178
    %v6560 = vunpack.c.h.b16 %v6178
    %v6561 = vunpack.c.l.b16 %v6179
    %v6562 = vunpack.c.h.b16 %v6179
    %v6563 = vunpack.c.l.b16 %v6180
    %v6564 = vunpack.c.h.b16 %v6180
    %v6565 = vunpack.c.l.b16 %v6181
    %v6566 = vunpack.c.h.b16 %v6181
    %v6567 = vunpack.c.l.b16 %v6182
    %v6568 = vunpack.c.h.b16 %v6182
    %v6569 = vunpack.c.l.b16 %v6183
    %v6570 = vunpack.c.h.b16 %v6183
    %v6571 = vunpack.c.l.b16 %v6184
    %v6572 = vunpack.c.h.b16 %v6184
    %v6573 = vunpack.c.l.b16 %v6185
    %v6574 = vunpack.c.h.b16 %v6185
    %v6575 = vunpack.c.l.b16 %v6186
    %v6576 = vunpack.c.h.b16 %v6186
    %v6577 = vunpack.c.l.b16 %v6187
    %v6578 = vunpack.c.h.b16 %v6187
    %v6579 = vunpack.c.l.b16 %v6188
    %v6580 = vunpack.c.h.b16 %v6188
    %v6581 = vunpack.c.l.b16 %v6189
    %v6582 = vunpack.c.h.b16 %v6189
    %v6583 = vunpack.c.l.b16 %v6190
    %v6584 = vunpack.c.h.b16 %v6190
    %v6585 = vunpack.c.l.b16 %v6191
    %v6586 = vunpack.c.h.b16 %v6191
    %v6587 = vunpack.c.l.b16 %v6192
    %v6588 = vunpack.c.h.b16 %v6192
    %v6589 = vunpack.c.l.b16 %v6193
    %v6590 = vunpack.c.h.b16 %v6193
    %v6591 = vunpack.c.l.b16 %v6194
    %v6592 = vunpack.c.h.b16 %v6194
    %v6593 = vunpack.c.l.b16 %v6195
    %v6594 = vunpack.c.h.b16 %v6195
    %v6595 = vunpack.c.l.b16 %v6196
    %v6596 = vunpack.c.h.b16 %v6196
    %v6597 = vunpack.c.l.b16 %v6197
    %v6598 = vunpack.c.h.b16 %v6197
    %v6599 = vunpack.c.l.b16 %v6198
    %v6600 = vunpack.c.h.b16 %v6198
    %v6601 = vunpack.c.l.b16 %v6199
    %v6602 = vunpack.c.h.b16 %v6199
    %v6603 = vunpack.c.l.b16 %v6200
    %v6604 = vunpack.c.h.b16 %v6200
    %v6605 = vunpack.c.l.b16 %v6201
    %v6606 = vunpack.c.h.b16 %v6201
    %v6607 = vunpack.c.l.b16 %v6202
    %v6608 = vunpack.c.h.b16 %v6202
    %v6609 = vunpack.c.l.b16 %v6203
    %v6610 = vunpack.c.h.b16 %v6203
    %v6611 = vunpack.c.l.b16 %v6204
    %v6612 = vunpack.c.h.b16 %v6204
    %v6613 = vunpack.c.l.b16 %v6205
    %v6614 = vunpack.c.h.b16 %v6205
    %v6615 = vunpack.c.l.b16 %v6206
    %v6616 = vunpack.c.h.b16 %v6206
    %v6617 = vunpack.c.l.b16 %v6207
    %v6618 = vunpack.c.h.b16 %v6207
    %v6619 = vpack.c.b16 %v6367, %v6363
    %v6620 = vpack.c.b16 %v6368, %v6364
    %v6621 = vpack.c.b16 %v6369, %v6365
    %v6622 = vpack.c.b16 %v6370, %v6366
    %v6623 = vpack.c.b16 %v6375, %v6371
    %v6624 = vpack.c.b16 %v6376, %v6372
    %v6625 = vpack.c.b16 %v6377, %v6373
    %v6626 = vpack.c.b16 %v6378, %v6374
    %v6627 = vpack.c.b16 %v6383, %v6379
    %v6628 = vpack.c.b16 %v6384, %v6380
    %v6629 = vpack.c.b16 %v6385, %v6381
    %v6630 = vpack.c.b16 %v6386, %v6382
    %v6631 = vpack.c.b16 %v6391, %v6387
    %v6632 = vpack.c.b16 %v6392, %v6388
    %v6633 = vpack.c.b16 %v6393, %v6389
    %v6634 = vpack.c.b16 %v6394, %v6390
    %v6635 = vpack.c.b16 %v6399, %v6395
    %v6636 = vpack.c.b16 %v6400, %v6396
    %v6637 = vpack.c.b16 %v6401, %v6397
    %v6638 = vpack.c.b16 %v6402, %v6398
    %v6639 = vpack.c.b16 %v6407, %v6403
    %v6640 = vpack.c.b16 %v6408, %v6404
    %v6641 = vpack.c.b16 %v6409, %v6405
    %v6642 = vpack.c.b16 %v6410, %v6406
    %v6643 = vpack.c.b16 %v6415, %v6411
    %v6644 = vpack.c.b16 %v6416, %v6412
    %v6645 = vpack.c.b16 %v6417, %v6413
    %v6646 = vpack.c.b16 %v6418, %v6414
    %v6647 = vpack.c.b16 %v6423, %v6419
    %v6648 = vpack.c.b16 %v6424, %v6420
    %v6649 = vpack.c.b16 %v6425, %v6421
    %v6650 = vpack.c.b16 %v6426, %v6422
    %v6651 = vpack.c.b16 %v6431, %v6427
    %v6652 = vpack.c.b16 %v6432, %v6428
    %v6653 = vpack.c.b16 %v6433, %v6429
    %v6654 = vpack.c.b16 %v6434, %v6430
    %v6655 = vpack.c.b16 %v6439, %v6435
    %v6656 = vpack.c.b16 %v6440, %v6436
    %v6657 = vpack.c.b16 %v6441, %v6437
    %v6658 = vpack.c.b16 %v6442, %v6438
    %v6659 = vpack.c.b16 %v6447, %v6443
    %v6660 = vpack.c.b16 %v6448, %v6444
    %v6661 = vpack.c.b16 %v6449, %v6445
    %v6662 = vpack.c.b16 %v6450, %v6446
    %v6663 = vpack.c.b16 %v6455, %v6451
    %v6664 = vpack.c.b16 %v6456, %v6452
    %v6665 = vpack.c.b16 %v6457, %v6453
    %v6666 = vpack.c.b16 %v6458, %v6454
    %v6667 = vpack.c.b16 %v6463, %v6459
    %v6668 = vpack.c.b16 %v6464, %v6460
    %v6669 = vpack.c.b16 %v6465, %v6461
    %v6670 = vpack.c.b16 %v6466, %v6462
    %v6671 = vpack.c.b16 %v6471, %v6467
    %v6672 = vpack.c.b16 %v6472, %v6468
    %v6673 = vpack.c.b16 %v6473, %v6469
    %v6674 = vpack.c.b16 %v6474, %v6470
    %v6675 = vpack.c.b16 %v6479, %v6475
    %v6676 = vpack.c.b16 %v6480, %v6476
    %v6677 = vpack.c.b16 %v6481, %v6477
    %v6678 = vpack.c.b16 %v6482, %v6478
    %v6679 = vpack.c.b16 %v6487, %v6483
    %v6680 = vpack.c.b16 %v6488, %v6484
    %v6681 = vpack.c.b16 %v6489, %v6485
    %v6682 = vpack.c.b16 %v6490, %v6486
    %v6683 = vpack.c.b16 %v6495, %v6491
    %v6684 = vpack.c.b16 %v6496, %v6492
    %v6685 = vpack.c.b16 %v6497, %v6493
    %v6686 = vpack.c.b16 %v6498, %v6494
    %v6687 = vpack.c.b16 %v6503, %v6499
    %v6688 = vpack.c.b16 %v6504, %v6500
    %v6689 = vpack.c.b16 %v6505, %v6501
    %v6690 = vpack.c.b16 %v6506, %v6502
    %v6691 = vpack.c.b16 %v6511, %v6507
    %v6692 = vpack.c.b16 %v6512, %v6508
    %v6693 = vpack.c.b16 %v6513, %v6509
    %v6694 = vpack.c.b16 %v6514, %v6510
    %v6695 = vpack.c.b16 %v6519, %v6515
    %v6696 = vpack.c.b16 %v6520, %v6516
    %v6697 = vpack.c.b16 %v6521, %v6517
    %v6698 = vpack.c.b16 %v6522, %v6518
    %v6699 = vpack.c.b16 %v6527, %v6523
    %v6700 = vpack.c.b16 %v6528, %v6524
    %v6701 = vpack.c.b16 %v6529, %v6525
    %v6702 = vpack.c.b16 %v6530, %v6526
    %v6703 = vpack.c.b16 %v6535, %v6531
    %v6704 = vpack.c.b16 %v6536, %v6532
    %v6705 = vpack.c.b16 %v6537, %v6533
    %v6706 = vpack.c.b16 %v6538, %v6534
    %v6707 = vpack.c.b16 %v6543, %v6539
    %v6708 = vpack.c.b16 %v6544, %v6540
    %v6709 = vpack.c.b16 %v6545, %v6541
    %v6710 = vpack.c.b16 %v6546, %v6542
    %v6711 = vpack.c.b16 %v6551, %v6547
    %v6712 = vpack.c.b16 %v6552, %v6548
    %v6713 = vpack.c.b16 %v6553, %v6549
    %v6714 = vpack.c.b16 %v6554, %v6550
    %v6715 = vpack.c.b16 %v6559, %v6555
    %v6716 = vpack.c.b16 %v6560, %v6556
    %v6717 = vpack.c.b16 %v6561, %v6557
    %v6718 = vpack.c.b16 %v6562, %v6558
    %v6719 = vpack.c.b16 %v6567, %v6563
    %v6720 = vpack.c.b16 %v6568, %v6564
    %v6721 = vpack.c.b16 %v6569, %v6565
    %v6722 = vpack.c.b16 %v6570, %v6566
    %v6723 = vpack.c.b16 %v6575, %v6571
    %v6724 = vpack.c.b16 %v6576, %v6572
    %v6725 = vpack.c.b16 %v6577, %v6573
    %v6726 = vpack.c.b16 %v6578, %v6574
    %v6727 = vpack.c.b16 %v6583, %v6579
    %v6728 = vpack.c.b16 %v6584, %v6580
    %v6729 = vpack.c.b16 %v6585, %v6581
    %v6730 = vpack.c.b16 %v6586, %v6582
    %v6731 = vpack.c.b16 %v6591, %v6587
    %v6732 = vpack.c.b16 %v6592, %v6588
    %v6733 = vpack.c.b16 %v6593, %v6589
    %v6734 = vpack.c.b16 %v6594, %v6590
    %v6735 = vpack.c.b16 %v6599, %v6595
    %v6736 = vpack.c.b16 %v6600, %v6596
    %v6737 = vpack.c.b16 %v6601, %v6597
    %v6738 = vpack.c.b16 %v6602, %v6598
    %v6739 = vpack.c.b16 %v6607, %v6603
    %v6740 = vpack.c.b16 %v6608, %v6604
    %v6741 = vpack.c.b16 %v6609, %v6605
    %v6742 = vpack.c.b16 %v6610, %v6606
    %v6743 = vpack.c.b16 %v6615, %v6611
    %v6744 = vpack.c.b16 %v6616, %v6612
    %v6745 = vpack.c.b16 %v6617, %v6613
    %v6746 = vpack.c.b16 %v6618, %v6614
    %6875 = vmatprep.subr.bf16.mxu0 %v6648
    %6876 = vmatpush1.bf16.msra.mxu0 %v6647
    %6877 = vmatprep.subr.bf16.mxu0 %v6644
    %6878 = vmatpush1.bf16.msra.mxu0 %v6643
    %6879 = vmatprep.subr.bf16.mxu0 %v6640
    %6880 = vmatpush1.bf16.msra.mxu0 %v6639
    %6881 = vmatprep.subr.bf16.mxu0 %v6636
    %6882 = vmatpush1.bf16.msra.mxu0 %v6635
    %6883 = vmatprep.subr.bf16.mxu0 %v6632
    %6884 = vmatpush1.bf16.msra.mxu0 %v6631
    %6885 = vmatprep.subr.bf16.mxu0 %v6628
    %6886 = vmatpush1.bf16.msra.mxu0 %v6627
    %6887 = vmatprep.subr.bf16.mxu0 %v6624
    %6888 = vmatpush1.bf16.msra.mxu0 %v6623
    %6889 = vmatprep.subr.bf16.mxu0 %v6620
    %6890 = vmatpush1.bf16.msra.mxu0 %v6619
    %6891 = vmatprep.subr.bf16.mxu0 %v6680
    %6892 = vmatpush2.bf16.msra.mxu0 %v6679
    %6893 = vmatprep.subr.bf16.mxu0 %v6676
    %6894 = vmatpush2.bf16.msra.mxu0 %v6675
    %6895 = vmatprep.subr.bf16.mxu0 %v6672
    %6896 = vmatpush2.bf16.msra.mxu0 %v6671
    %6897 = vmatprep.subr.bf16.mxu0 %v6668
    %6898 = vmatpush2.bf16.msra.mxu0 %v6667
    %6899 = vmatprep.subr.bf16.mxu0 %v6664
    %6900 = vmatpush2.bf16.msra.mxu0 %v6663
    %6901 = vmatprep.subr.bf16.mxu0 %v6660
    %6902 = vmatpush2.bf16.msra.mxu0 %v6659
    %6903 = vmatprep.subr.bf16.mxu0 %v6656
    %6904 = vmatpush2.bf16.msra.mxu0 %v6655
    %6905 = vmatprep.subr.bf16.mxu0 %v6652
    %6906 = vmatpush2.bf16.msra.mxu0 %v6651
    %6907 = vmatprep.mubr.bf16.mxu0 %v6211
    %6908 = vmatmul.mubr.bf16.gmra.mxu0 %v6210
    %v6909 = vpop.f32.mrf.mxu0
    %v6910 = vadd.f32 %v6218, %v6909
    %v6911 = vpop.f32.mrf.mxu0
    %v6912 = vadd.f32 %v6222, %v6911
    %v6913 = vpop.f32.mrf.mxu0
    %v6914 = vadd.f32 %v6218, %v6913
    %v6915 = vpop.f32.mrf.mxu0
    %v6916 = vadd.f32 %v6222, %v6915
    %6917 = vdwg.mxu0
    %6918 = vmatprep.subr.bf16.mxu0 %v6712
    %6919 = vmatpush1.bf16.msra.mxu0 %v6711
    %6920 = vmatprep.subr.bf16.mxu0 %v6708
    %6921 = vmatpush1.bf16.msra.mxu0 %v6707
    %6922 = vmatprep.subr.bf16.mxu0 %v6704
    %6923 = vmatpush1.bf16.msra.mxu0 %v6703
    %6924 = vmatprep.subr.bf16.mxu0 %v6700
    %6925 = vmatpush1.bf16.msra.mxu0 %v6699
    %6926 = vmatprep.subr.bf16.mxu0 %v6696
    %6927 = vmatpush1.bf16.msra.mxu0 %v6695
    %6928 = vmatprep.subr.bf16.mxu0 %v6692
    %6929 = vmatpush1.bf16.msra.mxu0 %v6691
    %6930 = vmatprep.subr.bf16.mxu0 %v6688
    %6931 = vmatpush1.bf16.msra.mxu0 %v6687
    %6932 = vmatprep.subr.bf16.mxu0 %v6684
    %6933 = vmatpush1.bf16.msra.mxu0 %v6683
    %6934 = vmatprep.subr.bf16.mxu0 %v6744
    %6935 = vmatpush2.bf16.msra.mxu0 %v6743
    %6936 = vmatprep.subr.bf16.mxu0 %v6740
    %6937 = vmatpush2.bf16.msra.mxu0 %v6739
    %6938 = vmatprep.subr.bf16.mxu0 %v6736
    %6939 = vmatpush2.bf16.msra.mxu0 %v6735
    %6940 = vmatprep.subr.bf16.mxu0 %v6732
    %6941 = vmatpush2.bf16.msra.mxu0 %v6731
    %6942 = vmatprep.subr.bf16.mxu0 %v6728
    %6943 = vmatpush2.bf16.msra.mxu0 %v6727
    %6944 = vmatprep.subr.bf16.mxu0 %v6724
    %6945 = vmatpush2.bf16.msra.mxu0 %v6723
    %6946 = vmatprep.subr.bf16.mxu0 %v6720
    %6947 = vmatpush2.bf16.msra.mxu0 %v6719
    %6948 = vmatprep.subr.bf16.mxu0 %v6716
    %6949 = vmatpush2.bf16.msra.mxu0 %v6715
    %6950 = vmatprep.mubr.bf16.mxu0 %v6213
    %6951 = vmatmul.mubr.bf16.gmra.mxu0 %v6212
    %v6952 = vpop.f32.mrf.mxu0
    %v6953 = vadd.f32 %v6910, %v6952
    %v6954 = vpop.f32.mrf.mxu0
    %v6955 = vadd.f32 %v6912, %v6954
    %v6956 = vpop.f32.mrf.mxu0
    %v6957 = vadd.f32 %v6914, %v6956
    %v6958 = vpop.f32.mrf.mxu0
    %v6959 = vadd.f32 %v6916, %v6958
    %6960 = vdwg.mxu0
    %6961 = vmatprep.subr.bf16.mxu0 %v6650
    %6962 = vmatpush1.bf16.msra.mxu0 %v6649
    %6963 = vmatprep.subr.bf16.mxu0 %v6646
    %6964 = vmatpush1.bf16.msra.mxu0 %v6645
    %6965 = vmatprep.subr.bf16.mxu0 %v6642
    %6966 = vmatpush1.bf16.msra.mxu0 %v6641
    %6967 = vmatprep.subr.bf16.mxu0 %v6638
    %6968 = vmatpush1.bf16.msra.mxu0 %v6637
    %6969 = vmatprep.subr.bf16.mxu0 %v6634
    %6970 = vmatpush1.bf16.msra.mxu0 %v6633
    %6971 = vmatprep.subr.bf16.mxu0 %v6630
    %6972 = vmatpush1.bf16.msra.mxu0 %v6629
    %6973 = vmatprep.subr.bf16.mxu0 %v6626
    %6974 = vmatpush1.bf16.msra.mxu0 %v6625
    %6975 = vmatprep.subr.bf16.mxu0 %v6622
    %6976 = vmatpush1.bf16.msra.mxu0 %v6621
    %6977 = vmatprep.subr.bf16.mxu0 %v6682
    %6978 = vmatpush2.bf16.msra.mxu0 %v6681
    %6979 = vmatprep.subr.bf16.mxu0 %v6678
    %6980 = vmatpush2.bf16.msra.mxu0 %v6677
    %6981 = vmatprep.subr.bf16.mxu0 %v6674
    %6982 = vmatpush2.bf16.msra.mxu0 %v6673
    %6983 = vmatprep.subr.bf16.mxu0 %v6670
    %6984 = vmatpush2.bf16.msra.mxu0 %v6669
    %6985 = vmatprep.subr.bf16.mxu0 %v6666
    %6986 = vmatpush2.bf16.msra.mxu0 %v6665
    %6987 = vmatprep.subr.bf16.mxu0 %v6662
    %6988 = vmatpush2.bf16.msra.mxu0 %v6661
    %6989 = vmatprep.subr.bf16.mxu0 %v6658
    %6990 = vmatpush2.bf16.msra.mxu0 %v6657
    %6991 = vmatprep.subr.bf16.mxu0 %v6654
    %6992 = vmatpush2.bf16.msra.mxu0 %v6653
    %6993 = vmatprep.mubr.bf16.mxu0 %v6211
    %6994 = vmatmul.mubr.bf16.gmra.mxu0 %v6210
    %v6995 = vpop.f32.mrf.mxu0
    %v6996 = vadd.f32 %v6226, %v6995
    %v6997 = vpop.f32.mrf.mxu0
    %v6998 = vadd.f32 %v6230, %v6997
    %v6999 = vpop.f32.mrf.mxu0
    %v7000 = vadd.f32 %v6226, %v6999
    %v7001 = vpop.f32.mrf.mxu0
    %v7002 = vadd.f32 %v6230, %v7001
    %7003 = vdwg.mxu0
    %7004 = vmatprep.subr.bf16.mxu0 %v6714
    %7005 = vmatpush1.bf16.msra.mxu0 %v6713
    %7006 = vmatprep.subr.bf16.mxu0 %v6710
    %7007 = vmatpush1.bf16.msra.mxu0 %v6709
    %7008 = vmatprep.subr.bf16.mxu0 %v6706
    %7009 = vmatpush1.bf16.msra.mxu0 %v6705
    %7010 = vmatprep.subr.bf16.mxu0 %v6702
    %7011 = vmatpush1.bf16.msra.mxu0 %v6701
    %7012 = vmatprep.subr.bf16.mxu0 %v6698
    %7013 = vmatpush1.bf16.msra.mxu0 %v6697
    %7014 = vmatprep.subr.bf16.mxu0 %v6694
    %7015 = vmatpush1.bf16.msra.mxu0 %v6693
    %7016 = vmatprep.subr.bf16.mxu0 %v6690
    %7017 = vmatpush1.bf16.msra.mxu0 %v6689
    %7018 = vmatprep.subr.bf16.mxu0 %v6686
    %7019 = vmatpush1.bf16.msra.mxu0 %v6685
    %7020 = vmatprep.subr.bf16.mxu0 %v6746
    %7021 = vmatpush2.bf16.msra.mxu0 %v6745
    %7022 = vmatprep.subr.bf16.mxu0 %v6742
    %7023 = vmatpush2.bf16.msra.mxu0 %v6741
    %7024 = vmatprep.subr.bf16.mxu0 %v6738
    %7025 = vmatpush2.bf16.msra.mxu0 %v6737
    %7026 = vmatprep.subr.bf16.mxu0 %v6734
    %7027 = vmatpush2.bf16.msra.mxu0 %v6733
    %7028 = vmatprep.subr.bf16.mxu0 %v6730
    %7029 = vmatpush2.bf16.msra.mxu0 %v6729
    %7030 = vmatprep.subr.bf16.mxu0 %v6726
    %7031 = vmatpush2.bf16.msra.mxu0 %v6725
    %7032 = vmatprep.subr.bf16.mxu0 %v6722
    %7033 = vmatpush2.bf16.msra.mxu0 %v6721
    %7034 = vmatprep.subr.bf16.mxu0 %v6718
    %7035 = vmatpush2.bf16.msra.mxu0 %v6717
    %7036 = vmatprep.mubr.bf16.mxu0 %v6213
    %7037 = vmatmul.mubr.bf16.gmra.mxu0 %v6212
    %v7038 = vpop.f32.mrf.mxu0
    %v7039 = vadd.f32 %v6996, %v7038
    %v7040 = vpop.f32.mrf.mxu0
    %v7041 = vadd.f32 %v6998, %v7040
    %v7042 = vpop.f32.mrf.mxu0
    %v7043 = vadd.f32 %v7000, %v7042
    %v7044 = vpop.f32.mrf.mxu0
    %v7045 = vadd.f32 %v7002, %v7044
    %7046 = vdwg.mxu0
    %vm7047 = vcmp.ge.f32.partialorder %v6953, 0.0
    %vm7048 = vcmp.ge.f32.partialorder %v6955, 0.0
    %vm7049 = vcmp.ge.f32.partialorder %v7039, 0.0
    %vm7050 = vcmp.ge.f32.partialorder %v7041, 0.0
    %vm7051 = vcmp.ge.f32.partialorder %v6957, 0.0
    %vm7052 = vcmp.ge.f32.partialorder %v6959, 0.0
    %vm7053 = vcmp.ge.f32.partialorder %v7043, 0.0
    %vm7054 = vcmp.ge.f32.partialorder %v7045, 0.0
    %v7055 = vmul.f32 %v6953, 0.01
    %v7056 = vmul.f32 %v6955, 0.01
    %v7057 = vmul.f32 %v7039, 0.01
    %v7058 = vmul.f32 %v7041, 0.01
    %v7059 = vmul.f32 %v6957, 0.01
    %v7060 = vmul.f32 %v6959, 0.01
    %v7061 = vmul.f32 %v7043, 0.01
    %v7062 = vmul.f32 %v7045, 0.01
    %v7063 = vsel %vm7047, %v6953, %v7055
    %v7064 = vsel %vm7048, %v6955, %v7056
    %v7065 = vsel %vm7049, %v7039, %v7057
    %v7066 = vsel %vm7050, %v7041, %v7058
    %v7067 = vsel %vm7051, %v6957, %v7059
    %v7068 = vsel %vm7052, %v6959, %v7060
    %v7069 = vsel %vm7053, %v7043, %v7061
    %v7070 = vsel %vm7054, %v7045, %v7062
    %s7071 = scalar_lea.vmem [#allocation11], 5120
    %v7072 = vld [vmem:[%s7071] sm:$0xff]
    %v7073 = vld [vmem:[%s7071 + $0x8] sm:$0xff]
    %v7074 = vld [vmem:[%s7071 + $0x10] sm:$0xff]
    %v7075 = vld [vmem:[%s7071 + $0x18] sm:$0xff]
    %v7076 = vld [vmem:[%s7071 + $0x20] sm:$0xff]
    %v7077 = vld [vmem:[%s7071 + $0x28] sm:$0xff]
    %v7078 = vld [vmem:[%s7071 + $0x30] sm:$0xff]
    %v7079 = vld [vmem:[%s7071 + $0x38] sm:$0xff]
    %v7080 = vld [vmem:[%s7071 + $0x40] sm:$0xff]
    %v7081 = vld [vmem:[%s7071 + $0x48] sm:$0xff]
    %v7082 = vld [vmem:[%s7071 + $0x50] sm:$0xff]
    %v7083 = vld [vmem:[%s7071 + $0x58] sm:$0xff]
    %v7084 = vld [vmem:[%s7071 + $0x60] sm:$0xff]
    %v7085 = vld [vmem:[%s7071 + $0x68] sm:$0xff]
    %v7086 = vld [vmem:[%s7071 + $0x70] sm:$0xff]
    %v7087 = vld [vmem:[%s7071 + $0x78] sm:$0xff]
    %v7088 = vld [vmem:[%s7071 + $0x80] sm:$0xff]
    %v7089 = vld [vmem:[%s7071 + $0x88] sm:$0xff]
    %v7090 = vld [vmem:[%s7071 + $0x90] sm:$0xff]
    %v7091 = vld [vmem:[%s7071 + $0x98] sm:$0xff]
    %v7092 = vld [vmem:[%s7071 + $0xa0] sm:$0xff]
    %v7093 = vld [vmem:[%s7071 + $0xa8] sm:$0xff]
    %v7094 = vld [vmem:[%s7071 + $0xb0] sm:$0xff]
    %v7095 = vld [vmem:[%s7071 + $0xb8] sm:$0xff]
    %v7096 = vld [vmem:[%s7071 + $0xc0] sm:$0xff]
    %v7097 = vld [vmem:[%s7071 + $0xc8] sm:$0xff]
    %v7098 = vld [vmem:[%s7071 + $0xd0] sm:$0xff]
    %v7099 = vld [vmem:[%s7071 + $0xd8] sm:$0xff]
    %v7100 = vld [vmem:[%s7071 + $0xe0] sm:$0xff]
    %v7101 = vld [vmem:[%s7071 + $0xe8] sm:$0xff]
    %v7102 = vld [vmem:[%s7071 + $0xf0] sm:$0xff]
    %v7103 = vld [vmem:[%s7071 + $0xf8] sm:$0xff]
    %v7104 = vld [vmem:[%s7071 + $0x100] sm:$0xff]
    %v7105 = vld [vmem:[%s7071 + $0x108] sm:$0xff]
    %v7106 = vld [vmem:[%s7071 + $0x110] sm:$0xff]
    %v7107 = vld [vmem:[%s7071 + $0x118] sm:$0xff]
    %v7108 = vld [vmem:[%s7071 + $0x120] sm:$0xff]
    %v7109 = vld [vmem:[%s7071 + $0x128] sm:$0xff]
    %v7110 = vld [vmem:[%s7071 + $0x130] sm:$0xff]
    %v7111 = vld [vmem:[%s7071 + $0x138] sm:$0xff]
    %v7112 = vld [vmem:[%s7071 + $0x140] sm:$0xff]
    %v7113 = vld [vmem:[%s7071 + $0x148] sm:$0xff]
    %v7114 = vld [vmem:[%s7071 + $0x150] sm:$0xff]
    %v7115 = vld [vmem:[%s7071 + $0x158] sm:$0xff]
    %v7116 = vld [vmem:[%s7071 + $0x160] sm:$0xff]
    %v7117 = vld [vmem:[%s7071 + $0x168] sm:$0xff]
    %v7118 = vld [vmem:[%s7071 + $0x170] sm:$0xff]
    %v7119 = vld [vmem:[%s7071 + $0x178] sm:$0xff]
    %v7120 = vld [vmem:[%s7071 + $0x180] sm:$0xff]
    %v7121 = vld [vmem:[%s7071 + $0x188] sm:$0xff]
    %v7122 = vld [vmem:[%s7071 + $0x190] sm:$0xff]
    %v7123 = vld [vmem:[%s7071 + $0x198] sm:$0xff]
    %v7124 = vld [vmem:[%s7071 + $0x1a0] sm:$0xff]
    %v7125 = vld [vmem:[%s7071 + $0x1a8] sm:$0xff]
    %v7126 = vld [vmem:[%s7071 + $0x1b0] sm:$0xff]
    %v7127 = vld [vmem:[%s7071 + $0x1b8] sm:$0xff]
    %v7128 = vld [vmem:[%s7071 + $0x1c0] sm:$0xff]
    %v7129 = vld [vmem:[%s7071 + $0x1c8] sm:$0xff]
    %v7130 = vld [vmem:[%s7071 + $0x1d0] sm:$0xff]
    %v7131 = vld [vmem:[%s7071 + $0x1d8] sm:$0xff]
    %v7132 = vld [vmem:[%s7071 + $0x1e0] sm:$0xff]
    %v7133 = vld [vmem:[%s7071 + $0x1e8] sm:$0xff]
    %v7134 = vld [vmem:[%s7071 + $0x1f0] sm:$0xff]
    %v7135 = vld [vmem:[%s7071 + $0x1f8] sm:$0xff]
    %v7136 = vld [vmem:[%s7071 + $0x200] sm:$0xff]
    %v7137 = vld [vmem:[%s7071 + $0x208] sm:$0xff]
    %v7138 = vld [vmem:[%s7071 + $0x210] sm:$0xff]
    %v7139 = vld [vmem:[%s7071 + $0x218] sm:$0xff]
    %v7140 = vld [vmem:[%s7071 + $0x220] sm:$0xff]
    %v7141 = vld [vmem:[%s7071 + $0x228] sm:$0xff]
    %v7142 = vld [vmem:[%s7071 + $0x230] sm:$0xff]
    %v7143 = vld [vmem:[%s7071 + $0x238] sm:$0xff]
    %v7144 = vld [vmem:[%s7071 + $0x240] sm:$0xff]
    %v7145 = vld [vmem:[%s7071 + $0x248] sm:$0xff]
    %v7146 = vld [vmem:[%s7071 + $0x250] sm:$0xff]
    %v7147 = vld [vmem:[%s7071 + $0x258] sm:$0xff]
    %v7148 = vld [vmem:[%s7071 + $0x260] sm:$0xff]
    %v7149 = vld [vmem:[%s7071 + $0x268] sm:$0xff]
    %v7150 = vld [vmem:[%s7071 + $0x270] sm:$0xff]
    %v7151 = vld [vmem:[%s7071 + $0x278] sm:$0xff]
    %v7152 = vld [vmem:[%s7071 + $0x280] sm:$0xff]
    %v7153 = vld [vmem:[%s7071 + $0x288] sm:$0xff]
    %v7154 = vld [vmem:[%s7071 + $0x290] sm:$0xff]
    %v7155 = vld [vmem:[%s7071 + $0x298] sm:$0xff]
    %v7156 = vld [vmem:[%s7071 + $0x2a0] sm:$0xff]
    %v7157 = vld [vmem:[%s7071 + $0x2a8] sm:$0xff]
    %v7158 = vld [vmem:[%s7071 + $0x2b0] sm:$0xff]
    %v7159 = vld [vmem:[%s7071 + $0x2b8] sm:$0xff]
    %v7160 = vld [vmem:[%s7071 + $0x2c0] sm:$0xff]
    %v7161 = vld [vmem:[%s7071 + $0x2c8] sm:$0xff]
    %v7162 = vld [vmem:[%s7071 + $0x2d0] sm:$0xff]
    %v7163 = vld [vmem:[%s7071 + $0x2d8] sm:$0xff]
    %v7164 = vld [vmem:[%s7071 + $0x2e0] sm:$0xff]
    %v7165 = vld [vmem:[%s7071 + $0x2e8] sm:$0xff]
    %v7166 = vld [vmem:[%s7071 + $0x2f0] sm:$0xff]
    %v7167 = vld [vmem:[%s7071 + $0x2f8] sm:$0xff]
    %v7168 = vld [vmem:[%s7071 + $0x300] sm:$0xff]
    %v7169 = vld [vmem:[%s7071 + $0x308] sm:$0xff]
    %v7170 = vld [vmem:[%s7071 + $0x310] sm:$0xff]
    %v7171 = vld [vmem:[%s7071 + $0x318] sm:$0xff]
    %v7172 = vld [vmem:[%s7071 + $0x320] sm:$0xff]
    %v7173 = vld [vmem:[%s7071 + $0x328] sm:$0xff]
    %v7174 = vld [vmem:[%s7071 + $0x330] sm:$0xff]
    %v7175 = vld [vmem:[%s7071 + $0x338] sm:$0xff]
    %v7176 = vld [vmem:[%s7071 + $0x340] sm:$0xff]
    %v7177 = vld [vmem:[%s7071 + $0x348] sm:$0xff]
    %v7178 = vld [vmem:[%s7071 + $0x350] sm:$0xff]
    %v7179 = vld [vmem:[%s7071 + $0x358] sm:$0xff]
    %v7180 = vld [vmem:[%s7071 + $0x360] sm:$0xff]
    %v7181 = vld [vmem:[%s7071 + $0x368] sm:$0xff]
    %v7182 = vld [vmem:[%s7071 + $0x370] sm:$0xff]
    %v7183 = vld [vmem:[%s7071 + $0x378] sm:$0xff]
    %v7184 = vld [vmem:[%s7071 + $0x380] sm:$0xff]
    %v7185 = vld [vmem:[%s7071 + $0x388] sm:$0xff]
    %v7186 = vld [vmem:[%s7071 + $0x390] sm:$0xff]
    %v7187 = vld [vmem:[%s7071 + $0x398] sm:$0xff]
    %v7188 = vld [vmem:[%s7071 + $0x3a0] sm:$0xff]
    %v7189 = vld [vmem:[%s7071 + $0x3a8] sm:$0xff]
    %v7190 = vld [vmem:[%s7071 + $0x3b0] sm:$0xff]
    %v7191 = vld [vmem:[%s7071 + $0x3b8] sm:$0xff]
    %v7192 = vld [vmem:[%s7071 + $0x3c0] sm:$0xff]
    %v7193 = vld [vmem:[%s7071 + $0x3c8] sm:$0xff]
    %v7194 = vld [vmem:[%s7071 + $0x3d0] sm:$0xff]
    %v7195 = vld [vmem:[%s7071 + $0x3d8] sm:$0xff]
    %v7196 = vld [vmem:[%s7071 + $0x3e0] sm:$0xff]
    %v7197 = vld [vmem:[%s7071 + $0x3e8] sm:$0xff]
    %v7198 = vld [vmem:[%s7071 + $0x3f0] sm:$0xff]
    %v7199 = vld [vmem:[%s7071 + $0x3f8] sm:$0xff]
    %s7200 = scalar_lea.vmem [#allocation13], 7
    %v7201 = vld [vmem:[%s7200] ss:$8 sm:$0xf]
    %v7202 = vpack.c.bf16 %v7067, %v7063
    %v7203 = vpack.c.bf16 %v7068, %v7064
    %v7204 = vpack.c.bf16 %v7069, %v7065
    %v7205 = vpack.c.bf16 %v7070, %v7066
    %v7207 = vlaneseq
    %v7208 = vshrl.u32 %v7207, 7
    %v7209 = vsub.s32 0, %v7208
    %v7210 = vrot.slane %v7201, %v7209
    %v7211 = vlaneseq
    %v7212 = vshrl.u32 %v7211, 7
    %v7213 = vsub.s32 1, %v7212
    %v7214 = vrot.slane %v7201, %v7213
    %v7215 = vlaneseq
    %v7216 = vshrl.u32 %v7215, 7
    %v7217 = vsub.s32 2, %v7216
    %v7218 = vrot.slane %v7201, %v7217
    %v7219 = vlaneseq
    %v7220 = vshrl.u32 %v7219, 7
    %v7221 = vsub.s32 3, %v7220
    %v7222 = vrot.slane %v7201, %v7221
    %v7355 = vunpack.c.l.b16 %v7072
    %v7356 = vunpack.c.h.b16 %v7072
    %v7357 = vunpack.c.l.b16 %v7073
    %v7358 = vunpack.c.h.b16 %v7073
    %v7359 = vunpack.c.l.b16 %v7074
    %v7360 = vunpack.c.h.b16 %v7074
    %v7361 = vunpack.c.l.b16 %v7075
    %v7362 = vunpack.c.h.b16 %v7075
    %v7363 = vunpack.c.l.b16 %v7076
    %v7364 = vunpack.c.h.b16 %v7076
    %v7365 = vunpack.c.l.b16 %v7077
    %v7366 = vunpack.c.h.b16 %v7077
    %v7367 = vunpack.c.l.b16 %v7078
    %v7368 = vunpack.c.h.b16 %v7078
    %v7369 = vunpack.c.l.b16 %v7079
    %v7370 = vunpack.c.h.b16 %v7079
    %v7371 = vunpack.c.l.b16 %v7080
    %v7372 = vunpack.c.h.b16 %v7080
    %v7373 = vunpack.c.l.b16 %v7081
    %v7374 = vunpack.c.h.b16 %v7081
    %v7375 = vunpack.c.l.b16 %v7082
    %v7376 = vunpack.c.h.b16 %v7082
    %v7377 = vunpack.c.l.b16 %v7083
    %v7378 = vunpack.c.h.b16 %v7083
    %v7379 = vunpack.c.l.b16 %v7084
    %v7380 = vunpack.c.h.b16 %v7084
    %v7381 = vunpack.c.l.b16 %v7085
    %v7382 = vunpack.c.h.b16 %v7085
    %v7383 = vunpack.c.l.b16 %v7086
    %v7384 = vunpack.c.h.b16 %v7086
    %v7385 = vunpack.c.l.b16 %v7087
    %v7386 = vunpack.c.h.b16 %v7087
    %v7387 = vunpack.c.l.b16 %v7088
    %v7388 = vunpack.c.h.b16 %v7088
    %v7389 = vunpack.c.l.b16 %v7089
    %v7390 = vunpack.c.h.b16 %v7089
    %v7391 = vunpack.c.l.b16 %v7090
    %v7392 = vunpack.c.h.b16 %v7090
    %v7393 = vunpack.c.l.b16 %v7091
    %v7394 = vunpack.c.h.b16 %v7091
    %v7395 = vunpack.c.l.b16 %v7092
    %v7396 = vunpack.c.h.b16 %v7092
    %v7397 = vunpack.c.l.b16 %v7093
    %v7398 = vunpack.c.h.b16 %v7093
    %v7399 = vunpack.c.l.b16 %v7094
    %v7400 = vunpack.c.h.b16 %v7094
    %v7401 = vunpack.c.l.b16 %v7095
    %v7402 = vunpack.c.h.b16 %v7095
    %v7403 = vunpack.c.l.b16 %v7096
    %v7404 = vunpack.c.h.b16 %v7096
    %v7405 = vunpack.c.l.b16 %v7097
    %v7406 = vunpack.c.h.b16 %v7097
    %v7407 = vunpack.c.l.b16 %v7098
    %v7408 = vunpack.c.h.b16 %v7098
    %v7409 = vunpack.c.l.b16 %v7099
    %v7410 = vunpack.c.h.b16 %v7099
    %v7411 = vunpack.c.l.b16 %v7100
    %v7412 = vunpack.c.h.b16 %v7100
    %v7413 = vunpack.c.l.b16 %v7101
    %v7414 = vunpack.c.h.b16 %v7101
    %v7415 = vunpack.c.l.b16 %v7102
    %v7416 = vunpack.c.h.b16 %v7102
    %v7417 = vunpack.c.l.b16 %v7103
    %v7418 = vunpack.c.h.b16 %v7103
    %v7419 = vunpack.c.l.b16 %v7104
    %v7420 = vunpack.c.h.b16 %v7104
    %v7421 = vunpack.c.l.b16 %v7105
    %v7422 = vunpack.c.h.b16 %v7105
    %v7423 = vunpack.c.l.b16 %v7106
    %v7424 = vunpack.c.h.b16 %v7106
    %v7425 = vunpack.c.l.b16 %v7107
    %v7426 = vunpack.c.h.b16 %v7107
    %v7427 = vunpack.c.l.b16 %v7108
    %v7428 = vunpack.c.h.b16 %v7108
    %v7429 = vunpack.c.l.b16 %v7109
    %v7430 = vunpack.c.h.b16 %v7109
    %v7431 = vunpack.c.l.b16 %v7110
    %v7432 = vunpack.c.h.b16 %v7110
    %v7433 = vunpack.c.l.b16 %v7111
    %v7434 = vunpack.c.h.b16 %v7111
    %v7435 = vunpack.c.l.b16 %v7112
    %v7436 = vunpack.c.h.b16 %v7112
    %v7437 = vunpack.c.l.b16 %v7113
    %v7438 = vunpack.c.h.b16 %v7113
    %v7439 = vunpack.c.l.b16 %v7114
    %v7440 = vunpack.c.h.b16 %v7114
    %v7441 = vunpack.c.l.b16 %v7115
    %v7442 = vunpack.c.h.b16 %v7115
    %v7443 = vunpack.c.l.b16 %v7116
    %v7444 = vunpack.c.h.b16 %v7116
    %v7445 = vunpack.c.l.b16 %v7117
    %v7446 = vunpack.c.h.b16 %v7117
    %v7447 = vunpack.c.l.b16 %v7118
    %v7448 = vunpack.c.h.b16 %v7118
    %v7449 = vunpack.c.l.b16 %v7119
    %v7450 = vunpack.c.h.b16 %v7119
    %v7451 = vunpack.c.l.b16 %v7120
    %v7452 = vunpack.c.h.b16 %v7120
    %v7453 = vunpack.c.l.b16 %v7121
    %v7454 = vunpack.c.h.b16 %v7121
    %v7455 = vunpack.c.l.b16 %v7122
    %v7456 = vunpack.c.h.b16 %v7122
    %v7457 = vunpack.c.l.b16 %v7123
    %v7458 = vunpack.c.h.b16 %v7123
    %v7459 = vunpack.c.l.b16 %v7124
    %v7460 = vunpack.c.h.b16 %v7124
    %v7461 = vunpack.c.l.b16 %v7125
    %v7462 = vunpack.c.h.b16 %v7125
    %v7463 = vunpack.c.l.b16 %v7126
    %v7464 = vunpack.c.h.b16 %v7126
    %v7465 = vunpack.c.l.b16 %v7127
    %v7466 = vunpack.c.h.b16 %v7127
    %v7467 = vunpack.c.l.b16 %v7128
    %v7468 = vunpack.c.h.b16 %v7128
    %v7469 = vunpack.c.l.b16 %v7129
    %v7470 = vunpack.c.h.b16 %v7129
    %v7471 = vunpack.c.l.b16 %v7130
    %v7472 = vunpack.c.h.b16 %v7130
    %v7473 = vunpack.c.l.b16 %v7131
    %v7474 = vunpack.c.h.b16 %v7131
    %v7475 = vunpack.c.l.b16 %v7132
    %v7476 = vunpack.c.h.b16 %v7132
    %v7477 = vunpack.c.l.b16 %v7133
    %v7478 = vunpack.c.h.b16 %v7133
    %v7479 = vunpack.c.l.b16 %v7134
    %v7480 = vunpack.c.h.b16 %v7134
    %v7481 = vunpack.c.l.b16 %v7135
    %v7482 = vunpack.c.h.b16 %v7135
    %v7483 = vunpack.c.l.b16 %v7136
    %v7484 = vunpack.c.h.b16 %v7136
    %v7485 = vunpack.c.l.b16 %v7137
    %v7486 = vunpack.c.h.b16 %v7137
    %v7487 = vunpack.c.l.b16 %v7138
    %v7488 = vunpack.c.h.b16 %v7138
    %v7489 = vunpack.c.l.b16 %v7139
    %v7490 = vunpack.c.h.b16 %v7139
    %v7491 = vunpack.c.l.b16 %v7140
    %v7492 = vunpack.c.h.b16 %v7140
    %v7493 = vunpack.c.l.b16 %v7141
    %v7494 = vunpack.c.h.b16 %v7141
    %v7495 = vunpack.c.l.b16 %v7142
    %v7496 = vunpack.c.h.b16 %v7142
    %v7497 = vunpack.c.l.b16 %v7143
    %v7498 = vunpack.c.h.b16 %v7143
    %v7499 = vunpack.c.l.b16 %v7144
    %v7500 = vunpack.c.h.b16 %v7144
    %v7501 = vunpack.c.l.b16 %v7145
    %v7502 = vunpack.c.h.b16 %v7145
    %v7503 = vunpack.c.l.b16 %v7146
    %v7504 = vunpack.c.h.b16 %v7146
    %v7505 = vunpack.c.l.b16 %v7147
    %v7506 = vunpack.c.h.b16 %v7147
    %v7507 = vunpack.c.l.b16 %v7148
    %v7508 = vunpack.c.h.b16 %v7148
    %v7509 = vunpack.c.l.b16 %v7149
    %v7510 = vunpack.c.h.b16 %v7149
    %v7511 = vunpack.c.l.b16 %v7150
    %v7512 = vunpack.c.h.b16 %v7150
    %v7513 = vunpack.c.l.b16 %v7151
    %v7514 = vunpack.c.h.b16 %v7151
    %v7515 = vunpack.c.l.b16 %v7152
    %v7516 = vunpack.c.h.b16 %v7152
    %v7517 = vunpack.c.l.b16 %v7153
    %v7518 = vunpack.c.h.b16 %v7153
    %v7519 = vunpack.c.l.b16 %v7154
    %v7520 = vunpack.c.h.b16 %v7154
    %v7521 = vunpack.c.l.b16 %v7155
    %v7522 = vunpack.c.h.b16 %v7155
    %v7523 = vunpack.c.l.b16 %v7156
    %v7524 = vunpack.c.h.b16 %v7156
    %v7525 = vunpack.c.l.b16 %v7157
    %v7526 = vunpack.c.h.b16 %v7157
    %v7527 = vunpack.c.l.b16 %v7158
    %v7528 = vunpack.c.h.b16 %v7158
    %v7529 = vunpack.c.l.b16 %v7159
    %v7530 = vunpack.c.h.b16 %v7159
    %v7531 = vunpack.c.l.b16 %v7160
    %v7532 = vunpack.c.h.b16 %v7160
    %v7533 = vunpack.c.l.b16 %v7161
    %v7534 = vunpack.c.h.b16 %v7161
    %v7535 = vunpack.c.l.b16 %v7162
    %v7536 = vunpack.c.h.b16 %v7162
    %v7537 = vunpack.c.l.b16 %v7163
    %v7538 = vunpack.c.h.b16 %v7163
    %v7539 = vunpack.c.l.b16 %v7164
    %v7540 = vunpack.c.h.b16 %v7164
    %v7541 = vunpack.c.l.b16 %v7165
    %v7542 = vunpack.c.h.b16 %v7165
    %v7543 = vunpack.c.l.b16 %v7166
    %v7544 = vunpack.c.h.b16 %v7166
    %v7545 = vunpack.c.l.b16 %v7167
    %v7546 = vunpack.c.h.b16 %v7167
    %v7547 = vunpack.c.l.b16 %v7168
    %v7548 = vunpack.c.h.b16 %v7168
    %v7549 = vunpack.c.l.b16 %v7169
    %v7550 = vunpack.c.h.b16 %v7169
    %v7551 = vunpack.c.l.b16 %v7170
    %v7552 = vunpack.c.h.b16 %v7170
    %v7553 = vunpack.c.l.b16 %v7171
    %v7554 = vunpack.c.h.b16 %v7171
    %v7555 = vunpack.c.l.b16 %v7172
    %v7556 = vunpack.c.h.b16 %v7172
    %v7557 = vunpack.c.l.b16 %v7173
    %v7558 = vunpack.c.h.b16 %v7173
    %v7559 = vunpack.c.l.b16 %v7174
    %v7560 = vunpack.c.h.b16 %v7174
    %v7561 = vunpack.c.l.b16 %v7175
    %v7562 = vunpack.c.h.b16 %v7175
    %v7563 = vunpack.c.l.b16 %v7176
    %v7564 = vunpack.c.h.b16 %v7176
    %v7565 = vunpack.c.l.b16 %v7177
    %v7566 = vunpack.c.h.b16 %v7177
    %v7567 = vunpack.c.l.b16 %v7178
    %v7568 = vunpack.c.h.b16 %v7178
    %v7569 = vunpack.c.l.b16 %v7179
    %v7570 = vunpack.c.h.b16 %v7179
    %v7571 = vunpack.c.l.b16 %v7180
    %v7572 = vunpack.c.h.b16 %v7180
    %v7573 = vunpack.c.l.b16 %v7181
    %v7574 = vunpack.c.h.b16 %v7181
    %v7575 = vunpack.c.l.b16 %v7182
    %v7576 = vunpack.c.h.b16 %v7182
    %v7577 = vunpack.c.l.b16 %v7183
    %v7578 = vunpack.c.h.b16 %v7183
    %v7579 = vunpack.c.l.b16 %v7184
    %v7580 = vunpack.c.h.b16 %v7184
    %v7581 = vunpack.c.l.b16 %v7185
    %v7582 = vunpack.c.h.b16 %v7185
    %v7583 = vunpack.c.l.b16 %v7186
    %v7584 = vunpack.c.h.b16 %v7186
    %v7585 = vunpack.c.l.b16 %v7187
    %v7586 = vunpack.c.h.b16 %v7187
    %v7587 = vunpack.c.l.b16 %v7188
    %v7588 = vunpack.c.h.b16 %v7188
    %v7589 = vunpack.c.l.b16 %v7189
    %v7590 = vunpack.c.h.b16 %v7189
    %v7591 = vunpack.c.l.b16 %v7190
    %v7592 = vunpack.c.h.b16 %v7190
    %v7593 = vunpack.c.l.b16 %v7191
    %v7594 = vunpack.c.h.b16 %v7191
    %v7595 = vunpack.c.l.b16 %v7192
    %v7596 = vunpack.c.h.b16 %v7192
    %v7597 = vunpack.c.l.b16 %v7193
    %v7598 = vunpack.c.h.b16 %v7193
    %v7599 = vunpack.c.l.b16 %v7194
    %v7600 = vunpack.c.h.b16 %v7194
    %v7601 = vunpack.c.l.b16 %v7195
    %v7602 = vunpack.c.h.b16 %v7195
    %v7603 = vunpack.c.l.b16 %v7196
    %v7604 = vunpack.c.h.b16 %v7196
    %v7605 = vunpack.c.l.b16 %v7197
    %v7606 = vunpack.c.h.b16 %v7197
    %v7607 = vunpack.c.l.b16 %v7198
    %v7608 = vunpack.c.h.b16 %v7198
    %v7609 = vunpack.c.l.b16 %v7199
    %v7610 = vunpack.c.h.b16 %v7199
    %v7611 = vpack.c.b16 %v7359, %v7355
    %v7612 = vpack.c.b16 %v7360, %v7356
    %v7613 = vpack.c.b16 %v7361, %v7357
    %v7614 = vpack.c.b16 %v7362, %v7358
    %v7615 = vpack.c.b16 %v7367, %v7363
    %v7616 = vpack.c.b16 %v7368, %v7364
    %v7617 = vpack.c.b16 %v7369, %v7365
    %v7618 = vpack.c.b16 %v7370, %v7366
    %v7619 = vpack.c.b16 %v7375, %v7371
    %v7620 = vpack.c.b16 %v7376, %v7372
    %v7621 = vpack.c.b16 %v7377, %v7373
    %v7622 = vpack.c.b16 %v7378, %v7374
    %v7623 = vpack.c.b16 %v7383, %v7379
    %v7624 = vpack.c.b16 %v7384, %v7380
    %v7625 = vpack.c.b16 %v7385, %v7381
    %v7626 = vpack.c.b16 %v7386, %v7382
    %v7627 = vpack.c.b16 %v7391, %v7387
    %v7628 = vpack.c.b16 %v7392, %v7388
    %v7629 = vpack.c.b16 %v7393, %v7389
    %v7630 = vpack.c.b16 %v7394, %v7390
    %v7631 = vpack.c.b16 %v7399, %v7395
    %v7632 = vpack.c.b16 %v7400, %v7396
    %v7633 = vpack.c.b16 %v7401, %v7397
    %v7634 = vpack.c.b16 %v7402, %v7398
    %v7635 = vpack.c.b16 %v7407, %v7403
    %v7636 = vpack.c.b16 %v7408, %v7404
    %v7637 = vpack.c.b16 %v7409, %v7405
    %v7638 = vpack.c.b16 %v7410, %v7406
    %v7639 = vpack.c.b16 %v7415, %v7411
    %v7640 = vpack.c.b16 %v7416, %v7412
    %v7641 = vpack.c.b16 %v7417, %v7413
    %v7642 = vpack.c.b16 %v7418, %v7414
    %v7643 = vpack.c.b16 %v7423, %v7419
    %v7644 = vpack.c.b16 %v7424, %v7420
    %v7645 = vpack.c.b16 %v7425, %v7421
    %v7646 = vpack.c.b16 %v7426, %v7422
    %v7647 = vpack.c.b16 %v7431, %v7427
    %v7648 = vpack.c.b16 %v7432, %v7428
    %v7649 = vpack.c.b16 %v7433, %v7429
    %v7650 = vpack.c.b16 %v7434, %v7430
    %v7651 = vpack.c.b16 %v7439, %v7435
    %v7652 = vpack.c.b16 %v7440, %v7436
    %v7653 = vpack.c.b16 %v7441, %v7437
    %v7654 = vpack.c.b16 %v7442, %v7438
    %v7655 = vpack.c.b16 %v7447, %v7443
    %v7656 = vpack.c.b16 %v7448, %v7444
    %v7657 = vpack.c.b16 %v7449, %v7445
    %v7658 = vpack.c.b16 %v7450, %v7446
    %v7659 = vpack.c.b16 %v7455, %v7451
    %v7660 = vpack.c.b16 %v7456, %v7452
    %v7661 = vpack.c.b16 %v7457, %v7453
    %v7662 = vpack.c.b16 %v7458, %v7454
    %v7663 = vpack.c.b16 %v7463, %v7459
    %v7664 = vpack.c.b16 %v7464, %v7460
    %v7665 = vpack.c.b16 %v7465, %v7461
    %v7666 = vpack.c.b16 %v7466, %v7462
    %v7667 = vpack.c.b16 %v7471, %v7467
    %v7668 = vpack.c.b16 %v7472, %v7468
    %v7669 = vpack.c.b16 %v7473, %v7469
    %v7670 = vpack.c.b16 %v7474, %v7470
    %v7671 = vpack.c.b16 %v7479, %v7475
    %v7672 = vpack.c.b16 %v7480, %v7476
    %v7673 = vpack.c.b16 %v7481, %v7477
    %v7674 = vpack.c.b16 %v7482, %v7478
    %v7675 = vpack.c.b16 %v7487, %v7483
    %v7676 = vpack.c.b16 %v7488, %v7484
    %v7677 = vpack.c.b16 %v7489, %v7485
    %v7678 = vpack.c.b16 %v7490, %v7486
    %v7679 = vpack.c.b16 %v7495, %v7491
    %v7680 = vpack.c.b16 %v7496, %v7492
    %v7681 = vpack.c.b16 %v7497, %v7493
    %v7682 = vpack.c.b16 %v7498, %v7494
    %v7683 = vpack.c.b16 %v7503, %v7499
    %v7684 = vpack.c.b16 %v7504, %v7500
    %v7685 = vpack.c.b16 %v7505, %v7501
    %v7686 = vpack.c.b16 %v7506, %v7502
    %v7687 = vpack.c.b16 %v7511, %v7507
    %v7688 = vpack.c.b16 %v7512, %v7508
    %v7689 = vpack.c.b16 %v7513, %v7509
    %v7690 = vpack.c.b16 %v7514, %v7510
    %v7691 = vpack.c.b16 %v7519, %v7515
    %v7692 = vpack.c.b16 %v7520, %v7516
    %v7693 = vpack.c.b16 %v7521, %v7517
    %v7694 = vpack.c.b16 %v7522, %v7518
    %v7695 = vpack.c.b16 %v7527, %v7523
    %v7696 = vpack.c.b16 %v7528, %v7524
    %v7697 = vpack.c.b16 %v7529, %v7525
    %v7698 = vpack.c.b16 %v7530, %v7526
    %v7699 = vpack.c.b16 %v7535, %v7531
    %v7700 = vpack.c.b16 %v7536, %v7532
    %v7701 = vpack.c.b16 %v7537, %v7533
    %v7702 = vpack.c.b16 %v7538, %v7534
    %v7703 = vpack.c.b16 %v7543, %v7539
    %v7704 = vpack.c.b16 %v7544, %v7540
    %v7705 = vpack.c.b16 %v7545, %v7541
    %v7706 = vpack.c.b16 %v7546, %v7542
    %v7707 = vpack.c.b16 %v7551, %v7547
    %v7708 = vpack.c.b16 %v7552, %v7548
    %v7709 = vpack.c.b16 %v7553, %v7549
    %v7710 = vpack.c.b16 %v7554, %v7550
    %v7711 = vpack.c.b16 %v7559, %v7555
    %v7712 = vpack.c.b16 %v7560, %v7556
    %v7713 = vpack.c.b16 %v7561, %v7557
    %v7714 = vpack.c.b16 %v7562, %v7558
    %v7715 = vpack.c.b16 %v7567, %v7563
    %v7716 = vpack.c.b16 %v7568, %v7564
    %v7717 = vpack.c.b16 %v7569, %v7565
    %v7718 = vpack.c.b16 %v7570, %v7566
    %v7719 = vpack.c.b16 %v7575, %v7571
    %v7720 = vpack.c.b16 %v7576, %v7572
    %v7721 = vpack.c.b16 %v7577, %v7573
    %v7722 = vpack.c.b16 %v7578, %v7574
    %v7723 = vpack.c.b16 %v7583, %v7579
    %v7724 = vpack.c.b16 %v7584, %v7580
    %v7725 = vpack.c.b16 %v7585, %v7581
    %v7726 = vpack.c.b16 %v7586, %v7582
    %v7727 = vpack.c.b16 %v7591, %v7587
    %v7728 = vpack.c.b16 %v7592, %v7588
    %v7729 = vpack.c.b16 %v7593, %v7589
    %v7730 = vpack.c.b16 %v7594, %v7590
    %v7731 = vpack.c.b16 %v7599, %v7595
    %v7732 = vpack.c.b16 %v7600, %v7596
    %v7733 = vpack.c.b16 %v7601, %v7597
    %v7734 = vpack.c.b16 %v7602, %v7598
    %v7735 = vpack.c.b16 %v7607, %v7603
    %v7736 = vpack.c.b16 %v7608, %v7604
    %v7737 = vpack.c.b16 %v7609, %v7605
    %v7738 = vpack.c.b16 %v7610, %v7606
    %7867 = vmatprep.subr.bf16.mxu0 %v7640
    %7868 = vmatpush1.bf16.msra.mxu0 %v7639
    %7869 = vmatprep.subr.bf16.mxu0 %v7636
    %7870 = vmatpush1.bf16.msra.mxu0 %v7635
    %7871 = vmatprep.subr.bf16.mxu0 %v7632
    %7872 = vmatpush1.bf16.msra.mxu0 %v7631
    %7873 = vmatprep.subr.bf16.mxu0 %v7628
    %7874 = vmatpush1.bf16.msra.mxu0 %v7627
    %7875 = vmatprep.subr.bf16.mxu0 %v7624
    %7876 = vmatpush1.bf16.msra.mxu0 %v7623
    %7877 = vmatprep.subr.bf16.mxu0 %v7620
    %7878 = vmatpush1.bf16.msra.mxu0 %v7619
    %7879 = vmatprep.subr.bf16.mxu0 %v7616
    %7880 = vmatpush1.bf16.msra.mxu0 %v7615
    %7881 = vmatprep.subr.bf16.mxu0 %v7612
    %7882 = vmatpush1.bf16.msra.mxu0 %v7611
    %7883 = vmatprep.subr.bf16.mxu0 %v7672
    %7884 = vmatpush2.bf16.msra.mxu0 %v7671
    %7885 = vmatprep.subr.bf16.mxu0 %v7668
    %7886 = vmatpush2.bf16.msra.mxu0 %v7667
    %7887 = vmatprep.subr.bf16.mxu0 %v7664
    %7888 = vmatpush2.bf16.msra.mxu0 %v7663
    %7889 = vmatprep.subr.bf16.mxu0 %v7660
    %7890 = vmatpush2.bf16.msra.mxu0 %v7659
    %7891 = vmatprep.subr.bf16.mxu0 %v7656
    %7892 = vmatpush2.bf16.msra.mxu0 %v7655
    %7893 = vmatprep.subr.bf16.mxu0 %v7652
    %7894 = vmatpush2.bf16.msra.mxu0 %v7651
    %7895 = vmatprep.subr.bf16.mxu0 %v7648
    %7896 = vmatpush2.bf16.msra.mxu0 %v7647
    %7897 = vmatprep.subr.bf16.mxu0 %v7644
    %7898 = vmatpush2.bf16.msra.mxu0 %v7643
    %7899 = vmatprep.mubr.bf16.mxu0 %v7203
    %7900 = vmatmul.mubr.bf16.gmra.mxu0 %v7202
    %v7901 = vpop.f32.mrf.mxu0
    %v7902 = vadd.f32 %v7210, %v7901
    %v7903 = vpop.f32.mrf.mxu0
    %v7904 = vadd.f32 %v7214, %v7903
    %v7905 = vpop.f32.mrf.mxu0
    %v7906 = vadd.f32 %v7210, %v7905
    %v7907 = vpop.f32.mrf.mxu0
    %v7908 = vadd.f32 %v7214, %v7907
    %7909 = vdwg.mxu0
    %7910 = vmatprep.subr.bf16.mxu0 %v7704
    %7911 = vmatpush1.bf16.msra.mxu0 %v7703
    %7912 = vmatprep.subr.bf16.mxu0 %v7700
    %7913 = vmatpush1.bf16.msra.mxu0 %v7699
    %7914 = vmatprep.subr.bf16.mxu0 %v7696
    %7915 = vmatpush1.bf16.msra.mxu0 %v7695
    %7916 = vmatprep.subr.bf16.mxu0 %v7692
    %7917 = vmatpush1.bf16.msra.mxu0 %v7691
    %7918 = vmatprep.subr.bf16.mxu0 %v7688
    %7919 = vmatpush1.bf16.msra.mxu0 %v7687
    %7920 = vmatprep.subr.bf16.mxu0 %v7684
    %7921 = vmatpush1.bf16.msra.mxu0 %v7683
    %7922 = vmatprep.subr.bf16.mxu0 %v7680
    %7923 = vmatpush1.bf16.msra.mxu0 %v7679
    %7924 = vmatprep.subr.bf16.mxu0 %v7676
    %7925 = vmatpush1.bf16.msra.mxu0 %v7675
    %7926 = vmatprep.subr.bf16.mxu0 %v7736
    %7927 = vmatpush2.bf16.msra.mxu0 %v7735
    %7928 = vmatprep.subr.bf16.mxu0 %v7732
    %7929 = vmatpush2.bf16.msra.mxu0 %v7731
    %7930 = vmatprep.subr.bf16.mxu0 %v7728
    %7931 = vmatpush2.bf16.msra.mxu0 %v7727
    %7932 = vmatprep.subr.bf16.mxu0 %v7724
    %7933 = vmatpush2.bf16.msra.mxu0 %v7723
    %7934 = vmatprep.subr.bf16.mxu0 %v7720
    %7935 = vmatpush2.bf16.msra.mxu0 %v7719
    %7936 = vmatprep.subr.bf16.mxu0 %v7716
    %7937 = vmatpush2.bf16.msra.mxu0 %v7715
    %7938 = vmatprep.subr.bf16.mxu0 %v7712
    %7939 = vmatpush2.bf16.msra.mxu0 %v7711
    %7940 = vmatprep.subr.bf16.mxu0 %v7708
    %7941 = vmatpush2.bf16.msra.mxu0 %v7707
    %7942 = vmatprep.mubr.bf16.mxu0 %v7205
    %7943 = vmatmul.mubr.bf16.gmra.mxu0 %v7204
    %v7944 = vpop.f32.mrf.mxu0
    %v7945 = vadd.f32 %v7902, %v7944
    %v7946 = vpop.f32.mrf.mxu0
    %v7947 = vadd.f32 %v7904, %v7946
    %v7948 = vpop.f32.mrf.mxu0
    %v7949 = vadd.f32 %v7906, %v7948
    %v7950 = vpop.f32.mrf.mxu0
    %v7951 = vadd.f32 %v7908, %v7950
    %7952 = vdwg.mxu0
    %7953 = vmatprep.subr.bf16.mxu0 %v7642
    %7954 = vmatpush1.bf16.msra.mxu0 %v7641
    %7955 = vmatprep.subr.bf16.mxu0 %v7638
    %7956 = vmatpush1.bf16.msra.mxu0 %v7637
    %7957 = vmatprep.subr.bf16.mxu0 %v7634
    %7958 = vmatpush1.bf16.msra.mxu0 %v7633
    %7959 = vmatprep.subr.bf16.mxu0 %v7630
    %7960 = vmatpush1.bf16.msra.mxu0 %v7629
    %7961 = vmatprep.subr.bf16.mxu0 %v7626
    %7962 = vmatpush1.bf16.msra.mxu0 %v7625
    %7963 = vmatprep.subr.bf16.mxu0 %v7622
    %7964 = vmatpush1.bf16.msra.mxu0 %v7621
    %7965 = vmatprep.subr.bf16.mxu0 %v7618
    %7966 = vmatpush1.bf16.msra.mxu0 %v7617
    %7967 = vmatprep.subr.bf16.mxu0 %v7614
    %7968 = vmatpush1.bf16.msra.mxu0 %v7613
    %7969 = vmatprep.subr.bf16.mxu0 %v7674
    %7970 = vmatpush2.bf16.msra.mxu0 %v7673
    %7971 = vmatprep.subr.bf16.mxu0 %v7670
    %7972 = vmatpush2.bf16.msra.mxu0 %v7669
    %7973 = vmatprep.subr.bf16.mxu0 %v7666
    %7974 = vmatpush2.bf16.msra.mxu0 %v7665
    %7975 = vmatprep.subr.bf16.mxu0 %v7662
    %7976 = vmatpush2.bf16.msra.mxu0 %v7661
    %7977 = vmatprep.subr.bf16.mxu0 %v7658
    %7978 = vmatpush2.bf16.msra.mxu0 %v7657
    %7979 = vmatprep.subr.bf16.mxu0 %v7654
    %7980 = vmatpush2.bf16.msra.mxu0 %v7653
    %7981 = vmatprep.subr.bf16.mxu0 %v7650
    %7982 = vmatpush2.bf16.msra.mxu0 %v7649
    %7983 = vmatprep.subr.bf16.mxu0 %v7646
    %7984 = vmatpush2.bf16.msra.mxu0 %v7645
    %7985 = vmatprep.mubr.bf16.mxu0 %v7203
    %7986 = vmatmul.mubr.bf16.gmra.mxu0 %v7202
    %v7987 = vpop.f32.mrf.mxu0
    %v7988 = vadd.f32 %v7218, %v7987
    %v7989 = vpop.f32.mrf.mxu0
    %v7990 = vadd.f32 %v7222, %v7989
    %v7991 = vpop.f32.mrf.mxu0
    %v7992 = vadd.f32 %v7218, %v7991
    %v7993 = vpop.f32.mrf.mxu0
    %v7994 = vadd.f32 %v7222, %v7993
    %7995 = vdwg.mxu0
    %7996 = vmatprep.subr.bf16.mxu0 %v7706
    %7997 = vmatpush1.bf16.msra.mxu0 %v7705
    %7998 = vmatprep.subr.bf16.mxu0 %v7702
    %7999 = vmatpush1.bf16.msra.mxu0 %v7701
    %8000 = vmatprep.subr.bf16.mxu0 %v7698
    %8001 = vmatpush1.bf16.msra.mxu0 %v7697
    %8002 = vmatprep.subr.bf16.mxu0 %v7694
    %8003 = vmatpush1.bf16.msra.mxu0 %v7693
    %8004 = vmatprep.subr.bf16.mxu0 %v7690
    %8005 = vmatpush1.bf16.msra.mxu0 %v7689
    %8006 = vmatprep.subr.bf16.mxu0 %v7686
    %8007 = vmatpush1.bf16.msra.mxu0 %v7685
    %8008 = vmatprep.subr.bf16.mxu0 %v7682
    %8009 = vmatpush1.bf16.msra.mxu0 %v7681
    %8010 = vmatprep.subr.bf16.mxu0 %v7678
    %8011 = vmatpush1.bf16.msra.mxu0 %v7677
    %8012 = vmatprep.subr.bf16.mxu0 %v7738
    %8013 = vmatpush2.bf16.msra.mxu0 %v7737
    %8014 = vmatprep.subr.bf16.mxu0 %v7734
    %8015 = vmatpush2.bf16.msra.mxu0 %v7733
    %8016 = vmatprep.subr.bf16.mxu0 %v7730
    %8017 = vmatpush2.bf16.msra.mxu0 %v7729
    %8018 = vmatprep.subr.bf16.mxu0 %v7726
    %8019 = vmatpush2.bf16.msra.mxu0 %v7725
    %8020 = vmatprep.subr.bf16.mxu0 %v7722
    %8021 = vmatpush2.bf16.msra.mxu0 %v7721
    %8022 = vmatprep.subr.bf16.mxu0 %v7718
    %8023 = vmatpush2.bf16.msra.mxu0 %v7717
    %8024 = vmatprep.subr.bf16.mxu0 %v7714
    %8025 = vmatpush2.bf16.msra.mxu0 %v7713
    %8026 = vmatprep.subr.bf16.mxu0 %v7710
    %8027 = vmatpush2.bf16.msra.mxu0 %v7709
    %8028 = vmatprep.mubr.bf16.mxu0 %v7205
    %8029 = vmatmul.mubr.bf16.gmra.mxu0 %v7204
    %v8030 = vpop.f32.mrf.mxu0
    %v8031 = vadd.f32 %v7988, %v8030
    %v8032 = vpop.f32.mrf.mxu0
    %v8033 = vadd.f32 %v7990, %v8032
    %v8034 = vpop.f32.mrf.mxu0
    %v8035 = vadd.f32 %v7992, %v8034
    %v8036 = vpop.f32.mrf.mxu0
    %v8037 = vadd.f32 %v7994, %v8036
    %8038 = vdwg.mxu0
    %vm8039 = vcmp.ge.f32.partialorder %v7945, 0.0
    %vm8040 = vcmp.ge.f32.partialorder %v7947, 0.0
    %vm8041 = vcmp.ge.f32.partialorder %v8031, 0.0
    %vm8042 = vcmp.ge.f32.partialorder %v8033, 0.0
    %vm8043 = vcmp.ge.f32.partialorder %v7949, 0.0
    %vm8044 = vcmp.ge.f32.partialorder %v7951, 0.0
    %vm8045 = vcmp.ge.f32.partialorder %v8035, 0.0
    %vm8046 = vcmp.ge.f32.partialorder %v8037, 0.0
    %v8047 = vmul.f32 %v7945, 0.01
    %v8048 = vmul.f32 %v7947, 0.01
    %v8049 = vmul.f32 %v8031, 0.01
    %v8050 = vmul.f32 %v8033, 0.01
    %v8051 = vmul.f32 %v7949, 0.01
    %v8052 = vmul.f32 %v7951, 0.01
    %v8053 = vmul.f32 %v8035, 0.01
    %v8054 = vmul.f32 %v8037, 0.01
    %v8055 = vsel %vm8039, %v7945, %v8047
    %v8056 = vsel %vm8040, %v7947, %v8048
    %v8057 = vsel %vm8041, %v8031, %v8049
    %v8058 = vsel %vm8042, %v8033, %v8050
    %v8059 = vsel %vm8043, %v7949, %v8051
    %v8060 = vsel %vm8044, %v7951, %v8052
    %v8061 = vsel %vm8045, %v8035, %v8053
    %v8062 = vsel %vm8046, %v8037, %v8054
    %v8063 = vadd.f32 %v8055, %v7063
    %v8064 = vadd.f32 %v8056, %v7064
    %v8065 = vadd.f32 %v8057, %v7065
    %v8066 = vadd.f32 %v8058, %v7066
    %v8067 = vadd.f32 %v8059, %v7067
    %v8068 = vadd.f32 %v8060, %v7068
    %v8069 = vadd.f32 %v8061, %v7069
    %v8070 = vadd.f32 %v8062, %v7070
    %s8071 = scalar_lea.vmem [#allocation11], 6144
    %v8072 = vld [vmem:[%s8071] sm:$0xff]
    %v8073 = vld [vmem:[%s8071 + $0x8] sm:$0xff]
    %v8074 = vld [vmem:[%s8071 + $0x10] sm:$0xff]
    %v8075 = vld [vmem:[%s8071 + $0x18] sm:$0xff]
    %v8076 = vld [vmem:[%s8071 + $0x20] sm:$0xff]
    %v8077 = vld [vmem:[%s8071 + $0x28] sm:$0xff]
    %v8078 = vld [vmem:[%s8071 + $0x30] sm:$0xff]
    %v8079 = vld [vmem:[%s8071 + $0x38] sm:$0xff]
    %v8080 = vld [vmem:[%s8071 + $0x40] sm:$0xff]
    %v8081 = vld [vmem:[%s8071 + $0x48] sm:$0xff]
    %v8082 = vld [vmem:[%s8071 + $0x50] sm:$0xff]
    %v8083 = vld [vmem:[%s8071 + $0x58] sm:$0xff]
    %v8084 = vld [vmem:[%s8071 + $0x60] sm:$0xff]
    %v8085 = vld [vmem:[%s8071 + $0x68] sm:$0xff]
    %v8086 = vld [vmem:[%s8071 + $0x70] sm:$0xff]
    %v8087 = vld [vmem:[%s8071 + $0x78] sm:$0xff]
    %v8088 = vld [vmem:[%s8071 + $0x80] sm:$0xff]
    %v8089 = vld [vmem:[%s8071 + $0x88] sm:$0xff]
    %v8090 = vld [vmem:[%s8071 + $0x90] sm:$0xff]
    %v8091 = vld [vmem:[%s8071 + $0x98] sm:$0xff]
    %v8092 = vld [vmem:[%s8071 + $0xa0] sm:$0xff]
    %v8093 = vld [vmem:[%s8071 + $0xa8] sm:$0xff]
    %v8094 = vld [vmem:[%s8071 + $0xb0] sm:$0xff]
    %v8095 = vld [vmem:[%s8071 + $0xb8] sm:$0xff]
    %v8096 = vld [vmem:[%s8071 + $0xc0] sm:$0xff]
    %v8097 = vld [vmem:[%s8071 + $0xc8] sm:$0xff]
    %v8098 = vld [vmem:[%s8071 + $0xd0] sm:$0xff]
    %v8099 = vld [vmem:[%s8071 + $0xd8] sm:$0xff]
    %v8100 = vld [vmem:[%s8071 + $0xe0] sm:$0xff]
    %v8101 = vld [vmem:[%s8071 + $0xe8] sm:$0xff]
    %v8102 = vld [vmem:[%s8071 + $0xf0] sm:$0xff]
    %v8103 = vld [vmem:[%s8071 + $0xf8] sm:$0xff]
    %v8104 = vld [vmem:[%s8071 + $0x100] sm:$0xff]
    %v8105 = vld [vmem:[%s8071 + $0x108] sm:$0xff]
    %v8106 = vld [vmem:[%s8071 + $0x110] sm:$0xff]
    %v8107 = vld [vmem:[%s8071 + $0x118] sm:$0xff]
    %v8108 = vld [vmem:[%s8071 + $0x120] sm:$0xff]
    %v8109 = vld [vmem:[%s8071 + $0x128] sm:$0xff]
    %v8110 = vld [vmem:[%s8071 + $0x130] sm:$0xff]
    %v8111 = vld [vmem:[%s8071 + $0x138] sm:$0xff]
    %v8112 = vld [vmem:[%s8071 + $0x140] sm:$0xff]
    %v8113 = vld [vmem:[%s8071 + $0x148] sm:$0xff]
    %v8114 = vld [vmem:[%s8071 + $0x150] sm:$0xff]
    %v8115 = vld [vmem:[%s8071 + $0x158] sm:$0xff]
    %v8116 = vld [vmem:[%s8071 + $0x160] sm:$0xff]
    %v8117 = vld [vmem:[%s8071 + $0x168] sm:$0xff]
    %v8118 = vld [vmem:[%s8071 + $0x170] sm:$0xff]
    %v8119 = vld [vmem:[%s8071 + $0x178] sm:$0xff]
    %v8120 = vld [vmem:[%s8071 + $0x180] sm:$0xff]
    %v8121 = vld [vmem:[%s8071 + $0x188] sm:$0xff]
    %v8122 = vld [vmem:[%s8071 + $0x190] sm:$0xff]
    %v8123 = vld [vmem:[%s8071 + $0x198] sm:$0xff]
    %v8124 = vld [vmem:[%s8071 + $0x1a0] sm:$0xff]
    %v8125 = vld [vmem:[%s8071 + $0x1a8] sm:$0xff]
    %v8126 = vld [vmem:[%s8071 + $0x1b0] sm:$0xff]
    %v8127 = vld [vmem:[%s8071 + $0x1b8] sm:$0xff]
    %v8128 = vld [vmem:[%s8071 + $0x1c0] sm:$0xff]
    %v8129 = vld [vmem:[%s8071 + $0x1c8] sm:$0xff]
    %v8130 = vld [vmem:[%s8071 + $0x1d0] sm:$0xff]
    %v8131 = vld [vmem:[%s8071 + $0x1d8] sm:$0xff]
    %v8132 = vld [vmem:[%s8071 + $0x1e0] sm:$0xff]
    %v8133 = vld [vmem:[%s8071 + $0x1e8] sm:$0xff]
    %v8134 = vld [vmem:[%s8071 + $0x1f0] sm:$0xff]
    %v8135 = vld [vmem:[%s8071 + $0x1f8] sm:$0xff]
    %v8136 = vld [vmem:[%s8071 + $0x200] sm:$0xff]
    %v8137 = vld [vmem:[%s8071 + $0x208] sm:$0xff]
    %v8138 = vld [vmem:[%s8071 + $0x210] sm:$0xff]
    %v8139 = vld [vmem:[%s8071 + $0x218] sm:$0xff]
    %v8140 = vld [vmem:[%s8071 + $0x220] sm:$0xff]
    %v8141 = vld [vmem:[%s8071 + $0x228] sm:$0xff]
    %v8142 = vld [vmem:[%s8071 + $0x230] sm:$0xff]
    %v8143 = vld [vmem:[%s8071 + $0x238] sm:$0xff]
    %v8144 = vld [vmem:[%s8071 + $0x240] sm:$0xff]
    %v8145 = vld [vmem:[%s8071 + $0x248] sm:$0xff]
    %v8146 = vld [vmem:[%s8071 + $0x250] sm:$0xff]
    %v8147 = vld [vmem:[%s8071 + $0x258] sm:$0xff]
    %v8148 = vld [vmem:[%s8071 + $0x260] sm:$0xff]
    %v8149 = vld [vmem:[%s8071 + $0x268] sm:$0xff]
    %v8150 = vld [vmem:[%s8071 + $0x270] sm:$0xff]
    %v8151 = vld [vmem:[%s8071 + $0x278] sm:$0xff]
    %v8152 = vld [vmem:[%s8071 + $0x280] sm:$0xff]
    %v8153 = vld [vmem:[%s8071 + $0x288] sm:$0xff]
    %v8154 = vld [vmem:[%s8071 + $0x290] sm:$0xff]
    %v8155 = vld [vmem:[%s8071 + $0x298] sm:$0xff]
    %v8156 = vld [vmem:[%s8071 + $0x2a0] sm:$0xff]
    %v8157 = vld [vmem:[%s8071 + $0x2a8] sm:$0xff]
    %v8158 = vld [vmem:[%s8071 + $0x2b0] sm:$0xff]
    %v8159 = vld [vmem:[%s8071 + $0x2b8] sm:$0xff]
    %v8160 = vld [vmem:[%s8071 + $0x2c0] sm:$0xff]
    %v8161 = vld [vmem:[%s8071 + $0x2c8] sm:$0xff]
    %v8162 = vld [vmem:[%s8071 + $0x2d0] sm:$0xff]
    %v8163 = vld [vmem:[%s8071 + $0x2d8] sm:$0xff]
    %v8164 = vld [vmem:[%s8071 + $0x2e0] sm:$0xff]
    %v8165 = vld [vmem:[%s8071 + $0x2e8] sm:$0xff]
    %v8166 = vld [vmem:[%s8071 + $0x2f0] sm:$0xff]
    %v8167 = vld [vmem:[%s8071 + $0x2f8] sm:$0xff]
    %v8168 = vld [vmem:[%s8071 + $0x300] sm:$0xff]
    %v8169 = vld [vmem:[%s8071 + $0x308] sm:$0xff]
    %v8170 = vld [vmem:[%s8071 + $0x310] sm:$0xff]
    %v8171 = vld [vmem:[%s8071 + $0x318] sm:$0xff]
    %v8172 = vld [vmem:[%s8071 + $0x320] sm:$0xff]
    %v8173 = vld [vmem:[%s8071 + $0x328] sm:$0xff]
    %v8174 = vld [vmem:[%s8071 + $0x330] sm:$0xff]
    %v8175 = vld [vmem:[%s8071 + $0x338] sm:$0xff]
    %v8176 = vld [vmem:[%s8071 + $0x340] sm:$0xff]
    %v8177 = vld [vmem:[%s8071 + $0x348] sm:$0xff]
    %v8178 = vld [vmem:[%s8071 + $0x350] sm:$0xff]
    %v8179 = vld [vmem:[%s8071 + $0x358] sm:$0xff]
    %v8180 = vld [vmem:[%s8071 + $0x360] sm:$0xff]
    %v8181 = vld [vmem:[%s8071 + $0x368] sm:$0xff]
    %v8182 = vld [vmem:[%s8071 + $0x370] sm:$0xff]
    %v8183 = vld [vmem:[%s8071 + $0x378] sm:$0xff]
    %v8184 = vld [vmem:[%s8071 + $0x380] sm:$0xff]
    %v8185 = vld [vmem:[%s8071 + $0x388] sm:$0xff]
    %v8186 = vld [vmem:[%s8071 + $0x390] sm:$0xff]
    %v8187 = vld [vmem:[%s8071 + $0x398] sm:$0xff]
    %v8188 = vld [vmem:[%s8071 + $0x3a0] sm:$0xff]
    %v8189 = vld [vmem:[%s8071 + $0x3a8] sm:$0xff]
    %v8190 = vld [vmem:[%s8071 + $0x3b0] sm:$0xff]
    %v8191 = vld [vmem:[%s8071 + $0x3b8] sm:$0xff]
    %v8192 = vld [vmem:[%s8071 + $0x3c0] sm:$0xff]
    %v8193 = vld [vmem:[%s8071 + $0x3c8] sm:$0xff]
    %v8194 = vld [vmem:[%s8071 + $0x3d0] sm:$0xff]
    %v8195 = vld [vmem:[%s8071 + $0x3d8] sm:$0xff]
    %v8196 = vld [vmem:[%s8071 + $0x3e0] sm:$0xff]
    %v8197 = vld [vmem:[%s8071 + $0x3e8] sm:$0xff]
    %v8198 = vld [vmem:[%s8071 + $0x3f0] sm:$0xff]
    %v8199 = vld [vmem:[%s8071 + $0x3f8] sm:$0xff]
    %s8200 = scalar_lea.vmem [#allocation13], 32
    %v8201 = vld [vmem:[%s8200] ss:$8 sm:$0xf]
    %v8202 = vpack.c.bf16 %v8067, %v8063
    %v8203 = vpack.c.bf16 %v8068, %v8064
    %v8204 = vpack.c.bf16 %v8069, %v8065
    %v8205 = vpack.c.bf16 %v8070, %v8066
    %v8207 = vlaneseq
    %v8208 = vshrl.u32 %v8207, 7
    %v8209 = vsub.s32 0, %v8208
    %v8210 = vrot.slane %v8201, %v8209
    %v8211 = vlaneseq
    %v8212 = vshrl.u32 %v8211, 7
    %v8213 = vsub.s32 1, %v8212
    %v8214 = vrot.slane %v8201, %v8213
    %v8215 = vlaneseq
    %v8216 = vshrl.u32 %v8215, 7
    %v8217 = vsub.s32 2, %v8216
    %v8218 = vrot.slane %v8201, %v8217
    %v8219 = vlaneseq
    %v8220 = vshrl.u32 %v8219, 7
    %v8221 = vsub.s32 3, %v8220
    %v8222 = vrot.slane %v8201, %v8221
    %v8355 = vunpack.c.l.b16 %v8072
    %v8356 = vunpack.c.h.b16 %v8072
    %v8357 = vunpack.c.l.b16 %v8073
    %v8358 = vunpack.c.h.b16 %v8073
    %v8359 = vunpack.c.l.b16 %v8074
    %v8360 = vunpack.c.h.b16 %v8074
    %v8361 = vunpack.c.l.b16 %v8075
    %v8362 = vunpack.c.h.b16 %v8075
    %v8363 = vunpack.c.l.b16 %v8076
    %v8364 = vunpack.c.h.b16 %v8076
    %v8365 = vunpack.c.l.b16 %v8077
    %v8366 = vunpack.c.h.b16 %v8077
    %v8367 = vunpack.c.l.b16 %v8078
    %v8368 = vunpack.c.h.b16 %v8078
    %v8369 = vunpack.c.l.b16 %v8079
    %v8370 = vunpack.c.h.b16 %v8079
    %v8371 = vunpack.c.l.b16 %v8080
    %v8372 = vunpack.c.h.b16 %v8080
    %v8373 = vunpack.c.l.b16 %v8081
    %v8374 = vunpack.c.h.b16 %v8081
    %v8375 = vunpack.c.l.b16 %v8082
    %v8376 = vunpack.c.h.b16 %v8082
    %v8377 = vunpack.c.l.b16 %v8083
    %v8378 = vunpack.c.h.b16 %v8083
    %v8379 = vunpack.c.l.b16 %v8084
    %v8380 = vunpack.c.h.b16 %v8084
    %v8381 = vunpack.c.l.b16 %v8085
    %v8382 = vunpack.c.h.b16 %v8085
    %v8383 = vunpack.c.l.b16 %v8086
    %v8384 = vunpack.c.h.b16 %v8086
    %v8385 = vunpack.c.l.b16 %v8087
    %v8386 = vunpack.c.h.b16 %v8087
    %v8387 = vunpack.c.l.b16 %v8088
    %v8388 = vunpack.c.h.b16 %v8088
    %v8389 = vunpack.c.l.b16 %v8089
    %v8390 = vunpack.c.h.b16 %v8089
    %v8391 = vunpack.c.l.b16 %v8090
    %v8392 = vunpack.c.h.b16 %v8090
    %v8393 = vunpack.c.l.b16 %v8091
    %v8394 = vunpack.c.h.b16 %v8091
    %v8395 = vunpack.c.l.b16 %v8092
    %v8396 = vunpack.c.h.b16 %v8092
    %v8397 = vunpack.c.l.b16 %v8093
    %v8398 = vunpack.c.h.b16 %v8093
    %v8399 = vunpack.c.l.b16 %v8094
    %v8400 = vunpack.c.h.b16 %v8094
    %v8401 = vunpack.c.l.b16 %v8095
    %v8402 = vunpack.c.h.b16 %v8095
    %v8403 = vunpack.c.l.b16 %v8096
    %v8404 = vunpack.c.h.b16 %v8096
    %v8405 = vunpack.c.l.b16 %v8097
    %v8406 = vunpack.c.h.b16 %v8097
    %v8407 = vunpack.c.l.b16 %v8098
    %v8408 = vunpack.c.h.b16 %v8098
    %v8409 = vunpack.c.l.b16 %v8099
    %v8410 = vunpack.c.h.b16 %v8099
    %v8411 = vunpack.c.l.b16 %v8100
    %v8412 = vunpack.c.h.b16 %v8100
    %v8413 = vunpack.c.l.b16 %v8101
    %v8414 = vunpack.c.h.b16 %v8101
    %v8415 = vunpack.c.l.b16 %v8102
    %v8416 = vunpack.c.h.b16 %v8102
    %v8417 = vunpack.c.l.b16 %v8103
    %v8418 = vunpack.c.h.b16 %v8103
    %v8419 = vunpack.c.l.b16 %v8104
    %v8420 = vunpack.c.h.b16 %v8104
    %v8421 = vunpack.c.l.b16 %v8105
    %v8422 = vunpack.c.h.b16 %v8105
    %v8423 = vunpack.c.l.b16 %v8106
    %v8424 = vunpack.c.h.b16 %v8106
    %v8425 = vunpack.c.l.b16 %v8107
    %v8426 = vunpack.c.h.b16 %v8107
    %v8427 = vunpack.c.l.b16 %v8108
    %v8428 = vunpack.c.h.b16 %v8108
    %v8429 = vunpack.c.l.b16 %v8109
    %v8430 = vunpack.c.h.b16 %v8109
    %v8431 = vunpack.c.l.b16 %v8110
    %v8432 = vunpack.c.h.b16 %v8110
    %v8433 = vunpack.c.l.b16 %v8111
    %v8434 = vunpack.c.h.b16 %v8111
    %v8435 = vunpack.c.l.b16 %v8112
    %v8436 = vunpack.c.h.b16 %v8112
    %v8437 = vunpack.c.l.b16 %v8113
    %v8438 = vunpack.c.h.b16 %v8113
    %v8439 = vunpack.c.l.b16 %v8114
    %v8440 = vunpack.c.h.b16 %v8114
    %v8441 = vunpack.c.l.b16 %v8115
    %v8442 = vunpack.c.h.b16 %v8115
    %v8443 = vunpack.c.l.b16 %v8116
    %v8444 = vunpack.c.h.b16 %v8116
    %v8445 = vunpack.c.l.b16 %v8117
    %v8446 = vunpack.c.h.b16 %v8117
    %v8447 = vunpack.c.l.b16 %v8118
    %v8448 = vunpack.c.h.b16 %v8118
    %v8449 = vunpack.c.l.b16 %v8119
    %v8450 = vunpack.c.h.b16 %v8119
    %v8451 = vunpack.c.l.b16 %v8120
    %v8452 = vunpack.c.h.b16 %v8120
    %v8453 = vunpack.c.l.b16 %v8121
    %v8454 = vunpack.c.h.b16 %v8121
    %v8455 = vunpack.c.l.b16 %v8122
    %v8456 = vunpack.c.h.b16 %v8122
    %v8457 = vunpack.c.l.b16 %v8123
    %v8458 = vunpack.c.h.b16 %v8123
    %v8459 = vunpack.c.l.b16 %v8124
    %v8460 = vunpack.c.h.b16 %v8124
    %v8461 = vunpack.c.l.b16 %v8125
    %v8462 = vunpack.c.h.b16 %v8125
    %v8463 = vunpack.c.l.b16 %v8126
    %v8464 = vunpack.c.h.b16 %v8126
    %v8465 = vunpack.c.l.b16 %v8127
    %v8466 = vunpack.c.h.b16 %v8127
    %v8467 = vunpack.c.l.b16 %v8128
    %v8468 = vunpack.c.h.b16 %v8128
    %v8469 = vunpack.c.l.b16 %v8129
    %v8470 = vunpack.c.h.b16 %v8129
    %v8471 = vunpack.c.l.b16 %v8130
    %v8472 = vunpack.c.h.b16 %v8130
    %v8473 = vunpack.c.l.b16 %v8131
    %v8474 = vunpack.c.h.b16 %v8131
    %v8475 = vunpack.c.l.b16 %v8132
    %v8476 = vunpack.c.h.b16 %v8132
    %v8477 = vunpack.c.l.b16 %v8133
    %v8478 = vunpack.c.h.b16 %v8133
    %v8479 = vunpack.c.l.b16 %v8134
    %v8480 = vunpack.c.h.b16 %v8134
    %v8481 = vunpack.c.l.b16 %v8135
    %v8482 = vunpack.c.h.b16 %v8135
    %v8483 = vunpack.c.l.b16 %v8136
    %v8484 = vunpack.c.h.b16 %v8136
    %v8485 = vunpack.c.l.b16 %v8137
    %v8486 = vunpack.c.h.b16 %v8137
    %v8487 = vunpack.c.l.b16 %v8138
    %v8488 = vunpack.c.h.b16 %v8138
    %v8489 = vunpack.c.l.b16 %v8139
    %v8490 = vunpack.c.h.b16 %v8139
    %v8491 = vunpack.c.l.b16 %v8140
    %v8492 = vunpack.c.h.b16 %v8140
    %v8493 = vunpack.c.l.b16 %v8141
    %v8494 = vunpack.c.h.b16 %v8141
    %v8495 = vunpack.c.l.b16 %v8142
    %v8496 = vunpack.c.h.b16 %v8142
    %v8497 = vunpack.c.l.b16 %v8143
    %v8498 = vunpack.c.h.b16 %v8143
    %v8499 = vunpack.c.l.b16 %v8144
    %v8500 = vunpack.c.h.b16 %v8144
    %v8501 = vunpack.c.l.b16 %v8145
    %v8502 = vunpack.c.h.b16 %v8145
    %v8503 = vunpack.c.l.b16 %v8146
    %v8504 = vunpack.c.h.b16 %v8146
    %v8505 = vunpack.c.l.b16 %v8147
    %v8506 = vunpack.c.h.b16 %v8147
    %v8507 = vunpack.c.l.b16 %v8148
    %v8508 = vunpack.c.h.b16 %v8148
    %v8509 = vunpack.c.l.b16 %v8149
    %v8510 = vunpack.c.h.b16 %v8149
    %v8511 = vunpack.c.l.b16 %v8150
    %v8512 = vunpack.c.h.b16 %v8150
    %v8513 = vunpack.c.l.b16 %v8151
    %v8514 = vunpack.c.h.b16 %v8151
    %v8515 = vunpack.c.l.b16 %v8152
    %v8516 = vunpack.c.h.b16 %v8152
    %v8517 = vunpack.c.l.b16 %v8153
    %v8518 = vunpack.c.h.b16 %v8153
    %v8519 = vunpack.c.l.b16 %v8154
    %v8520 = vunpack.c.h.b16 %v8154
    %v8521 = vunpack.c.l.b16 %v8155
    %v8522 = vunpack.c.h.b16 %v8155
    %v8523 = vunpack.c.l.b16 %v8156
    %v8524 = vunpack.c.h.b16 %v8156
    %v8525 = vunpack.c.l.b16 %v8157
    %v8526 = vunpack.c.h.b16 %v8157
    %v8527 = vunpack.c.l.b16 %v8158
    %v8528 = vunpack.c.h.b16 %v8158
    %v8529 = vunpack.c.l.b16 %v8159
    %v8530 = vunpack.c.h.b16 %v8159
    %v8531 = vunpack.c.l.b16 %v8160
    %v8532 = vunpack.c.h.b16 %v8160
    %v8533 = vunpack.c.l.b16 %v8161
    %v8534 = vunpack.c.h.b16 %v8161
    %v8535 = vunpack.c.l.b16 %v8162
    %v8536 = vunpack.c.h.b16 %v8162
    %v8537 = vunpack.c.l.b16 %v8163
    %v8538 = vunpack.c.h.b16 %v8163
    %v8539 = vunpack.c.l.b16 %v8164
    %v8540 = vunpack.c.h.b16 %v8164
    %v8541 = vunpack.c.l.b16 %v8165
    %v8542 = vunpack.c.h.b16 %v8165
    %v8543 = vunpack.c.l.b16 %v8166
    %v8544 = vunpack.c.h.b16 %v8166
    %v8545 = vunpack.c.l.b16 %v8167
    %v8546 = vunpack.c.h.b16 %v8167
    %v8547 = vunpack.c.l.b16 %v8168
    %v8548 = vunpack.c.h.b16 %v8168
    %v8549 = vunpack.c.l.b16 %v8169
    %v8550 = vunpack.c.h.b16 %v8169
    %v8551 = vunpack.c.l.b16 %v8170
    %v8552 = vunpack.c.h.b16 %v8170
    %v8553 = vunpack.c.l.b16 %v8171
    %v8554 = vunpack.c.h.b16 %v8171
    %v8555 = vunpack.c.l.b16 %v8172
    %v8556 = vunpack.c.h.b16 %v8172
    %v8557 = vunpack.c.l.b16 %v8173
    %v8558 = vunpack.c.h.b16 %v8173
    %v8559 = vunpack.c.l.b16 %v8174
    %v8560 = vunpack.c.h.b16 %v8174
    %v8561 = vunpack.c.l.b16 %v8175
    %v8562 = vunpack.c.h.b16 %v8175
    %v8563 = vunpack.c.l.b16 %v8176
    %v8564 = vunpack.c.h.b16 %v8176
    %v8565 = vunpack.c.l.b16 %v8177
    %v8566 = vunpack.c.h.b16 %v8177
    %v8567 = vunpack.c.l.b16 %v8178
    %v8568 = vunpack.c.h.b16 %v8178
    %v8569 = vunpack.c.l.b16 %v8179
    %v8570 = vunpack.c.h.b16 %v8179
    %v8571 = vunpack.c.l.b16 %v8180
    %v8572 = vunpack.c.h.b16 %v8180
    %v8573 = vunpack.c.l.b16 %v8181
    %v8574 = vunpack.c.h.b16 %v8181
    %v8575 = vunpack.c.l.b16 %v8182
    %v8576 = vunpack.c.h.b16 %v8182
    %v8577 = vunpack.c.l.b16 %v8183
    %v8578 = vunpack.c.h.b16 %v8183
    %v8579 = vunpack.c.l.b16 %v8184
    %v8580 = vunpack.c.h.b16 %v8184
    %v8581 = vunpack.c.l.b16 %v8185
    %v8582 = vunpack.c.h.b16 %v8185
    %v8583 = vunpack.c.l.b16 %v8186
    %v8584 = vunpack.c.h.b16 %v8186
    %v8585 = vunpack.c.l.b16 %v8187
    %v8586 = vunpack.c.h.b16 %v8187
    %v8587 = vunpack.c.l.b16 %v8188
    %v8588 = vunpack.c.h.b16 %v8188
    %v8589 = vunpack.c.l.b16 %v8189
    %v8590 = vunpack.c.h.b16 %v8189
    %v8591 = vunpack.c.l.b16 %v8190
    %v8592 = vunpack.c.h.b16 %v8190
    %v8593 = vunpack.c.l.b16 %v8191
    %v8594 = vunpack.c.h.b16 %v8191
    %v8595 = vunpack.c.l.b16 %v8192
    %v8596 = vunpack.c.h.b16 %v8192
    %v8597 = vunpack.c.l.b16 %v8193
    %v8598 = vunpack.c.h.b16 %v8193
    %v8599 = vunpack.c.l.b16 %v8194
    %v8600 = vunpack.c.h.b16 %v8194
    %v8601 = vunpack.c.l.b16 %v8195
    %v8602 = vunpack.c.h.b16 %v8195
    %v8603 = vunpack.c.l.b16 %v8196
    %v8604 = vunpack.c.h.b16 %v8196
    %v8605 = vunpack.c.l.b16 %v8197
    %v8606 = vunpack.c.h.b16 %v8197
    %v8607 = vunpack.c.l.b16 %v8198
    %v8608 = vunpack.c.h.b16 %v8198
    %v8609 = vunpack.c.l.b16 %v8199
    %v8610 = vunpack.c.h.b16 %v8199
    %v8611 = vpack.c.b16 %v8359, %v8355
    %v8612 = vpack.c.b16 %v8360, %v8356
    %v8613 = vpack.c.b16 %v8361, %v8357
    %v8614 = vpack.c.b16 %v8362, %v8358
    %v8615 = vpack.c.b16 %v8367, %v8363
    %v8616 = vpack.c.b16 %v8368, %v8364
    %v8617 = vpack.c.b16 %v8369, %v8365
    %v8618 = vpack.c.b16 %v8370, %v8366
    %v8619 = vpack.c.b16 %v8375, %v8371
    %v8620 = vpack.c.b16 %v8376, %v8372
    %v8621 = vpack.c.b16 %v8377, %v8373
    %v8622 = vpack.c.b16 %v8378, %v8374
    %v8623 = vpack.c.b16 %v8383, %v8379
    %v8624 = vpack.c.b16 %v8384, %v8380
    %v8625 = vpack.c.b16 %v8385, %v8381
    %v8626 = vpack.c.b16 %v8386, %v8382
    %v8627 = vpack.c.b16 %v8391, %v8387
    %v8628 = vpack.c.b16 %v8392, %v8388
    %v8629 = vpack.c.b16 %v8393, %v8389
    %v8630 = vpack.c.b16 %v8394, %v8390
    %v8631 = vpack.c.b16 %v8399, %v8395
    %v8632 = vpack.c.b16 %v8400, %v8396
    %v8633 = vpack.c.b16 %v8401, %v8397
    %v8634 = vpack.c.b16 %v8402, %v8398
    %v8635 = vpack.c.b16 %v8407, %v8403
    %v8636 = vpack.c.b16 %v8408, %v8404
    %v8637 = vpack.c.b16 %v8409, %v8405
    %v8638 = vpack.c.b16 %v8410, %v8406
    %v8639 = vpack.c.b16 %v8415, %v8411
    %v8640 = vpack.c.b16 %v8416, %v8412
    %v8641 = vpack.c.b16 %v8417, %v8413
    %v8642 = vpack.c.b16 %v8418, %v8414
    %v8643 = vpack.c.b16 %v8423, %v8419
    %v8644 = vpack.c.b16 %v8424, %v8420
    %v8645 = vpack.c.b16 %v8425, %v8421
    %v8646 = vpack.c.b16 %v8426, %v8422
    %v8647 = vpack.c.b16 %v8431, %v8427
    %v8648 = vpack.c.b16 %v8432, %v8428
    %v8649 = vpack.c.b16 %v8433, %v8429
    %v8650 = vpack.c.b16 %v8434, %v8430
    %v8651 = vpack.c.b16 %v8439, %v8435
    %v8652 = vpack.c.b16 %v8440, %v8436
    %v8653 = vpack.c.b16 %v8441, %v8437
    %v8654 = vpack.c.b16 %v8442, %v8438
    %v8655 = vpack.c.b16 %v8447, %v8443
    %v8656 = vpack.c.b16 %v8448, %v8444
    %v8657 = vpack.c.b16 %v8449, %v8445
    %v8658 = vpack.c.b16 %v8450, %v8446
    %v8659 = vpack.c.b16 %v8455, %v8451
    %v8660 = vpack.c.b16 %v8456, %v8452
    %v8661 = vpack.c.b16 %v8457, %v8453
    %v8662 = vpack.c.b16 %v8458, %v8454
    %v8663 = vpack.c.b16 %v8463, %v8459
    %v8664 = vpack.c.b16 %v8464, %v8460
    %v8665 = vpack.c.b16 %v8465, %v8461
    %v8666 = vpack.c.b16 %v8466, %v8462
    %v8667 = vpack.c.b16 %v8471, %v8467
    %v8668 = vpack.c.b16 %v8472, %v8468
    %v8669 = vpack.c.b16 %v8473, %v8469
    %v8670 = vpack.c.b16 %v8474, %v8470
    %v8671 = vpack.c.b16 %v8479, %v8475
    %v8672 = vpack.c.b16 %v8480, %v8476
    %v8673 = vpack.c.b16 %v8481, %v8477
    %v8674 = vpack.c.b16 %v8482, %v8478
    %v8675 = vpack.c.b16 %v8487, %v8483
    %v8676 = vpack.c.b16 %v8488, %v8484
    %v8677 = vpack.c.b16 %v8489, %v8485
    %v8678 = vpack.c.b16 %v8490, %v8486
    %v8679 = vpack.c.b16 %v8495, %v8491
    %v8680 = vpack.c.b16 %v8496, %v8492
    %v8681 = vpack.c.b16 %v8497, %v8493
    %v8682 = vpack.c.b16 %v8498, %v8494
    %v8683 = vpack.c.b16 %v8503, %v8499
    %v8684 = vpack.c.b16 %v8504, %v8500
    %v8685 = vpack.c.b16 %v8505, %v8501
    %v8686 = vpack.c.b16 %v8506, %v8502
    %v8687 = vpack.c.b16 %v8511, %v8507
    %v8688 = vpack.c.b16 %v8512, %v8508
    %v8689 = vpack.c.b16 %v8513, %v8509
    %v8690 = vpack.c.b16 %v8514, %v8510
    %v8691 = vpack.c.b16 %v8519, %v8515
    %v8692 = vpack.c.b16 %v8520, %v8516
    %v8693 = vpack.c.b16 %v8521, %v8517
    %v8694 = vpack.c.b16 %v8522, %v8518
    %v8695 = vpack.c.b16 %v8527, %v8523
    %v8696 = vpack.c.b16 %v8528, %v8524
    %v8697 = vpack.c.b16 %v8529, %v8525
    %v8698 = vpack.c.b16 %v8530, %v8526
    %v8699 = vpack.c.b16 %v8535, %v8531
    %v8700 = vpack.c.b16 %v8536, %v8532
    %v8701 = vpack.c.b16 %v8537, %v8533
    %v8702 = vpack.c.b16 %v8538, %v8534
    %v8703 = vpack.c.b16 %v8543, %v8539
    %v8704 = vpack.c.b16 %v8544, %v8540
    %v8705 = vpack.c.b16 %v8545, %v8541
    %v8706 = vpack.c.b16 %v8546, %v8542
    %v8707 = vpack.c.b16 %v8551, %v8547
    %v8708 = vpack.c.b16 %v8552, %v8548
    %v8709 = vpack.c.b16 %v8553, %v8549
    %v8710 = vpack.c.b16 %v8554, %v8550
    %v8711 = vpack.c.b16 %v8559, %v8555
    %v8712 = vpack.c.b16 %v8560, %v8556
    %v8713 = vpack.c.b16 %v8561, %v8557
    %v8714 = vpack.c.b16 %v8562, %v8558
    %v8715 = vpack.c.b16 %v8567, %v8563
    %v8716 = vpack.c.b16 %v8568, %v8564
    %v8717 = vpack.c.b16 %v8569, %v8565
    %v8718 = vpack.c.b16 %v8570, %v8566
    %v8719 = vpack.c.b16 %v8575, %v8571
    %v8720 = vpack.c.b16 %v8576, %v8572
    %v8721 = vpack.c.b16 %v8577, %v8573
    %v8722 = vpack.c.b16 %v8578, %v8574
    %v8723 = vpack.c.b16 %v8583, %v8579
    %v8724 = vpack.c.b16 %v8584, %v8580
    %v8725 = vpack.c.b16 %v8585, %v8581
    %v8726 = vpack.c.b16 %v8586, %v8582
    %v8727 = vpack.c.b16 %v8591, %v8587
    %v8728 = vpack.c.b16 %v8592, %v8588
    %v8729 = vpack.c.b16 %v8593, %v8589
    %v8730 = vpack.c.b16 %v8594, %v8590
    %v8731 = vpack.c.b16 %v8599, %v8595
    %v8732 = vpack.c.b16 %v8600, %v8596
    %v8733 = vpack.c.b16 %v8601, %v8597
    %v8734 = vpack.c.b16 %v8602, %v8598
    %v8735 = vpack.c.b16 %v8607, %v8603
    %v8736 = vpack.c.b16 %v8608, %v8604
    %v8737 = vpack.c.b16 %v8609, %v8605
    %v8738 = vpack.c.b16 %v8610, %v8606
    %8867 = vmatprep.subr.bf16.mxu0 %v8640
    %8868 = vmatpush1.bf16.msra.mxu0 %v8639
    %8869 = vmatprep.subr.bf16.mxu0 %v8636
    %8870 = vmatpush1.bf16.msra.mxu0 %v8635
    %8871 = vmatprep.subr.bf16.mxu0 %v8632
    %8872 = vmatpush1.bf16.msra.mxu0 %v8631
    %8873 = vmatprep.subr.bf16.mxu0 %v8628
    %8874 = vmatpush1.bf16.msra.mxu0 %v8627
    %8875 = vmatprep.subr.bf16.mxu0 %v8624
    %8876 = vmatpush1.bf16.msra.mxu0 %v8623
    %8877 = vmatprep.subr.bf16.mxu0 %v8620
    %8878 = vmatpush1.bf16.msra.mxu0 %v8619
    %8879 = vmatprep.subr.bf16.mxu0 %v8616
    %8880 = vmatpush1.bf16.msra.mxu0 %v8615
    %8881 = vmatprep.subr.bf16.mxu0 %v8612
    %8882 = vmatpush1.bf16.msra.mxu0 %v8611
    %8883 = vmatprep.subr.bf16.mxu0 %v8672
    %8884 = vmatpush2.bf16.msra.mxu0 %v8671
    %8885 = vmatprep.subr.bf16.mxu0 %v8668
    %8886 = vmatpush2.bf16.msra.mxu0 %v8667
    %8887 = vmatprep.subr.bf16.mxu0 %v8664
    %8888 = vmatpush2.bf16.msra.mxu0 %v8663
    %8889 = vmatprep.subr.bf16.mxu0 %v8660
    %8890 = vmatpush2.bf16.msra.mxu0 %v8659
    %8891 = vmatprep.subr.bf16.mxu0 %v8656
    %8892 = vmatpush2.bf16.msra.mxu0 %v8655
    %8893 = vmatprep.subr.bf16.mxu0 %v8652
    %8894 = vmatpush2.bf16.msra.mxu0 %v8651
    %8895 = vmatprep.subr.bf16.mxu0 %v8648
    %8896 = vmatpush2.bf16.msra.mxu0 %v8647
    %8897 = vmatprep.subr.bf16.mxu0 %v8644
    %8898 = vmatpush2.bf16.msra.mxu0 %v8643
    %8899 = vmatprep.mubr.bf16.mxu0 %v8203
    %8900 = vmatmul.mubr.bf16.gmra.mxu0 %v8202
    %v8901 = vpop.f32.mrf.mxu0
    %v8902 = vadd.f32 %v8210, %v8901
    %v8903 = vpop.f32.mrf.mxu0
    %v8904 = vadd.f32 %v8214, %v8903
    %v8905 = vpop.f32.mrf.mxu0
    %v8906 = vadd.f32 %v8210, %v8905
    %v8907 = vpop.f32.mrf.mxu0
    %v8908 = vadd.f32 %v8214, %v8907
    %8909 = vdwg.mxu0
    %8910 = vmatprep.subr.bf16.mxu0 %v8704
    %8911 = vmatpush1.bf16.msra.mxu0 %v8703
    %8912 = vmatprep.subr.bf16.mxu0 %v8700
    %8913 = vmatpush1.bf16.msra.mxu0 %v8699
    %8914 = vmatprep.subr.bf16.mxu0 %v8696
    %8915 = vmatpush1.bf16.msra.mxu0 %v8695
    %8916 = vmatprep.subr.bf16.mxu0 %v8692
    %8917 = vmatpush1.bf16.msra.mxu0 %v8691
    %8918 = vmatprep.subr.bf16.mxu0 %v8688
    %8919 = vmatpush1.bf16.msra.mxu0 %v8687
    %8920 = vmatprep.subr.bf16.mxu0 %v8684
    %8921 = vmatpush1.bf16.msra.mxu0 %v8683
    %8922 = vmatprep.subr.bf16.mxu0 %v8680
    %8923 = vmatpush1.bf16.msra.mxu0 %v8679
    %8924 = vmatprep.subr.bf16.mxu0 %v8676
    %8925 = vmatpush1.bf16.msra.mxu0 %v8675
    %8926 = vmatprep.subr.bf16.mxu0 %v8736
    %8927 = vmatpush2.bf16.msra.mxu0 %v8735
    %8928 = vmatprep.subr.bf16.mxu0 %v8732
    %8929 = vmatpush2.bf16.msra.mxu0 %v8731
    %8930 = vmatprep.subr.bf16.mxu0 %v8728
    %8931 = vmatpush2.bf16.msra.mxu0 %v8727
    %8932 = vmatprep.subr.bf16.mxu0 %v8724
    %8933 = vmatpush2.bf16.msra.mxu0 %v8723
    %8934 = vmatprep.subr.bf16.mxu0 %v8720
    %8935 = vmatpush2.bf16.msra.mxu0 %v8719
    %8936 = vmatprep.subr.bf16.mxu0 %v8716
    %8937 = vmatpush2.bf16.msra.mxu0 %v8715
    %8938 = vmatprep.subr.bf16.mxu0 %v8712
    %8939 = vmatpush2.bf16.msra.mxu0 %v8711
    %8940 = vmatprep.subr.bf16.mxu0 %v8708
    %8941 = vmatpush2.bf16.msra.mxu0 %v8707
    %8942 = vmatprep.mubr.bf16.mxu0 %v8205
    %8943 = vmatmul.mubr.bf16.gmra.mxu0 %v8204
    %v8944 = vpop.f32.mrf.mxu0
    %v8945 = vadd.f32 %v8902, %v8944
    %v8946 = vpop.f32.mrf.mxu0
    %v8947 = vadd.f32 %v8904, %v8946
    %v8948 = vpop.f32.mrf.mxu0
    %v8949 = vadd.f32 %v8906, %v8948
    %v8950 = vpop.f32.mrf.mxu0
    %v8951 = vadd.f32 %v8908, %v8950
    %8952 = vdwg.mxu0
    %8953 = vmatprep.subr.bf16.mxu0 %v8642
    %8954 = vmatpush1.bf16.msra.mxu0 %v8641
    %8955 = vmatprep.subr.bf16.mxu0 %v8638
    %8956 = vmatpush1.bf16.msra.mxu0 %v8637
    %8957 = vmatprep.subr.bf16.mxu0 %v8634
    %8958 = vmatpush1.bf16.msra.mxu0 %v8633
    %8959 = vmatprep.subr.bf16.mxu0 %v8630
    %8960 = vmatpush1.bf16.msra.mxu0 %v8629
    %8961 = vmatprep.subr.bf16.mxu0 %v8626
    %8962 = vmatpush1.bf16.msra.mxu0 %v8625
    %8963 = vmatprep.subr.bf16.mxu0 %v8622
    %8964 = vmatpush1.bf16.msra.mxu0 %v8621
    %8965 = vmatprep.subr.bf16.mxu0 %v8618
    %8966 = vmatpush1.bf16.msra.mxu0 %v8617
    %8967 = vmatprep.subr.bf16.mxu0 %v8614
    %8968 = vmatpush1.bf16.msra.mxu0 %v8613
    %8969 = vmatprep.subr.bf16.mxu0 %v8674
    %8970 = vmatpush2.bf16.msra.mxu0 %v8673
    %8971 = vmatprep.subr.bf16.mxu0 %v8670
    %8972 = vmatpush2.bf16.msra.mxu0 %v8669
    %8973 = vmatprep.subr.bf16.mxu0 %v8666
    %8974 = vmatpush2.bf16.msra.mxu0 %v8665
    %8975 = vmatprep.subr.bf16.mxu0 %v8662
    %8976 = vmatpush2.bf16.msra.mxu0 %v8661
    %8977 = vmatprep.subr.bf16.mxu0 %v8658
    %8978 = vmatpush2.bf16.msra.mxu0 %v8657
    %8979 = vmatprep.subr.bf16.mxu0 %v8654
    %8980 = vmatpush2.bf16.msra.mxu0 %v8653
    %8981 = vmatprep.subr.bf16.mxu0 %v8650
    %8982 = vmatpush2.bf16.msra.mxu0 %v8649
    %8983 = vmatprep.subr.bf16.mxu0 %v8646
    %8984 = vmatpush2.bf16.msra.mxu0 %v8645
    %8985 = vmatprep.mubr.bf16.mxu0 %v8203
    %8986 = vmatmul.mubr.bf16.gmra.mxu0 %v8202
    %v8987 = vpop.f32.mrf.mxu0
    %v8988 = vadd.f32 %v8218, %v8987
    %v8989 = vpop.f32.mrf.mxu0
    %v8990 = vadd.f32 %v8222, %v8989
    %v8991 = vpop.f32.mrf.mxu0
    %v8992 = vadd.f32 %v8218, %v8991
    %v8993 = vpop.f32.mrf.mxu0
    %v8994 = vadd.f32 %v8222, %v8993
    %8995 = vdwg.mxu0
    %8996 = vmatprep.subr.bf16.mxu0 %v8706
    %8997 = vmatpush1.bf16.msra.mxu0 %v8705
    %8998 = vmatprep.subr.bf16.mxu0 %v8702
    %8999 = vmatpush1.bf16.msra.mxu0 %v8701
    %9000 = vmatprep.subr.bf16.mxu0 %v8698
    %9001 = vmatpush1.bf16.msra.mxu0 %v8697
    %9002 = vmatprep.subr.bf16.mxu0 %v8694
    %9003 = vmatpush1.bf16.msra.mxu0 %v8693
    %9004 = vmatprep.subr.bf16.mxu0 %v8690
    %9005 = vmatpush1.bf16.msra.mxu0 %v8689
    %9006 = vmatprep.subr.bf16.mxu0 %v8686
    %9007 = vmatpush1.bf16.msra.mxu0 %v8685
    %9008 = vmatprep.subr.bf16.mxu0 %v8682
    %9009 = vmatpush1.bf16.msra.mxu0 %v8681
    %9010 = vmatprep.subr.bf16.mxu0 %v8678
    %9011 = vmatpush1.bf16.msra.mxu0 %v8677
    %9012 = vmatprep.subr.bf16.mxu0 %v8738
    %9013 = vmatpush2.bf16.msra.mxu0 %v8737
    %9014 = vmatprep.subr.bf16.mxu0 %v8734
    %9015 = vmatpush2.bf16.msra.mxu0 %v8733
    %9016 = vmatprep.subr.bf16.mxu0 %v8730
    %9017 = vmatpush2.bf16.msra.mxu0 %v8729
    %9018 = vmatprep.subr.bf16.mxu0 %v8726
    %9019 = vmatpush2.bf16.msra.mxu0 %v8725
    %9020 = vmatprep.subr.bf16.mxu0 %v8722
    %9021 = vmatpush2.bf16.msra.mxu0 %v8721
    %9022 = vmatprep.subr.bf16.mxu0 %v8718
    %9023 = vmatpush2.bf16.msra.mxu0 %v8717
    %9024 = vmatprep.subr.bf16.mxu0 %v8714
    %9025 = vmatpush2.bf16.msra.mxu0 %v8713
    %9026 = vmatprep.subr.bf16.mxu0 %v8710
    %9027 = vmatpush2.bf16.msra.mxu0 %v8709
    %9028 = vmatprep.mubr.bf16.mxu0 %v8205
    %9029 = vmatmul.mubr.bf16.gmra.mxu0 %v8204
    %v9030 = vpop.f32.mrf.mxu0
    %v9031 = vadd.f32 %v8988, %v9030
    %v9032 = vpop.f32.mrf.mxu0
    %v9033 = vadd.f32 %v8990, %v9032
    %v9034 = vpop.f32.mrf.mxu0
    %v9035 = vadd.f32 %v8992, %v9034
    %v9036 = vpop.f32.mrf.mxu0
    %v9037 = vadd.f32 %v8994, %v9036
    %9038 = vdwg.mxu0
    %vm9039 = vcmp.ge.f32.partialorder %v8945, 0.0
    %vm9040 = vcmp.ge.f32.partialorder %v8947, 0.0
    %vm9041 = vcmp.ge.f32.partialorder %v9031, 0.0
    %vm9042 = vcmp.ge.f32.partialorder %v9033, 0.0
    %vm9043 = vcmp.ge.f32.partialorder %v8949, 0.0
    %vm9044 = vcmp.ge.f32.partialorder %v8951, 0.0
    %vm9045 = vcmp.ge.f32.partialorder %v9035, 0.0
    %vm9046 = vcmp.ge.f32.partialorder %v9037, 0.0
    %v9047 = vmul.f32 %v8945, 0.01
    %v9048 = vmul.f32 %v8947, 0.01
    %v9049 = vmul.f32 %v9031, 0.01
    %v9050 = vmul.f32 %v9033, 0.01
    %v9051 = vmul.f32 %v8949, 0.01
    %v9052 = vmul.f32 %v8951, 0.01
    %v9053 = vmul.f32 %v9035, 0.01
    %v9054 = vmul.f32 %v9037, 0.01
    %v9055 = vsel %vm9039, %v8945, %v9047
    %v9056 = vsel %vm9040, %v8947, %v9048
    %v9057 = vsel %vm9041, %v9031, %v9049
    %v9058 = vsel %vm9042, %v9033, %v9050
    %v9059 = vsel %vm9043, %v8949, %v9051
    %v9060 = vsel %vm9044, %v8951, %v9052
    %v9061 = vsel %vm9045, %v9035, %v9053
    %v9062 = vsel %vm9046, %v9037, %v9054
    %v9063 = vadd.f32 %v9055, %v8063
    %v9064 = vadd.f32 %v9056, %v8064
    %v9065 = vadd.f32 %v9057, %v8065
    %v9066 = vadd.f32 %v9058, %v8066
    %v9067 = vadd.f32 %v9059, %v8067
    %v9068 = vadd.f32 %v9060, %v8068
    %v9069 = vadd.f32 %v9061, %v8069
    %v9070 = vadd.f32 %v9062, %v8070
    %s9071 = scalar_lea.vmem [#allocation11], 7168
    %v9072 = vld [vmem:[%s9071] sm:$0xff]
    %v9073 = vld [vmem:[%s9071 + $0x8] sm:$0xff]
    %v9074 = vld [vmem:[%s9071 + $0x10] sm:$0xff]
    %v9075 = vld [vmem:[%s9071 + $0x18] sm:$0xff]
    %v9076 = vld [vmem:[%s9071 + $0x20] sm:$0xff]
    %v9077 = vld [vmem:[%s9071 + $0x28] sm:$0xff]
    %v9078 = vld [vmem:[%s9071 + $0x30] sm:$0xff]
    %v9079 = vld [vmem:[%s9071 + $0x38] sm:$0xff]
    %v9080 = vld [vmem:[%s9071 + $0x40] sm:$0xff]
    %v9081 = vld [vmem:[%s9071 + $0x48] sm:$0xff]
    %v9082 = vld [vmem:[%s9071 + $0x50] sm:$0xff]
    %v9083 = vld [vmem:[%s9071 + $0x58] sm:$0xff]
    %v9084 = vld [vmem:[%s9071 + $0x60] sm:$0xff]
    %v9085 = vld [vmem:[%s9071 + $0x68] sm:$0xff]
    %v9086 = vld [vmem:[%s9071 + $0x70] sm:$0xff]
    %v9087 = vld [vmem:[%s9071 + $0x78] sm:$0xff]
    %v9088 = vld [vmem:[%s9071 + $0x80] sm:$0xff]
    %v9089 = vld [vmem:[%s9071 + $0x88] sm:$0xff]
    %v9090 = vld [vmem:[%s9071 + $0x90] sm:$0xff]
    %v9091 = vld [vmem:[%s9071 + $0x98] sm:$0xff]
    %v9092 = vld [vmem:[%s9071 + $0xa0] sm:$0xff]
    %v9093 = vld [vmem:[%s9071 + $0xa8] sm:$0xff]
    %v9094 = vld [vmem:[%s9071 + $0xb0] sm:$0xff]
    %v9095 = vld [vmem:[%s9071 + $0xb8] sm:$0xff]
    %v9096 = vld [vmem:[%s9071 + $0xc0] sm:$0xff]
    %v9097 = vld [vmem:[%s9071 + $0xc8] sm:$0xff]
    %v9098 = vld [vmem:[%s9071 + $0xd0] sm:$0xff]
    %v9099 = vld [vmem:[%s9071 + $0xd8] sm:$0xff]
    %v9100 = vld [vmem:[%s9071 + $0xe0] sm:$0xff]
    %v9101 = vld [vmem:[%s9071 + $0xe8] sm:$0xff]
    %v9102 = vld [vmem:[%s9071 + $0xf0] sm:$0xff]
    %v9103 = vld [vmem:[%s9071 + $0xf8] sm:$0xff]
    %v9104 = vld [vmem:[%s9071 + $0x100] sm:$0xff]
    %v9105 = vld [vmem:[%s9071 + $0x108] sm:$0xff]
    %v9106 = vld [vmem:[%s9071 + $0x110] sm:$0xff]
    %v9107 = vld [vmem:[%s9071 + $0x118] sm:$0xff]
    %v9108 = vld [vmem:[%s9071 + $0x120] sm:$0xff]
    %v9109 = vld [vmem:[%s9071 + $0x128] sm:$0xff]
    %v9110 = vld [vmem:[%s9071 + $0x130] sm:$0xff]
    %v9111 = vld [vmem:[%s9071 + $0x138] sm:$0xff]
    %v9112 = vld [vmem:[%s9071 + $0x140] sm:$0xff]
    %v9113 = vld [vmem:[%s9071 + $0x148] sm:$0xff]
    %v9114 = vld [vmem:[%s9071 + $0x150] sm:$0xff]
    %v9115 = vld [vmem:[%s9071 + $0x158] sm:$0xff]
    %v9116 = vld [vmem:[%s9071 + $0x160] sm:$0xff]
    %v9117 = vld [vmem:[%s9071 + $0x168] sm:$0xff]
    %v9118 = vld [vmem:[%s9071 + $0x170] sm:$0xff]
    %v9119 = vld [vmem:[%s9071 + $0x178] sm:$0xff]
    %v9120 = vld [vmem:[%s9071 + $0x180] sm:$0xff]
    %v9121 = vld [vmem:[%s9071 + $0x188] sm:$0xff]
    %v9122 = vld [vmem:[%s9071 + $0x190] sm:$0xff]
    %v9123 = vld [vmem:[%s9071 + $0x198] sm:$0xff]
    %v9124 = vld [vmem:[%s9071 + $0x1a0] sm:$0xff]
    %v9125 = vld [vmem:[%s9071 + $0x1a8] sm:$0xff]
    %v9126 = vld [vmem:[%s9071 + $0x1b0] sm:$0xff]
    %v9127 = vld [vmem:[%s9071 + $0x1b8] sm:$0xff]
    %v9128 = vld [vmem:[%s9071 + $0x1c0] sm:$0xff]
    %v9129 = vld [vmem:[%s9071 + $0x1c8] sm:$0xff]
    %v9130 = vld [vmem:[%s9071 + $0x1d0] sm:$0xff]
    %v9131 = vld [vmem:[%s9071 + $0x1d8] sm:$0xff]
    %v9132 = vld [vmem:[%s9071 + $0x1e0] sm:$0xff]
    %v9133 = vld [vmem:[%s9071 + $0x1e8] sm:$0xff]
    %v9134 = vld [vmem:[%s9071 + $0x1f0] sm:$0xff]
    %v9135 = vld [vmem:[%s9071 + $0x1f8] sm:$0xff]
    %v9136 = vld [vmem:[%s9071 + $0x200] sm:$0xff]
    %v9137 = vld [vmem:[%s9071 + $0x208] sm:$0xff]
    %v9138 = vld [vmem:[%s9071 + $0x210] sm:$0xff]
    %v9139 = vld [vmem:[%s9071 + $0x218] sm:$0xff]
    %v9140 = vld [vmem:[%s9071 + $0x220] sm:$0xff]
    %v9141 = vld [vmem:[%s9071 + $0x228] sm:$0xff]
    %v9142 = vld [vmem:[%s9071 + $0x230] sm:$0xff]
    %v9143 = vld [vmem:[%s9071 + $0x238] sm:$0xff]
    %v9144 = vld [vmem:[%s9071 + $0x240] sm:$0xff]
    %v9145 = vld [vmem:[%s9071 + $0x248] sm:$0xff]
    %v9146 = vld [vmem:[%s9071 + $0x250] sm:$0xff]
    %v9147 = vld [vmem:[%s9071 + $0x258] sm:$0xff]
    %v9148 = vld [vmem:[%s9071 + $0x260] sm:$0xff]
    %v9149 = vld [vmem:[%s9071 + $0x268] sm:$0xff]
    %v9150 = vld [vmem:[%s9071 + $0x270] sm:$0xff]
    %v9151 = vld [vmem:[%s9071 + $0x278] sm:$0xff]
    %v9152 = vld [vmem:[%s9071 + $0x280] sm:$0xff]
    %v9153 = vld [vmem:[%s9071 + $0x288] sm:$0xff]
    %v9154 = vld [vmem:[%s9071 + $0x290] sm:$0xff]
    %v9155 = vld [vmem:[%s9071 + $0x298] sm:$0xff]
    %v9156 = vld [vmem:[%s9071 + $0x2a0] sm:$0xff]
    %v9157 = vld [vmem:[%s9071 + $0x2a8] sm:$0xff]
    %v9158 = vld [vmem:[%s9071 + $0x2b0] sm:$0xff]
    %v9159 = vld [vmem:[%s9071 + $0x2b8] sm:$0xff]
    %v9160 = vld [vmem:[%s9071 + $0x2c0] sm:$0xff]
    %v9161 = vld [vmem:[%s9071 + $0x2c8] sm:$0xff]
    %v9162 = vld [vmem:[%s9071 + $0x2d0] sm:$0xff]
    %v9163 = vld [vmem:[%s9071 + $0x2d8] sm:$0xff]
    %v9164 = vld [vmem:[%s9071 + $0x2e0] sm:$0xff]
    %v9165 = vld [vmem:[%s9071 + $0x2e8] sm:$0xff]
    %v9166 = vld [vmem:[%s9071 + $0x2f0] sm:$0xff]
    %v9167 = vld [vmem:[%s9071 + $0x2f8] sm:$0xff]
    %v9168 = vld [vmem:[%s9071 + $0x300] sm:$0xff]
    %v9169 = vld [vmem:[%s9071 + $0x308] sm:$0xff]
    %v9170 = vld [vmem:[%s9071 + $0x310] sm:$0xff]
    %v9171 = vld [vmem:[%s9071 + $0x318] sm:$0xff]
    %v9172 = vld [vmem:[%s9071 + $0x320] sm:$0xff]
    %v9173 = vld [vmem:[%s9071 + $0x328] sm:$0xff]
    %v9174 = vld [vmem:[%s9071 + $0x330] sm:$0xff]
    %v9175 = vld [vmem:[%s9071 + $0x338] sm:$0xff]
    %v9176 = vld [vmem:[%s9071 + $0x340] sm:$0xff]
    %v9177 = vld [vmem:[%s9071 + $0x348] sm:$0xff]
    %v9178 = vld [vmem:[%s9071 + $0x350] sm:$0xff]
    %v9179 = vld [vmem:[%s9071 + $0x358] sm:$0xff]
    %v9180 = vld [vmem:[%s9071 + $0x360] sm:$0xff]
    %v9181 = vld [vmem:[%s9071 + $0x368] sm:$0xff]
    %v9182 = vld [vmem:[%s9071 + $0x370] sm:$0xff]
    %v9183 = vld [vmem:[%s9071 + $0x378] sm:$0xff]
    %v9184 = vld [vmem:[%s9071 + $0x380] sm:$0xff]
    %v9185 = vld [vmem:[%s9071 + $0x388] sm:$0xff]
    %v9186 = vld [vmem:[%s9071 + $0x390] sm:$0xff]
    %v9187 = vld [vmem:[%s9071 + $0x398] sm:$0xff]
    %v9188 = vld [vmem:[%s9071 + $0x3a0] sm:$0xff]
    %v9189 = vld [vmem:[%s9071 + $0x3a8] sm:$0xff]
    %v9190 = vld [vmem:[%s9071 + $0x3b0] sm:$0xff]
    %v9191 = vld [vmem:[%s9071 + $0x3b8] sm:$0xff]
    %v9192 = vld [vmem:[%s9071 + $0x3c0] sm:$0xff]
    %v9193 = vld [vmem:[%s9071 + $0x3c8] sm:$0xff]
    %v9194 = vld [vmem:[%s9071 + $0x3d0] sm:$0xff]
    %v9195 = vld [vmem:[%s9071 + $0x3d8] sm:$0xff]
    %v9196 = vld [vmem:[%s9071 + $0x3e0] sm:$0xff]
    %v9197 = vld [vmem:[%s9071 + $0x3e8] sm:$0xff]
    %v9198 = vld [vmem:[%s9071 + $0x3f0] sm:$0xff]
    %v9199 = vld [vmem:[%s9071 + $0x3f8] sm:$0xff]
    %s9200 = scalar_lea.vmem [#allocation13], 33
    %v9201 = vld [vmem:[%s9200] ss:$8 sm:$0xf]
    %v9202 = vpack.c.bf16 %v9067, %v9063
    %v9203 = vpack.c.bf16 %v9068, %v9064
    %v9204 = vpack.c.bf16 %v9069, %v9065
    %v9205 = vpack.c.bf16 %v9070, %v9066
    %v9207 = vlaneseq
    %v9208 = vshrl.u32 %v9207, 7
    %v9209 = vsub.s32 0, %v9208
    %v9210 = vrot.slane %v9201, %v9209
    %v9211 = vlaneseq
    %v9212 = vshrl.u32 %v9211, 7
    %v9213 = vsub.s32 1, %v9212
    %v9214 = vrot.slane %v9201, %v9213
    %v9215 = vlaneseq
    %v9216 = vshrl.u32 %v9215, 7
    %v9217 = vsub.s32 2, %v9216
    %v9218 = vrot.slane %v9201, %v9217
    %v9219 = vlaneseq
    %v9220 = vshrl.u32 %v9219, 7
    %v9221 = vsub.s32 3, %v9220
    %v9222 = vrot.slane %v9201, %v9221
    %v9355 = vunpack.c.l.b16 %v9072
    %v9356 = vunpack.c.h.b16 %v9072
    %v9357 = vunpack.c.l.b16 %v9073
    %v9358 = vunpack.c.h.b16 %v9073
    %v9359 = vunpack.c.l.b16 %v9074
    %v9360 = vunpack.c.h.b16 %v9074
    %v9361 = vunpack.c.l.b16 %v9075
    %v9362 = vunpack.c.h.b16 %v9075
    %v9363 = vunpack.c.l.b16 %v9076
    %v9364 = vunpack.c.h.b16 %v9076
    %v9365 = vunpack.c.l.b16 %v9077
    %v9366 = vunpack.c.h.b16 %v9077
    %v9367 = vunpack.c.l.b16 %v9078
    %v9368 = vunpack.c.h.b16 %v9078
    %v9369 = vunpack.c.l.b16 %v9079
    %v9370 = vunpack.c.h.b16 %v9079
    %v9371 = vunpack.c.l.b16 %v9080
    %v9372 = vunpack.c.h.b16 %v9080
    %v9373 = vunpack.c.l.b16 %v9081
    %v9374 = vunpack.c.h.b16 %v9081
    %v9375 = vunpack.c.l.b16 %v9082
    %v9376 = vunpack.c.h.b16 %v9082
    %v9377 = vunpack.c.l.b16 %v9083
    %v9378 = vunpack.c.h.b16 %v9083
    %v9379 = vunpack.c.l.b16 %v9084
    %v9380 = vunpack.c.h.b16 %v9084
    %v9381 = vunpack.c.l.b16 %v9085
    %v9382 = vunpack.c.h.b16 %v9085
    %v9383 = vunpack.c.l.b16 %v9086
    %v9384 = vunpack.c.h.b16 %v9086
    %v9385 = vunpack.c.l.b16 %v9087
    %v9386 = vunpack.c.h.b16 %v9087
    %v9387 = vunpack.c.l.b16 %v9088
    %v9388 = vunpack.c.h.b16 %v9088
    %v9389 = vunpack.c.l.b16 %v9089
    %v9390 = vunpack.c.h.b16 %v9089
    %v9391 = vunpack.c.l.b16 %v9090
    %v9392 = vunpack.c.h.b16 %v9090
    %v9393 = vunpack.c.l.b16 %v9091
    %v9394 = vunpack.c.h.b16 %v9091
    %v9395 = vunpack.c.l.b16 %v9092
    %v9396 = vunpack.c.h.b16 %v9092
    %v9397 = vunpack.c.l.b16 %v9093
    %v9398 = vunpack.c.h.b16 %v9093
    %v9399 = vunpack.c.l.b16 %v9094
    %v9400 = vunpack.c.h.b16 %v9094
    %v9401 = vunpack.c.l.b16 %v9095
    %v9402 = vunpack.c.h.b16 %v9095
    %v9403 = vunpack.c.l.b16 %v9096
    %v9404 = vunpack.c.h.b16 %v9096
    %v9405 = vunpack.c.l.b16 %v9097
    %v9406 = vunpack.c.h.b16 %v9097
    %v9407 = vunpack.c.l.b16 %v9098
    %v9408 = vunpack.c.h.b16 %v9098
    %v9409 = vunpack.c.l.b16 %v9099
    %v9410 = vunpack.c.h.b16 %v9099
    %v9411 = vunpack.c.l.b16 %v9100
    %v9412 = vunpack.c.h.b16 %v9100
    %v9413 = vunpack.c.l.b16 %v9101
    %v9414 = vunpack.c.h.b16 %v9101
    %v9415 = vunpack.c.l.b16 %v9102
    %v9416 = vunpack.c.h.b16 %v9102
    %v9417 = vunpack.c.l.b16 %v9103
    %v9418 = vunpack.c.h.b16 %v9103
    %v9419 = vunpack.c.l.b16 %v9104
    %v9420 = vunpack.c.h.b16 %v9104
    %v9421 = vunpack.c.l.b16 %v9105
    %v9422 = vunpack.c.h.b16 %v9105
    %v9423 = vunpack.c.l.b16 %v9106
    %v9424 = vunpack.c.h.b16 %v9106
    %v9425 = vunpack.c.l.b16 %v9107
    %v9426 = vunpack.c.h.b16 %v9107
    %v9427 = vunpack.c.l.b16 %v9108
    %v9428 = vunpack.c.h.b16 %v9108
    %v9429 = vunpack.c.l.b16 %v9109
    %v9430 = vunpack.c.h.b16 %v9109
    %v9431 = vunpack.c.l.b16 %v9110
    %v9432 = vunpack.c.h.b16 %v9110
    %v9433 = vunpack.c.l.b16 %v9111
    %v9434 = vunpack.c.h.b16 %v9111
    %v9435 = vunpack.c.l.b16 %v9112
    %v9436 = vunpack.c.h.b16 %v9112
    %v9437 = vunpack.c.l.b16 %v9113
    %v9438 = vunpack.c.h.b16 %v9113
    %v9439 = vunpack.c.l.b16 %v9114
    %v9440 = vunpack.c.h.b16 %v9114
    %v9441 = vunpack.c.l.b16 %v9115
    %v9442 = vunpack.c.h.b16 %v9115
    %v9443 = vunpack.c.l.b16 %v9116
    %v9444 = vunpack.c.h.b16 %v9116
    %v9445 = vunpack.c.l.b16 %v9117
    %v9446 = vunpack.c.h.b16 %v9117
    %v9447 = vunpack.c.l.b16 %v9118
    %v9448 = vunpack.c.h.b16 %v9118
    %v9449 = vunpack.c.l.b16 %v9119
    %v9450 = vunpack.c.h.b16 %v9119
    %v9451 = vunpack.c.l.b16 %v9120
    %v9452 = vunpack.c.h.b16 %v9120
    %v9453 = vunpack.c.l.b16 %v9121
    %v9454 = vunpack.c.h.b16 %v9121
    %v9455 = vunpack.c.l.b16 %v9122
    %v9456 = vunpack.c.h.b16 %v9122
    %v9457 = vunpack.c.l.b16 %v9123
    %v9458 = vunpack.c.h.b16 %v9123
    %v9459 = vunpack.c.l.b16 %v9124
    %v9460 = vunpack.c.h.b16 %v9124
    %v9461 = vunpack.c.l.b16 %v9125
    %v9462 = vunpack.c.h.b16 %v9125
    %v9463 = vunpack.c.l.b16 %v9126
    %v9464 = vunpack.c.h.b16 %v9126
    %v9465 = vunpack.c.l.b16 %v9127
    %v9466 = vunpack.c.h.b16 %v9127
    %v9467 = vunpack.c.l.b16 %v9128
    %v9468 = vunpack.c.h.b16 %v9128
    %v9469 = vunpack.c.l.b16 %v9129
    %v9470 = vunpack.c.h.b16 %v9129
    %v9471 = vunpack.c.l.b16 %v9130
    %v9472 = vunpack.c.h.b16 %v9130
    %v9473 = vunpack.c.l.b16 %v9131
    %v9474 = vunpack.c.h.b16 %v9131
    %v9475 = vunpack.c.l.b16 %v9132
    %v9476 = vunpack.c.h.b16 %v9132
    %v9477 = vunpack.c.l.b16 %v9133
    %v9478 = vunpack.c.h.b16 %v9133
    %v9479 = vunpack.c.l.b16 %v9134
    %v9480 = vunpack.c.h.b16 %v9134
    %v9481 = vunpack.c.l.b16 %v9135
    %v9482 = vunpack.c.h.b16 %v9135
    %v9483 = vunpack.c.l.b16 %v9136
    %v9484 = vunpack.c.h.b16 %v9136
    %v9485 = vunpack.c.l.b16 %v9137
    %v9486 = vunpack.c.h.b16 %v9137
    %v9487 = vunpack.c.l.b16 %v9138
    %v9488 = vunpack.c.h.b16 %v9138
    %v9489 = vunpack.c.l.b16 %v9139
    %v9490 = vunpack.c.h.b16 %v9139
    %v9491 = vunpack.c.l.b16 %v9140
    %v9492 = vunpack.c.h.b16 %v9140
    %v9493 = vunpack.c.l.b16 %v9141
    %v9494 = vunpack.c.h.b16 %v9141
    %v9495 = vunpack.c.l.b16 %v9142
    %v9496 = vunpack.c.h.b16 %v9142
    %v9497 = vunpack.c.l.b16 %v9143
    %v9498 = vunpack.c.h.b16 %v9143
    %v9499 = vunpack.c.l.b16 %v9144
    %v9500 = vunpack.c.h.b16 %v9144
    %v9501 = vunpack.c.l.b16 %v9145
    %v9502 = vunpack.c.h.b16 %v9145
    %v9503 = vunpack.c.l.b16 %v9146
    %v9504 = vunpack.c.h.b16 %v9146
    %v9505 = vunpack.c.l.b16 %v9147
    %v9506 = vunpack.c.h.b16 %v9147
    %v9507 = vunpack.c.l.b16 %v9148
    %v9508 = vunpack.c.h.b16 %v9148
    %v9509 = vunpack.c.l.b16 %v9149
    %v9510 = vunpack.c.h.b16 %v9149
    %v9511 = vunpack.c.l.b16 %v9150
    %v9512 = vunpack.c.h.b16 %v9150
    %v9513 = vunpack.c.l.b16 %v9151
    %v9514 = vunpack.c.h.b16 %v9151
    %v9515 = vunpack.c.l.b16 %v9152
    %v9516 = vunpack.c.h.b16 %v9152
    %v9517 = vunpack.c.l.b16 %v9153
    %v9518 = vunpack.c.h.b16 %v9153
    %v9519 = vunpack.c.l.b16 %v9154
    %v9520 = vunpack.c.h.b16 %v9154
    %v9521 = vunpack.c.l.b16 %v9155
    %v9522 = vunpack.c.h.b16 %v9155
    %v9523 = vunpack.c.l.b16 %v9156
    %v9524 = vunpack.c.h.b16 %v9156
    %v9525 = vunpack.c.l.b16 %v9157
    %v9526 = vunpack.c.h.b16 %v9157
    %v9527 = vunpack.c.l.b16 %v9158
    %v9528 = vunpack.c.h.b16 %v9158
    %v9529 = vunpack.c.l.b16 %v9159
    %v9530 = vunpack.c.h.b16 %v9159
    %v9531 = vunpack.c.l.b16 %v9160
    %v9532 = vunpack.c.h.b16 %v9160
    %v9533 = vunpack.c.l.b16 %v9161
    %v9534 = vunpack.c.h.b16 %v9161
    %v9535 = vunpack.c.l.b16 %v9162
    %v9536 = vunpack.c.h.b16 %v9162
    %v9537 = vunpack.c.l.b16 %v9163
    %v9538 = vunpack.c.h.b16 %v9163
    %v9539 = vunpack.c.l.b16 %v9164
    %v9540 = vunpack.c.h.b16 %v9164
    %v9541 = vunpack.c.l.b16 %v9165
    %v9542 = vunpack.c.h.b16 %v9165
    %v9543 = vunpack.c.l.b16 %v9166
    %v9544 = vunpack.c.h.b16 %v9166
    %v9545 = vunpack.c.l.b16 %v9167
    %v9546 = vunpack.c.h.b16 %v9167
    %v9547 = vunpack.c.l.b16 %v9168
    %v9548 = vunpack.c.h.b16 %v9168
    %v9549 = vunpack.c.l.b16 %v9169
    %v9550 = vunpack.c.h.b16 %v9169
    %v9551 = vunpack.c.l.b16 %v9170
    %v9552 = vunpack.c.h.b16 %v9170
    %v9553 = vunpack.c.l.b16 %v9171
    %v9554 = vunpack.c.h.b16 %v9171
    %v9555 = vunpack.c.l.b16 %v9172
    %v9556 = vunpack.c.h.b16 %v9172
    %v9557 = vunpack.c.l.b16 %v9173
    %v9558 = vunpack.c.h.b16 %v9173
    %v9559 = vunpack.c.l.b16 %v9174
    %v9560 = vunpack.c.h.b16 %v9174
    %v9561 = vunpack.c.l.b16 %v9175
    %v9562 = vunpack.c.h.b16 %v9175
    %v9563 = vunpack.c.l.b16 %v9176
    %v9564 = vunpack.c.h.b16 %v9176
    %v9565 = vunpack.c.l.b16 %v9177
    %v9566 = vunpack.c.h.b16 %v9177
    %v9567 = vunpack.c.l.b16 %v9178
    %v9568 = vunpack.c.h.b16 %v9178
    %v9569 = vunpack.c.l.b16 %v9179
    %v9570 = vunpack.c.h.b16 %v9179
    %v9571 = vunpack.c.l.b16 %v9180
    %v9572 = vunpack.c.h.b16 %v9180
    %v9573 = vunpack.c.l.b16 %v9181
    %v9574 = vunpack.c.h.b16 %v9181
    %v9575 = vunpack.c.l.b16 %v9182
    %v9576 = vunpack.c.h.b16 %v9182
    %v9577 = vunpack.c.l.b16 %v9183
    %v9578 = vunpack.c.h.b16 %v9183
    %v9579 = vunpack.c.l.b16 %v9184
    %v9580 = vunpack.c.h.b16 %v9184
    %v9581 = vunpack.c.l.b16 %v9185
    %v9582 = vunpack.c.h.b16 %v9185
    %v9583 = vunpack.c.l.b16 %v9186
    %v9584 = vunpack.c.h.b16 %v9186
    %v9585 = vunpack.c.l.b16 %v9187
    %v9586 = vunpack.c.h.b16 %v9187
    %v9587 = vunpack.c.l.b16 %v9188
    %v9588 = vunpack.c.h.b16 %v9188
    %v9589 = vunpack.c.l.b16 %v9189
    %v9590 = vunpack.c.h.b16 %v9189
    %v9591 = vunpack.c.l.b16 %v9190
    %v9592 = vunpack.c.h.b16 %v9190
    %v9593 = vunpack.c.l.b16 %v9191
    %v9594 = vunpack.c.h.b16 %v9191
    %v9595 = vunpack.c.l.b16 %v9192
    %v9596 = vunpack.c.h.b16 %v9192
    %v9597 = vunpack.c.l.b16 %v9193
    %v9598 = vunpack.c.h.b16 %v9193
    %v9599 = vunpack.c.l.b16 %v9194
    %v9600 = vunpack.c.h.b16 %v9194
    %v9601 = vunpack.c.l.b16 %v9195
    %v9602 = vunpack.c.h.b16 %v9195
    %v9603 = vunpack.c.l.b16 %v9196
    %v9604 = vunpack.c.h.b16 %v9196
    %v9605 = vunpack.c.l.b16 %v9197
    %v9606 = vunpack.c.h.b16 %v9197
    %v9607 = vunpack.c.l.b16 %v9198
    %v9608 = vunpack.c.h.b16 %v9198
    %v9609 = vunpack.c.l.b16 %v9199
    %v9610 = vunpack.c.h.b16 %v9199
    %v9611 = vpack.c.b16 %v9359, %v9355
    %v9612 = vpack.c.b16 %v9360, %v9356
    %v9613 = vpack.c.b16 %v9361, %v9357
    %v9614 = vpack.c.b16 %v9362, %v9358
    %v9615 = vpack.c.b16 %v9367, %v9363
    %v9616 = vpack.c.b16 %v9368, %v9364
    %v9617 = vpack.c.b16 %v9369, %v9365
    %v9618 = vpack.c.b16 %v9370, %v9366
    %v9619 = vpack.c.b16 %v9375, %v9371
    %v9620 = vpack.c.b16 %v9376, %v9372
    %v9621 = vpack.c.b16 %v9377, %v9373
    %v9622 = vpack.c.b16 %v9378, %v9374
    %v9623 = vpack.c.b16 %v9383, %v9379
    %v9624 = vpack.c.b16 %v9384, %v9380
    %v9625 = vpack.c.b16 %v9385, %v9381
    %v9626 = vpack.c.b16 %v9386, %v9382
    %v9627 = vpack.c.b16 %v9391, %v9387
    %v9628 = vpack.c.b16 %v9392, %v9388
    %v9629 = vpack.c.b16 %v9393, %v9389
    %v9630 = vpack.c.b16 %v9394, %v9390
    %v9631 = vpack.c.b16 %v9399, %v9395
    %v9632 = vpack.c.b16 %v9400, %v9396
    %v9633 = vpack.c.b16 %v9401, %v9397
    %v9634 = vpack.c.b16 %v9402, %v9398
    %v9635 = vpack.c.b16 %v9407, %v9403
    %v9636 = vpack.c.b16 %v9408, %v9404
    %v9637 = vpack.c.b16 %v9409, %v9405
    %v9638 = vpack.c.b16 %v9410, %v9406
    %v9639 = vpack.c.b16 %v9415, %v9411
    %v9640 = vpack.c.b16 %v9416, %v9412
    %v9641 = vpack.c.b16 %v9417, %v9413
    %v9642 = vpack.c.b16 %v9418, %v9414
    %v9643 = vpack.c.b16 %v9423, %v9419
    %v9644 = vpack.c.b16 %v9424, %v9420
    %v9645 = vpack.c.b16 %v9425, %v9421
    %v9646 = vpack.c.b16 %v9426, %v9422
    %v9647 = vpack.c.b16 %v9431, %v9427
    %v9648 = vpack.c.b16 %v9432, %v9428
    %v9649 = vpack.c.b16 %v9433, %v9429
    %v9650 = vpack.c.b16 %v9434, %v9430
    %v9651 = vpack.c.b16 %v9439, %v9435
    %v9652 = vpack.c.b16 %v9440, %v9436
    %v9653 = vpack.c.b16 %v9441, %v9437
    %v9654 = vpack.c.b16 %v9442, %v9438
    %v9655 = vpack.c.b16 %v9447, %v9443
    %v9656 = vpack.c.b16 %v9448, %v9444
    %v9657 = vpack.c.b16 %v9449, %v9445
    %v9658 = vpack.c.b16 %v9450, %v9446
    %v9659 = vpack.c.b16 %v9455, %v9451
    %v9660 = vpack.c.b16 %v9456, %v9452
    %v9661 = vpack.c.b16 %v9457, %v9453
    %v9662 = vpack.c.b16 %v9458, %v9454
    %v9663 = vpack.c.b16 %v9463, %v9459
    %v9664 = vpack.c.b16 %v9464, %v9460
    %v9665 = vpack.c.b16 %v9465, %v9461
    %v9666 = vpack.c.b16 %v9466, %v9462
    %v9667 = vpack.c.b16 %v9471, %v9467
    %v9668 = vpack.c.b16 %v9472, %v9468
    %v9669 = vpack.c.b16 %v9473, %v9469
    %v9670 = vpack.c.b16 %v9474, %v9470
    %v9671 = vpack.c.b16 %v9479, %v9475
    %v9672 = vpack.c.b16 %v9480, %v9476
    %v9673 = vpack.c.b16 %v9481, %v9477
    %v9674 = vpack.c.b16 %v9482, %v9478
    %v9675 = vpack.c.b16 %v9487, %v9483
    %v9676 = vpack.c.b16 %v9488, %v9484
    %v9677 = vpack.c.b16 %v9489, %v9485
    %v9678 = vpack.c.b16 %v9490, %v9486
    %v9679 = vpack.c.b16 %v9495, %v9491
    %v9680 = vpack.c.b16 %v9496, %v9492
    %v9681 = vpack.c.b16 %v9497, %v9493
    %v9682 = vpack.c.b16 %v9498, %v9494
    %v9683 = vpack.c.b16 %v9503, %v9499
    %v9684 = vpack.c.b16 %v9504, %v9500
    %v9685 = vpack.c.b16 %v9505, %v9501
    %v9686 = vpack.c.b16 %v9506, %v9502
    %v9687 = vpack.c.b16 %v9511, %v9507
    %v9688 = vpack.c.b16 %v9512, %v9508
    %v9689 = vpack.c.b16 %v9513, %v9509
    %v9690 = vpack.c.b16 %v9514, %v9510
    %v9691 = vpack.c.b16 %v9519, %v9515
    %v9692 = vpack.c.b16 %v9520, %v9516
    %v9693 = vpack.c.b16 %v9521, %v9517
    %v9694 = vpack.c.b16 %v9522, %v9518
    %v9695 = vpack.c.b16 %v9527, %v9523
    %v9696 = vpack.c.b16 %v9528, %v9524
    %v9697 = vpack.c.b16 %v9529, %v9525
    %v9698 = vpack.c.b16 %v9530, %v9526
    %v9699 = vpack.c.b16 %v9535, %v9531
    %v9700 = vpack.c.b16 %v9536, %v9532
    %v9701 = vpack.c.b16 %v9537, %v9533
    %v9702 = vpack.c.b16 %v9538, %v9534
    %v9703 = vpack.c.b16 %v9543, %v9539
    %v9704 = vpack.c.b16 %v9544, %v9540
    %v9705 = vpack.c.b16 %v9545, %v9541
    %v9706 = vpack.c.b16 %v9546, %v9542
    %v9707 = vpack.c.b16 %v9551, %v9547
    %v9708 = vpack.c.b16 %v9552, %v9548
    %v9709 = vpack.c.b16 %v9553, %v9549
    %v9710 = vpack.c.b16 %v9554, %v9550
    %v9711 = vpack.c.b16 %v9559, %v9555
    %v9712 = vpack.c.b16 %v9560, %v9556
    %v9713 = vpack.c.b16 %v9561, %v9557
    %v9714 = vpack.c.b16 %v9562, %v9558
    %v9715 = vpack.c.b16 %v9567, %v9563
    %v9716 = vpack.c.b16 %v9568, %v9564
    %v9717 = vpack.c.b16 %v9569, %v9565
    %v9718 = vpack.c.b16 %v9570, %v9566
    %v9719 = vpack.c.b16 %v9575, %v9571
    %v9720 = vpack.c.b16 %v9576, %v9572
    %v9721 = vpack.c.b16 %v9577, %v9573
    %v9722 = vpack.c.b16 %v9578, %v9574
    %v9723 = vpack.c.b16 %v9583, %v9579
    %v9724 = vpack.c.b16 %v9584, %v9580
    %v9725 = vpack.c.b16 %v9585, %v9581
    %v9726 = vpack.c.b16 %v9586, %v9582
    %v9727 = vpack.c.b16 %v9591, %v9587
    %v9728 = vpack.c.b16 %v9592, %v9588
    %v9729 = vpack.c.b16 %v9593, %v9589
    %v9730 = vpack.c.b16 %v9594, %v9590
    %v9731 = vpack.c.b16 %v9599, %v9595
    %v9732 = vpack.c.b16 %v9600, %v9596
    %v9733 = vpack.c.b16 %v9601, %v9597
    %v9734 = vpack.c.b16 %v9602, %v9598
    %v9735 = vpack.c.b16 %v9607, %v9603
    %v9736 = vpack.c.b16 %v9608, %v9604
    %v9737 = vpack.c.b16 %v9609, %v9605
    %v9738 = vpack.c.b16 %v9610, %v9606
    %9867 = vmatprep.subr.bf16.mxu0 %v9640
    %9868 = vmatpush1.bf16.msra.mxu0 %v9639
    %9869 = vmatprep.subr.bf16.mxu0 %v9636
    %9870 = vmatpush1.bf16.msra.mxu0 %v9635
    %9871 = vmatprep.subr.bf16.mxu0 %v9632
    %9872 = vmatpush1.bf16.msra.mxu0 %v9631
    %9873 = vmatprep.subr.bf16.mxu0 %v9628
    %9874 = vmatpush1.bf16.msra.mxu0 %v9627
    %9875 = vmatprep.subr.bf16.mxu0 %v9624
    %9876 = vmatpush1.bf16.msra.mxu0 %v9623
    %9877 = vmatprep.subr.bf16.mxu0 %v9620
    %9878 = vmatpush1.bf16.msra.mxu0 %v9619
    %9879 = vmatprep.subr.bf16.mxu0 %v9616
    %9880 = vmatpush1.bf16.msra.mxu0 %v9615
    %9881 = vmatprep.subr.bf16.mxu0 %v9612
    %9882 = vmatpush1.bf16.msra.mxu0 %v9611
    %9883 = vmatprep.subr.bf16.mxu0 %v9672
    %9884 = vmatpush2.bf16.msra.mxu0 %v9671
    %9885 = vmatprep.subr.bf16.mxu0 %v9668
    %9886 = vmatpush2.bf16.msra.mxu0 %v9667
    %9887 = vmatprep.subr.bf16.mxu0 %v9664
    %9888 = vmatpush2.bf16.msra.mxu0 %v9663
    %9889 = vmatprep.subr.bf16.mxu0 %v9660
    %9890 = vmatpush2.bf16.msra.mxu0 %v9659
    %9891 = vmatprep.subr.bf16.mxu0 %v9656
    %9892 = vmatpush2.bf16.msra.mxu0 %v9655
    %9893 = vmatprep.subr.bf16.mxu0 %v9652
    %9894 = vmatpush2.bf16.msra.mxu0 %v9651
    %9895 = vmatprep.subr.bf16.mxu0 %v9648
    %9896 = vmatpush2.bf16.msra.mxu0 %v9647
    %9897 = vmatprep.subr.bf16.mxu0 %v9644
    %9898 = vmatpush2.bf16.msra.mxu0 %v9643
    %9899 = vmatprep.mubr.bf16.mxu0 %v9203
    %9900 = vmatmul.mubr.bf16.gmra.mxu0 %v9202
    %v9901 = vpop.f32.mrf.mxu0
    %v9902 = vadd.f32 %v9210, %v9901
    %v9903 = vpop.f32.mrf.mxu0
    %v9904 = vadd.f32 %v9214, %v9903
    %v9905 = vpop.f32.mrf.mxu0
    %v9906 = vadd.f32 %v9210, %v9905
    %v9907 = vpop.f32.mrf.mxu0
    %v9908 = vadd.f32 %v9214, %v9907
    %9909 = vdwg.mxu0
    %9910 = vmatprep.subr.bf16.mxu0 %v9704
    %9911 = vmatpush1.bf16.msra.mxu0 %v9703
    %9912 = vmatprep.subr.bf16.mxu0 %v9700
    %9913 = vmatpush1.bf16.msra.mxu0 %v9699
    %9914 = vmatprep.subr.bf16.mxu0 %v9696
    %9915 = vmatpush1.bf16.msra.mxu0 %v9695
    %9916 = vmatprep.subr.bf16.mxu0 %v9692
    %9917 = vmatpush1.bf16.msra.mxu0 %v9691
    %9918 = vmatprep.subr.bf16.mxu0 %v9688
    %9919 = vmatpush1.bf16.msra.mxu0 %v9687
    %9920 = vmatprep.subr.bf16.mxu0 %v9684
    %9921 = vmatpush1.bf16.msra.mxu0 %v9683
    %9922 = vmatprep.subr.bf16.mxu0 %v9680
    %9923 = vmatpush1.bf16.msra.mxu0 %v9679
    %9924 = vmatprep.subr.bf16.mxu0 %v9676
    %9925 = vmatpush1.bf16.msra.mxu0 %v9675
    %9926 = vmatprep.subr.bf16.mxu0 %v9736
    %9927 = vmatpush2.bf16.msra.mxu0 %v9735
    %9928 = vmatprep.subr.bf16.mxu0 %v9732
    %9929 = vmatpush2.bf16.msra.mxu0 %v9731
    %9930 = vmatprep.subr.bf16.mxu0 %v9728
    %9931 = vmatpush2.bf16.msra.mxu0 %v9727
    %9932 = vmatprep.subr.bf16.mxu0 %v9724
    %9933 = vmatpush2.bf16.msra.mxu0 %v9723
    %9934 = vmatprep.subr.bf16.mxu0 %v9720
    %9935 = vmatpush2.bf16.msra.mxu0 %v9719
    %9936 = vmatprep.subr.bf16.mxu0 %v9716
    %9937 = vmatpush2.bf16.msra.mxu0 %v9715
    %9938 = vmatprep.subr.bf16.mxu0 %v9712
    %9939 = vmatpush2.bf16.msra.mxu0 %v9711
    %9940 = vmatprep.subr.bf16.mxu0 %v9708
    %9941 = vmatpush2.bf16.msra.mxu0 %v9707
    %9942 = vmatprep.mubr.bf16.mxu0 %v9205
    %9943 = vmatmul.mubr.bf16.gmra.mxu0 %v9204
    %v9944 = vpop.f32.mrf.mxu0
    %v9945 = vadd.f32 %v9902, %v9944
    %v9946 = vpop.f32.mrf.mxu0
    %v9947 = vadd.f32 %v9904, %v9946
    %v9948 = vpop.f32.mrf.mxu0
    %v9949 = vadd.f32 %v9906, %v9948
    %v9950 = vpop.f32.mrf.mxu0
    %v9951 = vadd.f32 %v9908, %v9950
    %9952 = vdwg.mxu0
    %9953 = vmatprep.subr.bf16.mxu0 %v9642
    %9954 = vmatpush1.bf16.msra.mxu0 %v9641
    %9955 = vmatprep.subr.bf16.mxu0 %v9638
    %9956 = vmatpush1.bf16.msra.mxu0 %v9637
    %9957 = vmatprep.subr.bf16.mxu0 %v9634
    %9958 = vmatpush1.bf16.msra.mxu0 %v9633
    %9959 = vmatprep.subr.bf16.mxu0 %v9630
    %9960 = vmatpush1.bf16.msra.mxu0 %v9629
    %9961 = vmatprep.subr.bf16.mxu0 %v9626
    %9962 = vmatpush1.bf16.msra.mxu0 %v9625
    %9963 = vmatprep.subr.bf16.mxu0 %v9622
    %9964 = vmatpush1.bf16.msra.mxu0 %v9621
    %9965 = vmatprep.subr.bf16.mxu0 %v9618
    %9966 = vmatpush1.bf16.msra.mxu0 %v9617
    %9967 = vmatprep.subr.bf16.mxu0 %v9614
    %9968 = vmatpush1.bf16.msra.mxu0 %v9613
    %9969 = vmatprep.subr.bf16.mxu0 %v9674
    %9970 = vmatpush2.bf16.msra.mxu0 %v9673
    %9971 = vmatprep.subr.bf16.mxu0 %v9670
    %9972 = vmatpush2.bf16.msra.mxu0 %v9669
    %9973 = vmatprep.subr.bf16.mxu0 %v9666
    %9974 = vmatpush2.bf16.msra.mxu0 %v9665
    %9975 = vmatprep.subr.bf16.mxu0 %v9662
    %9976 = vmatpush2.bf16.msra.mxu0 %v9661
    %9977 = vmatprep.subr.bf16.mxu0 %v9658
    %9978 = vmatpush2.bf16.msra.mxu0 %v9657
    %9979 = vmatprep.subr.bf16.mxu0 %v9654
    %9980 = vmatpush2.bf16.msra.mxu0 %v9653
    %9981 = vmatprep.subr.bf16.mxu0 %v9650
    %9982 = vmatpush2.bf16.msra.mxu0 %v9649
    %9983 = vmatprep.subr.bf16.mxu0 %v9646
    %9984 = vmatpush2.bf16.msra.mxu0 %v9645
    %9985 = vmatprep.mubr.bf16.mxu0 %v9203
    %9986 = vmatmul.mubr.bf16.gmra.mxu0 %v9202
    %v9987 = vpop.f32.mrf.mxu0
    %v9988 = vadd.f32 %v9218, %v9987
    %v9989 = vpop.f32.mrf.mxu0
    %v9990 = vadd.f32 %v9222, %v9989
    %v9991 = vpop.f32.mrf.mxu0
    %v9992 = vadd.f32 %v9218, %v9991
    %v9993 = vpop.f32.mrf.mxu0
    %v9994 = vadd.f32 %v9222, %v9993
    %9995 = vdwg.mxu0
    %9996 = vmatprep.subr.bf16.mxu0 %v9706
    %9997 = vmatpush1.bf16.msra.mxu0 %v9705
    %9998 = vmatprep.subr.bf16.mxu0 %v9702
    %9999 = vmatpush1.bf16.msra.mxu0 %v9701
    %10000 = vmatprep.subr.bf16.mxu0 %v9698
    %10001 = vmatpush1.bf16.msra.mxu0 %v9697
    %10002 = vmatprep.subr.bf16.mxu0 %v9694
    %10003 = vmatpush1.bf16.msra.mxu0 %v9693
    %10004 = vmatprep.subr.bf16.mxu0 %v9690
    %10005 = vmatpush1.bf16.msra.mxu0 %v9689
    %10006 = vmatprep.subr.bf16.mxu0 %v9686
    %10007 = vmatpush1.bf16.msra.mxu0 %v9685
    %10008 = vmatprep.subr.bf16.mxu0 %v9682
    %10009 = vmatpush1.bf16.msra.mxu0 %v9681
    %10010 = vmatprep.subr.bf16.mxu0 %v9678
    %10011 = vmatpush1.bf16.msra.mxu0 %v9677
    %10012 = vmatprep.subr.bf16.mxu0 %v9738
    %10013 = vmatpush2.bf16.msra.mxu0 %v9737
    %10014 = vmatprep.subr.bf16.mxu0 %v9734
    %10015 = vmatpush2.bf16.msra.mxu0 %v9733
    %10016 = vmatprep.subr.bf16.mxu0 %v9730
    %10017 = vmatpush2.bf16.msra.mxu0 %v9729
    %10018 = vmatprep.subr.bf16.mxu0 %v9726
    %10019 = vmatpush2.bf16.msra.mxu0 %v9725
    %10020 = vmatprep.subr.bf16.mxu0 %v9722
    %10021 = vmatpush2.bf16.msra.mxu0 %v9721
    %10022 = vmatprep.subr.bf16.mxu0 %v9718
    %10023 = vmatpush2.bf16.msra.mxu0 %v9717
    %10024 = vmatprep.subr.bf16.mxu0 %v9714
    %10025 = vmatpush2.bf16.msra.mxu0 %v9713
    %10026 = vmatprep.subr.bf16.mxu0 %v9710
    %10027 = vmatpush2.bf16.msra.mxu0 %v9709
    %10028 = vmatprep.mubr.bf16.mxu0 %v9205
    %10029 = vmatmul.mubr.bf16.gmra.mxu0 %v9204
    %v10030 = vpop.f32.mrf.mxu0
    %v10031 = vadd.f32 %v9988, %v10030
    %v10032 = vpop.f32.mrf.mxu0
    %v10033 = vadd.f32 %v9990, %v10032
    %v10034 = vpop.f32.mrf.mxu0
    %v10035 = vadd.f32 %v9992, %v10034
    %v10036 = vpop.f32.mrf.mxu0
    %v10037 = vadd.f32 %v9994, %v10036
    %10038 = vdwg.mxu0
    %vm10039 = vcmp.ge.f32.partialorder %v9945, 0.0
    %vm10040 = vcmp.ge.f32.partialorder %v9947, 0.0
    %vm10041 = vcmp.ge.f32.partialorder %v10031, 0.0
    %vm10042 = vcmp.ge.f32.partialorder %v10033, 0.0
    %vm10043 = vcmp.ge.f32.partialorder %v9949, 0.0
    %vm10044 = vcmp.ge.f32.partialorder %v9951, 0.0
    %vm10045 = vcmp.ge.f32.partialorder %v10035, 0.0
    %vm10046 = vcmp.ge.f32.partialorder %v10037, 0.0
    %v10047 = vmul.f32 %v9945, 0.01
    %v10048 = vmul.f32 %v9947, 0.01
    %v10049 = vmul.f32 %v10031, 0.01
    %v10050 = vmul.f32 %v10033, 0.01
    %v10051 = vmul.f32 %v9949, 0.01
    %v10052 = vmul.f32 %v9951, 0.01
    %v10053 = vmul.f32 %v10035, 0.01
    %v10054 = vmul.f32 %v10037, 0.01
    %v10055 = vsel %vm10039, %v9945, %v10047
    %v10056 = vsel %vm10040, %v9947, %v10048
    %v10057 = vsel %vm10041, %v10031, %v10049
    %v10058 = vsel %vm10042, %v10033, %v10050
    %v10059 = vsel %vm10043, %v9949, %v10051
    %v10060 = vsel %vm10044, %v9951, %v10052
    %v10061 = vsel %vm10045, %v10035, %v10053
    %v10062 = vsel %vm10046, %v10037, %v10054
    %v10063 = vand.u32 2147483647, %v10055
    %vm10064 = vcmp.le.f32.partialorder %v10063, 0.7853982
    %vm10065 = vcmp.lt.s32.totalorder %v10055, 0
    %v10066 = vand.u32 %v10055, 2139095040
    %v10067 = vshrl.u32 %v10066, 23
    %v10068 = vsub.s32 %v10067, 127
    %v10069 = vand.u32 2147483647, %v10055
    %v10070 = vand.u32 %v10069, 8388607
    %v10071 = vor.u32 %v10070, 8388608
    %v10072 = vsub.s32 0, %v10071
    %v10073 = vadd.s32 %v10068, 1
    %vm10074 = vcmp.gt.s32.totalorder %v10073, 0
    %v10075 = vsel %vm10074, %v10073, 0
    %v10076 = vshrl.u32 %v10075, 5
    %v10077 = vand.u32 %v10075, 31
    %v10078 = vsub.s32 32, %v10077
    %v10079 = vshrl.u32 683565275, %v10078
    %v10080 = vshll.u32 683565275, %v10077
    %v10081 = vshrl.u32 2475754826, %v10078
    %v10082 = vor.u32 %v10080, %v10081
    %v10083 = vshll.u32 2475754826, %v10077
    %v10084 = vshrl.u32 2131351028, %v10078
    %v10085 = vor.u32 %v10083, %v10084
    %v10086 = vshll.u32 2131351028, %v10077
    %v10087 = vshrl.u32 2102212464, %v10078
    %v10088 = vor.u32 %v10086, %v10087
    %v10089 = vshll.u32 2102212464, %v10077
    %v10090 = vshrl.u32 920167782, %v10078
    %v10091 = vor.u32 %v10089, %v10090
    %v10092 = vshll.u32 920167782, %v10077
    %v10093 = vshrl.u32 1326507024, %v10078
    %v10094 = vor.u32 %v10092, %v10093
    %vm10095 = vcmp.lt.s32.totalorder %v10076, 1
    %vm10096 = vcmp.lt.s32.totalorder %v10076, 2
    %vm10097 = vcmp.lt.s32.totalorder %v10076, 3
    %vm10098 = vcmp.lt.s32.totalorder %v10076, 4
    %v10099 = vsel %vm10095, %v10079, %v10082
    %v10100 = vsel %vm10098, %v10088, 2102212464
    %v10101 = vsel %vm10097, %v10085, %v10100
    %v10102 = vsel %vm10096, %v10099, %v10101
    %v10103 = vsel %vm10095, %v10082, %v10085
    %v10104 = vsel %vm10098, %v10091, 920167782
    %v10105 = vsel %vm10097, %v10088, %v10104
    %v10106 = vsel %vm10096, %v10103, %v10105
    %v10107 = vsel %vm10095, %v10085, %v10088
    %v10108 = vsel %vm10098, %v10094, 1326507024
    %v10109 = vsel %vm10097, %v10091, %v10108
    %v10110 = vsel %vm10096, %v10107, %v10109
    %v10111 = vshll.u32 %v10071, 8
    %v10112 = vmul.u32.u64.compose %v10111, %v10110
    %v10113 = vextract.low.u32 %v10112
    %v10114 = vextract.high.u32 %v10112
    %v10115 = vmul.u32.u64.compose %v10111, %v10106
    %v10116 = vextract.low.u32 %v10115
    %v10117 = vextract.high.u32 %v10115
    %v10118 = vmul.u32 %v10111, %v10102
    %v10119 = vadd.s32 %v10114, %v10116
    %vm10120 = vc.u32 %v10114, %v10116
    %v10121 = vadd.s32 %v10117, 1
    %v10122 = vsel %vm10120, %v10121, %v10117
    %v10123 = vadd.s32 %v10118, %v10122
    %v10124 = vadd.s32 %v10123, 536870912
    %v10125 = vshrl.u32 %v10124, 30
    %v10126 = vshll.u32 %v10125, 30
    %v10127 = vsub.s32 %v10123, %v10126
    %vm10128 = vcmp.lt.s32.totalorder %v10127, 0
    %v10129 = vsub.s32 0, %v10127
    %v10130 = vsel %vm10128, %v10129, %v10127
    %v10131 = vclz %v10130
    %v10132 = vsub.s32 %v10131, 2
    %vm10133 = vcmp.gt.s32.totalorder 0, %v10132
    %v10134 = vsel %vm10133, 0, %v10132
    %v10135 = vsub.s32 32, %v10134
    %v10136 = vshll.u32 %v10127, %v10134
    %v10137 = vshrl.u32 %v10119, %v10135
    %v10138 = vor.u32 %v10136, %v10137
    %v10139 = vsub.s32 4294967266, %v10134
    %v10140 = vadd.s32 %v10139, 127
    %v10141 = vshll.u32 %v10140, 23
    %v10142 = vor.u32 4788187, %v10141
    %v10143 = vand.u32 2147483647, %v10142
    %v10145 = vcvt.s32.f32 %v10138
    %v10146 = vmul.f32 %v10145, %v10143
    %v10147 = vxor.u32 %v10146, 2147483648
    %v10148 = vsel %vm10065, %v10147, %v10146
    %v10149 = vsub.s32 4, %v10125
    %v10150 = vsel %vm10065, %v10149, %v10125
    %v10151 = vsel %vm10064, %v10055, %v10148
    %v10152 = vsel %vm10064, 0, %v10150
    %v10153 = vcosq.f32.pop %v10151
    %v10154 = vsinq.f32.pop %v10151
    %vm10155 = vweird.f32 %v10055
    %v10156 = vand.u32 %v10152, 3
    %vm10157 = vcmp.lt.s32.totalorder %v10156, 2
    %vm10158 = vcmp.eq.s32.totalorder %v10156, 0
    %v10159 = vxor.u32 %v10154, 2147483648
    %v10160 = vsel %vm10158, %v10153, %v10159
    %vm10161 = vcmp.eq.s32.totalorder %v10156, 2
    %v10162 = vxor.u32 %v10153, 2147483648
    %v10163 = vsel %vm10161, %v10162, %v10154
    %v10164 = vsel %vm10157, %v10160, %v10163
    %v10165 = vsel %vm10155, nan, %v10164
    %v10166 = vand.u32 2147483647, %v10056
    %vm10167 = vcmp.le.f32.partialorder %v10166, 0.7853982
    %vm10168 = vcmp.lt.s32.totalorder %v10056, 0
    %v10169 = vand.u32 %v10056, 2139095040
    %v10170 = vshrl.u32 %v10169, 23
    %v10171 = vsub.s32 %v10170, 127
    %v10172 = vand.u32 2147483647, %v10056
    %v10173 = vand.u32 %v10172, 8388607
    %v10174 = vor.u32 %v10173, 8388608
    %v10175 = vsub.s32 0, %v10174
    %v10176 = vadd.s32 %v10171, 1
    %vm10177 = vcmp.gt.s32.totalorder %v10176, 0
    %v10178 = vsel %vm10177, %v10176, 0
    %v10179 = vshrl.u32 %v10178, 5
    %v10180 = vand.u32 %v10178, 31
    %v10181 = vsub.s32 32, %v10180
    %v10182 = vshrl.u32 683565275, %v10181
    %v10183 = vshll.u32 683565275, %v10180
    %v10184 = vshrl.u32 2475754826, %v10181
    %v10185 = vor.u32 %v10183, %v10184
    %v10186 = vshll.u32 2475754826, %v10180
    %v10187 = vshrl.u32 2131351028, %v10181
    %v10188 = vor.u32 %v10186, %v10187
    %v10189 = vshll.u32 2131351028, %v10180
    %v10190 = vshrl.u32 2102212464, %v10181
    %v10191 = vor.u32 %v10189, %v10190
    %v10192 = vshll.u32 2102212464, %v10180
    %v10193 = vshrl.u32 920167782, %v10181
    %v10194 = vor.u32 %v10192, %v10193
    %v10195 = vshll.u32 920167782, %v10180
    %v10196 = vshrl.u32 1326507024, %v10181
    %v10197 = vor.u32 %v10195, %v10196
    %vm10198 = vcmp.lt.s32.totalorder %v10179, 1
    %vm10199 = vcmp.lt.s32.totalorder %v10179, 2
    %vm10200 = vcmp.lt.s32.totalorder %v10179, 3
    %vm10201 = vcmp.lt.s32.totalorder %v10179, 4
    %v10202 = vsel %vm10198, %v10182, %v10185
    %v10203 = vsel %vm10201, %v10191, 2102212464
    %v10204 = vsel %vm10200, %v10188, %v10203
    %v10205 = vsel %vm10199, %v10202, %v10204
    %v10206 = vsel %vm10198, %v10185, %v10188
    %v10207 = vsel %vm10201, %v10194, 920167782
    %v10208 = vsel %vm10200, %v10191, %v10207
    %v10209 = vsel %vm10199, %v10206, %v10208
    %v10210 = vsel %vm10198, %v10188, %v10191
    %v10211 = vsel %vm10201, %v10197, 1326507024
    %v10212 = vsel %vm10200, %v10194, %v10211
    %v10213 = vsel %vm10199, %v10210, %v10212
    %v10214 = vshll.u32 %v10174, 8
    %v10215 = vmul.u32.u64.compose %v10214, %v10213
    %v10216 = vextract.low.u32 %v10215
    %v10217 = vextract.high.u32 %v10215
    %v10218 = vmul.u32.u64.compose %v10214, %v10209
    %v10219 = vextract.low.u32 %v10218
    %v10220 = vextract.high.u32 %v10218
    %v10221 = vmul.u32 %v10214, %v10205
    %v10222 = vadd.s32 %v10217, %v10219
    %vm10223 = vc.u32 %v10217, %v10219
    %v10224 = vadd.s32 %v10220, 1
    %v10225 = vsel %vm10223, %v10224, %v10220
    %v10226 = vadd.s32 %v10221, %v10225
    %v10227 = vadd.s32 %v10226, 536870912
    %v10228 = vshrl.u32 %v10227, 30
    %v10229 = vshll.u32 %v10228, 30
    %v10230 = vsub.s32 %v10226, %v10229
    %vm10231 = vcmp.lt.s32.totalorder %v10230, 0
    %v10232 = vsub.s32 0, %v10230
    %v10233 = vsel %vm10231, %v10232, %v10230
    %v10234 = vclz %v10233
    %v10235 = vsub.s32 %v10234, 2
    %vm10236 = vcmp.gt.s32.totalorder 0, %v10235
    %v10237 = vsel %vm10236, 0, %v10235
    %v10238 = vsub.s32 32, %v10237
    %v10239 = vshll.u32 %v10230, %v10237
    %v10240 = vshrl.u32 %v10222, %v10238
    %v10241 = vor.u32 %v10239, %v10240
    %v10242 = vsub.s32 4294967266, %v10237
    %v10243 = vadd.s32 %v10242, 127
    %v10244 = vshll.u32 %v10243, 23
    %v10245 = vor.u32 4788187, %v10244
    %v10246 = vand.u32 2147483647, %v10245
    %v10248 = vcvt.s32.f32 %v10241
    %v10249 = vmul.f32 %v10248, %v10246
    %v10250 = vxor.u32 %v10249, 2147483648
    %v10251 = vsel %vm10168, %v10250, %v10249
    %v10252 = vsub.s32 4, %v10228
    %v10253 = vsel %vm10168, %v10252, %v10228
    %v10254 = vsel %vm10167, %v10056, %v10251
    %v10255 = vsel %vm10167, 0, %v10253
    %v10256 = vcosq.f32.pop %v10254
    %v10257 = vsinq.f32.pop %v10254
    %vm10258 = vweird.f32 %v10056
    %v10259 = vand.u32 %v10255, 3
    %vm10260 = vcmp.lt.s32.totalorder %v10259, 2
    %vm10261 = vcmp.eq.s32.totalorder %v10259, 0
    %v10262 = vxor.u32 %v10257, 2147483648
    %v10263 = vsel %vm10261, %v10256, %v10262
    %vm10264 = vcmp.eq.s32.totalorder %v10259, 2
    %v10265 = vxor.u32 %v10256, 2147483648
    %v10266 = vsel %vm10264, %v10265, %v10257
    %v10267 = vsel %vm10260, %v10263, %v10266
    %v10268 = vsel %vm10258, nan, %v10267
    %v10269 = vand.u32 2147483647, %v10057
    %vm10270 = vcmp.le.f32.partialorder %v10269, 0.7853982
    %vm10271 = vcmp.lt.s32.totalorder %v10057, 0
    %v10272 = vand.u32 %v10057, 2139095040
    %v10273 = vshrl.u32 %v10272, 23
    %v10274 = vsub.s32 %v10273, 127
    %v10275 = vand.u32 2147483647, %v10057
    %v10276 = vand.u32 %v10275, 8388607
    %v10277 = vor.u32 %v10276, 8388608
    %v10278 = vsub.s32 0, %v10277
    %v10279 = vadd.s32 %v10274, 1
    %vm10280 = vcmp.gt.s32.totalorder %v10279, 0
    %v10281 = vsel %vm10280, %v10279, 0
    %v10282 = vshrl.u32 %v10281, 5
    %v10283 = vand.u32 %v10281, 31
    %v10284 = vsub.s32 32, %v10283
    %v10285 = vshrl.u32 683565275, %v10284
    %v10286 = vshll.u32 683565275, %v10283
    %v10287 = vshrl.u32 2475754826, %v10284
    %v10288 = vor.u32 %v10286, %v10287
    %v10289 = vshll.u32 2475754826, %v10283
    %v10290 = vshrl.u32 2131351028, %v10284
    %v10291 = vor.u32 %v10289, %v10290
    %v10292 = vshll.u32 2131351028, %v10283
    %v10293 = vshrl.u32 2102212464, %v10284
    %v10294 = vor.u32 %v10292, %v10293
    %v10295 = vshll.u32 2102212464, %v10283
    %v10296 = vshrl.u32 920167782, %v10284
    %v10297 = vor.u32 %v10295, %v10296
    %v10298 = vshll.u32 920167782, %v10283
    %v10299 = vshrl.u32 1326507024, %v10284
    %v10300 = vor.u32 %v10298, %v10299
    %vm10301 = vcmp.lt.s32.totalorder %v10282, 1
    %vm10302 = vcmp.lt.s32.totalorder %v10282, 2
    %vm10303 = vcmp.lt.s32.totalorder %v10282, 3
    %vm10304 = vcmp.lt.s32.totalorder %v10282, 4
    %v10305 = vsel %vm10301, %v10285, %v10288
    %v10306 = vsel %vm10304, %v10294, 2102212464
    %v10307 = vsel %vm10303, %v10291, %v10306
    %v10308 = vsel %vm10302, %v10305, %v10307
    %v10309 = vsel %vm10301, %v10288, %v10291
    %v10310 = vsel %vm10304, %v10297, 920167782
    %v10311 = vsel %vm10303, %v10294, %v10310
    %v10312 = vsel %vm10302, %v10309, %v10311
    %v10313 = vsel %vm10301, %v10291, %v10294
    %v10314 = vsel %vm10304, %v10300, 1326507024
    %v10315 = vsel %vm10303, %v10297, %v10314
    %v10316 = vsel %vm10302, %v10313, %v10315
    %v10317 = vshll.u32 %v10277, 8
    %v10318 = vmul.u32.u64.compose %v10317, %v10316
    %v10319 = vextract.low.u32 %v10318
    %v10320 = vextract.high.u32 %v10318
    %v10321 = vmul.u32.u64.compose %v10317, %v10312
    %v10322 = vextract.low.u32 %v10321
    %v10323 = vextract.high.u32 %v10321
    %v10324 = vmul.u32 %v10317, %v10308
    %v10325 = vadd.s32 %v10320, %v10322
    %vm10326 = vc.u32 %v10320, %v10322
    %v10327 = vadd.s32 %v10323, 1
    %v10328 = vsel %vm10326, %v10327, %v10323
    %v10329 = vadd.s32 %v10324, %v10328
    %v10330 = vadd.s32 %v10329, 536870912
    %v10331 = vshrl.u32 %v10330, 30
    %v10332 = vshll.u32 %v10331, 30
    %v10333 = vsub.s32 %v10329, %v10332
    %vm10334 = vcmp.lt.s32.totalorder %v10333, 0
    %v10335 = vsub.s32 0, %v10333
    %v10336 = vsel %vm10334, %v10335, %v10333
    %v10337 = vclz %v10336
    %v10338 = vsub.s32 %v10337, 2
    %vm10339 = vcmp.gt.s32.totalorder 0, %v10338
    %v10340 = vsel %vm10339, 0, %v10338
    %v10341 = vsub.s32 32, %v10340
    %v10342 = vshll.u32 %v10333, %v10340
    %v10343 = vshrl.u32 %v10325, %v10341
    %v10344 = vor.u32 %v10342, %v10343
    %v10345 = vsub.s32 4294967266, %v10340
    %v10346 = vadd.s32 %v10345, 127
    %v10347 = vshll.u32 %v10346, 23
    %v10348 = vor.u32 4788187, %v10347
    %v10349 = vand.u32 2147483647, %v10348
    %v10351 = vcvt.s32.f32 %v10344
    %v10352 = vmul.f32 %v10351, %v10349
    %v10353 = vxor.u32 %v10352, 2147483648
    %v10354 = vsel %vm10271, %v10353, %v10352
    %v10355 = vsub.s32 4, %v10331
    %v10356 = vsel %vm10271, %v10355, %v10331
    %v10357 = vsel %vm10270, %v10057, %v10354
    %v10358 = vsel %vm10270, 0, %v10356
    %v10359 = vcosq.f32.pop %v10357
    %v10360 = vsinq.f32.pop %v10357
    %vm10361 = vweird.f32 %v10057
    %v10362 = vand.u32 %v10358, 3
    %vm10363 = vcmp.lt.s32.totalorder %v10362, 2
    %vm10364 = vcmp.eq.s32.totalorder %v10362, 0
    %v10365 = vxor.u32 %v10360, 2147483648
    %v10366 = vsel %vm10364, %v10359, %v10365
    %vm10367 = vcmp.eq.s32.totalorder %v10362, 2
    %v10368 = vxor.u32 %v10359, 2147483648
    %v10369 = vsel %vm10367, %v10368, %v10360
    %v10370 = vsel %vm10363, %v10366, %v10369
    %v10371 = vsel %vm10361, nan, %v10370
    %v10372 = vand.u32 2147483647, %v10058
    %vm10373 = vcmp.le.f32.partialorder %v10372, 0.7853982
    %vm10374 = vcmp.lt.s32.totalorder %v10058, 0
    %v10375 = vand.u32 %v10058, 2139095040
    %v10376 = vshrl.u32 %v10375, 23
    %v10377 = vsub.s32 %v10376, 127
    %v10378 = vand.u32 2147483647, %v10058
    %v10379 = vand.u32 %v10378, 8388607
    %v10380 = vor.u32 %v10379, 8388608
    %v10381 = vsub.s32 0, %v10380
    %v10382 = vadd.s32 %v10377, 1
    %vm10383 = vcmp.gt.s32.totalorder %v10382, 0
    %v10384 = vsel %vm10383, %v10382, 0
    %v10385 = vshrl.u32 %v10384, 5
    %v10386 = vand.u32 %v10384, 31
    %v10387 = vsub.s32 32, %v10386
    %v10388 = vshrl.u32 683565275, %v10387
    %v10389 = vshll.u32 683565275, %v10386
    %v10390 = vshrl.u32 2475754826, %v10387
    %v10391 = vor.u32 %v10389, %v10390
    %v10392 = vshll.u32 2475754826, %v10386
    %v10393 = vshrl.u32 2131351028, %v10387
    %v10394 = vor.u32 %v10392, %v10393
    %v10395 = vshll.u32 2131351028, %v10386
    %v10396 = vshrl.u32 2102212464, %v10387
    %v10397 = vor.u32 %v10395, %v10396
    %v10398 = vshll.u32 2102212464, %v10386
    %v10399 = vshrl.u32 920167782, %v10387
    %v10400 = vor.u32 %v10398, %v10399
    %v10401 = vshll.u32 920167782, %v10386
    %v10402 = vshrl.u32 1326507024, %v10387
    %v10403 = vor.u32 %v10401, %v10402
    %vm10404 = vcmp.lt.s32.totalorder %v10385, 1
    %vm10405 = vcmp.lt.s32.totalorder %v10385, 2
    %vm10406 = vcmp.lt.s32.totalorder %v10385, 3
    %vm10407 = vcmp.lt.s32.totalorder %v10385, 4
    %v10408 = vsel %vm10404, %v10388, %v10391
    %v10409 = vsel %vm10407, %v10397, 2102212464
    %v10410 = vsel %vm10406, %v10394, %v10409
    %v10411 = vsel %vm10405, %v10408, %v10410
    %v10412 = vsel %vm10404, %v10391, %v10394
    %v10413 = vsel %vm10407, %v10400, 920167782
    %v10414 = vsel %vm10406, %v10397, %v10413
    %v10415 = vsel %vm10405, %v10412, %v10414
    %v10416 = vsel %vm10404, %v10394, %v10397
    %v10417 = vsel %vm10407, %v10403, 1326507024
    %v10418 = vsel %vm10406, %v10400, %v10417
    %v10419 = vsel %vm10405, %v10416, %v10418
    %v10420 = vshll.u32 %v10380, 8
    %v10421 = vmul.u32.u64.compose %v10420, %v10419
    %v10422 = vextract.low.u32 %v10421
    %v10423 = vextract.high.u32 %v10421
    %v10424 = vmul.u32.u64.compose %v10420, %v10415
    %v10425 = vextract.low.u32 %v10424
    %v10426 = vextract.high.u32 %v10424
    %v10427 = vmul.u32 %v10420, %v10411
    %v10428 = vadd.s32 %v10423, %v10425
    %vm10429 = vc.u32 %v10423, %v10425
    %v10430 = vadd.s32 %v10426, 1
    %v10431 = vsel %vm10429, %v10430, %v10426
    %v10432 = vadd.s32 %v10427, %v10431
    %v10433 = vadd.s32 %v10432, 536870912
    %v10434 = vshrl.u32 %v10433, 30
    %v10435 = vshll.u32 %v10434, 30
    %v10436 = vsub.s32 %v10432, %v10435
    %vm10437 = vcmp.lt.s32.totalorder %v10436, 0
    %v10438 = vsub.s32 0, %v10436
    %v10439 = vsel %vm10437, %v10438, %v10436
    %v10440 = vclz %v10439
    %v10441 = vsub.s32 %v10440, 2
    %vm10442 = vcmp.gt.s32.totalorder 0, %v10441
    %v10443 = vsel %vm10442, 0, %v10441
    %v10444 = vsub.s32 32, %v10443
    %v10445 = vshll.u32 %v10436, %v10443
    %v10446 = vshrl.u32 %v10428, %v10444
    %v10447 = vor.u32 %v10445, %v10446
    %v10448 = vsub.s32 4294967266, %v10443
    %v10449 = vadd.s32 %v10448, 127
    %v10450 = vshll.u32 %v10449, 23
    %v10451 = vor.u32 4788187, %v10450
    %v10452 = vand.u32 2147483647, %v10451
    %v10454 = vcvt.s32.f32 %v10447
    %v10455 = vmul.f32 %v10454, %v10452
    %v10456 = vxor.u32 %v10455, 2147483648
    %v10457 = vsel %vm10374, %v10456, %v10455
    %v10458 = vsub.s32 4, %v10434
    %v10459 = vsel %vm10374, %v10458, %v10434
    %v10460 = vsel %vm10373, %v10058, %v10457
    %v10461 = vsel %vm10373, 0, %v10459
    %v10462 = vcosq.f32.pop %v10460
    %v10463 = vsinq.f32.pop %v10460
    %vm10464 = vweird.f32 %v10058
    %v10465 = vand.u32 %v10461, 3
    %vm10466 = vcmp.lt.s32.totalorder %v10465, 2
    %vm10467 = vcmp.eq.s32.totalorder %v10465, 0
    %v10468 = vxor.u32 %v10463, 2147483648
    %v10469 = vsel %vm10467, %v10462, %v10468
    %vm10470 = vcmp.eq.s32.totalorder %v10465, 2
    %v10471 = vxor.u32 %v10462, 2147483648
    %v10472 = vsel %vm10470, %v10471, %v10463
    %v10473 = vsel %vm10466, %v10469, %v10472
    %v10474 = vsel %vm10464, nan, %v10473
    %v10475 = vand.u32 2147483647, %v10059
    %vm10476 = vcmp.le.f32.partialorder %v10475, 0.7853982
    %vm10477 = vcmp.lt.s32.totalorder %v10059, 0
    %v10478 = vand.u32 %v10059, 2139095040
    %v10479 = vshrl.u32 %v10478, 23
    %v10480 = vsub.s32 %v10479, 127
    %v10481 = vand.u32 2147483647, %v10059
    %v10482 = vand.u32 %v10481, 8388607
    %v10483 = vor.u32 %v10482, 8388608
    %v10484 = vsub.s32 0, %v10483
    %v10485 = vadd.s32 %v10480, 1
    %vm10486 = vcmp.gt.s32.totalorder %v10485, 0
    %v10487 = vsel %vm10486, %v10485, 0
    %v10488 = vshrl.u32 %v10487, 5
    %v10489 = vand.u32 %v10487, 31
    %v10490 = vsub.s32 32, %v10489
    %v10491 = vshrl.u32 683565275, %v10490
    %v10492 = vshll.u32 683565275, %v10489
    %v10493 = vshrl.u32 2475754826, %v10490
    %v10494 = vor.u32 %v10492, %v10493
    %v10495 = vshll.u32 2475754826, %v10489
    %v10496 = vshrl.u32 2131351028, %v10490
    %v10497 = vor.u32 %v10495, %v10496
    %v10498 = vshll.u32 2131351028, %v10489
    %v10499 = vshrl.u32 2102212464, %v10490
    %v10500 = vor.u32 %v10498, %v10499
    %v10501 = vshll.u32 2102212464, %v10489
    %v10502 = vshrl.u32 920167782, %v10490
    %v10503 = vor.u32 %v10501, %v10502
    %v10504 = vshll.u32 920167782, %v10489
    %v10505 = vshrl.u32 1326507024, %v10490
    %v10506 = vor.u32 %v10504, %v10505
    %vm10507 = vcmp.lt.s32.totalorder %v10488, 1
    %vm10508 = vcmp.lt.s32.totalorder %v10488, 2
    %vm10509 = vcmp.lt.s32.totalorder %v10488, 3
    %vm10510 = vcmp.lt.s32.totalorder %v10488, 4
    %v10511 = vsel %vm10507, %v10491, %v10494
    %v10512 = vsel %vm10510, %v10500, 2102212464
    %v10513 = vsel %vm10509, %v10497, %v10512
    %v10514 = vsel %vm10508, %v10511, %v10513
    %v10515 = vsel %vm10507, %v10494, %v10497
    %v10516 = vsel %vm10510, %v10503, 920167782
    %v10517 = vsel %vm10509, %v10500, %v10516
    %v10518 = vsel %vm10508, %v10515, %v10517
    %v10519 = vsel %vm10507, %v10497, %v10500
    %v10520 = vsel %vm10510, %v10506, 1326507024
    %v10521 = vsel %vm10509, %v10503, %v10520
    %v10522 = vsel %vm10508, %v10519, %v10521
    %v10523 = vshll.u32 %v10483, 8
    %v10524 = vmul.u32.u64.compose %v10523, %v10522
    %v10525 = vextract.low.u32 %v10524
    %v10526 = vextract.high.u32 %v10524
    %v10527 = vmul.u32.u64.compose %v10523, %v10518
    %v10528 = vextract.low.u32 %v10527
    %v10529 = vextract.high.u32 %v10527
    %v10530 = vmul.u32 %v10523, %v10514
    %v10531 = vadd.s32 %v10526, %v10528
    %vm10532 = vc.u32 %v10526, %v10528
    %v10533 = vadd.s32 %v10529, 1
    %v10534 = vsel %vm10532, %v10533, %v10529
    %v10535 = vadd.s32 %v10530, %v10534
    %v10536 = vadd.s32 %v10535, 536870912
    %v10537 = vshrl.u32 %v10536, 30
    %v10538 = vshll.u32 %v10537, 30
    %v10539 = vsub.s32 %v10535, %v10538
    %vm10540 = vcmp.lt.s32.totalorder %v10539, 0
    %v10541 = vsub.s32 0, %v10539
    %v10542 = vsel %vm10540, %v10541, %v10539
    %v10543 = vclz %v10542
    %v10544 = vsub.s32 %v10543, 2
    %vm10545 = vcmp.gt.s32.totalorder 0, %v10544
    %v10546 = vsel %vm10545, 0, %v10544
    %v10547 = vsub.s32 32, %v10546
    %v10548 = vshll.u32 %v10539, %v10546
    %v10549 = vshrl.u32 %v10531, %v10547
    %v10550 = vor.u32 %v10548, %v10549
    %v10551 = vsub.s32 4294967266, %v10546
    %v10552 = vadd.s32 %v10551, 127
    %v10553 = vshll.u32 %v10552, 23
    %v10554 = vor.u32 4788187, %v10553
    %v10555 = vand.u32 2147483647, %v10554
    %v10557 = vcvt.s32.f32 %v10550
    %v10558 = vmul.f32 %v10557, %v10555
    %v10559 = vxor.u32 %v10558, 2147483648
    %v10560 = vsel %vm10477, %v10559, %v10558
    %v10561 = vsub.s32 4, %v10537
    %v10562 = vsel %vm10477, %v10561, %v10537
    %v10563 = vsel %vm10476, %v10059, %v10560
    %v10564 = vsel %vm10476, 0, %v10562
    %v10565 = vcosq.f32.pop %v10563
    %v10566 = vsinq.f32.pop %v10563
    %vm10567 = vweird.f32 %v10059
    %v10568 = vand.u32 %v10564, 3
    %vm10569 = vcmp.lt.s32.totalorder %v10568, 2
    %vm10570 = vcmp.eq.s32.totalorder %v10568, 0
    %v10571 = vxor.u32 %v10566, 2147483648
    %v10572 = vsel %vm10570, %v10565, %v10571
    %vm10573 = vcmp.eq.s32.totalorder %v10568, 2
    %v10574 = vxor.u32 %v10565, 2147483648
    %v10575 = vsel %vm10573, %v10574, %v10566
    %v10576 = vsel %vm10569, %v10572, %v10575
    %v10577 = vsel %vm10567, nan, %v10576
    %v10578 = vand.u32 2147483647, %v10060
    %vm10579 = vcmp.le.f32.partialorder %v10578, 0.7853982
    %vm10580 = vcmp.lt.s32.totalorder %v10060, 0
    %v10581 = vand.u32 %v10060, 2139095040
    %v10582 = vshrl.u32 %v10581, 23
    %v10583 = vsub.s32 %v10582, 127
    %v10584 = vand.u32 2147483647, %v10060
    %v10585 = vand.u32 %v10584, 8388607
    %v10586 = vor.u32 %v10585, 8388608
    %v10587 = vsub.s32 0, %v10586
    %v10588 = vadd.s32 %v10583, 1
    %vm10589 = vcmp.gt.s32.totalorder %v10588, 0
    %v10590 = vsel %vm10589, %v10588, 0
    %v10591 = vshrl.u32 %v10590, 5
    %v10592 = vand.u32 %v10590, 31
    %v10593 = vsub.s32 32, %v10592
    %v10594 = vshrl.u32 683565275, %v10593
    %v10595 = vshll.u32 683565275, %v10592
    %v10596 = vshrl.u32 2475754826, %v10593
    %v10597 = vor.u32 %v10595, %v10596
    %v10598 = vshll.u32 2475754826, %v10592
    %v10599 = vshrl.u32 2131351028, %v10593
    %v10600 = vor.u32 %v10598, %v10599
    %v10601 = vshll.u32 2131351028, %v10592
    %v10602 = vshrl.u32 2102212464, %v10593
    %v10603 = vor.u32 %v10601, %v10602
    %v10604 = vshll.u32 2102212464, %v10592
    %v10605 = vshrl.u32 920167782, %v10593
    %v10606 = vor.u32 %v10604, %v10605
    %v10607 = vshll.u32 920167782, %v10592
    %v10608 = vshrl.u32 1326507024, %v10593
    %v10609 = vor.u32 %v10607, %v10608
    %vm10610 = vcmp.lt.s32.totalorder %v10591, 1
    %vm10611 = vcmp.lt.s32.totalorder %v10591, 2
    %vm10612 = vcmp.lt.s32.totalorder %v10591, 3
    %vm10613 = vcmp.lt.s32.totalorder %v10591, 4
    %v10614 = vsel %vm10610, %v10594, %v10597
    %v10615 = vsel %vm10613, %v10603, 2102212464
    %v10616 = vsel %vm10612, %v10600, %v10615
    %v10617 = vsel %vm10611, %v10614, %v10616
    %v10618 = vsel %vm10610, %v10597, %v10600
    %v10619 = vsel %vm10613, %v10606, 920167782
    %v10620 = vsel %vm10612, %v10603, %v10619
    %v10621 = vsel %vm10611, %v10618, %v10620
    %v10622 = vsel %vm10610, %v10600, %v10603
    %v10623 = vsel %vm10613, %v10609, 1326507024
    %v10624 = vsel %vm10612, %v10606, %v10623
    %v10625 = vsel %vm10611, %v10622, %v10624
    %v10626 = vshll.u32 %v10586, 8
    %v10627 = vmul.u32.u64.compose %v10626, %v10625
    %v10628 = vextract.low.u32 %v10627
    %v10629 = vextract.high.u32 %v10627
    %v10630 = vmul.u32.u64.compose %v10626, %v10621
    %v10631 = vextract.low.u32 %v10630
    %v10632 = vextract.high.u32 %v10630
    %v10633 = vmul.u32 %v10626, %v10617
    %v10634 = vadd.s32 %v10629, %v10631
    %vm10635 = vc.u32 %v10629, %v10631
    %v10636 = vadd.s32 %v10632, 1
    %v10637 = vsel %vm10635, %v10636, %v10632
    %v10638 = vadd.s32 %v10633, %v10637
    %v10639 = vadd.s32 %v10638, 536870912
    %v10640 = vshrl.u32 %v10639, 30
    %v10641 = vshll.u32 %v10640, 30
    %v10642 = vsub.s32 %v10638, %v10641
    %vm10643 = vcmp.lt.s32.totalorder %v10642, 0
    %v10644 = vsub.s32 0, %v10642
    %v10645 = vsel %vm10643, %v10644, %v10642
    %v10646 = vclz %v10645
    %v10647 = vsub.s32 %v10646, 2
    %vm10648 = vcmp.gt.s32.totalorder 0, %v10647
    %v10649 = vsel %vm10648, 0, %v10647
    %v10650 = vsub.s32 32, %v10649
    %v10651 = vshll.u32 %v10642, %v10649
    %v10652 = vshrl.u32 %v10634, %v10650
    %v10653 = vor.u32 %v10651, %v10652
    %v10654 = vsub.s32 4294967266, %v10649
    %v10655 = vadd.s32 %v10654, 127
    %v10656 = vshll.u32 %v10655, 23
    %v10657 = vor.u32 4788187, %v10656
    %v10658 = vand.u32 2147483647, %v10657
    %v10660 = vcvt.s32.f32 %v10653
    %v10661 = vmul.f32 %v10660, %v10658
    %v10662 = vxor.u32 %v10661, 2147483648
    %v10663 = vsel %vm10580, %v10662, %v10661
    %v10664 = vsub.s32 4, %v10640
    %v10665 = vsel %vm10580, %v10664, %v10640
    %v10666 = vsel %vm10579, %v10060, %v10663
    %v10667 = vsel %vm10579, 0, %v10665
    %v10668 = vcosq.f32.pop %v10666
    %v10669 = vsinq.f32.pop %v10666
    %vm10670 = vweird.f32 %v10060
    %v10671 = vand.u32 %v10667, 3
    %vm10672 = vcmp.lt.s32.totalorder %v10671, 2
    %vm10673 = vcmp.eq.s32.totalorder %v10671, 0
    %v10674 = vxor.u32 %v10669, 2147483648
    %v10675 = vsel %vm10673, %v10668, %v10674
    %vm10676 = vcmp.eq.s32.totalorder %v10671, 2
    %v10677 = vxor.u32 %v10668, 2147483648
    %v10678 = vsel %vm10676, %v10677, %v10669
    %v10679 = vsel %vm10672, %v10675, %v10678
    %v10680 = vsel %vm10670, nan, %v10679
    %v10681 = vand.u32 2147483647, %v10061
    %vm10682 = vcmp.le.f32.partialorder %v10681, 0.7853982
    %vm10683 = vcmp.lt.s32.totalorder %v10061, 0
    %v10684 = vand.u32 %v10061, 2139095040
    %v10685 = vshrl.u32 %v10684, 23
    %v10686 = vsub.s32 %v10685, 127
    %v10687 = vand.u32 2147483647, %v10061
    %v10688 = vand.u32 %v10687, 8388607
    %v10689 = vor.u32 %v10688, 8388608
    %v10690 = vsub.s32 0, %v10689
    %v10691 = vadd.s32 %v10686, 1
    %vm10692 = vcmp.gt.s32.totalorder %v10691, 0
    %v10693 = vsel %vm10692, %v10691, 0
    %v10694 = vshrl.u32 %v10693, 5
    %v10695 = vand.u32 %v10693, 31
    %v10696 = vsub.s32 32, %v10695
    %v10697 = vshrl.u32 683565275, %v10696
    %v10698 = vshll.u32 683565275, %v10695
    %v10699 = vshrl.u32 2475754826, %v10696
    %v10700 = vor.u32 %v10698, %v10699
    %v10701 = vshll.u32 2475754826, %v10695
    %v10702 = vshrl.u32 2131351028, %v10696
    %v10703 = vor.u32 %v10701, %v10702
    %v10704 = vshll.u32 2131351028, %v10695
    %v10705 = vshrl.u32 2102212464, %v10696
    %v10706 = vor.u32 %v10704, %v10705
    %v10707 = vshll.u32 2102212464, %v10695
    %v10708 = vshrl.u32 920167782, %v10696
    %v10709 = vor.u32 %v10707, %v10708
    %v10710 = vshll.u32 920167782, %v10695
    %v10711 = vshrl.u32 1326507024, %v10696
    %v10712 = vor.u32 %v10710, %v10711
    %vm10713 = vcmp.lt.s32.totalorder %v10694, 1
    %vm10714 = vcmp.lt.s32.totalorder %v10694, 2
    %vm10715 = vcmp.lt.s32.totalorder %v10694, 3
    %vm10716 = vcmp.lt.s32.totalorder %v10694, 4
    %v10717 = vsel %vm10713, %v10697, %v10700
    %v10718 = vsel %vm10716, %v10706, 2102212464
    %v10719 = vsel %vm10715, %v10703, %v10718
    %v10720 = vsel %vm10714, %v10717, %v10719
    %v10721 = vsel %vm10713, %v10700, %v10703
    %v10722 = vsel %vm10716, %v10709, 920167782
    %v10723 = vsel %vm10715, %v10706, %v10722
    %v10724 = vsel %vm10714, %v10721, %v10723
    %v10725 = vsel %vm10713, %v10703, %v10706
    %v10726 = vsel %vm10716, %v10712, 1326507024
    %v10727 = vsel %vm10715, %v10709, %v10726
    %v10728 = vsel %vm10714, %v10725, %v10727
    %v10729 = vshll.u32 %v10689, 8
    %v10730 = vmul.u32.u64.compose %v10729, %v10728
    %v10731 = vextract.low.u32 %v10730
    %v10732 = vextract.high.u32 %v10730
    %v10733 = vmul.u32.u64.compose %v10729, %v10724
    %v10734 = vextract.low.u32 %v10733
    %v10735 = vextract.high.u32 %v10733
    %v10736 = vmul.u32 %v10729, %v10720
    %v10737 = vadd.s32 %v10732, %v10734
    %vm10738 = vc.u32 %v10732, %v10734
    %v10739 = vadd.s32 %v10735, 1
    %v10740 = vsel %vm10738, %v10739, %v10735
    %v10741 = vadd.s32 %v10736, %v10740
    %v10742 = vadd.s32 %v10741, 536870912
    %v10743 = vshrl.u32 %v10742, 30
    %v10744 = vshll.u32 %v10743, 30
    %v10745 = vsub.s32 %v10741, %v10744
    %vm10746 = vcmp.lt.s32.totalorder %v10745, 0
    %v10747 = vsub.s32 0, %v10745
    %v10748 = vsel %vm10746, %v10747, %v10745
    %v10749 = vclz %v10748
    %v10750 = vsub.s32 %v10749, 2
    %vm10751 = vcmp.gt.s32.totalorder 0, %v10750
    %v10752 = vsel %vm10751, 0, %v10750
    %v10753 = vsub.s32 32, %v10752
    %v10754 = vshll.u32 %v10745, %v10752
    %v10755 = vshrl.u32 %v10737, %v10753
    %v10756 = vor.u32 %v10754, %v10755
    %v10757 = vsub.s32 4294967266, %v10752
    %v10758 = vadd.s32 %v10757, 127
    %v10759 = vshll.u32 %v10758, 23
    %v10760 = vor.u32 4788187, %v10759
    %v10761 = vand.u32 2147483647, %v10760
    %v10763 = vcvt.s32.f32 %v10756
    %v10764 = vmul.f32 %v10763, %v10761
    %v10765 = vxor.u32 %v10764, 2147483648
    %v10766 = vsel %vm10683, %v10765, %v10764
    %v10767 = vsub.s32 4, %v10743
    %v10768 = vsel %vm10683, %v10767, %v10743
    %v10769 = vsel %vm10682, %v10061, %v10766
    %v10770 = vsel %vm10682, 0, %v10768
    %v10771 = vcosq.f32.pop %v10769
    %v10772 = vsinq.f32.pop %v10769
    %vm10773 = vweird.f32 %v10061
    %v10774 = vand.u32 %v10770, 3
    %vm10775 = vcmp.lt.s32.totalorder %v10774, 2
    %vm10776 = vcmp.eq.s32.totalorder %v10774, 0
    %v10777 = vxor.u32 %v10772, 2147483648
    %v10778 = vsel %vm10776, %v10771, %v10777
    %vm10779 = vcmp.eq.s32.totalorder %v10774, 2
    %v10780 = vxor.u32 %v10771, 2147483648
    %v10781 = vsel %vm10779, %v10780, %v10772
    %v10782 = vsel %vm10775, %v10778, %v10781
    %v10783 = vsel %vm10773, nan, %v10782
    %v10784 = vand.u32 2147483647, %v10062
    %vm10785 = vcmp.le.f32.partialorder %v10784, 0.7853982
    %vm10786 = vcmp.lt.s32.totalorder %v10062, 0
    %v10787 = vand.u32 %v10062, 2139095040
    %v10788 = vshrl.u32 %v10787, 23
    %v10789 = vsub.s32 %v10788, 127
    %v10790 = vand.u32 2147483647, %v10062
    %v10791 = vand.u32 %v10790, 8388607
    %v10792 = vor.u32 %v10791, 8388608
    %v10793 = vsub.s32 0, %v10792
    %v10794 = vadd.s32 %v10789, 1
    %vm10795 = vcmp.gt.s32.totalorder %v10794, 0
    %v10796 = vsel %vm10795, %v10794, 0
    %v10797 = vshrl.u32 %v10796, 5
    %v10798 = vand.u32 %v10796, 31
    %v10799 = vsub.s32 32, %v10798
    %v10800 = vshrl.u32 683565275, %v10799
    %v10801 = vshll.u32 683565275, %v10798
    %v10802 = vshrl.u32 2475754826, %v10799
    %v10803 = vor.u32 %v10801, %v10802
    %v10804 = vshll.u32 2475754826, %v10798
    %v10805 = vshrl.u32 2131351028, %v10799
    %v10806 = vor.u32 %v10804, %v10805
    %v10807 = vshll.u32 2131351028, %v10798
    %v10808 = vshrl.u32 2102212464, %v10799
    %v10809 = vor.u32 %v10807, %v10808
    %v10810 = vshll.u32 2102212464, %v10798
    %v10811 = vshrl.u32 920167782, %v10799
    %v10812 = vor.u32 %v10810, %v10811
    %v10813 = vshll.u32 920167782, %v10798
    %v10814 = vshrl.u32 1326507024, %v10799
    %v10815 = vor.u32 %v10813, %v10814
    %vm10816 = vcmp.lt.s32.totalorder %v10797, 1
    %vm10817 = vcmp.lt.s32.totalorder %v10797, 2
    %vm10818 = vcmp.lt.s32.totalorder %v10797, 3
    %vm10819 = vcmp.lt.s32.totalorder %v10797, 4
    %v10820 = vsel %vm10816, %v10800, %v10803
    %v10821 = vsel %vm10819, %v10809, 2102212464
    %v10822 = vsel %vm10818, %v10806, %v10821
    %v10823 = vsel %vm10817, %v10820, %v10822
    %v10824 = vsel %vm10816, %v10803, %v10806
    %v10825 = vsel %vm10819, %v10812, 920167782
    %v10826 = vsel %vm10818, %v10809, %v10825
    %v10827 = vsel %vm10817, %v10824, %v10826
    %v10828 = vsel %vm10816, %v10806, %v10809
    %v10829 = vsel %vm10819, %v10815, 1326507024
    %v10830 = vsel %vm10818, %v10812, %v10829
    %v10831 = vsel %vm10817, %v10828, %v10830
    %v10832 = vshll.u32 %v10792, 8
    %v10833 = vmul.u32.u64.compose %v10832, %v10831
    %v10834 = vextract.low.u32 %v10833
    %v10835 = vextract.high.u32 %v10833
    %v10836 = vmul.u32.u64.compose %v10832, %v10827
    %v10837 = vextract.low.u32 %v10836
    %v10838 = vextract.high.u32 %v10836
    %v10839 = vmul.u32 %v10832, %v10823
    %v10840 = vadd.s32 %v10835, %v10837
    %vm10841 = vc.u32 %v10835, %v10837
    %v10842 = vadd.s32 %v10838, 1
    %v10843 = vsel %vm10841, %v10842, %v10838
    %v10844 = vadd.s32 %v10839, %v10843
    %v10845 = vadd.s32 %v10844, 536870912
    %v10846 = vshrl.u32 %v10845, 30
    %v10847 = vshll.u32 %v10846, 30
    %v10848 = vsub.s32 %v10844, %v10847
    %vm10849 = vcmp.lt.s32.totalorder %v10848, 0
    %v10850 = vsub.s32 0, %v10848
    %v10851 = vsel %vm10849, %v10850, %v10848
    %v10852 = vclz %v10851
    %v10853 = vsub.s32 %v10852, 2
    %vm10854 = vcmp.gt.s32.totalorder 0, %v10853
    %v10855 = vsel %vm10854, 0, %v10853
    %v10856 = vsub.s32 32, %v10855
    %v10857 = vshll.u32 %v10848, %v10855
    %v10858 = vshrl.u32 %v10840, %v10856
    %v10859 = vor.u32 %v10857, %v10858
    %v10860 = vsub.s32 4294967266, %v10855
    %v10861 = vadd.s32 %v10860, 127
    %v10862 = vshll.u32 %v10861, 23
    %v10863 = vor.u32 4788187, %v10862
    %v10864 = vand.u32 2147483647, %v10863
    %v10866 = vcvt.s32.f32 %v10859
    %v10867 = vmul.f32 %v10866, %v10864
    %v10868 = vxor.u32 %v10867, 2147483648
    %v10869 = vsel %vm10786, %v10868, %v10867
    %v10870 = vsub.s32 4, %v10846
    %v10871 = vsel %vm10786, %v10870, %v10846
    %v10872 = vsel %vm10785, %v10062, %v10869
    %v10873 = vsel %vm10785, 0, %v10871
    %v10874 = vcosq.f32.pop %v10872
    %v10875 = vsinq.f32.pop %v10872
    %vm10876 = vweird.f32 %v10062
    %v10877 = vand.u32 %v10873, 3
    %vm10878 = vcmp.lt.s32.totalorder %v10877, 2
    %vm10879 = vcmp.eq.s32.totalorder %v10877, 0
    %v10880 = vxor.u32 %v10875, 2147483648
    %v10881 = vsel %vm10879, %v10874, %v10880
    %vm10882 = vcmp.eq.s32.totalorder %v10877, 2
    %v10883 = vxor.u32 %v10874, 2147483648
    %v10884 = vsel %vm10882, %v10883, %v10875
    %v10885 = vsel %vm10878, %v10881, %v10884
    %v10886 = vsel %vm10876, nan, %v10885
    %v10887 = vadd.f32 %v10165, %v9063
    %v10888 = vadd.f32 %v10268, %v9064
    %v10889 = vadd.f32 %v10371, %v9065
    %v10890 = vadd.f32 %v10474, %v9066
    %v10891 = vadd.f32 %v10577, %v9067
    %v10892 = vadd.f32 %v10680, %v9068
    %v10893 = vadd.f32 %v10783, %v9069
    %v10894 = vadd.f32 %v10886, %v9070
    %v10895 = vld [vmem:[#allocation20] sm:$0xf]
    %v10896 = vld [vmem:[#allocation20 + $0x4] sm:$0xf]
    %v10897 = vld [vmem:[#allocation20 + $0x8] sm:$0xf]
    %v10898 = vld [vmem:[#allocation20 + $0xc] sm:$0xf]
    %v10899 = vld [vmem:[#allocation20 + $0x10] sm:$0xf]
    %v10900 = vld [vmem:[#allocation20 + $0x14] sm:$0xf]
    %v10901 = vld [vmem:[#allocation20 + $0x18] sm:$0xf]
    %v10902 = vld [vmem:[#allocation20 + $0x1c] sm:$0xf]
    %v10903 = vld [vmem:[#allocation20 + $0x20] sm:$0xf]
    %v10904 = vld [vmem:[#allocation20 + $0x24] sm:$0xf]
    %v10905 = vld [vmem:[#allocation20 + $0x28] sm:$0xf]
    %v10906 = vld [vmem:[#allocation20 + $0x2c] sm:$0xf]
    %v10907 = vld [vmem:[#allocation20 + $0x30] sm:$0xf]
    %v10908 = vld [vmem:[#allocation20 + $0x34] sm:$0xf]
    %v10909 = vld [vmem:[#allocation20 + $0x38] sm:$0xf]
    %v10910 = vld [vmem:[#allocation20 + $0x3c] sm:$0xf]
    %v10911 = vld [vmem:[#allocation20 + $0x40] sm:$0xf]
    %v10912 = vld [vmem:[#allocation20 + $0x44] sm:$0xf]
    %v10913 = vld [vmem:[#allocation20 + $0x48] sm:$0xf]
    %v10914 = vld [vmem:[#allocation20 + $0x4c] sm:$0xf]
    %v10915 = vld [vmem:[#allocation20 + $0x50] sm:$0xf]
    %v10916 = vld [vmem:[#allocation20 + $0x54] sm:$0xf]
    %v10917 = vld [vmem:[#allocation20 + $0x58] sm:$0xf]
    %v10918 = vld [vmem:[#allocation20 + $0x5c] sm:$0xf]
    %v10919 = vld [vmem:[#allocation20 + $0x60] sm:$0xf]
    %v10920 = vld [vmem:[#allocation20 + $0x64] sm:$0xf]
    %v10921 = vld [vmem:[#allocation20 + $0x68] sm:$0xf]
    %v10922 = vld [vmem:[#allocation20 + $0x6c] sm:$0xf]
    %v10923 = vld [vmem:[#allocation20 + $0x70] sm:$0xf]
    %v10924 = vld [vmem:[#allocation20 + $0x74] sm:$0xf]
    %v10925 = vld [vmem:[#allocation20 + $0x78] sm:$0xf]
    %v10926 = vld [vmem:[#allocation20 + $0x7c] sm:$0xf]
    %v10927 = vld [vmem:[#allocation20 + $0x80] sm:$0xf]
    %v10928 = vld [vmem:[#allocation20 + $0x84] sm:$0xf]
    %v10929 = vld [vmem:[#allocation20 + $0x88] sm:$0xf]
    %v10930 = vld [vmem:[#allocation20 + $0x8c] sm:$0xf]
    %v10931 = vld [vmem:[#allocation20 + $0x90] sm:$0xf]
    %v10932 = vld [vmem:[#allocation20 + $0x94] sm:$0xf]
    %v10933 = vld [vmem:[#allocation20 + $0x98] sm:$0xf]
    %v10934 = vld [vmem:[#allocation20 + $0x9c] sm:$0xf]
    %v10935 = vld [vmem:[#allocation20 + $0xa0] sm:$0xf]
    %v10936 = vld [vmem:[#allocation20 + $0xa4] sm:$0xf]
    %v10937 = vld [vmem:[#allocation20 + $0xa8] sm:$0xf]
    %v10938 = vld [vmem:[#allocation20 + $0xac] sm:$0xf]
    %v10939 = vld [vmem:[#allocation20 + $0xb0] sm:$0xf]
    %v10940 = vld [vmem:[#allocation20 + $0xb4] sm:$0xf]
    %v10941 = vld [vmem:[#allocation20 + $0xb8] sm:$0xf]
    %v10942 = vld [vmem:[#allocation20 + $0xbc] sm:$0xf]
    %v10943 = vld [vmem:[#allocation20 + $0xc0] sm:$0xf]
    %v10944 = vld [vmem:[#allocation20 + $0xc4] sm:$0xf]
    %v10945 = vld [vmem:[#allocation20 + $0xc8] sm:$0xf]
    %v10946 = vld [vmem:[#allocation20 + $0xcc] sm:$0xf]
    %v10947 = vld [vmem:[#allocation20 + $0xd0] sm:$0xf]
    %v10948 = vld [vmem:[#allocation20 + $0xd4] sm:$0xf]
    %v10949 = vld [vmem:[#allocation20 + $0xd8] sm:$0xf]
    %v10950 = vld [vmem:[#allocation20 + $0xdc] sm:$0xf]
    %v10951 = vld [vmem:[#allocation20 + $0xe0] sm:$0xf]
    %v10952 = vld [vmem:[#allocation20 + $0xe4] sm:$0xf]
    %v10953 = vld [vmem:[#allocation20 + $0xe8] sm:$0xf]
    %v10954 = vld [vmem:[#allocation20 + $0xec] sm:$0xf]
    %v10955 = vld [vmem:[#allocation20 + $0xf0] sm:$0xf]
    %v10956 = vld [vmem:[#allocation20 + $0xf4] sm:$0xf]
    %v10957 = vld [vmem:[#allocation20 + $0xf8] sm:$0xf]
    %v10958 = vld [vmem:[#allocation20 + $0xfc] sm:$0xf]
    %v10959 = vld [vmem:[#allocation22] sm:$0x1]
    %v10960 = vpack.c.bf16 %v10891, %v10887
    %v10961 = vpack.c.bf16 %v10892, %v10888
    %v10962 = vpack.c.bf16 %v10893, %v10889
    %v10963 = vpack.c.bf16 %v10894, %v10890
    %v10965 = vlaneseq
    %v10966 = vshrl.u32 %v10965, 7
    %v10967 = vsub.s32 0, %v10966
    %v10968 = vrot.slane %v10959, %v10967
    %v11034 = vunpack.c.l.b16 %v10895
    %v11035 = vunpack.c.l.b16 %v10896
    %v11036 = vunpack.c.l.b16 %v10897
    %v11037 = vunpack.c.l.b16 %v10898
    %v11038 = vunpack.c.l.b16 %v10899
    %v11039 = vunpack.c.l.b16 %v10900
    %v11040 = vunpack.c.l.b16 %v10901
    %v11041 = vunpack.c.l.b16 %v10902
    %v11042 = vunpack.c.l.b16 %v10903
    %v11043 = vunpack.c.l.b16 %v10904
    %v11044 = vunpack.c.l.b16 %v10905
    %v11045 = vunpack.c.l.b16 %v10906
    %v11046 = vunpack.c.l.b16 %v10907
    %v11047 = vunpack.c.l.b16 %v10908
    %v11048 = vunpack.c.l.b16 %v10909
    %v11049 = vunpack.c.l.b16 %v10910
    %v11050 = vunpack.c.l.b16 %v10911
    %v11051 = vunpack.c.l.b16 %v10912
    %v11052 = vunpack.c.l.b16 %v10913
    %v11053 = vunpack.c.l.b16 %v10914
    %v11054 = vunpack.c.l.b16 %v10915
    %v11055 = vunpack.c.l.b16 %v10916
    %v11056 = vunpack.c.l.b16 %v10917
    %v11057 = vunpack.c.l.b16 %v10918
    %v11058 = vunpack.c.l.b16 %v10919
    %v11059 = vunpack.c.l.b16 %v10920
    %v11060 = vunpack.c.l.b16 %v10921
    %v11061 = vunpack.c.l.b16 %v10922
    %v11062 = vunpack.c.l.b16 %v10923
    %v11063 = vunpack.c.l.b16 %v10924
    %v11064 = vunpack.c.l.b16 %v10925
    %v11065 = vunpack.c.l.b16 %v10926
    %v11066 = vunpack.c.l.b16 %v10927
    %v11067 = vunpack.c.l.b16 %v10928
    %v11068 = vunpack.c.l.b16 %v10929
    %v11069 = vunpack.c.l.b16 %v10930
    %v11070 = vunpack.c.l.b16 %v10931
    %v11071 = vunpack.c.l.b16 %v10932
    %v11072 = vunpack.c.l.b16 %v10933
    %v11073 = vunpack.c.l.b16 %v10934
    %v11074 = vunpack.c.l.b16 %v10935
    %v11075 = vunpack.c.l.b16 %v10936
    %v11076 = vunpack.c.l.b16 %v10937
    %v11077 = vunpack.c.l.b16 %v10938
    %v11078 = vunpack.c.l.b16 %v10939
    %v11079 = vunpack.c.l.b16 %v10940
    %v11080 = vunpack.c.l.b16 %v10941
    %v11081 = vunpack.c.l.b16 %v10942
    %v11082 = vunpack.c.l.b16 %v10943
    %v11083 = vunpack.c.l.b16 %v10944
    %v11084 = vunpack.c.l.b16 %v10945
    %v11085 = vunpack.c.l.b16 %v10946
    %v11086 = vunpack.c.l.b16 %v10947
    %v11087 = vunpack.c.l.b16 %v10948
    %v11088 = vunpack.c.l.b16 %v10949
    %v11089 = vunpack.c.l.b16 %v10950
    %v11090 = vunpack.c.l.b16 %v10951
    %v11091 = vunpack.c.l.b16 %v10952
    %v11092 = vunpack.c.l.b16 %v10953
    %v11093 = vunpack.c.l.b16 %v10954
    %v11094 = vunpack.c.l.b16 %v10955
    %v11095 = vunpack.c.l.b16 %v10956
    %v11096 = vunpack.c.l.b16 %v10957
    %v11097 = vunpack.c.l.b16 %v10958
    %v11098 = vpack.c.b16 %v11035, %v11034
    %v11099 = vpack.c.b16 %v11037, %v11036
    %v11100 = vpack.c.b16 %v11039, %v11038
    %v11101 = vpack.c.b16 %v11041, %v11040
    %v11102 = vpack.c.b16 %v11043, %v11042
    %v11103 = vpack.c.b16 %v11045, %v11044
    %v11104 = vpack.c.b16 %v11047, %v11046
    %v11105 = vpack.c.b16 %v11049, %v11048
    %v11106 = vpack.c.b16 %v11051, %v11050
    %v11107 = vpack.c.b16 %v11053, %v11052
    %v11108 = vpack.c.b16 %v11055, %v11054
    %v11109 = vpack.c.b16 %v11057, %v11056
    %v11110 = vpack.c.b16 %v11059, %v11058
    %v11111 = vpack.c.b16 %v11061, %v11060
    %v11112 = vpack.c.b16 %v11063, %v11062
    %v11113 = vpack.c.b16 %v11065, %v11064
    %v11114 = vpack.c.b16 %v11067, %v11066
    %v11115 = vpack.c.b16 %v11069, %v11068
    %v11116 = vpack.c.b16 %v11071, %v11070
    %v11117 = vpack.c.b16 %v11073, %v11072
    %v11118 = vpack.c.b16 %v11075, %v11074
    %v11119 = vpack.c.b16 %v11077, %v11076
    %v11120 = vpack.c.b16 %v11079, %v11078
    %v11121 = vpack.c.b16 %v11081, %v11080
    %v11122 = vpack.c.b16 %v11083, %v11082
    %v11123 = vpack.c.b16 %v11085, %v11084
    %v11124 = vpack.c.b16 %v11087, %v11086
    %v11125 = vpack.c.b16 %v11089, %v11088
    %v11126 = vpack.c.b16 %v11091, %v11090
    %v11127 = vpack.c.b16 %v11093, %v11092
    %v11128 = vpack.c.b16 %v11095, %v11094
    %v11129 = vpack.c.b16 %v11097, %v11096
    %11162 = vmatprep.subr.bf16.mxu0 0
    %11163 = vmatpush1.bf16.msra.mxu0 %v11105
    %11164 = vmatprep.subr.bf16.mxu0 0
    %11165 = vmatpush1.bf16.msra.mxu0 %v11104
    %11166 = vmatprep.subr.bf16.mxu0 0
    %11167 = vmatpush1.bf16.msra.mxu0 %v11103
    %11168 = vmatprep.subr.bf16.mxu0 0
    %11169 = vmatpush1.bf16.msra.mxu0 %v11102
    %11170 = vmatprep.subr.bf16.mxu0 0
    %11171 = vmatpush1.bf16.msra.mxu0 %v11101
    %11172 = vmatprep.subr.bf16.mxu0 0
    %11173 = vmatpush1.bf16.msra.mxu0 %v11100
    %11174 = vmatprep.subr.bf16.mxu0 0
    %11175 = vmatpush1.bf16.msra.mxu0 %v11099
    %11176 = vmatprep.subr.bf16.mxu0 0
    %11177 = vmatpush1.bf16.msra.mxu0 %v11098
    %11178 = vmatprep.subr.bf16.mxu0 0
    %11179 = vmatpush2.bf16.msra.mxu0 %v11113
    %11180 = vmatprep.subr.bf16.mxu0 0
    %11181 = vmatpush2.bf16.msra.mxu0 %v11112
    %11182 = vmatprep.subr.bf16.mxu0 0
    %11183 = vmatpush2.bf16.msra.mxu0 %v11111
    %11184 = vmatprep.subr.bf16.mxu0 0
    %11185 = vmatpush2.bf16.msra.mxu0 %v11110
    %11186 = vmatprep.subr.bf16.mxu0 0
    %11187 = vmatpush2.bf16.msra.mxu0 %v11109
    %11188 = vmatprep.subr.bf16.mxu0 0
    %11189 = vmatpush2.bf16.msra.mxu0 %v11108
    %11190 = vmatprep.subr.bf16.mxu0 0
    %11191 = vmatpush2.bf16.msra.mxu0 %v11107
    %11192 = vmatprep.subr.bf16.mxu0 0
    %11193 = vmatpush2.bf16.msra.mxu0 %v11106
    %11194 = vmatprep.mubr.bf16.mxu0 %v10961
    %11195 = vmatmul.mubr.bf16.gmra.mxu0 %v10960
    %v11196 = vpop.f32.mrf.mxu0
    %v11197 = vadd.f32 %v10968, %v11196
    %v11198 = vpop.f32.mrf.mxu0
    %v11199 = vpop.f32.mrf.mxu0
    %v11200 = vadd.f32 %v10968, %v11199
    %v11201 = vpop.f32.mrf.mxu0
    %11202 = vdwg.mxu0
    %11203 = vmatprep.subr.bf16.mxu0 0
    %11204 = vmatpush1.bf16.msra.mxu0 %v11121
    %11205 = vmatprep.subr.bf16.mxu0 0
    %11206 = vmatpush1.bf16.msra.mxu0 %v11120
    %11207 = vmatprep.subr.bf16.mxu0 0
    %11208 = vmatpush1.bf16.msra.mxu0 %v11119
    %11209 = vmatprep.subr.bf16.mxu0 0
    %11210 = vmatpush1.bf16.msra.mxu0 %v11118
    %11211 = vmatprep.subr.bf16.mxu0 0
    %11212 = vmatpush1.bf16.msra.mxu0 %v11117
    %11213 = vmatprep.subr.bf16.mxu0 0
    %11214 = vmatpush1.bf16.msra.mxu0 %v11116
    %11215 = vmatprep.subr.bf16.mxu0 0
    %11216 = vmatpush1.bf16.msra.mxu0 %v11115
    %11217 = vmatprep.subr.bf16.mxu0 0
    %11218 = vmatpush1.bf16.msra.mxu0 %v11114
    %11219 = vmatprep.subr.bf16.mxu0 0
    %11220 = vmatpush2.bf16.msra.mxu0 %v11129
    %11221 = vmatprep.subr.bf16.mxu0 0
    %11222 = vmatpush2.bf16.msra.mxu0 %v11128
    %11223 = vmatprep.subr.bf16.mxu0 0
    %11224 = vmatpush2.bf16.msra.mxu0 %v11127
    %11225 = vmatprep.subr.bf16.mxu0 0
    %11226 = vmatpush2.bf16.msra.mxu0 %v11126
    %11227 = vmatprep.subr.bf16.mxu0 0
    %11228 = vmatpush2.bf16.msra.mxu0 %v11125
    %11229 = vmatprep.subr.bf16.mxu0 0
    %11230 = vmatpush2.bf16.msra.mxu0 %v11124
    %11231 = vmatprep.subr.bf16.mxu0 0
    %11232 = vmatpush2.bf16.msra.mxu0 %v11123
    %11233 = vmatprep.subr.bf16.mxu0 0
    %11234 = vmatpush2.bf16.msra.mxu0 %v11122
    %11235 = vmatprep.mubr.bf16.mxu0 %v10963
    %11236 = vmatmul.mubr.bf16.gmra.mxu0 %v10962
    %v11237 = vpop.f32.mrf.mxu0
    %v11238 = vadd.f32 %v11197, %v11237
    %v11239 = vpop.f32.mrf.mxu0
    %v11240 = vpop.f32.mrf.mxu0
    %v11241 = vadd.f32 %v11200, %v11240
    %v11242 = vpop.f32.mrf.mxu0
    %11243 = vdwg.mxu0
    %11244 = vst [vmem:[#allocation23] sm:$0xff] %v11238
    %11245 = vst [vmem:[#allocation23 + $0x8] sm:$0xff] %v11241
    // Predicated region
    $region106: #{tpu_custom_call.1} parent=1 // pred_check
      _
    $region107: #{tpu_custom_call.1} parent=1 // pred_check_branch
      %11247 = sbr.rel (0) target = $region109
    $region108: #{tpu_custom_call.1} parent=1 // pred_region
      %s11249 = ssub.s32 256, 256
      %11250 = vsyncadd [#allocation4], %s11249
      %s11251 = sshll.u32 [#allocation23], 4
      %s11252 = int_to_ptr.vmem [resolvable:$true] %s11251
      %11257 = dma.vmem_to_hbm [thread:$0]  %s11252, 256, %s13, [#allocation4], 128, 128, 8
    $region109: #{tpu_custom_call.1} parent=1 // pred_fallthru
      _
    // Predicated region
    $region110: #{tpu_custom_call.1} parent=1 // pred_check
      _
    $region111: #{tpu_custom_call.1} parent=1 // pred_check_branch
      %11259 = sbr.rel (0) target = $region113
    $region112: #{tpu_custom_call.1} parent=1 // pred_region
      %s11261 = ssub.s32 256, 256
      %11262 = vsyncadd [#allocation25], %s11261
      %s11263 = sshll.u32 [#allocation24], 4
      %s11264 = int_to_ptr.vmem [resolvable:$true] %s11263
      %11269 = dma.vmem_to_hbm [thread:$0]  %s11264, 256, %s14, [#allocation25], 128, 128, 8
    $region113: #{tpu_custom_call.1} parent=1 // pred_fallthru
      _
    // Predicated region
    $region114: #{tpu_custom_call.1} parent=1 // pred_check
      _
    $region115: #{tpu_custom_call.1} parent=1 // pred_check_branch
      %11271 = sbr.rel (0) target = $region117
    $region116: #{tpu_custom_call.1} parent=1 // pred_region
      %s11273 = ssub.s32 256, 256
      %11274 = vsyncadd [#allocation25], %s11273
      %s11275 = sshll.u32 [#allocation26], 4
      %s11276 = int_to_ptr.vmem [resolvable:$true] %s11275
      %11281 = dma.vmem_to_hbm [thread:$0]  %s11276, 256, %s15, [#allocation25], 128, 128, 8
    $region117: #{tpu_custom_call.1} parent=1 // pred_fallthru
      _
    // Predicated region
    $region118: #{tpu_custom_call.1} parent=1 // pred_check
      _
    $region119: #{tpu_custom_call.1} parent=1 // pred_check_branch
      %11283 = sbr.rel (0) target = $region121
    $region120: #{tpu_custom_call.1} parent=1 // pred_region
      %11284 = dma.done [#allocation4], 256
    $region121: #{tpu_custom_call.1} parent=1 // pred_fallthru
      _
    // Predicated region
    $region122: #{tpu_custom_call.1} parent=1 // pred_check
      _
    $region123: #{tpu_custom_call.1} parent=1 // pred_check_branch
      %11286 = sbr.rel (0) target = $region125
    $region124: #{tpu_custom_call.1} parent=1 // pred_region
      %11287 = dma.done [#allocation25], 256
    $region125: #{tpu_custom_call.1} parent=1 // pred_fallthru
      _
    // Predicated region
    $region126: #{tpu_custom_call.1} parent=1 // pred_check
      _
    $region127: #{tpu_custom_call.1} parent=1 // pred_check_branch
      %11289 = sbr.rel (0) target = $region129
    $region128: #{tpu_custom_call.1} parent=1 // pred_region
      %11290 = dma.done [#allocation25], 256
    $region129: #{tpu_custom_call.1} parent=1 // pred_fallthru
      _
    %11291 = vsyncpa [#allocation3], 1
    %11292 = vsyncpa [#allocation6], 1
    %11293 = vsyncpa [#allocation9], 1
    %11294 = vsyncpa [#allocation12], 1
    %11295 = vsyncpa [#allocation15], 1
    %11296 = vsyncpa [#allocation18], 1
    %11297 = vsyncpa [#allocation21], 1
    %11298 = vsyncpa [#allocation4], 1
    %11299 = vsyncpa [#allocation25], 1

</llo_original>
